<compile_context>
chip_gen: v7x
topology: tpu7x:2x2x1
jax: 0.10.0
libtpu: 0.0.40
codegen_flags: <defaults>
</compile_context>

<pallas_src>
import functools
import numpy as np
import jax
import jax.numpy as jnp
from jax import lax
from jax.experimental import pallas as pl
from jax.experimental.pallas import tpu as pltpu

# NatureCNN hyper-parameters: (out_channels, kernel, stride)
CONV_CFG = ((32, 8, 4), (64, 4, 2), (64, 3, 1))
FC_DIM = 512          # multiple of 128 -> lane-dense trunk
HEAD_PAD = 128        # fused policy+value head padded to one 128-lane output


def conv_out(size, k, s):
    return (size - k) // s + 1


# ----------------------------------------------------------------------------- kernel
def _make_kernel(H, W, Cin, n_actions):
    (C1, K1, S1), (C2, K2, S2), (C3, K3, S3) = CONV_CFG
    OH1, OW1 = conv_out(H, K1, S1), conv_out(W, K1, S1)
    OH2, OW2 = conv_out(OH1, K2, S2), conv_out(OW1, K2, S2)
    OH3, OW3 = conv_out(OH2, K3, S3), conv_out(OW2, K3, S3)

    def kernel(img_ref, sel1_ref, m1_ref, b1_ref, sel2_ref, m2_ref, b2_ref,
               m3_ref, b3_ref, wf_ref, bfc_ref, wh_ref, bh_ref, out_ref):
        # preprocess_image: scale uint8-valued pixels to [0,1]; bf16 feed, f32 math.
        x = (img_ref[0] * (1.0 / 255.0)).astype(jnp.bfloat16)          # (H, W*Cin)

        def conv(x_bf, sel_ref, m_ref, b_ref, k, oh, out_cols):
            acc = jnp.zeros((oh, out_cols), jnp.float32)
            for ky in range(k):
                # exact row gather (0/1 matmul) — replaces a strided sublane load
                rows = jnp.dot(sel_ref[ky], x_bf,
                               preferred_element_type=jnp.float32).astype(jnp.bfloat16)
                acc = acc + jnp.dot(rows, m_ref[ky],
                                    preferred_element_type=jnp.float32)
            return jnp.maximum(acc + b_ref[...], 0.0)                   # ReLU in f32

        h1 = conv(x, sel1_ref, m1_ref, b1_ref, K1, OH1, OW1 * C1).astype(jnp.bfloat16)
        h2 = conv(h1, sel2_ref, m2_ref, b2_ref, K2, OH2, OW2 * C2).astype(jnp.bfloat16)

        # conv3 has stride 1: rows are contiguous, plain static slices.
        acc3 = jnp.zeros((OH3, OW3 * C3), jnp.float32)
        for ky in range(K3):
            acc3 = acc3 + jnp.dot(h2[ky:ky + OH3, :], m3_ref[ky],
                                  preferred_element_type=jnp.float32)
        h3 = jnp.maximum(acc3 + b3_ref[...], 0.0).astype(jnp.bfloat16)  # (OH3, OW3*C3)

        # fully-connected trunk without any in-kernel flatten: per-output-row matmuls.
        acc_fc = jnp.zeros((1, FC_DIM), jnp.float32)
        for oh in range(OH3):
            acc_fc = acc_fc + jnp.dot(h3[oh:oh + 1, :], wf_ref[oh],
                                      preferred_element_type=jnp.float32)
        h = jnp.maximum(acc_fc + bfc_ref[...], 0.0).astype(jnp.bfloat16)  # (1, 512)

        # Fused, 128-lane policy+value head: one matmul, one lane-dense store.
        head = jnp.dot(h, wh_ref[...], preferred_element_type=jnp.float32) + bh_ref[...]
        col = lax.broadcasted_iota(jnp.int32, (1, HEAD_PAD), 1)
        logits = jnp.where(col < n_actions, head, -1e30)   # mask value + pad columns
        m = jnp.max(logits, axis=-1, keepdims=True)
        e = jnp.exp(logits - m)
        denom = jnp.sum(e, axis=-1, keepdims=True)
        probs = e * pl.reciprocal(denom, approx=True)       # EUP reciprocal (free slot)
        # columns [0,A): probs, column A: value, rest: exactly 0.
        out_ref[0] = jnp.where(col == n_actions, head, probs)

    return kernel


# ------------------------------------------------------------------- parameter packing
def build_operands(params, H, W, Cin, n_actions):
    (w1, b1, w2, b2, w3, b3, wf, bfc, wp, bp, wv, bv) = params
    (C1, K1, S1), (C2, K2, S2), (C3, K3, S3) = CONV_CFG
    OH1, OW1 = conv_out(H, K1, S1), conv_out(W, K1, S1)
    OH2, OW2 = conv_out(OH1, K2, S2), conv_out(OW1, K2, S2)
    OH3, OW3 = conv_out(OH2, K3, S3), conv_out(OW2, K3, S3)

    def sel_mats(oh, h_in, s, k):
        hs = jnp.arange(h_in)[None, :]
        return jnp.stack([(hs == (s * jnp.arange(oh)[:, None] + ky)).astype(jnp.float32)
                          for ky in range(k)])

    def row_mats(w, w_in, ow, s):
        # w: (K, K, Cin, Cout) -> (K, w_in*Cin, ow*Cout); one block-Toeplitz matrix per ky.
        k, _, cin, cout = w.shape
        mats = []
        for ky in range(k):
            m = jnp.zeros((w_in, cin, ow, cout), jnp.float32)
            for o in range(ow):
                m = m.at[o * s:o * s + k, :, o, :].set(w[ky])
            mats.append(m.reshape(w_in * cin, ow * cout))
        return jnp.stack(mats)

    cast = lambda a: a.astype(jnp.bfloat16)       # bf16 weight storage / MXU feed
    sel1 = cast(sel_mats(OH1, H, S1, K1))
    m1 = cast(row_mats(w1, W, OW1, S1))
    b1r = jnp.tile(b1, OW1)[None, :]
    sel2 = cast(sel_mats(OH2, OH1, S2, K2))
    m2 = cast(row_mats(w2, OW1, OW2, S2))
    b2r = jnp.tile(b2, OW2)[None, :]
    m3 = cast(row_mats(w3, OW2, OW3, S3))
    b3r = jnp.tile(b3, OW3)[None, :]

    # fused policy+value head, padded to 128 lanes
    wh = jnp.zeros((FC_DIM, HEAD_PAD), jnp.float32)
    wh = wh.at[:, :n_actions].set(wp).at[:, n_actions].set(wv[:, 0])
    bh = jnp.zeros((1, HEAD_PAD), jnp.float32)
    bh = bh.at[0, :n_actions].set(bp).at[0, n_actions].set(bv[0])

    return (sel1, m1, b1r, sel2, m2, b2r, m3, b3r,
            cast(wf), bfc[None, :], cast(wh), bh)


# ----------------------------------------------------------------------------- wrapper
@functools.partial(jax.jit, static_argnums=(2,))
def image_agent_forward(image, operands, n_actions):
    B, H, W, Cin = image.shape
    kernel = _make_kernel(H, W, Cin, n_actions)
    img2 = image.reshape(B, H, W * Cin)           # wrapper-side layout plumbing only

    def const_spec(a):                            # weights: resident across grid steps
        nd = a.ndim
        return pl.BlockSpec(a.shape, lambda b, nd=nd: (0,) * nd)

    in_specs = [pl.BlockSpec((1, H, W * Cin), lambda b: (b, 0, 0))]
    in_specs += [const_spec(a) for a in operands]

    out = pl.pallas_call(
        kernel,
        grid=(B,),
        in_specs=in_specs,
        out_specs=pl.BlockSpec((1, 1, HEAD_PAD), lambda b: (b, 0, 0)),
        out_shape=jax.ShapeDtypeStruct((B, 1, HEAD_PAD), jnp.float32),
        compiler_params=pltpu.CompilerParams(dimension_semantics=("parallel",)),
    )(img2, *operands)[:, 0, :]

    probs = out[:, :n_actions]                    # Categorical.probs
    value = out[:, n_actions:n_actions + 1]       # value head
    return probs, value


def agent_forward(obs, operands, n_actions, state):
    probs, value = image_agent_forward(obs["image"], operands, n_actions)
    return probs, value, state                    # recurrent state is pass-through


def agent_predict(obs, operands, n_actions, state, deterministic=True, key=None):
    probs, _, state = agent_forward(obs, operands, n_actions, state)
    if deterministic:
        # argmax(probs) == argmax(logits): no extra softmax work beyond the fused kernel.
        return jnp.argmax(probs, axis=-1), state
    return jax.random.categorical(key, jnp.log(probs), axis=-1), state


# ----------------------------------------------------------------- init + f32 reference
def make_params(key, in_ch, n_actions, H, W):
    (C1, K1, S1), (C2, K2, S2), (C3, K3, S3) = CONV_CFG
    OH1, OW1 = conv_out(H, K1, S1), conv_out(W, K1, S1)
    OH2, OW2 = conv_out(OH1, K2, S2), conv_out(OW1, K2, S2)
    OH3, OW3 = conv_out(OH2, K3, S3), conv_out(OW2, K3, S3)
    ks = jax.random.split(key, 6)

    def init(k, shape, fan_in, gain=1.0):
        return (gain / np.sqrt(fan_in)) * jax.random.normal(k, shape, jnp.float32)

    w1 = init(ks[0], (K1, K1, in_ch, C1), K1 * K1 * in_ch)
    w2 = init(ks[1], (K2, K2, C1, C2), K2 * K2 * C1)
    w3 = init(ks[2], (K3, K3, C2, C3), K3 * K3 * C2)
    wf = init(ks[3], (OH3, OW3 * C3, FC_DIM), OH3 * OW3 * C3)
    wp = init(ks[4], (FC_DIM, n_actions), FC_DIM, gain=0.01)   # MLP(..., out_gain=0.01)
    wv = init(ks[5], (FC_DIM, 1), FC_DIM, gain=1.0)            # MLP(..., out_gain=1.0)
    z = lambda *s: jnp.zeros(s, jnp.float32)
    return (w1, z(C1), w2, z(C2), w3, z(C3), wf, z(FC_DIM), wp, z(n_actions), wv, z(1))


def reference_forward(image, params, n_actions):
    (w1, b1, w2, b2, w3, b3, wf, bfc, wp, bp, wv, bv) = params
    r = lambda a: a.astype(jnp.bfloat16).astype(jnp.float32)   # match bf16 weight storage
    x = r(image * (1.0 / 255.0))

    def conv(x, w, b, s):
        y = lax.conv_general_dilated(x, r(w), (s, s), "VALID",
                                     dimension_numbers=("NHWC", "HWIO", "NHWC"))
        return jnp.maximum(y + b, 0.0)

    y = conv(x, w1, b1, 4)
    y = conv(y, w2, b2, 2)
    y = conv(y, w3, b3, 1)
    B, OH3, OW3, C3 = y.shape
    h3 = y.reshape(B, OH3, OW3 * C3)
    h = jnp.maximum(jnp.einsum("bok,okj->bj", h3, r(wf)) + bfc, 0.0)
    logits = h @ r(wp) + bp
    value = h @ r(wv) + bv
    return jax.nn.softmax(logits, axis=-1), value


# -------------------------------------------------------------------------------- main
if __name__ == "__main__":
    key = jax.random.PRNGKey(0)
    k_img, k_par = jax.random.split(key)

    B, H, W, Cin, n_actions = 8, 56, 56, 4, 6     # small frame-stacked image observations
    image = jnp.round(jax.random.uniform(k_img, (B, H, W, Cin), jnp.float32) * 255.0)
    obs = {"image": image}

    params = make_params(k_par, Cin, n_actions, H, W)
    operands = build_operands(params, H, W, Cin, n_actions)

    state = []                                    # Agent.initial(): empty recurrent state
    probs, value, state = agent_forward(obs, operands, n_actions, state)
    actions, state = agent_predict(obs, operands, n_actions, state, deterministic=True)
    jax.block_until_ready((probs, value, actions))

    # sanity + correctness vs a pure-JAX/XLA reference of the same ImageAgent forward
    assert probs.shape == (B, n_actions) and value.shape == (B, 1) and actions.shape == (B,)
    assert jnp.all(jnp.abs(jnp.sum(probs, axis=-1) - 1.0) < 2e-2)   # approx reciprocal
    p_ref, v_ref = reference_forward(image, params, n_actions)
    assert jnp.allclose(probs, p_ref, atol=3e-2, rtol=3e-2)
    assert jnp.allclose(value, v_ref, atol=3e-2, rtol=3e-2)

    print("KERNEL_OK")
</pallas_src>

<mosaic_0001>
module attributes {stable_mosaic.version = 11 : i64} {
  func.func @kernel(%arg0: i32, %arg1: memref<1x56x224xf32, #tpu.memory_space<vmem>>, %arg2: memref<8x13x56xbf16, #tpu.memory_space<vmem>>, %arg3: memref<8x224x416xbf16, #tpu.memory_space<vmem>>, %arg4: memref<1x416xf32, #tpu.memory_space<vmem>>, %arg5: memref<4x5x13xbf16, #tpu.memory_space<vmem>>, %arg6: memref<4x416x320xbf16, #tpu.memory_space<vmem>>, %arg7: memref<1x320xf32, #tpu.memory_space<vmem>>, %arg8: memref<3x320x192xbf16, #tpu.memory_space<vmem>>, %arg9: memref<1x192xf32, #tpu.memory_space<vmem>>, %arg10: memref<3x192x512xbf16, #tpu.memory_space<vmem>>, %arg11: memref<1x512xf32, #tpu.memory_space<vmem>>, %arg12: memref<512x128xbf16, #tpu.memory_space<vmem>>, %arg13: memref<1x128xf32, #tpu.memory_space<vmem>>, %arg14: memref<1x1x128xf32, #tpu.memory_space<vmem>>) attributes {dimension_semantics = [#tpu.dimension_semantics<parallel>], iteration_bounds = array<i64: 8>, scalar_prefetch = 0 : i64, scratch_operands = 0 : i64, tpu.core_type = #tpu.core_type<tc>, window_params = [{transform_indices = @transform_0, window_bounds = array<i64: 1, 56, 224>}, {pipeline_mode = #tpu.pipeline_mode<synchronous>, transform_indices = @transform_1, window_bounds = array<i64: 8, 13, 56>}, {pipeline_mode = #tpu.pipeline_mode<synchronous>, transform_indices = @transform_2, window_bounds = array<i64: 8, 224, 416>}, {pipeline_mode = #tpu.pipeline_mode<synchronous>, transform_indices = @transform_3, window_bounds = array<i64: 1, 416>}, {pipeline_mode = #tpu.pipeline_mode<synchronous>, transform_indices = @transform_4, window_bounds = array<i64: 4, 5, 13>}, {pipeline_mode = #tpu.pipeline_mode<synchronous>, transform_indices = @transform_5, window_bounds = array<i64: 4, 416, 320>}, {pipeline_mode = #tpu.pipeline_mode<synchronous>, transform_indices = @transform_6, window_bounds = array<i64: 1, 320>}, {pipeline_mode = #tpu.pipeline_mode<synchronous>, transform_indices = @transform_7, window_bounds = array<i64: 3, 320, 192>}, {pipeline_mode = #tpu.pipeline_mode<synchronous>, transform_indices = @transform_8, window_bounds = array<i64: 1, 192>}, {pipeline_mode = #tpu.pipeline_mode<synchronous>, transform_indices = @transform_9, window_bounds = array<i64: 3, 192, 512>}, {pipeline_mode = #tpu.pipeline_mode<synchronous>, transform_indices = @transform_10, window_bounds = array<i64: 1, 512>}, {pipeline_mode = #tpu.pipeline_mode<synchronous>, transform_indices = @transform_11, window_bounds = array<i64: 512, 128>}, {pipeline_mode = #tpu.pipeline_mode<synchronous>, transform_indices = @transform_12, window_bounds = array<i64: 1, 128>}, {transform_indices = @transform_13, window_bounds = array<i64: 1, 1, 128>}]} {
    %c0 = arith.constant 0 : index
    %c0_0 = arith.constant 0 : index
    %c0_1 = arith.constant 0 : index
    %0 = vector.load %arg1[%c0, %c0_0, %c0_1] : memref<1x56x224xf32, #tpu.memory_space<vmem>>, vector<1x56x224xf32>
    %1 = vector.shape_cast %0 : vector<1x56x224xf32> to vector<56x224xf32>
    %cst = arith.constant 0.00392156886 : f32
    %2 = vector.broadcast %cst : f32 to vector<56x224xf32>
    %3 = arith.mulf %1, %2 : vector<56x224xf32>
    %4 = arith.truncf %3 : vector<56x224xf32> to vector<56x224xbf16>
    %cst_2 = arith.constant 0.000000e+00 : f32
    %5 = vector.broadcast %cst_2 : f32 to vector<13x416xf32>
    %c0_3 = arith.constant 0 : index
    %c0_4 = arith.constant 0 : index
    %c0_5 = arith.constant 0 : index
    %6 = vector.load %arg2[%c0_3, %c0_4, %c0_5] : memref<8x13x56xbf16, #tpu.memory_space<vmem>>, vector<1x13x56xbf16>
    %7 = vector.shape_cast %6 : vector<1x13x56xbf16> to vector<13x56xbf16>
    %cst_6 = arith.constant dense<0.000000e+00> : vector<13x224xf32>
    %8 = tpu.matmul %7, %4, %cst_6 {dimension_numbers = #tpu.dot_dimension_numbers<[1], [0], [0], [1], [0, 0, 1, 1], [], []>} : vector<13x56xbf16>, vector<56x224xbf16>, vector<13x224xf32> -> vector<13x224xf32>
    %9 = arith.truncf %8 : vector<13x224xf32> to vector<13x224xbf16>
    %c0_7 = arith.constant 0 : index
    %c0_8 = arith.constant 0 : index
    %c0_9 = arith.constant 0 : index
    %10 = vector.load %arg3[%c0_7, %c0_8, %c0_9] : memref<8x224x416xbf16, #tpu.memory_space<vmem>>, vector<1x224x416xbf16>
    %11 = vector.shape_cast %10 : vector<1x224x416xbf16> to vector<224x416xbf16>
    %cst_10 = arith.constant dense<0.000000e+00> : vector<13x416xf32>
    %12 = tpu.matmul %9, %11, %cst_10 {dimension_numbers = #tpu.dot_dimension_numbers<[1], [0], [0], [1], [0, 0, 1, 1], [], []>} : vector<13x224xbf16>, vector<224x416xbf16>, vector<13x416xf32> -> vector<13x416xf32>
    %13 = arith.addf %5, %12 : vector<13x416xf32>
    %c1 = arith.constant 1 : index
    %c0_11 = arith.constant 0 : index
    %c0_12 = arith.constant 0 : index
    %14 = vector.load %arg2[%c1, %c0_11, %c0_12] : memref<8x13x56xbf16, #tpu.memory_space<vmem>>, vector<1x13x56xbf16>
    %15 = vector.shape_cast %14 : vector<1x13x56xbf16> to vector<13x56xbf16>
    %cst_13 = arith.constant dense<0.000000e+00> : vector<13x224xf32>
    %16 = tpu.matmul %15, %4, %cst_13 {dimension_numbers = #tpu.dot_dimension_numbers<[1], [0], [0], [1], [0, 0, 1, 1], [], []>} : vector<13x56xbf16>, vector<56x224xbf16>, vector<13x224xf32> -> vector<13x224xf32>
    %17 = arith.truncf %16 : vector<13x224xf32> to vector<13x224xbf16>
    %c1_14 = arith.constant 1 : index
    %c0_15 = arith.constant 0 : index
    %c0_16 = arith.constant 0 : index
    %18 = vector.load %arg3[%c1_14, %c0_15, %c0_16] : memref<8x224x416xbf16, #tpu.memory_space<vmem>>, vector<1x224x416xbf16>
    %19 = vector.shape_cast %18 : vector<1x224x416xbf16> to vector<224x416xbf16>
    %cst_17 = arith.constant dense<0.000000e+00> : vector<13x416xf32>
    %20 = tpu.matmul %17, %19, %cst_17 {dimension_numbers = #tpu.dot_dimension_numbers<[1], [0], [0], [1], [0, 0, 1, 1], [], []>} : vector<13x224xbf16>, vector<224x416xbf16>, vector<13x416xf32> -> vector<13x416xf32>
    %21 = arith.addf %13, %20 : vector<13x416xf32>
    %c2 = arith.constant 2 : index
    %c0_18 = arith.constant 0 : index
    %c0_19 = arith.constant 0 : index
    %22 = vector.load %arg2[%c2, %c0_18, %c0_19] : memref<8x13x56xbf16, #tpu.memory_space<vmem>>, vector<1x13x56xbf16>
    %23 = vector.shape_cast %22 : vector<1x13x56xbf16> to vector<13x56xbf16>
    %cst_20 = arith.constant dense<0.000000e+00> : vector<13x224xf32>
    %24 = tpu.matmul %23, %4, %cst_20 {dimension_numbers = #tpu.dot_dimension_numbers<[1], [0], [0], [1], [0, 0, 1, 1], [], []>} : vector<13x56xbf16>, vector<56x224xbf16>, vector<13x224xf32> -> vector<13x224xf32>
    %25 = arith.truncf %24 : vector<13x224xf32> to vector<13x224xbf16>
    %c2_21 = arith.constant 2 : index
    %c0_22 = arith.constant 0 : index
    %c0_23 = arith.constant 0 : index
    %26 = vector.load %arg3[%c2_21, %c0_22, %c0_23] : memref<8x224x416xbf16, #tpu.memory_space<vmem>>, vector<1x224x416xbf16>
    %27 = vector.shape_cast %26 : vector<1x224x416xbf16> to vector<224x416xbf16>
    %cst_24 = arith.constant dense<0.000000e+00> : vector<13x416xf32>
    %28 = tpu.matmul %25, %27, %cst_24 {dimension_numbers = #tpu.dot_dimension_numbers<[1], [0], [0], [1], [0, 0, 1, 1], [], []>} : vector<13x224xbf16>, vector<224x416xbf16>, vector<13x416xf32> -> vector<13x416xf32>
    %29 = arith.addf %21, %28 : vector<13x416xf32>
    %c3 = arith.constant 3 : index
    %c0_25 = arith.constant 0 : index
    %c0_26 = arith.constant 0 : index
    %30 = vector.load %arg2[%c3, %c0_25, %c0_26] : memref<8x13x56xbf16, #tpu.memory_space<vmem>>, vector<1x13x56xbf16>
    %31 = vector.shape_cast %30 : vector<1x13x56xbf16> to vector<13x56xbf16>
    %cst_27 = arith.constant dense<0.000000e+00> : vector<13x224xf32>
    %32 = tpu.matmul %31, %4, %cst_27 {dimension_numbers = #tpu.dot_dimension_numbers<[1], [0], [0], [1], [0, 0, 1, 1], [], []>} : vector<13x56xbf16>, vector<56x224xbf16>, vector<13x224xf32> -> vector<13x224xf32>
    %33 = arith.truncf %32 : vector<13x224xf32> to vector<13x224xbf16>
    %c3_28 = arith.constant 3 : index
    %c0_29 = arith.constant 0 : index
    %c0_30 = arith.constant 0 : index
    %34 = vector.load %arg3[%c3_28, %c0_29, %c0_30] : memref<8x224x416xbf16, #tpu.memory_space<vmem>>, vector<1x224x416xbf16>
    %35 = vector.shape_cast %34 : vector<1x224x416xbf16> to vector<224x416xbf16>
    %cst_31 = arith.constant dense<0.000000e+00> : vector<13x416xf32>
    %36 = tpu.matmul %33, %35, %cst_31 {dimension_numbers = #tpu.dot_dimension_numbers<[1], [0], [0], [1], [0, 0, 1, 1], [], []>} : vector<13x224xbf16>, vector<224x416xbf16>, vector<13x416xf32> -> vector<13x416xf32>
    %37 = arith.addf %29, %36 : vector<13x416xf32>
    %c4 = arith.constant 4 : index
    %c0_32 = arith.constant 0 : index
    %c0_33 = arith.constant 0 : index
    %38 = vector.load %arg2[%c4, %c0_32, %c0_33] : memref<8x13x56xbf16, #tpu.memory_space<vmem>>, vector<1x13x56xbf16>
    %39 = vector.shape_cast %38 : vector<1x13x56xbf16> to vector<13x56xbf16>
    %cst_34 = arith.constant dense<0.000000e+00> : vector<13x224xf32>
    %40 = tpu.matmul %39, %4, %cst_34 {dimension_numbers = #tpu.dot_dimension_numbers<[1], [0], [0], [1], [0, 0, 1, 1], [], []>} : vector<13x56xbf16>, vector<56x224xbf16>, vector<13x224xf32> -> vector<13x224xf32>
    %41 = arith.truncf %40 : vector<13x224xf32> to vector<13x224xbf16>
    %c4_35 = arith.constant 4 : index
    %c0_36 = arith.constant 0 : index
    %c0_37 = arith.constant 0 : index
    %42 = vector.load %arg3[%c4_35, %c0_36, %c0_37] : memref<8x224x416xbf16, #tpu.memory_space<vmem>>, vector<1x224x416xbf16>
    %43 = vector.shape_cast %42 : vector<1x224x416xbf16> to vector<224x416xbf16>
    %cst_38 = arith.constant dense<0.000000e+00> : vector<13x416xf32>
    %44 = tpu.matmul %41, %43, %cst_38 {dimension_numbers = #tpu.dot_dimension_numbers<[1], [0], [0], [1], [0, 0, 1, 1], [], []>} : vector<13x224xbf16>, vector<224x416xbf16>, vector<13x416xf32> -> vector<13x416xf32>
    %45 = arith.addf %37, %44 : vector<13x416xf32>
    %c5 = arith.constant 5 : index
    %c0_39 = arith.constant 0 : index
    %c0_40 = arith.constant 0 : index
    %46 = vector.load %arg2[%c5, %c0_39, %c0_40] : memref<8x13x56xbf16, #tpu.memory_space<vmem>>, vector<1x13x56xbf16>
    %47 = vector.shape_cast %46 : vector<1x13x56xbf16> to vector<13x56xbf16>
    %cst_41 = arith.constant dense<0.000000e+00> : vector<13x224xf32>
    %48 = tpu.matmul %47, %4, %cst_41 {dimension_numbers = #tpu.dot_dimension_numbers<[1], [0], [0], [1], [0, 0, 1, 1], [], []>} : vector<13x56xbf16>, vector<56x224xbf16>, vector<13x224xf32> -> vector<13x224xf32>
    %49 = arith.truncf %48 : vector<13x224xf32> to vector<13x224xbf16>
    %c5_42 = arith.constant 5 : index
    %c0_43 = arith.constant 0 : index
    %c0_44 = arith.constant 0 : index
    %50 = vector.load %arg3[%c5_42, %c0_43, %c0_44] : memref<8x224x416xbf16, #tpu.memory_space<vmem>>, vector<1x224x416xbf16>
    %51 = vector.shape_cast %50 : vector<1x224x416xbf16> to vector<224x416xbf16>
    %cst_45 = arith.constant dense<0.000000e+00> : vector<13x416xf32>
    %52 = tpu.matmul %49, %51, %cst_45 {dimension_numbers = #tpu.dot_dimension_numbers<[1], [0], [0], [1], [0, 0, 1, 1], [], []>} : vector<13x224xbf16>, vector<224x416xbf16>, vector<13x416xf32> -> vector<13x416xf32>
    %53 = arith.addf %45, %52 : vector<13x416xf32>
    %c6 = arith.constant 6 : index
    %c0_46 = arith.constant 0 : index
    %c0_47 = arith.constant 0 : index
    %54 = vector.load %arg2[%c6, %c0_46, %c0_47] : memref<8x13x56xbf16, #tpu.memory_space<vmem>>, vector<1x13x56xbf16>
    %55 = vector.shape_cast %54 : vector<1x13x56xbf16> to vector<13x56xbf16>
    %cst_48 = arith.constant dense<0.000000e+00> : vector<13x224xf32>
    %56 = tpu.matmul %55, %4, %cst_48 {dimension_numbers = #tpu.dot_dimension_numbers<[1], [0], [0], [1], [0, 0, 1, 1], [], []>} : vector<13x56xbf16>, vector<56x224xbf16>, vector<13x224xf32> -> vector<13x224xf32>
    %57 = arith.truncf %56 : vector<13x224xf32> to vector<13x224xbf16>
    %c6_49 = arith.constant 6 : index
    %c0_50 = arith.constant 0 : index
    %c0_51 = arith.constant 0 : index
    %58 = vector.load %arg3[%c6_49, %c0_50, %c0_51] : memref<8x224x416xbf16, #tpu.memory_space<vmem>>, vector<1x224x416xbf16>
    %59 = vector.shape_cast %58 : vector<1x224x416xbf16> to vector<224x416xbf16>
    %cst_52 = arith.constant dense<0.000000e+00> : vector<13x416xf32>
    %60 = tpu.matmul %57, %59, %cst_52 {dimension_numbers = #tpu.dot_dimension_numbers<[1], [0], [0], [1], [0, 0, 1, 1], [], []>} : vector<13x224xbf16>, vector<224x416xbf16>, vector<13x416xf32> -> vector<13x416xf32>
    %61 = arith.addf %53, %60 : vector<13x416xf32>
    %c7 = arith.constant 7 : index
    %c0_53 = arith.constant 0 : index
    %c0_54 = arith.constant 0 : index
    %62 = vector.load %arg2[%c7, %c0_53, %c0_54] : memref<8x13x56xbf16, #tpu.memory_space<vmem>>, vector<1x13x56xbf16>
    %63 = vector.shape_cast %62 : vector<1x13x56xbf16> to vector<13x56xbf16>
    %cst_55 = arith.constant dense<0.000000e+00> : vector<13x224xf32>
    %64 = tpu.matmul %63, %4, %cst_55 {dimension_numbers = #tpu.dot_dimension_numbers<[1], [0], [0], [1], [0, 0, 1, 1], [], []>} : vector<13x56xbf16>, vector<56x224xbf16>, vector<13x224xf32> -> vector<13x224xf32>
    %65 = arith.truncf %64 : vector<13x224xf32> to vector<13x224xbf16>
    %c7_56 = arith.constant 7 : index
    %c0_57 = arith.constant 0 : index
    %c0_58 = arith.constant 0 : index
    %66 = vector.load %arg3[%c7_56, %c0_57, %c0_58] : memref<8x224x416xbf16, #tpu.memory_space<vmem>>, vector<1x224x416xbf16>
    %67 = vector.shape_cast %66 : vector<1x224x416xbf16> to vector<224x416xbf16>
    %cst_59 = arith.constant dense<0.000000e+00> : vector<13x416xf32>
    %68 = tpu.matmul %65, %67, %cst_59 {dimension_numbers = #tpu.dot_dimension_numbers<[1], [0], [0], [1], [0, 0, 1, 1], [], []>} : vector<13x224xbf16>, vector<224x416xbf16>, vector<13x416xf32> -> vector<13x416xf32>
    %69 = arith.addf %61, %68 : vector<13x416xf32>
    %c0_60 = arith.constant 0 : index
    %c0_61 = arith.constant 0 : index
    %70 = vector.load %arg4[%c0_60, %c0_61] : memref<1x416xf32, #tpu.memory_space<vmem>>, vector<1x416xf32>
    %71 = vector.broadcast %70 : vector<1x416xf32> to vector<13x416xf32>
    %72 = arith.addf %69, %71 : vector<13x416xf32>
    %cst_62 = arith.constant 0.000000e+00 : f32
    %73 = vector.broadcast %cst_62 : f32 to vector<13x416xf32>
    %74 = arith.maximumf %72, %73 : vector<13x416xf32>
    %75 = arith.truncf %74 : vector<13x416xf32> to vector<13x416xbf16>
    %cst_63 = arith.constant 0.000000e+00 : f32
    %76 = vector.broadcast %cst_63 : f32 to vector<5x320xf32>
    %c0_64 = arith.constant 0 : index
    %c0_65 = arith.constant 0 : index
    %c0_66 = arith.constant 0 : index
    %77 = vector.load %arg5[%c0_64, %c0_65, %c0_66] : memref<4x5x13xbf16, #tpu.memory_space<vmem>>, vector<1x5x13xbf16>
    %78 = vector.shape_cast %77 : vector<1x5x13xbf16> to vector<5x13xbf16>
    %cst_67 = arith.constant dense<0.000000e+00> : vector<5x416xf32>
    %79 = tpu.matmul %78, %75, %cst_67 {dimension_numbers = #tpu.dot_dimension_numbers<[1], [0], [0], [1], [0, 0, 1, 1], [], []>} : vector<5x13xbf16>, vector<13x416xbf16>, vector<5x416xf32> -> vector<5x416xf32>
    %80 = arith.truncf %79 : vector<5x416xf32> to vector<5x416xbf16>
    %c0_68 = arith.constant 0 : index
    %c0_69 = arith.constant 0 : index
    %c0_70 = arith.constant 0 : index
    %81 = vector.load %arg6[%c0_68, %c0_69, %c0_70] : memref<4x416x320xbf16, #tpu.memory_space<vmem>>, vector<1x416x320xbf16>
    %82 = vector.shape_cast %81 : vector<1x416x320xbf16> to vector<416x320xbf16>
    %cst_71 = arith.constant dense<0.000000e+00> : vector<5x320xf32>
    %83 = tpu.matmul %80, %82, %cst_71 {dimension_numbers = #tpu.dot_dimension_numbers<[1], [0], [0], [1], [0, 0, 1, 1], [], []>} : vector<5x416xbf16>, vector<416x320xbf16>, vector<5x320xf32> -> vector<5x320xf32>
    %84 = arith.addf %76, %83 : vector<5x320xf32>
    %c1_72 = arith.constant 1 : index
    %c0_73 = arith.constant 0 : index
    %c0_74 = arith.constant 0 : index
    %85 = vector.load %arg5[%c1_72, %c0_73, %c0_74] : memref<4x5x13xbf16, #tpu.memory_space<vmem>>, vector<1x5x13xbf16>
    %86 = vector.shape_cast %85 : vector<1x5x13xbf16> to vector<5x13xbf16>
    %cst_75 = arith.constant dense<0.000000e+00> : vector<5x416xf32>
    %87 = tpu.matmul %86, %75, %cst_75 {dimension_numbers = #tpu.dot_dimension_numbers<[1], [0], [0], [1], [0, 0, 1, 1], [], []>} : vector<5x13xbf16>, vector<13x416xbf16>, vector<5x416xf32> -> vector<5x416xf32>
    %88 = arith.truncf %87 : vector<5x416xf32> to vector<5x416xbf16>
    %c1_76 = arith.constant 1 : index
    %c0_77 = arith.constant 0 : index
    %c0_78 = arith.constant 0 : index
    %89 = vector.load %arg6[%c1_76, %c0_77, %c0_78] : memref<4x416x320xbf16, #tpu.memory_space<vmem>>, vector<1x416x320xbf16>
    %90 = vector.shape_cast %89 : vector<1x416x320xbf16> to vector<416x320xbf16>
    %cst_79 = arith.constant dense<0.000000e+00> : vector<5x320xf32>
    %91 = tpu.matmul %88, %90, %cst_79 {dimension_numbers = #tpu.dot_dimension_numbers<[1], [0], [0], [1], [0, 0, 1, 1], [], []>} : vector<5x416xbf16>, vector<416x320xbf16>, vector<5x320xf32> -> vector<5x320xf32>
    %92 = arith.addf %84, %91 : vector<5x320xf32>
    %c2_80 = arith.constant 2 : index
    %c0_81 = arith.constant 0 : index
    %c0_82 = arith.constant 0 : index
    %93 = vector.load %arg5[%c2_80, %c0_81, %c0_82] : memref<4x5x13xbf16, #tpu.memory_space<vmem>>, vector<1x5x13xbf16>
    %94 = vector.shape_cast %93 : vector<1x5x13xbf16> to vector<5x13xbf16>
    %cst_83 = arith.constant dense<0.000000e+00> : vector<5x416xf32>
    %95 = tpu.matmul %94, %75, %cst_83 {dimension_numbers = #tpu.dot_dimension_numbers<[1], [0], [0], [1], [0, 0, 1, 1], [], []>} : vector<5x13xbf16>, vector<13x416xbf16>, vector<5x416xf32> -> vector<5x416xf32>
    %96 = arith.truncf %95 : vector<5x416xf32> to vector<5x416xbf16>
    %c2_84 = arith.constant 2 : index
    %c0_85 = arith.constant 0 : index
    %c0_86 = arith.constant 0 : index
    %97 = vector.load %arg6[%c2_84, %c0_85, %c0_86] : memref<4x416x320xbf16, #tpu.memory_space<vmem>>, vector<1x416x320xbf16>
    %98 = vector.shape_cast %97 : vector<1x416x320xbf16> to vector<416x320xbf16>
    %cst_87 = arith.constant dense<0.000000e+00> : vector<5x320xf32>
    %99 = tpu.matmul %96, %98, %cst_87 {dimension_numbers = #tpu.dot_dimension_numbers<[1], [0], [0], [1], [0, 0, 1, 1], [], []>} : vector<5x416xbf16>, vector<416x320xbf16>, vector<5x320xf32> -> vector<5x320xf32>
    %100 = arith.addf %92, %99 : vector<5x320xf32>
    %c3_88 = arith.constant 3 : index
    %c0_89 = arith.constant 0 : index
    %c0_90 = arith.constant 0 : index
    %101 = vector.load %arg5[%c3_88, %c0_89, %c0_90] : memref<4x5x13xbf16, #tpu.memory_space<vmem>>, vector<1x5x13xbf16>
    %102 = vector.shape_cast %101 : vector<1x5x13xbf16> to vector<5x13xbf16>
    %cst_91 = arith.constant dense<0.000000e+00> : vector<5x416xf32>
    %103 = tpu.matmul %102, %75, %cst_91 {dimension_numbers = #tpu.dot_dimension_numbers<[1], [0], [0], [1], [0, 0, 1, 1], [], []>} : vector<5x13xbf16>, vector<13x416xbf16>, vector<5x416xf32> -> vector<5x416xf32>
    %104 = arith.truncf %103 : vector<5x416xf32> to vector<5x416xbf16>
    %c3_92 = arith.constant 3 : index
    %c0_93 = arith.constant 0 : index
    %c0_94 = arith.constant 0 : index
    %105 = vector.load %arg6[%c3_92, %c0_93, %c0_94] : memref<4x416x320xbf16, #tpu.memory_space<vmem>>, vector<1x416x320xbf16>
    %106 = vector.shape_cast %105 : vector<1x416x320xbf16> to vector<416x320xbf16>
    %cst_95 = arith.constant dense<0.000000e+00> : vector<5x320xf32>
    %107 = tpu.matmul %104, %106, %cst_95 {dimension_numbers = #tpu.dot_dimension_numbers<[1], [0], [0], [1], [0, 0, 1, 1], [], []>} : vector<5x416xbf16>, vector<416x320xbf16>, vector<5x320xf32> -> vector<5x320xf32>
    %108 = arith.addf %100, %107 : vector<5x320xf32>
    %c0_96 = arith.constant 0 : index
    %c0_97 = arith.constant 0 : index
    %109 = vector.load %arg7[%c0_96, %c0_97] : memref<1x320xf32, #tpu.memory_space<vmem>>, vector<1x320xf32>
    %110 = vector.broadcast %109 : vector<1x320xf32> to vector<5x320xf32>
    %111 = arith.addf %108, %110 : vector<5x320xf32>
    %cst_98 = arith.constant 0.000000e+00 : f32
    %112 = vector.broadcast %cst_98 : f32 to vector<5x320xf32>
    %113 = arith.maximumf %111, %112 : vector<5x320xf32>
    %114 = arith.truncf %113 : vector<5x320xf32> to vector<5x320xbf16>
    %cst_99 = arith.constant 0.000000e+00 : f32
    %115 = vector.broadcast %cst_99 : f32 to vector<3x192xf32>
    %116 = vector.extract_strided_slice %114 {offsets = [0, 0], sizes = [3, 320], strides = [1, 1]} : vector<5x320xbf16> to vector<3x320xbf16>
    %c0_100 = arith.constant 0 : index
    %c0_101 = arith.constant 0 : index
    %c0_102 = arith.constant 0 : index
    %117 = vector.load %arg8[%c0_100, %c0_101, %c0_102] : memref<3x320x192xbf16, #tpu.memory_space<vmem>>, vector<1x320x192xbf16>
    %118 = vector.shape_cast %117 : vector<1x320x192xbf16> to vector<320x192xbf16>
    %cst_103 = arith.constant dense<0.000000e+00> : vector<3x192xf32>
    %119 = tpu.matmul %116, %118, %cst_103 {dimension_numbers = #tpu.dot_dimension_numbers<[1], [0], [0], [1], [0, 0, 1, 1], [], []>} : vector<3x320xbf16>, vector<320x192xbf16>, vector<3x192xf32> -> vector<3x192xf32>
    %120 = arith.addf %115, %119 : vector<3x192xf32>
    %121 = vector.extract_strided_slice %114 {offsets = [1, 0], sizes = [3, 320], strides = [1, 1]} : vector<5x320xbf16> to vector<3x320xbf16>
    %c1_104 = arith.constant 1 : index
    %c0_105 = arith.constant 0 : index
    %c0_106 = arith.constant 0 : index
    %122 = vector.load %arg8[%c1_104, %c0_105, %c0_106] : memref<3x320x192xbf16, #tpu.memory_space<vmem>>, vector<1x320x192xbf16>
    %123 = vector.shape_cast %122 : vector<1x320x192xbf16> to vector<320x192xbf16>
    %cst_107 = arith.constant dense<0.000000e+00> : vector<3x192xf32>
    %124 = tpu.matmul %121, %123, %cst_107 {dimension_numbers = #tpu.dot_dimension_numbers<[1], [0], [0], [1], [0, 0, 1, 1], [], []>} : vector<3x320xbf16>, vector<320x192xbf16>, vector<3x192xf32> -> vector<3x192xf32>
    %125 = arith.addf %120, %124 : vector<3x192xf32>
    %126 = vector.extract_strided_slice %114 {offsets = [2, 0], sizes = [3, 320], strides = [1, 1]} : vector<5x320xbf16> to vector<3x320xbf16>
    %c2_108 = arith.constant 2 : index
    %c0_109 = arith.constant 0 : index
    %c0_110 = arith.constant 0 : index
    %127 = vector.load %arg8[%c2_108, %c0_109, %c0_110] : memref<3x320x192xbf16, #tpu.memory_space<vmem>>, vector<1x320x192xbf16>
    %128 = vector.shape_cast %127 : vector<1x320x192xbf16> to vector<320x192xbf16>
    %cst_111 = arith.constant dense<0.000000e+00> : vector<3x192xf32>
    %129 = tpu.matmul %126, %128, %cst_111 {dimension_numbers = #tpu.dot_dimension_numbers<[1], [0], [0], [1], [0, 0, 1, 1], [], []>} : vector<3x320xbf16>, vector<320x192xbf16>, vector<3x192xf32> -> vector<3x192xf32>
    %130 = arith.addf %125, %129 : vector<3x192xf32>
    %c0_112 = arith.constant 0 : index
    %c0_113 = arith.constant 0 : index
    %131 = vector.load %arg9[%c0_112, %c0_113] : memref<1x192xf32, #tpu.memory_space<vmem>>, vector<1x192xf32>
    %132 = vector.broadcast %131 : vector<1x192xf32> to vector<3x192xf32>
    %133 = arith.addf %130, %132 : vector<3x192xf32>
    %cst_114 = arith.constant 0.000000e+00 : f32
    %134 = vector.broadcast %cst_114 : f32 to vector<3x192xf32>
    %135 = arith.maximumf %133, %134 : vector<3x192xf32>
    %136 = arith.truncf %135 : vector<3x192xf32> to vector<3x192xbf16>
    %cst_115 = arith.constant 0.000000e+00 : f32
    %137 = vector.broadcast %cst_115 : f32 to vector<1x512xf32>
    %138 = vector.extract_strided_slice %136 {offsets = [0, 0], sizes = [1, 192], strides = [1, 1]} : vector<3x192xbf16> to vector<1x192xbf16>
    %c0_116 = arith.constant 0 : index
    %c0_117 = arith.constant 0 : index
    %c0_118 = arith.constant 0 : index
    %139 = vector.load %arg10[%c0_116, %c0_117, %c0_118] : memref<3x192x512xbf16, #tpu.memory_space<vmem>>, vector<1x192x512xbf16>
    %140 = vector.shape_cast %139 : vector<1x192x512xbf16> to vector<192x512xbf16>
    %cst_119 = arith.constant dense<0.000000e+00> : vector<1x512xf32>
    %141 = tpu.matmul %138, %140, %cst_119 {dimension_numbers = #tpu.dot_dimension_numbers<[1], [0], [0], [1], [0, 0, 1, 1], [], []>} : vector<1x192xbf16>, vector<192x512xbf16>, vector<1x512xf32> -> vector<1x512xf32>
    %142 = arith.addf %137, %141 : vector<1x512xf32>
    %143 = vector.extract_strided_slice %136 {offsets = [1, 0], sizes = [1, 192], strides = [1, 1]} : vector<3x192xbf16> to vector<1x192xbf16>
    %c1_120 = arith.constant 1 : index
    %c0_121 = arith.constant 0 : index
    %c0_122 = arith.constant 0 : index
    %144 = vector.load %arg10[%c1_120, %c0_121, %c0_122] : memref<3x192x512xbf16, #tpu.memory_space<vmem>>, vector<1x192x512xbf16>
    %145 = vector.shape_cast %144 : vector<1x192x512xbf16> to vector<192x512xbf16>
    %cst_123 = arith.constant dense<0.000000e+00> : vector<1x512xf32>
    %146 = tpu.matmul %143, %145, %cst_123 {dimension_numbers = #tpu.dot_dimension_numbers<[1], [0], [0], [1], [0, 0, 1, 1], [], []>} : vector<1x192xbf16>, vector<192x512xbf16>, vector<1x512xf32> -> vector<1x512xf32>
    %147 = arith.addf %142, %146 : vector<1x512xf32>
    %148 = vector.extract_strided_slice %136 {offsets = [2, 0], sizes = [1, 192], strides = [1, 1]} : vector<3x192xbf16> to vector<1x192xbf16>
    %c2_124 = arith.constant 2 : index
    %c0_125 = arith.constant 0 : index
    %c0_126 = arith.constant 0 : index
    %149 = vector.load %arg10[%c2_124, %c0_125, %c0_126] : memref<3x192x512xbf16, #tpu.memory_space<vmem>>, vector<1x192x512xbf16>
    %150 = vector.shape_cast %149 : vector<1x192x512xbf16> to vector<192x512xbf16>
    %cst_127 = arith.constant dense<0.000000e+00> : vector<1x512xf32>
    %151 = tpu.matmul %148, %150, %cst_127 {dimension_numbers = #tpu.dot_dimension_numbers<[1], [0], [0], [1], [0, 0, 1, 1], [], []>} : vector<1x192xbf16>, vector<192x512xbf16>, vector<1x512xf32> -> vector<1x512xf32>
    %152 = arith.addf %147, %151 : vector<1x512xf32>
    %c0_128 = arith.constant 0 : index
    %c0_129 = arith.constant 0 : index
    %153 = vector.load %arg11[%c0_128, %c0_129] : memref<1x512xf32, #tpu.memory_space<vmem>>, vector<1x512xf32>
    %154 = arith.addf %152, %153 : vector<1x512xf32>
    %cst_130 = arith.constant 0.000000e+00 : f32
    %155 = vector.broadcast %cst_130 : f32 to vector<1x512xf32>
    %156 = arith.maximumf %154, %155 : vector<1x512xf32>
    %157 = arith.truncf %156 : vector<1x512xf32> to vector<1x512xbf16>
    %c0_131 = arith.constant 0 : index
    %c0_132 = arith.constant 0 : index
    %158 = vector.load %arg12[%c0_131, %c0_132] : memref<512x128xbf16, #tpu.memory_space<vmem>>, vector<512x128xbf16>
    %cst_133 = arith.constant dense<0.000000e+00> : vector<1x128xf32>
    %159 = tpu.matmul %157, %158, %cst_133 {dimension_numbers = #tpu.dot_dimension_numbers<[1], [0], [0], [1], [0, 0, 1, 1], [], []>} : vector<1x512xbf16>, vector<512x128xbf16>, vector<1x128xf32> -> vector<1x128xf32>
    %c0_134 = arith.constant 0 : index
    %c0_135 = arith.constant 0 : index
    %160 = vector.load %arg13[%c0_134, %c0_135] : memref<1x128xf32, #tpu.memory_space<vmem>>, vector<1x128xf32>
    %161 = arith.addf %159, %160 : vector<1x128xf32>
    %162 = tpu.iota {dimensions = array<i32: 1>} : vector<1x128xi32>
    %c6_i32 = arith.constant 6 : i32
    %163 = vector.broadcast %c6_i32 : i32 to vector<1x128xi32>
    %164 = arith.cmpi slt, %162, %163 : vector<1x128xi32>
    %cst_136 = arith.constant -1.000000e+30 : f32
    %165 = vector.broadcast %cst_136 : f32 to vector<1x128xf32>
    %166 = arith.select %164, %161, %165 : vector<1x128xi1>, vector<1x128xf32>
    %cst_137 = arith.constant dense<0xFF800000> : vector<1xf32>
    %167 = vector.multi_reduction <maximumf>, %166, %cst_137 [1] : vector<1x128xf32> to vector<1xf32>
    %168 = vector.shape_cast %167 : vector<1xf32> to vector<1x1xf32>
    %169 = vector.broadcast %168 : vector<1x1xf32> to vector<1x128xf32>
    %170 = arith.subf %166, %169 : vector<1x128xf32>
    %171 = math.exp %170 : vector<1x128xf32>
    %cst_138 = arith.constant dense<0.000000e+00> : vector<1xf32>
    %172 = vector.multi_reduction <add>, %171, %cst_138 [1] : vector<1x128xf32> to vector<1xf32>
    %173 = vector.shape_cast %172 : vector<1xf32> to vector<1x1xf32>
    %174 = tpu.reciprocal %173 {approx = true} : vector<1x1xf32> -> vector<1x1xf32>
    %175 = vector.broadcast %174 : vector<1x1xf32> to vector<1x128xf32>
    %176 = arith.mulf %171, %175 : vector<1x128xf32>
    %c6_i32_139 = arith.constant 6 : i32
    %177 = vector.broadcast %c6_i32_139 : i32 to vector<1x128xi32>
    %178 = arith.cmpi eq, %162, %177 : vector<1x128xi32>
    %179 = arith.select %178, %161, %176 : vector<1x128xi1>, vector<1x128xf32>
    %c0_140 = arith.constant 0 : index
    %c0_141 = arith.constant 0 : index
    %c0_142 = arith.constant 0 : index
    %180 = vector.load %arg14[%c0_140, %c0_141, %c0_142] : memref<1x1x128xf32, #tpu.memory_space<vmem>>, vector<1x1x128xf32>
    %181 = vector.shape_cast %180 : vector<1x1x128xf32> to vector<1x128xf32>
    %182 = vector.shape_cast %179 : vector<1x128xf32> to vector<1x1x128xf32>
    tpu.vector_store %arg14[%c0_140, %c0_141, %c0_142], %182 {strides = array<i32>} : memref<1x1x128xf32, #tpu.memory_space<vmem>>, vector<1x1x128xf32>,
    return
  }
  func.func @transform_0(%arg0: i32) -> (i32, i32, i32) {
    %c0_i32 = arith.constant 0 : i32
    %c0_i32_0 = arith.constant 0 : i32
    %c0_i32_1 = arith.constant 0 : i32
    return %arg0, %c0_i32, %c0_i32_0 : i32, i32, i32
  }
  func.func @transform_1(%arg0: i32) -> (i32, i32, i32) {
    %c0_i32 = arith.constant 0 : i32
    %c0_i32_0 = arith.constant 0 : i32
    %c0_i32_1 = arith.constant 0 : i32
    %c0_i32_2 = arith.constant 0 : i32
    return %c0_i32, %c0_i32_0, %c0_i32_1 : i32, i32, i32
  }
  func.func @transform_2(%arg0: i32) -> (i32, i32, i32) {
    %c0_i32 = arith.constant 0 : i32
    %c0_i32_0 = arith.constant 0 : i32
    %c0_i32_1 = arith.constant 0 : i32
    %c0_i32_2 = arith.constant 0 : i32
    return %c0_i32, %c0_i32_0, %c0_i32_1 : i32, i32, i32
  }
  func.func @transform_3(%arg0: i32) -> (i32, i32) {
    %c0_i32 = arith.constant 0 : i32
    %c0_i32_0 = arith.constant 0 : i32
    %c0_i32_1 = arith.constant 0 : i32
    return %c0_i32, %c0_i32_0 : i32, i32
  }
  func.func @transform_4(%arg0: i32) -> (i32, i32, i32) {
    %c0_i32 = arith.constant 0 : i32
    %c0_i32_0 = arith.constant 0 : i32
    %c0_i32_1 = arith.constant 0 : i32
    %c0_i32_2 = arith.constant 0 : i32
    return %c0_i32, %c0_i32_0, %c0_i32_1 : i32, i32, i32
  }
  func.func @transform_5(%arg0: i32) -> (i32, i32, i32) {
    %c0_i32 = arith.constant 0 : i32
    %c0_i32_0 = arith.constant 0 : i32
    %c0_i32_1 = arith.constant 0 : i32
    %c0_i32_2 = arith.constant 0 : i32
    return %c0_i32, %c0_i32_0, %c0_i32_1 : i32, i32, i32
  }
  func.func @transform_6(%arg0: i32) -> (i32, i32) {
    %c0_i32 = arith.constant 0 : i32
    %c0_i32_0 = arith.constant 0 : i32
    %c0_i32_1 = arith.constant 0 : i32
    return %c0_i32, %c0_i32_0 : i32, i32
  }
  func.func @transform_7(%arg0: i32) -> (i32, i32, i32) {
    %c0_i32 = arith.constant 0 : i32
    %c0_i32_0 = arith.constant 0 : i32
    %c0_i32_1 = arith.constant 0 : i32
    %c0_i32_2 = arith.constant 0 : i32
    return %c0_i32, %c0_i32_0, %c0_i32_1 : i32, i32, i32
  }
  func.func @transform_8(%arg0: i32) -> (i32, i32) {
    %c0_i32 = arith.constant 0 : i32
    %c0_i32_0 = arith.constant 0 : i32
    %c0_i32_1 = arith.constant 0 : i32
    return %c0_i32, %c0_i32_0 : i32, i32
  }
  func.func @transform_9(%arg0: i32) -> (i32, i32, i32) {
    %c0_i32 = arith.constant 0 : i32
    %c0_i32_0 = arith.constant 0 : i32
    %c0_i32_1 = arith.constant 0 : i32
    %c0_i32_2 = arith.constant 0 : i32
    return %c0_i32, %c0_i32_0, %c0_i32_1 : i32, i32, i32
  }
  func.func @transform_10(%arg0: i32) -> (i32, i32) {
    %c0_i32 = arith.constant 0 : i32
    %c0_i32_0 = arith.constant 0 : i32
    %c0_i32_1 = arith.constant 0 : i32
    return %c0_i32, %c0_i32_0 : i32, i32
  }
  func.func @transform_11(%arg0: i32) -> (i32, i32) {
    %c0_i32 = arith.constant 0 : i32
    %c0_i32_0 = arith.constant 0 : i32
    %c0_i32_1 = arith.constant 0 : i32
    return %c0_i32, %c0_i32_0 : i32, i32
  }
  func.func @transform_12(%arg0: i32) -> (i32, i32) {
    %c0_i32 = arith.constant 0 : i32
    %c0_i32_0 = arith.constant 0 : i32
    %c0_i32_1 = arith.constant 0 : i32
    return %c0_i32, %c0_i32_0 : i32, i32
  }
  func.func @transform_13(%arg0: i32) -> (i32, i32, i32) {
    %c0_i32 = arith.constant 0 : i32
    %c0_i32_0 = arith.constant 0 : i32
    %c0_i32_1 = arith.constant 0 : i32
    return %arg0, %c0_i32, %c0_i32_0 : i32, i32, i32
  }
}

</mosaic_0001>

<llo_original>
// kernel: image_agent_forward.1
$region0: #{image_agent_forward.1}
  #allocation0 [shape = 'u32[]', space=smem, size = 0x4, offset = 0x4, fixed_abs, tag = 'smem constant byte address 0x4 - core index']
  #allocation1 [shape = 'u32[144,128]{1,0:T(1,128)}', space=vmem, size = 0x12000, scoped, tag = 'internal scratch']
  %s0 = inlined_call_operand.vmem [shape: f32[8,56,224], index: 0, kind: input, shape index: {}]
  %s1 = inlined_call_operand.vmem [shape: bf16[8,13,56], index: 1, kind: input, shape index: {}]
  %s2 = inlined_call_operand.vmem [shape: bf16[8,224,416], index: 2, kind: input, shape index: {}]
  %s3 = inlined_call_operand.vmem [shape: f32[1,416], index: 3, kind: input, shape index: {}]
  %s4 = inlined_call_operand.vmem [shape: bf16[4,5,13], index: 4, kind: input, shape index: {}]
  %s5 = inlined_call_operand.vmem [shape: bf16[4,416,320], index: 5, kind: input, shape index: {}]
  %s6 = inlined_call_operand.vmem [shape: f32[1,320], index: 6, kind: input, shape index: {}]
  %s7 = inlined_call_operand.vmem [shape: bf16[3,320,192], index: 7, kind: input, shape index: {}]
  %s8 = inlined_call_operand.vmem [shape: f32[1,192], index: 8, kind: input, shape index: {}]
  %s9 = inlined_call_operand.vmem [shape: bf16[3,192,512], index: 9, kind: input, shape index: {}]
  %s10 = inlined_call_operand.vmem [shape: f32[1,512], index: 10, kind: input, shape index: {}]
  %s11 = inlined_call_operand.vmem [shape: bf16[512,128], index: 11, kind: input, shape index: {}]
  %s12 = inlined_call_operand.vmem [shape: f32[1,128], index: 12, kind: input, shape index: {}]
  %s13 = inlined_call_operand.vmem [shape: f32[8,1,128], index: 13, kind: output, shape index: {}]
  %s14 = sld [smem:[#allocation0]]
  $region85: #{image_agent_forward.1} parent=0
    _
  %s16 = ssub.s32 1, %s14
  %s17 = scalar_select 0, %s16, %s14
  loop: start=0, step=1, limit=10
  $region2: #{image_agent_forward.1} parent=0 // loop_pre_header
    _
  $region3: #{image_agent_forward.1} parent=0 // loop_header
    %s19 = sphi 0, %s23
    %p20 = scmp.ge.s32.totalorder %s19, 10
    %s29 = sphi 0, %s31
    %s32 = sphi 0, %s29
    %s33 = sphi 0, %s32
    %s49 = sphi 0, %s33
    %s53 = sphi 0, %s53
    %s55 = sphi 0, %s53
    %s56 = sphi 0, %s55
    %s70 = sphi 0, %s56
    %s74 = sphi 0, %s74
    %s76 = sphi 0, %s74
    %s77 = sphi 0, %s76
    %s91 = sphi 0, %s77
    %s95 = sphi 0, %s95
    %s97 = sphi 0, %s95
    %s98 = sphi 0, %s97
    %s112 = sphi 0, %s98
    %s116 = sphi 0, %s116
    %s118 = sphi 0, %s116
    %s119 = sphi 0, %s118
    %s133 = sphi 0, %s119
    %s137 = sphi 0, %s137
    %s139 = sphi 0, %s137
    %s140 = sphi 0, %s139
    %s154 = sphi 0, %s140
    %s158 = sphi 0, %s158
    %s160 = sphi 0, %s158
    %s161 = sphi 0, %s160
    %s175 = sphi 0, %s161
    %s179 = sphi 0, %s179
    %s181 = sphi 0, %s179
    %s182 = sphi 0, %s181
    %s196 = sphi 0, %s182
    %s200 = sphi 0, %s200
    %s202 = sphi 0, %s200
    %s203 = sphi 0, %s202
    %s217 = sphi 0, %s203
    %s221 = sphi 0, %s221
    %s223 = sphi 0, %s221
    %s224 = sphi 0, %s223
    %s238 = sphi 0, %s224
    %s242 = sphi 0, %s242
    %s244 = sphi 0, %s242
    %s245 = sphi 0, %s244
    %s259 = sphi 0, %s245
    %s263 = sphi 0, %s263
    %s265 = sphi 0, %s263
    %s266 = sphi 0, %s265
    %s280 = sphi 0, %s266
    %s284 = sphi 0, %s284
    %s286 = sphi 0, %s284
    %s287 = sphi 0, %s286
    %s301 = sphi 0, %s287
    %s307 = sphi 0, %s309
    %s310 = sphi 0, %s307
    %s311 = sphi 0, %s310
    %s327 = sphi 0, %s311
  $region4: #{image_agent_forward.1} parent=0 // loop_header_branch
    %22 = sbr.rel (%p20) target = $region8
  $region5: #{image_agent_forward.1} parent=0 // loop_body
    %s24 = ssub.s32 %s19, 1
    %s25 = ssub.s32 %s19, 2
    %s26 = sadd.s32 %s19, 1
    %s27 = ssub.s32 %s19, %s26
    %p28 = scmp.eq.s32.totalorder %s27, 0
    %s30 = sadd.s32 %s29, 1
    %s31 = scalar_select %p28, %s29, %s30
    %p34 = pneg %p28
    %p35 = scmp.eq.s32.totalorder %s19, 7
    %p36 = por %p34, %p35
    %p37 = scmp.ne.s32.totalorder %s29, %s32
    %p38 = scmp.eq.s32.totalorder %s19, 0
    %p39 = por %p37, %p38
    %p40 = scmp.ne.s32.totalorder %s29, %s32
    %p41 = scmp.eq.s32.totalorder %s24, 7
    %p42 = por %p40, %p41
    %p43 = scmp.ne.s32.totalorder %s32, %s33
    %p44 = scmp.eq.s32.totalorder %s24, 0
    %p45 = por %p43, %p44
    %p46 = scmp.ne.s32.totalorder %s32, %s33
    %p47 = scmp.eq.s32.totalorder %s25, 7
    %p48 = por %p46, %p47
    %p50 = scmp.ne.s32.totalorder %s33, %s49
    %p51 = scmp.eq.s32.totalorder %s25, 0
    %p52 = por %p50, %p51
    %s54 = sadd.s32 %s53, 1
    %p57 = scmp.eq.s32.totalorder %s19, 7
    %p58 = scmp.ne.s32.totalorder %s53, %s55
    %p59 = scmp.eq.s32.totalorder %s19, 0
    %p60 = por %p58, %p59
    %p61 = scmp.ne.s32.totalorder %s53, %s55
    %p62 = scmp.eq.s32.totalorder %s24, 7
    %p63 = por %p61, %p62
    %p64 = scmp.ne.s32.totalorder %s55, %s56
    %p65 = scmp.eq.s32.totalorder %s24, 0
    %p66 = por %p64, %p65
    %p67 = scmp.ne.s32.totalorder %s55, %s56
    %p68 = scmp.eq.s32.totalorder %s25, 7
    %p69 = por %p67, %p68
    %p71 = scmp.ne.s32.totalorder %s56, %s70
    %p72 = scmp.eq.s32.totalorder %s25, 0
    %p73 = por %p71, %p72
    %s75 = sadd.s32 %s74, 1
    %p78 = scmp.eq.s32.totalorder %s19, 7
    %p79 = scmp.ne.s32.totalorder %s74, %s76
    %p80 = scmp.eq.s32.totalorder %s19, 0
    %p81 = por %p79, %p80
    %p82 = scmp.ne.s32.totalorder %s74, %s76
    %p83 = scmp.eq.s32.totalorder %s24, 7
    %p84 = por %p82, %p83
    %p85 = scmp.ne.s32.totalorder %s76, %s77
    %p86 = scmp.eq.s32.totalorder %s24, 0
    %p87 = por %p85, %p86
    %p88 = scmp.ne.s32.totalorder %s76, %s77
    %p89 = scmp.eq.s32.totalorder %s25, 7
    %p90 = por %p88, %p89
    %p92 = scmp.ne.s32.totalorder %s77, %s91
    %p93 = scmp.eq.s32.totalorder %s25, 0
    %p94 = por %p92, %p93
    %s96 = sadd.s32 %s95, 1
    %p99 = scmp.eq.s32.totalorder %s19, 7
    %p100 = scmp.ne.s32.totalorder %s95, %s97
    %p101 = scmp.eq.s32.totalorder %s19, 0
    %p102 = por %p100, %p101
    %p103 = scmp.ne.s32.totalorder %s95, %s97
    %p104 = scmp.eq.s32.totalorder %s24, 7
    %p105 = por %p103, %p104
    %p106 = scmp.ne.s32.totalorder %s97, %s98
    %p107 = scmp.eq.s32.totalorder %s24, 0
    %p108 = por %p106, %p107
    %p109 = scmp.ne.s32.totalorder %s97, %s98
    %p110 = scmp.eq.s32.totalorder %s25, 7
    %p111 = por %p109, %p110
    %p113 = scmp.ne.s32.totalorder %s98, %s112
    %p114 = scmp.eq.s32.totalorder %s25, 0
    %p115 = por %p113, %p114
    %s117 = sadd.s32 %s116, 1
    %p120 = scmp.eq.s32.totalorder %s19, 7
    %p121 = scmp.ne.s32.totalorder %s116, %s118
    %p122 = scmp.eq.s32.totalorder %s19, 0
    %p123 = por %p121, %p122
    %p124 = scmp.ne.s32.totalorder %s116, %s118
    %p125 = scmp.eq.s32.totalorder %s24, 7
    %p126 = por %p124, %p125
    %p127 = scmp.ne.s32.totalorder %s118, %s119
    %p128 = scmp.eq.s32.totalorder %s24, 0
    %p129 = por %p127, %p128
    %p130 = scmp.ne.s32.totalorder %s118, %s119
    %p131 = scmp.eq.s32.totalorder %s25, 7
    %p132 = por %p130, %p131
    %p134 = scmp.ne.s32.totalorder %s119, %s133
    %p135 = scmp.eq.s32.totalorder %s25, 0
    %p136 = por %p134, %p135
    %s138 = sadd.s32 %s137, 1
    %p141 = scmp.eq.s32.totalorder %s19, 7
    %p142 = scmp.ne.s32.totalorder %s137, %s139
    %p143 = scmp.eq.s32.totalorder %s19, 0
    %p144 = por %p142, %p143
    %p145 = scmp.ne.s32.totalorder %s137, %s139
    %p146 = scmp.eq.s32.totalorder %s24, 7
    %p147 = por %p145, %p146
    %p148 = scmp.ne.s32.totalorder %s139, %s140
    %p149 = scmp.eq.s32.totalorder %s24, 0
    %p150 = por %p148, %p149
    %p151 = scmp.ne.s32.totalorder %s139, %s140
    %p152 = scmp.eq.s32.totalorder %s25, 7
    %p153 = por %p151, %p152
    %p155 = scmp.ne.s32.totalorder %s140, %s154
    %p156 = scmp.eq.s32.totalorder %s25, 0
    %p157 = por %p155, %p156
    %s159 = sadd.s32 %s158, 1
    %p162 = scmp.eq.s32.totalorder %s19, 7
    %p163 = scmp.ne.s32.totalorder %s158, %s160
    %p164 = scmp.eq.s32.totalorder %s19, 0
    %p165 = por %p163, %p164
    %p166 = scmp.ne.s32.totalorder %s158, %s160
    %p167 = scmp.eq.s32.totalorder %s24, 7
    %p168 = por %p166, %p167
    %p169 = scmp.ne.s32.totalorder %s160, %s161
    %p170 = scmp.eq.s32.totalorder %s24, 0
    %p171 = por %p169, %p170
    %p172 = scmp.ne.s32.totalorder %s160, %s161
    %p173 = scmp.eq.s32.totalorder %s25, 7
    %p174 = por %p172, %p173
    %p176 = scmp.ne.s32.totalorder %s161, %s175
    %p177 = scmp.eq.s32.totalorder %s25, 0
    %p178 = por %p176, %p177
    %s180 = sadd.s32 %s179, 1
    %p183 = scmp.eq.s32.totalorder %s19, 7
    %p184 = scmp.ne.s32.totalorder %s179, %s181
    %p185 = scmp.eq.s32.totalorder %s19, 0
    %p186 = por %p184, %p185
    %p187 = scmp.ne.s32.totalorder %s179, %s181
    %p188 = scmp.eq.s32.totalorder %s24, 7
    %p189 = por %p187, %p188
    %p190 = scmp.ne.s32.totalorder %s181, %s182
    %p191 = scmp.eq.s32.totalorder %s24, 0
    %p192 = por %p190, %p191
    %p193 = scmp.ne.s32.totalorder %s181, %s182
    %p194 = scmp.eq.s32.totalorder %s25, 7
    %p195 = por %p193, %p194
    %p197 = scmp.ne.s32.totalorder %s182, %s196
    %p198 = scmp.eq.s32.totalorder %s25, 0
    %p199 = por %p197, %p198
    %s201 = sadd.s32 %s200, 1
    %p204 = scmp.eq.s32.totalorder %s19, 7
    %p205 = scmp.ne.s32.totalorder %s200, %s202
    %p206 = scmp.eq.s32.totalorder %s19, 0
    %p207 = por %p205, %p206
    %p208 = scmp.ne.s32.totalorder %s200, %s202
    %p209 = scmp.eq.s32.totalorder %s24, 7
    %p210 = por %p208, %p209
    %p211 = scmp.ne.s32.totalorder %s202, %s203
    %p212 = scmp.eq.s32.totalorder %s24, 0
    %p213 = por %p211, %p212
    %p214 = scmp.ne.s32.totalorder %s202, %s203
    %p215 = scmp.eq.s32.totalorder %s25, 7
    %p216 = por %p214, %p215
    %p218 = scmp.ne.s32.totalorder %s203, %s217
    %p219 = scmp.eq.s32.totalorder %s25, 0
    %p220 = por %p218, %p219
    %s222 = sadd.s32 %s221, 1
    %p225 = scmp.eq.s32.totalorder %s19, 7
    %p226 = scmp.ne.s32.totalorder %s221, %s223
    %p227 = scmp.eq.s32.totalorder %s19, 0
    %p228 = por %p226, %p227
    %p229 = scmp.ne.s32.totalorder %s221, %s223
    %p230 = scmp.eq.s32.totalorder %s24, 7
    %p231 = por %p229, %p230
    %p232 = scmp.ne.s32.totalorder %s223, %s224
    %p233 = scmp.eq.s32.totalorder %s24, 0
    %p234 = por %p232, %p233
    %p235 = scmp.ne.s32.totalorder %s223, %s224
    %p236 = scmp.eq.s32.totalorder %s25, 7
    %p237 = por %p235, %p236
    %p239 = scmp.ne.s32.totalorder %s224, %s238
    %p240 = scmp.eq.s32.totalorder %s25, 0
    %p241 = por %p239, %p240
    %s243 = sadd.s32 %s242, 1
    %p246 = scmp.eq.s32.totalorder %s19, 7
    %p247 = scmp.ne.s32.totalorder %s242, %s244
    %p248 = scmp.eq.s32.totalorder %s19, 0
    %p249 = por %p247, %p248
    %p250 = scmp.ne.s32.totalorder %s242, %s244
    %p251 = scmp.eq.s32.totalorder %s24, 7
    %p252 = por %p250, %p251
    %p253 = scmp.ne.s32.totalorder %s244, %s245
    %p254 = scmp.eq.s32.totalorder %s24, 0
    %p255 = por %p253, %p254
    %p256 = scmp.ne.s32.totalorder %s244, %s245
    %p257 = scmp.eq.s32.totalorder %s25, 7
    %p258 = por %p256, %p257
    %p260 = scmp.ne.s32.totalorder %s245, %s259
    %p261 = scmp.eq.s32.totalorder %s25, 0
    %p262 = por %p260, %p261
    %s264 = sadd.s32 %s263, 1
    %p267 = scmp.eq.s32.totalorder %s19, 7
    %p268 = scmp.ne.s32.totalorder %s263, %s265
    %p269 = scmp.eq.s32.totalorder %s19, 0
    %p270 = por %p268, %p269
    %p271 = scmp.ne.s32.totalorder %s263, %s265
    %p272 = scmp.eq.s32.totalorder %s24, 7
    %p273 = por %p271, %p272
    %p274 = scmp.ne.s32.totalorder %s265, %s266
    %p275 = scmp.eq.s32.totalorder %s24, 0
    %p276 = por %p274, %p275
    %p277 = scmp.ne.s32.totalorder %s265, %s266
    %p278 = scmp.eq.s32.totalorder %s25, 7
    %p279 = por %p277, %p278
    %p281 = scmp.ne.s32.totalorder %s266, %s280
    %p282 = scmp.eq.s32.totalorder %s25, 0
    %p283 = por %p281, %p282
    %s285 = sadd.s32 %s284, 1
    %p288 = scmp.eq.s32.totalorder %s19, 7
    %p289 = scmp.ne.s32.totalorder %s284, %s286
    %p290 = scmp.eq.s32.totalorder %s19, 0
    %p291 = por %p289, %p290
    %p292 = scmp.ne.s32.totalorder %s284, %s286
    %p293 = scmp.eq.s32.totalorder %s24, 7
    %p294 = por %p292, %p293
    %p295 = scmp.ne.s32.totalorder %s286, %s287
    %p296 = scmp.eq.s32.totalorder %s24, 0
    %p297 = por %p295, %p296
    %p298 = scmp.ne.s32.totalorder %s286, %s287
    %p299 = scmp.eq.s32.totalorder %s25, 7
    %p300 = por %p298, %p299
    %p302 = scmp.ne.s32.totalorder %s287, %s301
    %p303 = scmp.eq.s32.totalorder %s25, 0
    %p304 = por %p302, %p303
    %s305 = ssub.s32 %s19, %s26
    %p306 = scmp.eq.s32.totalorder %s305, 0
    %s308 = sadd.s32 %s307, 1
    %s309 = scalar_select %p306, %s307, %s308
    %p312 = pneg %p306
    %p313 = scmp.eq.s32.totalorder %s19, 7
    %p314 = por %p312, %p313
    %p315 = scmp.ne.s32.totalorder %s307, %s310
    %p316 = scmp.eq.s32.totalorder %s19, 0
    %p317 = por %p315, %p316
    %p318 = scmp.ne.s32.totalorder %s307, %s310
    %p319 = scmp.eq.s32.totalorder %s24, 7
    %p320 = por %p318, %p319
    %p321 = scmp.ne.s32.totalorder %s310, %s311
    %p322 = scmp.eq.s32.totalorder %s24, 0
    %p323 = por %p321, %p322
    %p324 = scmp.ne.s32.totalorder %s310, %s311
    %p325 = scmp.eq.s32.totalorder %s25, 7
    %p326 = por %p324, %p325
    %p328 = scmp.ne.s32.totalorder %s311, %s327
    %p329 = scmp.eq.s32.totalorder %s25, 0
    %p330 = por %p328, %p329
    %p331 = scmp.le.s32.totalorder 1, %s19
    %p332 = scmp.lt.s32.totalorder %s19, 9
    %p333 = pnand %p331, %p332
    %p334 = pneg %p333
    // Predicated region
    $region9: #{image_agent_forward.1} parent=5 // pred_check
      _
    $region10: #{image_agent_forward.1} parent=5 // pred_check_branch
      %336 = sbr.rel (%p333) target = $region12
    $region11: #{image_agent_forward.1} parent=5 // pred_region
      %s337 = ssub.s32 %s19, 1
      // Predicated region
      $region13: #{image_agent_forward.1} parent=11 // pred_check
        %p338 = pneg %p66
      $region14: #{image_agent_forward.1} parent=11 // pred_check_branch
        %340 = sbr.rel (%p338) target = $region16
      $region15: #{image_agent_forward.1} parent=11 // pred_region
        _
      $region16: #{image_agent_forward.1} parent=11 // pred_fallthru
        _
      // Predicated region
      $region17: #{image_agent_forward.1} parent=11 // pred_check
        %p341 = pneg %p87
      $region18: #{image_agent_forward.1} parent=11 // pred_check_branch
        %343 = sbr.rel (%p341) target = $region20
      $region19: #{image_agent_forward.1} parent=11 // pred_region
        _
      $region20: #{image_agent_forward.1} parent=11 // pred_fallthru
        _
      // Predicated region
      $region21: #{image_agent_forward.1} parent=11 // pred_check
        %p344 = pneg %p108
      $region22: #{image_agent_forward.1} parent=11 // pred_check_branch
        %346 = sbr.rel (%p344) target = $region24
      $region23: #{image_agent_forward.1} parent=11 // pred_region
        _
      $region24: #{image_agent_forward.1} parent=11 // pred_fallthru
        _
      // Predicated region
      $region25: #{image_agent_forward.1} parent=11 // pred_check
        %p347 = pneg %p129
      $region26: #{image_agent_forward.1} parent=11 // pred_check_branch
        %349 = sbr.rel (%p347) target = $region28
      $region27: #{image_agent_forward.1} parent=11 // pred_region
        _
      $region28: #{image_agent_forward.1} parent=11 // pred_fallthru
        _
      // Predicated region
      $region29: #{image_agent_forward.1} parent=11 // pred_check
        %p350 = pneg %p150
      $region30: #{image_agent_forward.1} parent=11 // pred_check_branch
        %352 = sbr.rel (%p350) target = $region32
      $region31: #{image_agent_forward.1} parent=11 // pred_region
        _
      $region32: #{image_agent_forward.1} parent=11 // pred_fallthru
        _
      // Predicated region
      $region33: #{image_agent_forward.1} parent=11 // pred_check
        %p353 = pneg %p171
      $region34: #{image_agent_forward.1} parent=11 // pred_check_branch
        %355 = sbr.rel (%p353) target = $region36
      $region35: #{image_agent_forward.1} parent=11 // pred_region
        _
      $region36: #{image_agent_forward.1} parent=11 // pred_fallthru
        _
      // Predicated region
      $region37: #{image_agent_forward.1} parent=11 // pred_check
        %p356 = pneg %p192
      $region38: #{image_agent_forward.1} parent=11 // pred_check_branch
        %358 = sbr.rel (%p356) target = $region40
      $region39: #{image_agent_forward.1} parent=11 // pred_region
        _
      $region40: #{image_agent_forward.1} parent=11 // pred_fallthru
        _
      // Predicated region
      $region41: #{image_agent_forward.1} parent=11 // pred_check
        %p359 = pneg %p213
      $region42: #{image_agent_forward.1} parent=11 // pred_check_branch
        %361 = sbr.rel (%p359) target = $region44
      $region43: #{image_agent_forward.1} parent=11 // pred_region
        _
      $region44: #{image_agent_forward.1} parent=11 // pred_fallthru
        _
      // Predicated region
      $region45: #{image_agent_forward.1} parent=11 // pred_check
        %p362 = pneg %p234
      $region46: #{image_agent_forward.1} parent=11 // pred_check_branch
        %364 = sbr.rel (%p362) target = $region48
      $region47: #{image_agent_forward.1} parent=11 // pred_region
        _
      $region48: #{image_agent_forward.1} parent=11 // pred_fallthru
        _
      // Predicated region
      $region49: #{image_agent_forward.1} parent=11 // pred_check
        %p365 = pneg %p255
      $region50: #{image_agent_forward.1} parent=11 // pred_check_branch
        %367 = sbr.rel (%p365) target = $region52
      $region51: #{image_agent_forward.1} parent=11 // pred_region
        _
      $region52: #{image_agent_forward.1} parent=11 // pred_fallthru
        _
      // Predicated region
      $region53: #{image_agent_forward.1} parent=11 // pred_check
        %p368 = pneg %p276
      $region54: #{image_agent_forward.1} parent=11 // pred_check_branch
        %370 = sbr.rel (%p368) target = $region56
      $region55: #{image_agent_forward.1} parent=11 // pred_region
        _
      $region56: #{image_agent_forward.1} parent=11 // pred_fallthru
        _
      // Predicated region
      $region57: #{image_agent_forward.1} parent=11 // pred_check
        %p371 = pneg %p297
      $region58: #{image_agent_forward.1} parent=11 // pred_check_branch
        %373 = sbr.rel (%p371) target = $region60
      $region59: #{image_agent_forward.1} parent=11 // pred_region
        _
      $region60: #{image_agent_forward.1} parent=11 // pred_fallthru
        _
    $region12: #{image_agent_forward.1} parent=5 // pred_fallthru
      _
    %p374 = scmp.lt.s32.totalorder %s19, 8
    // Predicated region
    $region61: #{image_agent_forward.1} parent=5 // pred_check
      %p375 = pneg %p374
    $region62: #{image_agent_forward.1} parent=5 // pred_check_branch
      %377 = sbr.rel (%p375) target = $region64
    $region63: #{image_agent_forward.1} parent=5 // pred_region
      // Predicated region
      $region65: #{image_agent_forward.1} parent=63 // pred_check
        %p378 = pneg %p39
      $region66: #{image_agent_forward.1} parent=63 // pred_check_branch
        %380 = sbr.rel (%p378) target = $region68
      $region67: #{image_agent_forward.1} parent=63 // pred_region
        %p381 = scmp.lt.s32.totalorder %s19, 7
        %s382 = scalar_select %p381, %s19, 7
        %s383 = smul.addr %s382, 14
        %s384 = smul.addr %s383, 8
        %s385 = scalar_lea.vmem %s0, %s384
      $region68: #{image_agent_forward.1} parent=63 // pred_fallthru
        _
    $region64: #{image_agent_forward.1} parent=5 // pred_fallthru
      _
    %p386 = scmp.le.s32.totalorder 1, %s19
    %p387 = scmp.lt.s32.totalorder %s19, 9
    %p388 = pnand %p386, %p387
    %p389 = pneg %p388
    // Predicated region
    $region69: #{image_agent_forward.1} parent=5 // pred_check
      _
    $region70: #{image_agent_forward.1} parent=5 // pred_check_branch
      %391 = sbr.rel (%p388) target = $region72
    $region71: #{image_agent_forward.1} parent=5 // pred_region
      %s392 = ssub.s32 %s19, 1
      %p393 = scmp.lt.s32.totalorder %s24, 7
      %s394 = scalar_select %p393, %s24, 7
      %s395 = smul.addr %s394, 14
      %s396 = smul.addr %s395, 8
      %s397 = scalar_lea.vmem %s0, %s396
      %p398 = pneg %p45
      %p399 = pneg %p42
      %p400 = pneg %p66
      %p401 = pneg %p63
      %p402 = pneg %p87
      %p403 = pneg %p84
      %p404 = pneg %p108
      %p405 = pneg %p105
      %p406 = pneg %p129
      %p407 = pneg %p126
      %p408 = pneg %p150
      %p409 = pneg %p147
      %p410 = pneg %p171
      %p411 = pneg %p168
      %p412 = pneg %p192
      %p413 = pneg %p189
      %p414 = pneg %p213
      %p415 = pneg %p210
      %p416 = pneg %p234
      %p417 = pneg %p231
      %p418 = pneg %p255
      %p419 = pneg %p252
      %p420 = pneg %p276
      %p421 = pneg %p273
      %p422 = pneg %p297
      %p423 = pneg %p294
      %p424 = pneg %p323
      %p425 = pneg %p320
      %p426 = scmp.lt.s32.totalorder %s24, 7
      %s427 = scalar_select %p426, %s24, 7
      %s428 = scalar_lea.vmem %s13, %s427
      %p429 = scmp.lt.s32.totalorder %s24, 7
      %s430 = scalar_select %p429, %s24, 7
      %s431 = smul.addr %s430, 14
      %s432 = smul.addr %s431, 8
      %s433 = scalar_lea.vmem %s0, %s432
      %p434 = scmp.lt.s32.totalorder %s24, 7
      %s435 = scalar_select %p434, %s24, 7
      %s436 = scalar_lea.vmem %s13, %s435
      %v438 = vld [vmem:[%s433] sm:$0xff]
      %v439 = vld [vmem:[%s433 + $0x8] sm:$0xff]
      %v440 = vld [vmem:[%s433 + $0x10] sm:$0xff]
      %v441 = vld [vmem:[%s433 + $0x18] sm:$0xff]
      %v442 = vld [vmem:[%s433 + $0x20] sm:$0xff]
      %v443 = vld [vmem:[%s433 + $0x28] sm:$0xff]
      %v444 = vld [vmem:[%s433 + $0x30] sm:$0xff]
      %v445 = vld [vmem:[%s433 + $0x38] sm:$0xff]
      %v446 = vld [vmem:[%s433 + $0x40] sm:$0xff]
      %v447 = vld [vmem:[%s433 + $0x48] sm:$0xff]
      %v448 = vld [vmem:[%s433 + $0x50] sm:$0xff]
      %v449 = vld [vmem:[%s433 + $0x58] sm:$0xff]
      %v450 = vld [vmem:[%s433 + $0x60] sm:$0xff]
      %v451 = vld [vmem:[%s433 + $0x68] sm:$0xff]
      %v452 = vmul.f32 %v438, 0.003921569
      %v453 = vmul.f32 %v439, 0.003921569
      %v454 = vmul.f32 %v440, 0.003921569
      %v455 = vmul.f32 %v441, 0.003921569
      %v456 = vmul.f32 %v442, 0.003921569
      %v457 = vmul.f32 %v443, 0.003921569
      %v458 = vmul.f32 %v444, 0.003921569
      %v459 = vmul.f32 %v445, 0.003921569
      %v460 = vmul.f32 %v446, 0.003921569
      %v461 = vmul.f32 %v447, 0.003921569
      %v462 = vmul.f32 %v448, 0.003921569
      %v463 = vmul.f32 %v449, 0.003921569
      %v464 = vmul.f32 %v450, 0.003921569
      %v465 = vmul.f32 %v451, 0.003921569
      %v466 = vpack.c.bf16 %v454, %v452
      %v467 = vpack.c.bf16 %v455, %v453
      %v468 = vpack.c.bf16 %v458, %v456
      %v469 = vpack.c.bf16 %v459, %v457
      %v470 = vpack.c.bf16 %v462, %v460
      %v471 = vpack.c.bf16 %v463, %v461
      %v472 = vpack.c.bf16 %v464, %v464
      %v473 = vpack.c.bf16 %v465, %v465
      %v474 = vld [vmem:[%s1] sm:$0xf]
      %v475 = vld [vmem:[%s1 + $0x4] sm:$0x7]
      %v478 = vunpack.c.l.b16 %v474
      %v479 = vunpack.c.l.b16 %v475
      %v480 = vpack.c.b16 %v479, %v478
      %vm481 = vcmask 457728
      %v483 = vsel %vm481, %v480, 0
      %vm485 = vcmask 1043456
      %v487 = vsel %vm485, %v472, 0
      %v490 = vsel %vm485, %v473, 0
      %492 = vmatprep.subr.bf16.mxu0 %v467
      %493 = vmatpush1.bf16.msra.mxu0 %v466
      %494 = vmatprep.subr.bf16.mxu0 %v469
      %495 = vmatpush1.bf16.msra.mxu0 %v468
      %496 = vmatprep.subr.bf16.mxu0 %v471
      %497 = vmatpush1.bf16.msra.mxu0 %v470
      %498 = vmatprep.subr.bf16.mxu0 %v490
      %499 = vmatpush1.bf16.msra.mxu0 %v487
      %500 = vmatprep.subr.bf16.mxu0 0
      %501 = vmatpush1.bf16.msra.mxu0 0
      %502 = vmatprep.subr.bf16.mxu0 0
      %503 = vmatpush1.bf16.msra.mxu0 0
      %504 = vmatprep.subr.bf16.mxu0 0
      %505 = vmatpush1.bf16.msra.mxu0 0
      %506 = vmatprep.subr.bf16.mxu0 0
      %507 = vmatpush1.bf16.msra.mxu0 0
      %508 = vmatprep.subr.bf16.mxu0 0
      %509 = vmatpush1.bf16.msra.mxu0 0
      %510 = vmatprep.subr.bf16.mxu0 0
      %511 = vmatpush1.bf16.msra.mxu0 0
      %512 = vmatprep.subr.bf16.mxu0 0
      %513 = vmatpush1.bf16.msra.mxu0 0
      %514 = vmatprep.subr.bf16.mxu0 0
      %515 = vmatpush1.bf16.msra.mxu0 0
      %516 = vmatprep.subr.bf16.mxu0 0
      %517 = vmatpush1.bf16.msra.mxu0 0
      %518 = vmatprep.subr.bf16.mxu0 0
      %519 = vmatpush1.bf16.msra.mxu0 0
      %520 = vmatprep.subr.bf16.mxu0 0
      %521 = vmatpush1.bf16.msra.mxu0 0
      %522 = vmatprep.subr.bf16.mxu0 0
      %523 = vmatpush1.bf16.msra.mxu0 0
      %524 = vmatprep.mubr.bf16.mxu0 0
      %525 = vmatmul.mubr.bf16.gmra.mrb[0].mxu0 %v483
      %v526 = vpop.f32.mrb[0].mxu0
      %v527 = vadd.f32 0.0, %v526
      %v528 = vpop.f32.mrb[0].mxu0
      %v529 = vadd.f32 0.0, %v528
      %v530 = vpop.f32.mrb[0].mxu0
      %v531 = vadd.f32 0.0, %v530
      %v532 = vpop.f32.mrb[0].mxu0
      %v533 = vadd.f32 0.0, %v532
      %534 = vdwg.mxu0
      %v535 = vpack.c.bf16 %v531, %v527
      %v536 = vpack.c.bf16 %v533, %v529
      %v537 = vld [vmem:[%s2] sm:$0xff]
      %v538 = vld [vmem:[%s2 + $0x8] sm:$0xff]
      %v539 = vld [vmem:[%s2 + $0x10] sm:$0xff]
      %v540 = vld [vmem:[%s2 + $0x18] sm:$0xff]
      %v541 = vld [vmem:[%s2 + $0x20] sm:$0xff]
      %v542 = vld [vmem:[%s2 + $0x28] sm:$0xff]
      %v543 = vld [vmem:[%s2 + $0x30] sm:$0xff]
      %v544 = vld [vmem:[%s2 + $0x38] sm:$0xff]
      %v545 = vld [vmem:[%s2 + $0x40] sm:$0xff]
      %v546 = vld [vmem:[%s2 + $0x48] sm:$0xff]
      %v547 = vld [vmem:[%s2 + $0x50] sm:$0xff]
      %v548 = vld [vmem:[%s2 + $0x58] sm:$0xff]
      %v549 = vld [vmem:[%s2 + $0x60] sm:$0xff]
      %v550 = vld [vmem:[%s2 + $0x68] sm:$0xff]
      %v551 = vld [vmem:[%s2 + $0x70] sm:$0xff]
      %v552 = vld [vmem:[%s2 + $0x78] sm:$0xff]
      %v553 = vld [vmem:[%s2 + $0x80] sm:$0xff]
      %v554 = vld [vmem:[%s2 + $0x88] sm:$0xff]
      %v555 = vld [vmem:[%s2 + $0x90] sm:$0xff]
      %v556 = vld [vmem:[%s2 + $0x98] sm:$0xff]
      %v557 = vld [vmem:[%s2 + $0xa0] sm:$0xff]
      %v558 = vld [vmem:[%s2 + $0xa8] sm:$0xff]
      %v559 = vld [vmem:[%s2 + $0xb0] sm:$0xff]
      %v560 = vld [vmem:[%s2 + $0xb8] sm:$0xff]
      %v561 = vld [vmem:[%s2 + $0xc0] sm:$0xff]
      %v562 = vld [vmem:[%s2 + $0xc8] sm:$0xff]
      %v563 = vld [vmem:[%s2 + $0xd0] sm:$0xff]
      %v564 = vld [vmem:[%s2 + $0xd8] sm:$0xff]
      %v565 = vld [vmem:[%s2 + $0xe0] sm:$0xff]
      %v566 = vld [vmem:[%s2 + $0xe8] sm:$0xff]
      %v567 = vld [vmem:[%s2 + $0xf0] sm:$0xff]
      %v568 = vld [vmem:[%s2 + $0xf8] sm:$0xff]
      %v569 = vld [vmem:[%s2 + $0x100] sm:$0xff]
      %v570 = vld [vmem:[%s2 + $0x108] sm:$0xff]
      %v571 = vld [vmem:[%s2 + $0x110] sm:$0xff]
      %v572 = vld [vmem:[%s2 + $0x118] sm:$0xff]
      %v573 = vld [vmem:[%s2 + $0x120] sm:$0xff]
      %v574 = vld [vmem:[%s2 + $0x128] sm:$0xff]
      %v575 = vld [vmem:[%s2 + $0x130] sm:$0xff]
      %v576 = vld [vmem:[%s2 + $0x138] sm:$0xff]
      %v577 = vld [vmem:[%s2 + $0x140] sm:$0xff]
      %v578 = vld [vmem:[%s2 + $0x148] sm:$0xff]
      %v579 = vld [vmem:[%s2 + $0x150] sm:$0xff]
      %v580 = vld [vmem:[%s2 + $0x158] sm:$0xff]
      %v581 = vld [vmem:[%s2 + $0x160] sm:$0xff]
      %v582 = vld [vmem:[%s2 + $0x168] sm:$0xff]
      %v583 = vld [vmem:[%s2 + $0x170] sm:$0xff]
      %v584 = vld [vmem:[%s2 + $0x178] sm:$0xff]
      %v585 = vld [vmem:[%s2 + $0x180] sm:$0xff]
      %v586 = vld [vmem:[%s2 + $0x188] sm:$0xff]
      %v587 = vld [vmem:[%s2 + $0x190] sm:$0xff]
      %v588 = vld [vmem:[%s2 + $0x198] sm:$0xff]
      %v589 = vld [vmem:[%s2 + $0x1a0] sm:$0xff]
      %v590 = vld [vmem:[%s2 + $0x1a8] sm:$0xff]
      %v591 = vld [vmem:[%s2 + $0x1b0] sm:$0xff]
      %v592 = vld [vmem:[%s2 + $0x1b8] sm:$0xff]
      %s593 = scalar_lea.vmem %s1, 8
      %v594 = vld [vmem:[%s593] sm:$0xf]
      %v595 = vld [vmem:[%s593 + $0x4] sm:$0x7]
      %v598 = vunpack.c.l.b16 %v594
      %v599 = vunpack.c.l.b16 %v595
      %v600 = vpack.c.b16 %v599, %v598
      %v602 = vsel %vm481, %v600, 0
      %604 = vmatprep.subr.bf16.mxu0 %v467
      %605 = vmatpush1.bf16.msra.mxu0 %v466
      %606 = vmatprep.subr.bf16.mxu0 %v469
      %607 = vmatpush1.bf16.msra.mxu0 %v468
      %608 = vmatprep.subr.bf16.mxu0 %v471
      %609 = vmatpush1.bf16.msra.mxu0 %v470
      %610 = vmatprep.subr.bf16.mxu0 %v490
      %611 = vmatpush1.bf16.msra.mxu0 %v487
      %612 = vmatprep.subr.bf16.mxu0 0
      %613 = vmatpush1.bf16.msra.mxu0 0
      %614 = vmatprep.subr.bf16.mxu0 0
      %615 = vmatpush1.bf16.msra.mxu0 0
      %616 = vmatprep.subr.bf16.mxu0 0
      %617 = vmatpush1.bf16.msra.mxu0 0
      %618 = vmatprep.subr.bf16.mxu0 0
      %619 = vmatpush1.bf16.msra.mxu0 0
      %620 = vmatprep.subr.bf16.mxu0 0
      %621 = vmatpush1.bf16.msra.mxu0 0
      %622 = vmatprep.subr.bf16.mxu0 0
      %623 = vmatpush1.bf16.msra.mxu0 0
      %624 = vmatprep.subr.bf16.mxu0 0
      %625 = vmatpush1.bf16.msra.mxu0 0
      %626 = vmatprep.subr.bf16.mxu0 0
      %627 = vmatpush1.bf16.msra.mxu0 0
      %628 = vmatprep.subr.bf16.mxu0 0
      %629 = vmatpush1.bf16.msra.mxu0 0
      %630 = vmatprep.subr.bf16.mxu0 0
      %631 = vmatpush1.bf16.msra.mxu0 0
      %632 = vmatprep.subr.bf16.mxu0 0
      %633 = vmatpush1.bf16.msra.mxu0 0
      %634 = vmatprep.subr.bf16.mxu0 0
      %635 = vmatpush1.bf16.msra.mxu0 0
      %636 = vmatprep.mubr.bf16.mxu0 0
      %637 = vmatmul.mubr.bf16.gmra.mrb[0].mxu0 %v602
      %v638 = vpop.f32.mrb[0].mxu0
      %v639 = vadd.f32 0.0, %v638
      %v640 = vpop.f32.mrb[0].mxu0
      %v641 = vadd.f32 0.0, %v640
      %v642 = vpop.f32.mrb[0].mxu0
      %v643 = vadd.f32 0.0, %v642
      %v644 = vpop.f32.mrb[0].mxu0
      %v645 = vadd.f32 0.0, %v644
      %646 = vdwg.mxu0
      %v647 = vpack.c.bf16 %v643, %v639
      %v648 = vpack.c.bf16 %v645, %v641
      %s649 = scalar_lea.vmem %s2, 448
      %v650 = vld [vmem:[%s649] sm:$0xff]
      %v651 = vld [vmem:[%s649 + $0x8] sm:$0xff]
      %v652 = vld [vmem:[%s649 + $0x10] sm:$0xff]
      %v653 = vld [vmem:[%s649 + $0x18] sm:$0xff]
      %v654 = vld [vmem:[%s649 + $0x20] sm:$0xff]
      %v655 = vld [vmem:[%s649 + $0x28] sm:$0xff]
      %v656 = vld [vmem:[%s649 + $0x30] sm:$0xff]
      %v657 = vld [vmem:[%s649 + $0x38] sm:$0xff]
      %v658 = vld [vmem:[%s649 + $0x40] sm:$0xff]
      %v659 = vld [vmem:[%s649 + $0x48] sm:$0xff]
      %v660 = vld [vmem:[%s649 + $0x50] sm:$0xff]
      %v661 = vld [vmem:[%s649 + $0x58] sm:$0xff]
      %v662 = vld [vmem:[%s649 + $0x60] sm:$0xff]
      %v663 = vld [vmem:[%s649 + $0x68] sm:$0xff]
      %v664 = vld [vmem:[%s649 + $0x70] sm:$0xff]
      %v665 = vld [vmem:[%s649 + $0x78] sm:$0xff]
      %v666 = vld [vmem:[%s649 + $0x80] sm:$0xff]
      %v667 = vld [vmem:[%s649 + $0x88] sm:$0xff]
      %v668 = vld [vmem:[%s649 + $0x90] sm:$0xff]
      %v669 = vld [vmem:[%s649 + $0x98] sm:$0xff]
      %v670 = vld [vmem:[%s649 + $0xa0] sm:$0xff]
      %v671 = vld [vmem:[%s649 + $0xa8] sm:$0xff]
      %v672 = vld [vmem:[%s649 + $0xb0] sm:$0xff]
      %v673 = vld [vmem:[%s649 + $0xb8] sm:$0xff]
      %v674 = vld [vmem:[%s649 + $0xc0] sm:$0xff]
      %v675 = vld [vmem:[%s649 + $0xc8] sm:$0xff]
      %v676 = vld [vmem:[%s649 + $0xd0] sm:$0xff]
      %v677 = vld [vmem:[%s649 + $0xd8] sm:$0xff]
      %v678 = vld [vmem:[%s649 + $0xe0] sm:$0xff]
      %v679 = vld [vmem:[%s649 + $0xe8] sm:$0xff]
      %v680 = vld [vmem:[%s649 + $0xf0] sm:$0xff]
      %v681 = vld [vmem:[%s649 + $0xf8] sm:$0xff]
      %v682 = vld [vmem:[%s649 + $0x100] sm:$0xff]
      %v683 = vld [vmem:[%s649 + $0x108] sm:$0xff]
      %v684 = vld [vmem:[%s649 + $0x110] sm:$0xff]
      %v685 = vld [vmem:[%s649 + $0x118] sm:$0xff]
      %v686 = vld [vmem:[%s649 + $0x120] sm:$0xff]
      %v687 = vld [vmem:[%s649 + $0x128] sm:$0xff]
      %v688 = vld [vmem:[%s649 + $0x130] sm:$0xff]
      %v689 = vld [vmem:[%s649 + $0x138] sm:$0xff]
      %v690 = vld [vmem:[%s649 + $0x140] sm:$0xff]
      %v691 = vld [vmem:[%s649 + $0x148] sm:$0xff]
      %v692 = vld [vmem:[%s649 + $0x150] sm:$0xff]
      %v693 = vld [vmem:[%s649 + $0x158] sm:$0xff]
      %v694 = vld [vmem:[%s649 + $0x160] sm:$0xff]
      %v695 = vld [vmem:[%s649 + $0x168] sm:$0xff]
      %v696 = vld [vmem:[%s649 + $0x170] sm:$0xff]
      %v697 = vld [vmem:[%s649 + $0x178] sm:$0xff]
      %v698 = vld [vmem:[%s649 + $0x180] sm:$0xff]
      %v699 = vld [vmem:[%s649 + $0x188] sm:$0xff]
      %v700 = vld [vmem:[%s649 + $0x190] sm:$0xff]
      %v701 = vld [vmem:[%s649 + $0x198] sm:$0xff]
      %v702 = vld [vmem:[%s649 + $0x1a0] sm:$0xff]
      %v703 = vld [vmem:[%s649 + $0x1a8] sm:$0xff]
      %v704 = vld [vmem:[%s649 + $0x1b0] sm:$0xff]
      %v705 = vld [vmem:[%s649 + $0x1b8] sm:$0xff]
      %v762 = vunpack.c.l.b16 %v650
      %v763 = vunpack.c.h.b16 %v650
      %v764 = vunpack.c.l.b16 %v651
      %v765 = vunpack.c.h.b16 %v651
      %v766 = vunpack.c.l.b16 %v652
      %v767 = vunpack.c.h.b16 %v652
      %v768 = vunpack.c.l.b16 %v653
      %v769 = vunpack.c.h.b16 %v653
      %v770 = vunpack.c.l.b16 %v654
      %v771 = vunpack.c.h.b16 %v654
      %v772 = vunpack.c.l.b16 %v655
      %v773 = vunpack.c.h.b16 %v655
      %v774 = vunpack.c.l.b16 %v656
      %v775 = vunpack.c.h.b16 %v656
      %v776 = vunpack.c.l.b16 %v657
      %v777 = vunpack.c.h.b16 %v657
      %v778 = vunpack.c.l.b16 %v658
      %v779 = vunpack.c.h.b16 %v658
      %v780 = vunpack.c.l.b16 %v659
      %v781 = vunpack.c.h.b16 %v659
      %v782 = vunpack.c.l.b16 %v660
      %v783 = vunpack.c.h.b16 %v660
      %v784 = vunpack.c.l.b16 %v661
      %v785 = vunpack.c.h.b16 %v661
      %v786 = vunpack.c.l.b16 %v662
      %v787 = vunpack.c.h.b16 %v662
      %v788 = vunpack.c.l.b16 %v663
      %v789 = vunpack.c.h.b16 %v663
      %v790 = vunpack.c.l.b16 %v664
      %v791 = vunpack.c.h.b16 %v664
      %v792 = vunpack.c.l.b16 %v665
      %v793 = vunpack.c.h.b16 %v665
      %v794 = vunpack.c.l.b16 %v666
      %v795 = vunpack.c.h.b16 %v666
      %v796 = vunpack.c.l.b16 %v667
      %v797 = vunpack.c.h.b16 %v667
      %v798 = vunpack.c.l.b16 %v668
      %v799 = vunpack.c.h.b16 %v668
      %v800 = vunpack.c.l.b16 %v669
      %v801 = vunpack.c.h.b16 %v669
      %v802 = vunpack.c.l.b16 %v670
      %v803 = vunpack.c.h.b16 %v670
      %v804 = vunpack.c.l.b16 %v671
      %v805 = vunpack.c.h.b16 %v671
      %v806 = vunpack.c.l.b16 %v672
      %v807 = vunpack.c.h.b16 %v672
      %v808 = vunpack.c.l.b16 %v673
      %v809 = vunpack.c.h.b16 %v673
      %v810 = vunpack.c.l.b16 %v674
      %v811 = vunpack.c.h.b16 %v674
      %v812 = vunpack.c.l.b16 %v675
      %v813 = vunpack.c.h.b16 %v675
      %v814 = vunpack.c.l.b16 %v676
      %v815 = vunpack.c.h.b16 %v676
      %v816 = vunpack.c.l.b16 %v677
      %v817 = vunpack.c.h.b16 %v677
      %v818 = vunpack.c.l.b16 %v678
      %v819 = vunpack.c.h.b16 %v678
      %v820 = vunpack.c.l.b16 %v679
      %v821 = vunpack.c.h.b16 %v679
      %v822 = vunpack.c.l.b16 %v680
      %v823 = vunpack.c.h.b16 %v680
      %v824 = vunpack.c.l.b16 %v681
      %v825 = vunpack.c.h.b16 %v681
      %v826 = vunpack.c.l.b16 %v682
      %v827 = vunpack.c.h.b16 %v682
      %v828 = vunpack.c.l.b16 %v683
      %v829 = vunpack.c.h.b16 %v683
      %v830 = vunpack.c.l.b16 %v684
      %v831 = vunpack.c.h.b16 %v684
      %v832 = vunpack.c.l.b16 %v685
      %v833 = vunpack.c.h.b16 %v685
      %v834 = vunpack.c.l.b16 %v686
      %v835 = vunpack.c.h.b16 %v686
      %v836 = vunpack.c.l.b16 %v687
      %v837 = vunpack.c.h.b16 %v687
      %v838 = vunpack.c.l.b16 %v688
      %v839 = vunpack.c.h.b16 %v688
      %v840 = vunpack.c.l.b16 %v689
      %v841 = vunpack.c.h.b16 %v689
      %v842 = vunpack.c.l.b16 %v690
      %v843 = vunpack.c.h.b16 %v690
      %v844 = vunpack.c.l.b16 %v691
      %v845 = vunpack.c.h.b16 %v691
      %v846 = vunpack.c.l.b16 %v692
      %v847 = vunpack.c.h.b16 %v692
      %v848 = vunpack.c.l.b16 %v693
      %v849 = vunpack.c.h.b16 %v693
      %v850 = vunpack.c.l.b16 %v694
      %v851 = vunpack.c.h.b16 %v694
      %v852 = vunpack.c.l.b16 %v695
      %v853 = vunpack.c.h.b16 %v695
      %v854 = vunpack.c.l.b16 %v696
      %v855 = vunpack.c.h.b16 %v696
      %v856 = vunpack.c.l.b16 %v697
      %v857 = vunpack.c.h.b16 %v697
      %v858 = vunpack.c.l.b16 %v698
      %v859 = vunpack.c.h.b16 %v698
      %v860 = vunpack.c.l.b16 %v699
      %v861 = vunpack.c.h.b16 %v699
      %v862 = vunpack.c.l.b16 %v700
      %v863 = vunpack.c.h.b16 %v700
      %v864 = vunpack.c.l.b16 %v701
      %v865 = vunpack.c.h.b16 %v701
      %v866 = vunpack.c.l.b16 %v702
      %v867 = vunpack.c.h.b16 %v702
      %v868 = vunpack.c.l.b16 %v703
      %v869 = vunpack.c.h.b16 %v703
      %v870 = vunpack.c.l.b16 %v704
      %v871 = vunpack.c.h.b16 %v704
      %v872 = vunpack.c.l.b16 %v705
      %v873 = vunpack.c.h.b16 %v705
      %v874 = vpack.c.b16 %v766, %v762
      %v875 = vpack.c.b16 %v767, %v763
      %v876 = vpack.c.b16 %v768, %v764
      %v877 = vpack.c.b16 %v769, %v765
      %v878 = vpack.c.b16 %v774, %v770
      %v879 = vpack.c.b16 %v775, %v771
      %v880 = vpack.c.b16 %v776, %v772
      %v881 = vpack.c.b16 %v777, %v773
      %v882 = vpack.c.b16 %v782, %v778
      %v883 = vpack.c.b16 %v783, %v779
      %v884 = vpack.c.b16 %v784, %v780
      %v885 = vpack.c.b16 %v785, %v781
      %v886 = vpack.c.b16 %v790, %v786
      %v887 = vpack.c.b16 %v791, %v787
      %v888 = vpack.c.b16 %v792, %v788
      %v889 = vpack.c.b16 %v793, %v789
      %v890 = vpack.c.b16 %v798, %v794
      %v891 = vpack.c.b16 %v799, %v795
      %v892 = vpack.c.b16 %v800, %v796
      %v893 = vpack.c.b16 %v801, %v797
      %v894 = vpack.c.b16 %v806, %v802
      %v895 = vpack.c.b16 %v807, %v803
      %v896 = vpack.c.b16 %v808, %v804
      %v897 = vpack.c.b16 %v809, %v805
      %v898 = vpack.c.b16 %v814, %v810
      %v899 = vpack.c.b16 %v815, %v811
      %v900 = vpack.c.b16 %v816, %v812
      %v901 = vpack.c.b16 %v817, %v813
      %v902 = vpack.c.b16 %v822, %v818
      %v903 = vpack.c.b16 %v823, %v819
      %v904 = vpack.c.b16 %v824, %v820
      %v905 = vpack.c.b16 %v825, %v821
      %v906 = vpack.c.b16 %v830, %v826
      %v907 = vpack.c.b16 %v831, %v827
      %v908 = vpack.c.b16 %v832, %v828
      %v909 = vpack.c.b16 %v833, %v829
      %v910 = vpack.c.b16 %v838, %v834
      %v911 = vpack.c.b16 %v839, %v835
      %v912 = vpack.c.b16 %v840, %v836
      %v913 = vpack.c.b16 %v841, %v837
      %v914 = vpack.c.b16 %v846, %v842
      %v915 = vpack.c.b16 %v847, %v843
      %v916 = vpack.c.b16 %v848, %v844
      %v917 = vpack.c.b16 %v849, %v845
      %v918 = vpack.c.b16 %v854, %v850
      %v919 = vpack.c.b16 %v855, %v851
      %v920 = vpack.c.b16 %v856, %v852
      %v921 = vpack.c.b16 %v857, %v853
      %v922 = vpack.c.b16 %v862, %v858
      %v923 = vpack.c.b16 %v863, %v859
      %v924 = vpack.c.b16 %v864, %v860
      %v925 = vpack.c.b16 %v865, %v861
      %v926 = vpack.c.b16 %v870, %v866
      %v927 = vpack.c.b16 %v871, %v867
      %v928 = vpack.c.b16 %v872, %v868
      %v929 = vpack.c.b16 %v873, %v869
      %vm986 = vcmask 785408
      %v988 = vsel %vm986, %v648, 0
      %990 = vmatprep.subr.bf16.mxu0 %v875
      %991 = vmatpush1.bf16.msra.mxu0 %v874
      %992 = vmatprep.subr.bf16.mxu0 %v879
      %993 = vmatpush1.bf16.msra.mxu0 %v878
      %994 = vmatprep.subr.bf16.mxu0 %v883
      %995 = vmatpush1.bf16.msra.mxu0 %v882
      %996 = vmatprep.subr.bf16.mxu0 %v887
      %997 = vmatpush1.bf16.msra.mxu0 %v886
      %998 = vmatprep.subr.bf16.mxu0 %v891
      %999 = vmatpush1.bf16.msra.mxu0 %v890
      %1000 = vmatprep.subr.bf16.mxu0 %v895
      %1001 = vmatpush1.bf16.msra.mxu0 %v894
      %1002 = vmatprep.subr.bf16.mxu0 %v899
      %1003 = vmatpush1.bf16.msra.mxu0 %v898
      %1004 = vmatprep.subr.bf16.mxu0 %v903
      %1005 = vmatpush1.bf16.msra.mxu0 %v902
      %1006 = vmatprep.subr.bf16.mxu0 %v907
      %1007 = vmatpush1.bf16.msra.mxu0 %v906
      %1008 = vmatprep.subr.bf16.mxu0 %v911
      %1009 = vmatpush1.bf16.msra.mxu0 %v910
      %1010 = vmatprep.subr.bf16.mxu0 %v915
      %1011 = vmatpush1.bf16.msra.mxu0 %v914
      %1012 = vmatprep.subr.bf16.mxu0 %v919
      %1013 = vmatpush1.bf16.msra.mxu0 %v918
      %1014 = vmatprep.subr.bf16.mxu0 %v923
      %1015 = vmatpush1.bf16.msra.mxu0 %v922
      %1016 = vmatprep.subr.bf16.mxu0 %v927
      %1017 = vmatpush1.bf16.msra.mxu0 %v926
      %1018 = vmatprep.subr.bf16.mxu0 0
      %1019 = vmatpush1.bf16.msra.mxu0 0
      %1020 = vmatprep.subr.bf16.mxu0 0
      %1021 = vmatpush1.bf16.msra.mxu0 0
      %1022 = vmatprep.mubr.bf16.mxu0 %v988
      %1023 = vmatmul.mubr.bf16.gmra.mrb[0].mxu0 %v647
      %v1024 = vpop.f32.mrb[0].mxu0
      %v1025 = vadd.f32 0.0, %v1024
      %v1026 = vpop.f32.mrb[0].mxu0
      %v1027 = vadd.f32 0.0, %v1026
      %v1028 = vpop.f32.mrb[0].mxu0
      %v1029 = vadd.f32 0.0, %v1028
      %v1030 = vpop.f32.mrb[0].mxu0
      %v1031 = vadd.f32 0.0, %v1030
      %1032 = vdwg.mxu0
      %1033 = vmatprep.subr.bf16.mxu0 %v877
      %1034 = vmatpush1.bf16.msra.mxu0 %v876
      %1035 = vmatprep.subr.bf16.mxu0 %v881
      %1036 = vmatpush1.bf16.msra.mxu0 %v880
      %1037 = vmatprep.subr.bf16.mxu0 %v885
      %1038 = vmatpush1.bf16.msra.mxu0 %v884
      %1039 = vmatprep.subr.bf16.mxu0 %v889
      %1040 = vmatpush1.bf16.msra.mxu0 %v888
      %1041 = vmatprep.subr.bf16.mxu0 %v893
      %1042 = vmatpush1.bf16.msra.mxu0 %v892
      %1043 = vmatprep.subr.bf16.mxu0 %v897
      %1044 = vmatpush1.bf16.msra.mxu0 %v896
      %1045 = vmatprep.subr.bf16.mxu0 %v901
      %1046 = vmatpush1.bf16.msra.mxu0 %v900
      %1047 = vmatprep.subr.bf16.mxu0 %v905
      %1048 = vmatpush1.bf16.msra.mxu0 %v904
      %1049 = vmatprep.subr.bf16.mxu0 %v909
      %1050 = vmatpush1.bf16.msra.mxu0 %v908
      %1051 = vmatprep.subr.bf16.mxu0 %v913
      %1052 = vmatpush1.bf16.msra.mxu0 %v912
      %1053 = vmatprep.subr.bf16.mxu0 %v917
      %1054 = vmatpush1.bf16.msra.mxu0 %v916
      %1055 = vmatprep.subr.bf16.mxu0 %v921
      %1056 = vmatpush1.bf16.msra.mxu0 %v920
      %1057 = vmatprep.subr.bf16.mxu0 %v925
      %1058 = vmatpush1.bf16.msra.mxu0 %v924
      %1059 = vmatprep.subr.bf16.mxu0 %v929
      %1060 = vmatpush1.bf16.msra.mxu0 %v928
      %1061 = vmatprep.subr.bf16.mxu0 0
      %1062 = vmatpush1.bf16.msra.mxu0 0
      %1063 = vmatprep.subr.bf16.mxu0 0
      %1064 = vmatpush1.bf16.msra.mxu0 0
      %1065 = vmatprep.mubr.bf16.mxu0 %v988
      %1066 = vmatmul.mubr.bf16.gmra.mrb[0].mxu0 %v647
      %v1067 = vpop.f32.mrb[0].mxu0
      %v1068 = vadd.f32 0.0, %v1067
      %v1069 = vpop.f32.mrb[0].mxu0
      %v1070 = vadd.f32 0.0, %v1069
      %v1071 = vpop.f32.mrb[0].mxu0
      %v1072 = vadd.f32 0.0, %v1071
      %v1073 = vpop.f32.mrb[0].mxu0
      %v1074 = vadd.f32 0.0, %v1073
      %1075 = vdwg.mxu0
      %v1132 = vunpack.c.l.b16 %v537
      %v1133 = vunpack.c.h.b16 %v537
      %v1134 = vunpack.c.l.b16 %v538
      %v1135 = vunpack.c.h.b16 %v538
      %v1136 = vunpack.c.l.b16 %v539
      %v1137 = vunpack.c.h.b16 %v539
      %v1138 = vunpack.c.l.b16 %v540
      %v1139 = vunpack.c.h.b16 %v540
      %v1140 = vunpack.c.l.b16 %v541
      %v1141 = vunpack.c.h.b16 %v541
      %v1142 = vunpack.c.l.b16 %v542
      %v1143 = vunpack.c.h.b16 %v542
      %v1144 = vunpack.c.l.b16 %v543
      %v1145 = vunpack.c.h.b16 %v543
      %v1146 = vunpack.c.l.b16 %v544
      %v1147 = vunpack.c.h.b16 %v544
      %v1148 = vunpack.c.l.b16 %v545
      %v1149 = vunpack.c.h.b16 %v545
      %v1150 = vunpack.c.l.b16 %v546
      %v1151 = vunpack.c.h.b16 %v546
      %v1152 = vunpack.c.l.b16 %v547
      %v1153 = vunpack.c.h.b16 %v547
      %v1154 = vunpack.c.l.b16 %v548
      %v1155 = vunpack.c.h.b16 %v548
      %v1156 = vunpack.c.l.b16 %v549
      %v1157 = vunpack.c.h.b16 %v549
      %v1158 = vunpack.c.l.b16 %v550
      %v1159 = vunpack.c.h.b16 %v550
      %v1160 = vunpack.c.l.b16 %v551
      %v1161 = vunpack.c.h.b16 %v551
      %v1162 = vunpack.c.l.b16 %v552
      %v1163 = vunpack.c.h.b16 %v552
      %v1164 = vunpack.c.l.b16 %v553
      %v1165 = vunpack.c.h.b16 %v553
      %v1166 = vunpack.c.l.b16 %v554
      %v1167 = vunpack.c.h.b16 %v554
      %v1168 = vunpack.c.l.b16 %v555
      %v1169 = vunpack.c.h.b16 %v555
      %v1170 = vunpack.c.l.b16 %v556
      %v1171 = vunpack.c.h.b16 %v556
      %v1172 = vunpack.c.l.b16 %v557
      %v1173 = vunpack.c.h.b16 %v557
      %v1174 = vunpack.c.l.b16 %v558
      %v1175 = vunpack.c.h.b16 %v558
      %v1176 = vunpack.c.l.b16 %v559
      %v1177 = vunpack.c.h.b16 %v559
      %v1178 = vunpack.c.l.b16 %v560
      %v1179 = vunpack.c.h.b16 %v560
      %v1180 = vunpack.c.l.b16 %v561
      %v1181 = vunpack.c.h.b16 %v561
      %v1182 = vunpack.c.l.b16 %v562
      %v1183 = vunpack.c.h.b16 %v562
      %v1184 = vunpack.c.l.b16 %v563
      %v1185 = vunpack.c.h.b16 %v563
      %v1186 = vunpack.c.l.b16 %v564
      %v1187 = vunpack.c.h.b16 %v564
      %v1188 = vunpack.c.l.b16 %v565
      %v1189 = vunpack.c.h.b16 %v565
      %v1190 = vunpack.c.l.b16 %v566
      %v1191 = vunpack.c.h.b16 %v566
      %v1192 = vunpack.c.l.b16 %v567
      %v1193 = vunpack.c.h.b16 %v567
      %v1194 = vunpack.c.l.b16 %v568
      %v1195 = vunpack.c.h.b16 %v568
      %v1196 = vunpack.c.l.b16 %v569
      %v1197 = vunpack.c.h.b16 %v569
      %v1198 = vunpack.c.l.b16 %v570
      %v1199 = vunpack.c.h.b16 %v570
      %v1200 = vunpack.c.l.b16 %v571
      %v1201 = vunpack.c.h.b16 %v571
      %v1202 = vunpack.c.l.b16 %v572
      %v1203 = vunpack.c.h.b16 %v572
      %v1204 = vunpack.c.l.b16 %v573
      %v1205 = vunpack.c.h.b16 %v573
      %v1206 = vunpack.c.l.b16 %v574
      %v1207 = vunpack.c.h.b16 %v574
      %v1208 = vunpack.c.l.b16 %v575
      %v1209 = vunpack.c.h.b16 %v575
      %v1210 = vunpack.c.l.b16 %v576
      %v1211 = vunpack.c.h.b16 %v576
      %v1212 = vunpack.c.l.b16 %v577
      %v1213 = vunpack.c.h.b16 %v577
      %v1214 = vunpack.c.l.b16 %v578
      %v1215 = vunpack.c.h.b16 %v578
      %v1216 = vunpack.c.l.b16 %v579
      %v1217 = vunpack.c.h.b16 %v579
      %v1218 = vunpack.c.l.b16 %v580
      %v1219 = vunpack.c.h.b16 %v580
      %v1220 = vunpack.c.l.b16 %v581
      %v1221 = vunpack.c.h.b16 %v581
      %v1222 = vunpack.c.l.b16 %v582
      %v1223 = vunpack.c.h.b16 %v582
      %v1224 = vunpack.c.l.b16 %v583
      %v1225 = vunpack.c.h.b16 %v583
      %v1226 = vunpack.c.l.b16 %v584
      %v1227 = vunpack.c.h.b16 %v584
      %v1228 = vunpack.c.l.b16 %v585
      %v1229 = vunpack.c.h.b16 %v585
      %v1230 = vunpack.c.l.b16 %v586
      %v1231 = vunpack.c.h.b16 %v586
      %v1232 = vunpack.c.l.b16 %v587
      %v1233 = vunpack.c.h.b16 %v587
      %v1234 = vunpack.c.l.b16 %v588
      %v1235 = vunpack.c.h.b16 %v588
      %v1236 = vunpack.c.l.b16 %v589
      %v1237 = vunpack.c.h.b16 %v589
      %v1238 = vunpack.c.l.b16 %v590
      %v1239 = vunpack.c.h.b16 %v590
      %v1240 = vunpack.c.l.b16 %v591
      %v1241 = vunpack.c.h.b16 %v591
      %v1242 = vunpack.c.l.b16 %v592
      %v1243 = vunpack.c.h.b16 %v592
      %v1244 = vpack.c.b16 %v1136, %v1132
      %v1245 = vpack.c.b16 %v1137, %v1133
      %v1246 = vpack.c.b16 %v1138, %v1134
      %v1247 = vpack.c.b16 %v1139, %v1135
      %v1248 = vpack.c.b16 %v1144, %v1140
      %v1249 = vpack.c.b16 %v1145, %v1141
      %v1250 = vpack.c.b16 %v1146, %v1142
      %v1251 = vpack.c.b16 %v1147, %v1143
      %v1252 = vpack.c.b16 %v1152, %v1148
      %v1253 = vpack.c.b16 %v1153, %v1149
      %v1254 = vpack.c.b16 %v1154, %v1150
      %v1255 = vpack.c.b16 %v1155, %v1151
      %v1256 = vpack.c.b16 %v1160, %v1156
      %v1257 = vpack.c.b16 %v1161, %v1157
      %v1258 = vpack.c.b16 %v1162, %v1158
      %v1259 = vpack.c.b16 %v1163, %v1159
      %v1260 = vpack.c.b16 %v1168, %v1164
      %v1261 = vpack.c.b16 %v1169, %v1165
      %v1262 = vpack.c.b16 %v1170, %v1166
      %v1263 = vpack.c.b16 %v1171, %v1167
      %v1264 = vpack.c.b16 %v1176, %v1172
      %v1265 = vpack.c.b16 %v1177, %v1173
      %v1266 = vpack.c.b16 %v1178, %v1174
      %v1267 = vpack.c.b16 %v1179, %v1175
      %v1268 = vpack.c.b16 %v1184, %v1180
      %v1269 = vpack.c.b16 %v1185, %v1181
      %v1270 = vpack.c.b16 %v1186, %v1182
      %v1271 = vpack.c.b16 %v1187, %v1183
      %v1272 = vpack.c.b16 %v1192, %v1188
      %v1273 = vpack.c.b16 %v1193, %v1189
      %v1274 = vpack.c.b16 %v1194, %v1190
      %v1275 = vpack.c.b16 %v1195, %v1191
      %v1276 = vpack.c.b16 %v1200, %v1196
      %v1277 = vpack.c.b16 %v1201, %v1197
      %v1278 = vpack.c.b16 %v1202, %v1198
      %v1279 = vpack.c.b16 %v1203, %v1199
      %v1280 = vpack.c.b16 %v1208, %v1204
      %v1281 = vpack.c.b16 %v1209, %v1205
      %v1282 = vpack.c.b16 %v1210, %v1206
      %v1283 = vpack.c.b16 %v1211, %v1207
      %v1284 = vpack.c.b16 %v1216, %v1212
      %v1285 = vpack.c.b16 %v1217, %v1213
      %v1286 = vpack.c.b16 %v1218, %v1214
      %v1287 = vpack.c.b16 %v1219, %v1215
      %v1288 = vpack.c.b16 %v1224, %v1220
      %v1289 = vpack.c.b16 %v1225, %v1221
      %v1290 = vpack.c.b16 %v1226, %v1222
      %v1291 = vpack.c.b16 %v1227, %v1223
      %v1292 = vpack.c.b16 %v1232, %v1228
      %v1293 = vpack.c.b16 %v1233, %v1229
      %v1294 = vpack.c.b16 %v1234, %v1230
      %v1295 = vpack.c.b16 %v1235, %v1231
      %v1296 = vpack.c.b16 %v1240, %v1236
      %v1297 = vpack.c.b16 %v1241, %v1237
      %v1298 = vpack.c.b16 %v1242, %v1238
      %v1299 = vpack.c.b16 %v1243, %v1239
      %v1357 = vsel %vm986, %v536, 0
      %1359 = vmatprep.subr.bf16.mxu0 %v1245
      %1360 = vmatpush1.bf16.msra.mxu0 %v1244
      %1361 = vmatprep.subr.bf16.mxu0 %v1249
      %1362 = vmatpush1.bf16.msra.mxu0 %v1248
      %1363 = vmatprep.subr.bf16.mxu0 %v1253
      %1364 = vmatpush1.bf16.msra.mxu0 %v1252
      %1365 = vmatprep.subr.bf16.mxu0 %v1257
      %1366 = vmatpush1.bf16.msra.mxu0 %v1256
      %1367 = vmatprep.subr.bf16.mxu0 %v1261
      %1368 = vmatpush1.bf16.msra.mxu0 %v1260
      %1369 = vmatprep.subr.bf16.mxu0 %v1265
      %1370 = vmatpush1.bf16.msra.mxu0 %v1264
      %1371 = vmatprep.subr.bf16.mxu0 %v1269
      %1372 = vmatpush1.bf16.msra.mxu0 %v1268
      %1373 = vmatprep.subr.bf16.mxu0 %v1273
      %1374 = vmatpush1.bf16.msra.mxu0 %v1272
      %1375 = vmatprep.subr.bf16.mxu0 %v1277
      %1376 = vmatpush1.bf16.msra.mxu0 %v1276
      %1377 = vmatprep.subr.bf16.mxu0 %v1281
      %1378 = vmatpush1.bf16.msra.mxu0 %v1280
      %1379 = vmatprep.subr.bf16.mxu0 %v1285
      %1380 = vmatpush1.bf16.msra.mxu0 %v1284
      %1381 = vmatprep.subr.bf16.mxu0 %v1289
      %1382 = vmatpush1.bf16.msra.mxu0 %v1288
      %1383 = vmatprep.subr.bf16.mxu0 %v1293
      %1384 = vmatpush1.bf16.msra.mxu0 %v1292
      %1385 = vmatprep.subr.bf16.mxu0 %v1297
      %1386 = vmatpush1.bf16.msra.mxu0 %v1296
      %1387 = vmatprep.subr.bf16.mxu0 0
      %1388 = vmatpush1.bf16.msra.mxu0 0
      %1389 = vmatprep.subr.bf16.mxu0 0
      %1390 = vmatpush1.bf16.msra.mxu0 0
      %1391 = vmatprep.mubr.bf16.mxu0 %v1357
      %1392 = vmatmul.mubr.bf16.gmra.mrb[0].mxu0 %v535
      %v1393 = vpop.f32.mrb[0].mxu0
      %v1394 = vadd.f32 %v1025, %v1393
      %v1395 = vpop.f32.mrb[0].mxu0
      %v1396 = vadd.f32 %v1027, %v1395
      %v1397 = vpop.f32.mrb[0].mxu0
      %v1398 = vadd.f32 %v1029, %v1397
      %v1399 = vpop.f32.mrb[0].mxu0
      %v1400 = vadd.f32 %v1031, %v1399
      %1401 = vdwg.mxu0
      %1402 = vmatprep.subr.bf16.mxu0 %v1247
      %1403 = vmatpush1.bf16.msra.mxu0 %v1246
      %1404 = vmatprep.subr.bf16.mxu0 %v1251
      %1405 = vmatpush1.bf16.msra.mxu0 %v1250
      %1406 = vmatprep.subr.bf16.mxu0 %v1255
      %1407 = vmatpush1.bf16.msra.mxu0 %v1254
      %1408 = vmatprep.subr.bf16.mxu0 %v1259
      %1409 = vmatpush1.bf16.msra.mxu0 %v1258
      %1410 = vmatprep.subr.bf16.mxu0 %v1263
      %1411 = vmatpush1.bf16.msra.mxu0 %v1262
      %1412 = vmatprep.subr.bf16.mxu0 %v1267
      %1413 = vmatpush1.bf16.msra.mxu0 %v1266
      %1414 = vmatprep.subr.bf16.mxu0 %v1271
      %1415 = vmatpush1.bf16.msra.mxu0 %v1270
      %1416 = vmatprep.subr.bf16.mxu0 %v1275
      %1417 = vmatpush1.bf16.msra.mxu0 %v1274
      %1418 = vmatprep.subr.bf16.mxu0 %v1279
      %1419 = vmatpush1.bf16.msra.mxu0 %v1278
      %1420 = vmatprep.subr.bf16.mxu0 %v1283
      %1421 = vmatpush1.bf16.msra.mxu0 %v1282
      %1422 = vmatprep.subr.bf16.mxu0 %v1287
      %1423 = vmatpush1.bf16.msra.mxu0 %v1286
      %1424 = vmatprep.subr.bf16.mxu0 %v1291
      %1425 = vmatpush1.bf16.msra.mxu0 %v1290
      %1426 = vmatprep.subr.bf16.mxu0 %v1295
      %1427 = vmatpush1.bf16.msra.mxu0 %v1294
      %1428 = vmatprep.subr.bf16.mxu0 %v1299
      %1429 = vmatpush1.bf16.msra.mxu0 %v1298
      %1430 = vmatprep.subr.bf16.mxu0 0
      %1431 = vmatpush1.bf16.msra.mxu0 0
      %1432 = vmatprep.subr.bf16.mxu0 0
      %1433 = vmatpush1.bf16.msra.mxu0 0
      %1434 = vmatprep.mubr.bf16.mxu0 %v1357
      %1435 = vmatmul.mubr.bf16.gmra.mrb[0].mxu0 %v535
      %v1436 = vpop.f32.mrb[0].mxu0
      %v1437 = vadd.f32 %v1068, %v1436
      %v1438 = vpop.f32.mrb[0].mxu0
      %v1439 = vadd.f32 %v1070, %v1438
      %v1440 = vpop.f32.mrb[0].mxu0
      %v1441 = vadd.f32 %v1072, %v1440
      %v1442 = vpop.f32.mrb[0].mxu0
      %v1443 = vadd.f32 %v1074, %v1442
      %1444 = vdwg.mxu0
      %s1445 = scalar_lea.vmem %s1, 16
      %v1446 = vld [vmem:[%s1445] sm:$0xf]
      %v1447 = vld [vmem:[%s1445 + $0x4] sm:$0x7]
      %v1450 = vunpack.c.l.b16 %v1446
      %v1451 = vunpack.c.l.b16 %v1447
      %v1452 = vpack.c.b16 %v1451, %v1450
      %v1454 = vsel %vm481, %v1452, 0
      %1456 = vmatprep.subr.bf16.mxu0 %v467
      %1457 = vmatpush1.bf16.msra.mxu0 %v466
      %1458 = vmatprep.subr.bf16.mxu0 %v469
      %1459 = vmatpush1.bf16.msra.mxu0 %v468
      %1460 = vmatprep.subr.bf16.mxu0 %v471
      %1461 = vmatpush1.bf16.msra.mxu0 %v470
      %1462 = vmatprep.subr.bf16.mxu0 %v490
      %1463 = vmatpush1.bf16.msra.mxu0 %v487
      %1464 = vmatprep.subr.bf16.mxu0 0
      %1465 = vmatpush1.bf16.msra.mxu0 0
      %1466 = vmatprep.subr.bf16.mxu0 0
      %1467 = vmatpush1.bf16.msra.mxu0 0
      %1468 = vmatprep.subr.bf16.mxu0 0
      %1469 = vmatpush1.bf16.msra.mxu0 0
      %1470 = vmatprep.subr.bf16.mxu0 0
      %1471 = vmatpush1.bf16.msra.mxu0 0
      %1472 = vmatprep.subr.bf16.mxu0 0
      %1473 = vmatpush1.bf16.msra.mxu0 0
      %1474 = vmatprep.subr.bf16.mxu0 0
      %1475 = vmatpush1.bf16.msra.mxu0 0
      %1476 = vmatprep.subr.bf16.mxu0 0
      %1477 = vmatpush1.bf16.msra.mxu0 0
      %1478 = vmatprep.subr.bf16.mxu0 0
      %1479 = vmatpush1.bf16.msra.mxu0 0
      %1480 = vmatprep.subr.bf16.mxu0 0
      %1481 = vmatpush1.bf16.msra.mxu0 0
      %1482 = vmatprep.subr.bf16.mxu0 0
      %1483 = vmatpush1.bf16.msra.mxu0 0
      %1484 = vmatprep.subr.bf16.mxu0 0
      %1485 = vmatpush1.bf16.msra.mxu0 0
      %1486 = vmatprep.subr.bf16.mxu0 0
      %1487 = vmatpush1.bf16.msra.mxu0 0
      %1488 = vmatprep.mubr.bf16.mxu0 0
      %1489 = vmatmul.mubr.bf16.gmra.mrb[0].mxu0 %v1454
      %v1490 = vpop.f32.mrb[0].mxu0
      %v1491 = vadd.f32 0.0, %v1490
      %v1492 = vpop.f32.mrb[0].mxu0
      %v1493 = vadd.f32 0.0, %v1492
      %v1494 = vpop.f32.mrb[0].mxu0
      %v1495 = vadd.f32 0.0, %v1494
      %v1496 = vpop.f32.mrb[0].mxu0
      %v1497 = vadd.f32 0.0, %v1496
      %1498 = vdwg.mxu0
      %v1499 = vpack.c.bf16 %v1495, %v1491
      %v1500 = vpack.c.bf16 %v1497, %v1493
      %s1501 = scalar_lea.vmem %s2, 896
      %v1502 = vld [vmem:[%s1501] sm:$0xff]
      %v1503 = vld [vmem:[%s1501 + $0x8] sm:$0xff]
      %v1504 = vld [vmem:[%s1501 + $0x10] sm:$0xff]
      %v1505 = vld [vmem:[%s1501 + $0x18] sm:$0xff]
      %v1506 = vld [vmem:[%s1501 + $0x20] sm:$0xff]
      %v1507 = vld [vmem:[%s1501 + $0x28] sm:$0xff]
      %v1508 = vld [vmem:[%s1501 + $0x30] sm:$0xff]
      %v1509 = vld [vmem:[%s1501 + $0x38] sm:$0xff]
      %v1510 = vld [vmem:[%s1501 + $0x40] sm:$0xff]
      %v1511 = vld [vmem:[%s1501 + $0x48] sm:$0xff]
      %v1512 = vld [vmem:[%s1501 + $0x50] sm:$0xff]
      %v1513 = vld [vmem:[%s1501 + $0x58] sm:$0xff]
      %v1514 = vld [vmem:[%s1501 + $0x60] sm:$0xff]
      %v1515 = vld [vmem:[%s1501 + $0x68] sm:$0xff]
      %v1516 = vld [vmem:[%s1501 + $0x70] sm:$0xff]
      %v1517 = vld [vmem:[%s1501 + $0x78] sm:$0xff]
      %v1518 = vld [vmem:[%s1501 + $0x80] sm:$0xff]
      %v1519 = vld [vmem:[%s1501 + $0x88] sm:$0xff]
      %v1520 = vld [vmem:[%s1501 + $0x90] sm:$0xff]
      %v1521 = vld [vmem:[%s1501 + $0x98] sm:$0xff]
      %v1522 = vld [vmem:[%s1501 + $0xa0] sm:$0xff]
      %v1523 = vld [vmem:[%s1501 + $0xa8] sm:$0xff]
      %v1524 = vld [vmem:[%s1501 + $0xb0] sm:$0xff]
      %v1525 = vld [vmem:[%s1501 + $0xb8] sm:$0xff]
      %v1526 = vld [vmem:[%s1501 + $0xc0] sm:$0xff]
      %v1527 = vld [vmem:[%s1501 + $0xc8] sm:$0xff]
      %v1528 = vld [vmem:[%s1501 + $0xd0] sm:$0xff]
      %v1529 = vld [vmem:[%s1501 + $0xd8] sm:$0xff]
      %v1530 = vld [vmem:[%s1501 + $0xe0] sm:$0xff]
      %v1531 = vld [vmem:[%s1501 + $0xe8] sm:$0xff]
      %v1532 = vld [vmem:[%s1501 + $0xf0] sm:$0xff]
      %v1533 = vld [vmem:[%s1501 + $0xf8] sm:$0xff]
      %v1534 = vld [vmem:[%s1501 + $0x100] sm:$0xff]
      %v1535 = vld [vmem:[%s1501 + $0x108] sm:$0xff]
      %v1536 = vld [vmem:[%s1501 + $0x110] sm:$0xff]
      %v1537 = vld [vmem:[%s1501 + $0x118] sm:$0xff]
      %v1538 = vld [vmem:[%s1501 + $0x120] sm:$0xff]
      %v1539 = vld [vmem:[%s1501 + $0x128] sm:$0xff]
      %v1540 = vld [vmem:[%s1501 + $0x130] sm:$0xff]
      %v1541 = vld [vmem:[%s1501 + $0x138] sm:$0xff]
      %v1542 = vld [vmem:[%s1501 + $0x140] sm:$0xff]
      %v1543 = vld [vmem:[%s1501 + $0x148] sm:$0xff]
      %v1544 = vld [vmem:[%s1501 + $0x150] sm:$0xff]
      %v1545 = vld [vmem:[%s1501 + $0x158] sm:$0xff]
      %v1546 = vld [vmem:[%s1501 + $0x160] sm:$0xff]
      %v1547 = vld [vmem:[%s1501 + $0x168] sm:$0xff]
      %v1548 = vld [vmem:[%s1501 + $0x170] sm:$0xff]
      %v1549 = vld [vmem:[%s1501 + $0x178] sm:$0xff]
      %v1550 = vld [vmem:[%s1501 + $0x180] sm:$0xff]
      %v1551 = vld [vmem:[%s1501 + $0x188] sm:$0xff]
      %v1552 = vld [vmem:[%s1501 + $0x190] sm:$0xff]
      %v1553 = vld [vmem:[%s1501 + $0x198] sm:$0xff]
      %v1554 = vld [vmem:[%s1501 + $0x1a0] sm:$0xff]
      %v1555 = vld [vmem:[%s1501 + $0x1a8] sm:$0xff]
      %v1556 = vld [vmem:[%s1501 + $0x1b0] sm:$0xff]
      %v1557 = vld [vmem:[%s1501 + $0x1b8] sm:$0xff]
      %v1614 = vunpack.c.l.b16 %v1502
      %v1615 = vunpack.c.h.b16 %v1502
      %v1616 = vunpack.c.l.b16 %v1503
      %v1617 = vunpack.c.h.b16 %v1503
      %v1618 = vunpack.c.l.b16 %v1504
      %v1619 = vunpack.c.h.b16 %v1504
      %v1620 = vunpack.c.l.b16 %v1505
      %v1621 = vunpack.c.h.b16 %v1505
      %v1622 = vunpack.c.l.b16 %v1506
      %v1623 = vunpack.c.h.b16 %v1506
      %v1624 = vunpack.c.l.b16 %v1507
      %v1625 = vunpack.c.h.b16 %v1507
      %v1626 = vunpack.c.l.b16 %v1508
      %v1627 = vunpack.c.h.b16 %v1508
      %v1628 = vunpack.c.l.b16 %v1509
      %v1629 = vunpack.c.h.b16 %v1509
      %v1630 = vunpack.c.l.b16 %v1510
      %v1631 = vunpack.c.h.b16 %v1510
      %v1632 = vunpack.c.l.b16 %v1511
      %v1633 = vunpack.c.h.b16 %v1511
      %v1634 = vunpack.c.l.b16 %v1512
      %v1635 = vunpack.c.h.b16 %v1512
      %v1636 = vunpack.c.l.b16 %v1513
      %v1637 = vunpack.c.h.b16 %v1513
      %v1638 = vunpack.c.l.b16 %v1514
      %v1639 = vunpack.c.h.b16 %v1514
      %v1640 = vunpack.c.l.b16 %v1515
      %v1641 = vunpack.c.h.b16 %v1515
      %v1642 = vunpack.c.l.b16 %v1516
      %v1643 = vunpack.c.h.b16 %v1516
      %v1644 = vunpack.c.l.b16 %v1517
      %v1645 = vunpack.c.h.b16 %v1517
      %v1646 = vunpack.c.l.b16 %v1518
      %v1647 = vunpack.c.h.b16 %v1518
      %v1648 = vunpack.c.l.b16 %v1519
      %v1649 = vunpack.c.h.b16 %v1519
      %v1650 = vunpack.c.l.b16 %v1520
      %v1651 = vunpack.c.h.b16 %v1520
      %v1652 = vunpack.c.l.b16 %v1521
      %v1653 = vunpack.c.h.b16 %v1521
      %v1654 = vunpack.c.l.b16 %v1522
      %v1655 = vunpack.c.h.b16 %v1522
      %v1656 = vunpack.c.l.b16 %v1523
      %v1657 = vunpack.c.h.b16 %v1523
      %v1658 = vunpack.c.l.b16 %v1524
      %v1659 = vunpack.c.h.b16 %v1524
      %v1660 = vunpack.c.l.b16 %v1525
      %v1661 = vunpack.c.h.b16 %v1525
      %v1662 = vunpack.c.l.b16 %v1526
      %v1663 = vunpack.c.h.b16 %v1526
      %v1664 = vunpack.c.l.b16 %v1527
      %v1665 = vunpack.c.h.b16 %v1527
      %v1666 = vunpack.c.l.b16 %v1528
      %v1667 = vunpack.c.h.b16 %v1528
      %v1668 = vunpack.c.l.b16 %v1529
      %v1669 = vunpack.c.h.b16 %v1529
      %v1670 = vunpack.c.l.b16 %v1530
      %v1671 = vunpack.c.h.b16 %v1530
      %v1672 = vunpack.c.l.b16 %v1531
      %v1673 = vunpack.c.h.b16 %v1531
      %v1674 = vunpack.c.l.b16 %v1532
      %v1675 = vunpack.c.h.b16 %v1532
      %v1676 = vunpack.c.l.b16 %v1533
      %v1677 = vunpack.c.h.b16 %v1533
      %v1678 = vunpack.c.l.b16 %v1534
      %v1679 = vunpack.c.h.b16 %v1534
      %v1680 = vunpack.c.l.b16 %v1535
      %v1681 = vunpack.c.h.b16 %v1535
      %v1682 = vunpack.c.l.b16 %v1536
      %v1683 = vunpack.c.h.b16 %v1536
      %v1684 = vunpack.c.l.b16 %v1537
      %v1685 = vunpack.c.h.b16 %v1537
      %v1686 = vunpack.c.l.b16 %v1538
      %v1687 = vunpack.c.h.b16 %v1538
      %v1688 = vunpack.c.l.b16 %v1539
      %v1689 = vunpack.c.h.b16 %v1539
      %v1690 = vunpack.c.l.b16 %v1540
      %v1691 = vunpack.c.h.b16 %v1540
      %v1692 = vunpack.c.l.b16 %v1541
      %v1693 = vunpack.c.h.b16 %v1541
      %v1694 = vunpack.c.l.b16 %v1542
      %v1695 = vunpack.c.h.b16 %v1542
      %v1696 = vunpack.c.l.b16 %v1543
      %v1697 = vunpack.c.h.b16 %v1543
      %v1698 = vunpack.c.l.b16 %v1544
      %v1699 = vunpack.c.h.b16 %v1544
      %v1700 = vunpack.c.l.b16 %v1545
      %v1701 = vunpack.c.h.b16 %v1545
      %v1702 = vunpack.c.l.b16 %v1546
      %v1703 = vunpack.c.h.b16 %v1546
      %v1704 = vunpack.c.l.b16 %v1547
      %v1705 = vunpack.c.h.b16 %v1547
      %v1706 = vunpack.c.l.b16 %v1548
      %v1707 = vunpack.c.h.b16 %v1548
      %v1708 = vunpack.c.l.b16 %v1549
      %v1709 = vunpack.c.h.b16 %v1549
      %v1710 = vunpack.c.l.b16 %v1550
      %v1711 = vunpack.c.h.b16 %v1550
      %v1712 = vunpack.c.l.b16 %v1551
      %v1713 = vunpack.c.h.b16 %v1551
      %v1714 = vunpack.c.l.b16 %v1552
      %v1715 = vunpack.c.h.b16 %v1552
      %v1716 = vunpack.c.l.b16 %v1553
      %v1717 = vunpack.c.h.b16 %v1553
      %v1718 = vunpack.c.l.b16 %v1554
      %v1719 = vunpack.c.h.b16 %v1554
      %v1720 = vunpack.c.l.b16 %v1555
      %v1721 = vunpack.c.h.b16 %v1555
      %v1722 = vunpack.c.l.b16 %v1556
      %v1723 = vunpack.c.h.b16 %v1556
      %v1724 = vunpack.c.l.b16 %v1557
      %v1725 = vunpack.c.h.b16 %v1557
      %v1726 = vpack.c.b16 %v1618, %v1614
      %v1727 = vpack.c.b16 %v1619, %v1615
      %v1728 = vpack.c.b16 %v1620, %v1616
      %v1729 = vpack.c.b16 %v1621, %v1617
      %v1730 = vpack.c.b16 %v1626, %v1622
      %v1731 = vpack.c.b16 %v1627, %v1623
      %v1732 = vpack.c.b16 %v1628, %v1624
      %v1733 = vpack.c.b16 %v1629, %v1625
      %v1734 = vpack.c.b16 %v1634, %v1630
      %v1735 = vpack.c.b16 %v1635, %v1631
      %v1736 = vpack.c.b16 %v1636, %v1632
      %v1737 = vpack.c.b16 %v1637, %v1633
      %v1738 = vpack.c.b16 %v1642, %v1638
      %v1739 = vpack.c.b16 %v1643, %v1639
      %v1740 = vpack.c.b16 %v1644, %v1640
      %v1741 = vpack.c.b16 %v1645, %v1641
      %v1742 = vpack.c.b16 %v1650, %v1646
      %v1743 = vpack.c.b16 %v1651, %v1647
      %v1744 = vpack.c.b16 %v1652, %v1648
      %v1745 = vpack.c.b16 %v1653, %v1649
      %v1746 = vpack.c.b16 %v1658, %v1654
      %v1747 = vpack.c.b16 %v1659, %v1655
      %v1748 = vpack.c.b16 %v1660, %v1656
      %v1749 = vpack.c.b16 %v1661, %v1657
      %v1750 = vpack.c.b16 %v1666, %v1662
      %v1751 = vpack.c.b16 %v1667, %v1663
      %v1752 = vpack.c.b16 %v1668, %v1664
      %v1753 = vpack.c.b16 %v1669, %v1665
      %v1754 = vpack.c.b16 %v1674, %v1670
      %v1755 = vpack.c.b16 %v1675, %v1671
      %v1756 = vpack.c.b16 %v1676, %v1672
      %v1757 = vpack.c.b16 %v1677, %v1673
      %v1758 = vpack.c.b16 %v1682, %v1678
      %v1759 = vpack.c.b16 %v1683, %v1679
      %v1760 = vpack.c.b16 %v1684, %v1680
      %v1761 = vpack.c.b16 %v1685, %v1681
      %v1762 = vpack.c.b16 %v1690, %v1686
      %v1763 = vpack.c.b16 %v1691, %v1687
      %v1764 = vpack.c.b16 %v1692, %v1688
      %v1765 = vpack.c.b16 %v1693, %v1689
      %v1766 = vpack.c.b16 %v1698, %v1694
      %v1767 = vpack.c.b16 %v1699, %v1695
      %v1768 = vpack.c.b16 %v1700, %v1696
      %v1769 = vpack.c.b16 %v1701, %v1697
      %v1770 = vpack.c.b16 %v1706, %v1702
      %v1771 = vpack.c.b16 %v1707, %v1703
      %v1772 = vpack.c.b16 %v1708, %v1704
      %v1773 = vpack.c.b16 %v1709, %v1705
      %v1774 = vpack.c.b16 %v1714, %v1710
      %v1775 = vpack.c.b16 %v1715, %v1711
      %v1776 = vpack.c.b16 %v1716, %v1712
      %v1777 = vpack.c.b16 %v1717, %v1713
      %v1778 = vpack.c.b16 %v1722, %v1718
      %v1779 = vpack.c.b16 %v1723, %v1719
      %v1780 = vpack.c.b16 %v1724, %v1720
      %v1781 = vpack.c.b16 %v1725, %v1721
      %v1839 = vsel %vm986, %v1500, 0
      %1841 = vmatprep.subr.bf16.mxu0 %v1727
      %1842 = vmatpush1.bf16.msra.mxu0 %v1726
      %1843 = vmatprep.subr.bf16.mxu0 %v1731
      %1844 = vmatpush1.bf16.msra.mxu0 %v1730
      %1845 = vmatprep.subr.bf16.mxu0 %v1735
      %1846 = vmatpush1.bf16.msra.mxu0 %v1734
      %1847 = vmatprep.subr.bf16.mxu0 %v1739
      %1848 = vmatpush1.bf16.msra.mxu0 %v1738
      %1849 = vmatprep.subr.bf16.mxu0 %v1743
      %1850 = vmatpush1.bf16.msra.mxu0 %v1742
      %1851 = vmatprep.subr.bf16.mxu0 %v1747
      %1852 = vmatpush1.bf16.msra.mxu0 %v1746
      %1853 = vmatprep.subr.bf16.mxu0 %v1751
      %1854 = vmatpush1.bf16.msra.mxu0 %v1750
      %1855 = vmatprep.subr.bf16.mxu0 %v1755
      %1856 = vmatpush1.bf16.msra.mxu0 %v1754
      %1857 = vmatprep.subr.bf16.mxu0 %v1759
      %1858 = vmatpush1.bf16.msra.mxu0 %v1758
      %1859 = vmatprep.subr.bf16.mxu0 %v1763
      %1860 = vmatpush1.bf16.msra.mxu0 %v1762
      %1861 = vmatprep.subr.bf16.mxu0 %v1767
      %1862 = vmatpush1.bf16.msra.mxu0 %v1766
      %1863 = vmatprep.subr.bf16.mxu0 %v1771
      %1864 = vmatpush1.bf16.msra.mxu0 %v1770
      %1865 = vmatprep.subr.bf16.mxu0 %v1775
      %1866 = vmatpush1.bf16.msra.mxu0 %v1774
      %1867 = vmatprep.subr.bf16.mxu0 %v1779
      %1868 = vmatpush1.bf16.msra.mxu0 %v1778
      %1869 = vmatprep.subr.bf16.mxu0 0
      %1870 = vmatpush1.bf16.msra.mxu0 0
      %1871 = vmatprep.subr.bf16.mxu0 0
      %1872 = vmatpush1.bf16.msra.mxu0 0
      %1873 = vmatprep.mubr.bf16.mxu0 %v1839
      %1874 = vmatmul.mubr.bf16.gmra.mrb[0].mxu0 %v1499
      %v1875 = vpop.f32.mrb[0].mxu0
      %v1876 = vadd.f32 0.0, %v1875
      %v1877 = vpop.f32.mrb[0].mxu0
      %v1878 = vadd.f32 0.0, %v1877
      %v1879 = vpop.f32.mrb[0].mxu0
      %v1880 = vadd.f32 0.0, %v1879
      %v1881 = vpop.f32.mrb[0].mxu0
      %v1882 = vadd.f32 0.0, %v1881
      %1883 = vdwg.mxu0
      %1884 = vmatprep.subr.bf16.mxu0 %v1729
      %1885 = vmatpush1.bf16.msra.mxu0 %v1728
      %1886 = vmatprep.subr.bf16.mxu0 %v1733
      %1887 = vmatpush1.bf16.msra.mxu0 %v1732
      %1888 = vmatprep.subr.bf16.mxu0 %v1737
      %1889 = vmatpush1.bf16.msra.mxu0 %v1736
      %1890 = vmatprep.subr.bf16.mxu0 %v1741
      %1891 = vmatpush1.bf16.msra.mxu0 %v1740
      %1892 = vmatprep.subr.bf16.mxu0 %v1745
      %1893 = vmatpush1.bf16.msra.mxu0 %v1744
      %1894 = vmatprep.subr.bf16.mxu0 %v1749
      %1895 = vmatpush1.bf16.msra.mxu0 %v1748
      %1896 = vmatprep.subr.bf16.mxu0 %v1753
      %1897 = vmatpush1.bf16.msra.mxu0 %v1752
      %1898 = vmatprep.subr.bf16.mxu0 %v1757
      %1899 = vmatpush1.bf16.msra.mxu0 %v1756
      %1900 = vmatprep.subr.bf16.mxu0 %v1761
      %1901 = vmatpush1.bf16.msra.mxu0 %v1760
      %1902 = vmatprep.subr.bf16.mxu0 %v1765
      %1903 = vmatpush1.bf16.msra.mxu0 %v1764
      %1904 = vmatprep.subr.bf16.mxu0 %v1769
      %1905 = vmatpush1.bf16.msra.mxu0 %v1768
      %1906 = vmatprep.subr.bf16.mxu0 %v1773
      %1907 = vmatpush1.bf16.msra.mxu0 %v1772
      %1908 = vmatprep.subr.bf16.mxu0 %v1777
      %1909 = vmatpush1.bf16.msra.mxu0 %v1776
      %1910 = vmatprep.subr.bf16.mxu0 %v1781
      %1911 = vmatpush1.bf16.msra.mxu0 %v1780
      %1912 = vmatprep.subr.bf16.mxu0 0
      %1913 = vmatpush1.bf16.msra.mxu0 0
      %1914 = vmatprep.subr.bf16.mxu0 0
      %1915 = vmatpush1.bf16.msra.mxu0 0
      %1916 = vmatprep.mubr.bf16.mxu0 %v1839
      %1917 = vmatmul.mubr.bf16.gmra.mrb[0].mxu0 %v1499
      %v1918 = vpop.f32.mrb[0].mxu0
      %v1919 = vadd.f32 0.0, %v1918
      %v1920 = vpop.f32.mrb[0].mxu0
      %v1921 = vadd.f32 0.0, %v1920
      %v1922 = vpop.f32.mrb[0].mxu0
      %v1923 = vadd.f32 0.0, %v1922
      %v1924 = vpop.f32.mrb[0].mxu0
      %v1925 = vadd.f32 0.0, %v1924
      %1926 = vdwg.mxu0
      %v1927 = vadd.f32 %v1394, %v1876
      %v1928 = vadd.f32 %v1396, %v1878
      %v1929 = vadd.f32 %v1437, %v1919
      %v1930 = vadd.f32 %v1439, %v1921
      %v1931 = vadd.f32 %v1398, %v1880
      %v1932 = vadd.f32 %v1400, %v1882
      %v1933 = vadd.f32 %v1441, %v1923
      %v1934 = vadd.f32 %v1443, %v1925
      %s1935 = scalar_lea.vmem %s1, 24
      %v1936 = vld [vmem:[%s1935] sm:$0xf]
      %v1937 = vld [vmem:[%s1935 + $0x4] sm:$0x7]
      %v1940 = vunpack.c.l.b16 %v1936
      %v1941 = vunpack.c.l.b16 %v1937
      %v1942 = vpack.c.b16 %v1941, %v1940
      %v1944 = vsel %vm481, %v1942, 0
      %1946 = vmatprep.subr.bf16.mxu0 %v467
      %1947 = vmatpush1.bf16.msra.mxu0 %v466
      %1948 = vmatprep.subr.bf16.mxu0 %v469
      %1949 = vmatpush1.bf16.msra.mxu0 %v468
      %1950 = vmatprep.subr.bf16.mxu0 %v471
      %1951 = vmatpush1.bf16.msra.mxu0 %v470
      %1952 = vmatprep.subr.bf16.mxu0 %v490
      %1953 = vmatpush1.bf16.msra.mxu0 %v487
      %1954 = vmatprep.subr.bf16.mxu0 0
      %1955 = vmatpush1.bf16.msra.mxu0 0
      %1956 = vmatprep.subr.bf16.mxu0 0
      %1957 = vmatpush1.bf16.msra.mxu0 0
      %1958 = vmatprep.subr.bf16.mxu0 0
      %1959 = vmatpush1.bf16.msra.mxu0 0
      %1960 = vmatprep.subr.bf16.mxu0 0
      %1961 = vmatpush1.bf16.msra.mxu0 0
      %1962 = vmatprep.subr.bf16.mxu0 0
      %1963 = vmatpush1.bf16.msra.mxu0 0
      %1964 = vmatprep.subr.bf16.mxu0 0
      %1965 = vmatpush1.bf16.msra.mxu0 0
      %1966 = vmatprep.subr.bf16.mxu0 0
      %1967 = vmatpush1.bf16.msra.mxu0 0
      %1968 = vmatprep.subr.bf16.mxu0 0
      %1969 = vmatpush1.bf16.msra.mxu0 0
      %1970 = vmatprep.subr.bf16.mxu0 0
      %1971 = vmatpush1.bf16.msra.mxu0 0
      %1972 = vmatprep.subr.bf16.mxu0 0
      %1973 = vmatpush1.bf16.msra.mxu0 0
      %1974 = vmatprep.subr.bf16.mxu0 0
      %1975 = vmatpush1.bf16.msra.mxu0 0
      %1976 = vmatprep.subr.bf16.mxu0 0
      %1977 = vmatpush1.bf16.msra.mxu0 0
      %1978 = vmatprep.mubr.bf16.mxu0 0
      %1979 = vmatmul.mubr.bf16.gmra.mrb[0].mxu0 %v1944
      %v1980 = vpop.f32.mrb[0].mxu0
      %v1981 = vadd.f32 0.0, %v1980
      %v1982 = vpop.f32.mrb[0].mxu0
      %v1983 = vadd.f32 0.0, %v1982
      %v1984 = vpop.f32.mrb[0].mxu0
      %v1985 = vadd.f32 0.0, %v1984
      %v1986 = vpop.f32.mrb[0].mxu0
      %v1987 = vadd.f32 0.0, %v1986
      %1988 = vdwg.mxu0
      %v1989 = vpack.c.bf16 %v1985, %v1981
      %v1990 = vpack.c.bf16 %v1987, %v1983
      %s1991 = scalar_lea.vmem %s2, 1344
      %v1992 = vld [vmem:[%s1991] sm:$0xff]
      %v1993 = vld [vmem:[%s1991 + $0x8] sm:$0xff]
      %v1994 = vld [vmem:[%s1991 + $0x10] sm:$0xff]
      %v1995 = vld [vmem:[%s1991 + $0x18] sm:$0xff]
      %v1996 = vld [vmem:[%s1991 + $0x20] sm:$0xff]
      %v1997 = vld [vmem:[%s1991 + $0x28] sm:$0xff]
      %v1998 = vld [vmem:[%s1991 + $0x30] sm:$0xff]
      %v1999 = vld [vmem:[%s1991 + $0x38] sm:$0xff]
      %v2000 = vld [vmem:[%s1991 + $0x40] sm:$0xff]
      %v2001 = vld [vmem:[%s1991 + $0x48] sm:$0xff]
      %v2002 = vld [vmem:[%s1991 + $0x50] sm:$0xff]
      %v2003 = vld [vmem:[%s1991 + $0x58] sm:$0xff]
      %v2004 = vld [vmem:[%s1991 + $0x60] sm:$0xff]
      %v2005 = vld [vmem:[%s1991 + $0x68] sm:$0xff]
      %v2006 = vld [vmem:[%s1991 + $0x70] sm:$0xff]
      %v2007 = vld [vmem:[%s1991 + $0x78] sm:$0xff]
      %v2008 = vld [vmem:[%s1991 + $0x80] sm:$0xff]
      %v2009 = vld [vmem:[%s1991 + $0x88] sm:$0xff]
      %v2010 = vld [vmem:[%s1991 + $0x90] sm:$0xff]
      %v2011 = vld [vmem:[%s1991 + $0x98] sm:$0xff]
      %v2012 = vld [vmem:[%s1991 + $0xa0] sm:$0xff]
      %v2013 = vld [vmem:[%s1991 + $0xa8] sm:$0xff]
      %v2014 = vld [vmem:[%s1991 + $0xb0] sm:$0xff]
      %v2015 = vld [vmem:[%s1991 + $0xb8] sm:$0xff]
      %v2016 = vld [vmem:[%s1991 + $0xc0] sm:$0xff]
      %v2017 = vld [vmem:[%s1991 + $0xc8] sm:$0xff]
      %v2018 = vld [vmem:[%s1991 + $0xd0] sm:$0xff]
      %v2019 = vld [vmem:[%s1991 + $0xd8] sm:$0xff]
      %v2020 = vld [vmem:[%s1991 + $0xe0] sm:$0xff]
      %v2021 = vld [vmem:[%s1991 + $0xe8] sm:$0xff]
      %v2022 = vld [vmem:[%s1991 + $0xf0] sm:$0xff]
      %v2023 = vld [vmem:[%s1991 + $0xf8] sm:$0xff]
      %v2024 = vld [vmem:[%s1991 + $0x100] sm:$0xff]
      %v2025 = vld [vmem:[%s1991 + $0x108] sm:$0xff]
      %v2026 = vld [vmem:[%s1991 + $0x110] sm:$0xff]
      %v2027 = vld [vmem:[%s1991 + $0x118] sm:$0xff]
      %v2028 = vld [vmem:[%s1991 + $0x120] sm:$0xff]
      %v2029 = vld [vmem:[%s1991 + $0x128] sm:$0xff]
      %v2030 = vld [vmem:[%s1991 + $0x130] sm:$0xff]
      %v2031 = vld [vmem:[%s1991 + $0x138] sm:$0xff]
      %v2032 = vld [vmem:[%s1991 + $0x140] sm:$0xff]
      %v2033 = vld [vmem:[%s1991 + $0x148] sm:$0xff]
      %v2034 = vld [vmem:[%s1991 + $0x150] sm:$0xff]
      %v2035 = vld [vmem:[%s1991 + $0x158] sm:$0xff]
      %v2036 = vld [vmem:[%s1991 + $0x160] sm:$0xff]
      %v2037 = vld [vmem:[%s1991 + $0x168] sm:$0xff]
      %v2038 = vld [vmem:[%s1991 + $0x170] sm:$0xff]
      %v2039 = vld [vmem:[%s1991 + $0x178] sm:$0xff]
      %v2040 = vld [vmem:[%s1991 + $0x180] sm:$0xff]
      %v2041 = vld [vmem:[%s1991 + $0x188] sm:$0xff]
      %v2042 = vld [vmem:[%s1991 + $0x190] sm:$0xff]
      %v2043 = vld [vmem:[%s1991 + $0x198] sm:$0xff]
      %v2044 = vld [vmem:[%s1991 + $0x1a0] sm:$0xff]
      %v2045 = vld [vmem:[%s1991 + $0x1a8] sm:$0xff]
      %v2046 = vld [vmem:[%s1991 + $0x1b0] sm:$0xff]
      %v2047 = vld [vmem:[%s1991 + $0x1b8] sm:$0xff]
      %v2104 = vunpack.c.l.b16 %v1992
      %v2105 = vunpack.c.h.b16 %v1992
      %v2106 = vunpack.c.l.b16 %v1993
      %v2107 = vunpack.c.h.b16 %v1993
      %v2108 = vunpack.c.l.b16 %v1994
      %v2109 = vunpack.c.h.b16 %v1994
      %v2110 = vunpack.c.l.b16 %v1995
      %v2111 = vunpack.c.h.b16 %v1995
      %v2112 = vunpack.c.l.b16 %v1996
      %v2113 = vunpack.c.h.b16 %v1996
      %v2114 = vunpack.c.l.b16 %v1997
      %v2115 = vunpack.c.h.b16 %v1997
      %v2116 = vunpack.c.l.b16 %v1998
      %v2117 = vunpack.c.h.b16 %v1998
      %v2118 = vunpack.c.l.b16 %v1999
      %v2119 = vunpack.c.h.b16 %v1999
      %v2120 = vunpack.c.l.b16 %v2000
      %v2121 = vunpack.c.h.b16 %v2000
      %v2122 = vunpack.c.l.b16 %v2001
      %v2123 = vunpack.c.h.b16 %v2001
      %v2124 = vunpack.c.l.b16 %v2002
      %v2125 = vunpack.c.h.b16 %v2002
      %v2126 = vunpack.c.l.b16 %v2003
      %v2127 = vunpack.c.h.b16 %v2003
      %v2128 = vunpack.c.l.b16 %v2004
      %v2129 = vunpack.c.h.b16 %v2004
      %v2130 = vunpack.c.l.b16 %v2005
      %v2131 = vunpack.c.h.b16 %v2005
      %v2132 = vunpack.c.l.b16 %v2006
      %v2133 = vunpack.c.h.b16 %v2006
      %v2134 = vunpack.c.l.b16 %v2007
      %v2135 = vunpack.c.h.b16 %v2007
      %v2136 = vunpack.c.l.b16 %v2008
      %v2137 = vunpack.c.h.b16 %v2008
      %v2138 = vunpack.c.l.b16 %v2009
      %v2139 = vunpack.c.h.b16 %v2009
      %v2140 = vunpack.c.l.b16 %v2010
      %v2141 = vunpack.c.h.b16 %v2010
      %v2142 = vunpack.c.l.b16 %v2011
      %v2143 = vunpack.c.h.b16 %v2011
      %v2144 = vunpack.c.l.b16 %v2012
      %v2145 = vunpack.c.h.b16 %v2012
      %v2146 = vunpack.c.l.b16 %v2013
      %v2147 = vunpack.c.h.b16 %v2013
      %v2148 = vunpack.c.l.b16 %v2014
      %v2149 = vunpack.c.h.b16 %v2014
      %v2150 = vunpack.c.l.b16 %v2015
      %v2151 = vunpack.c.h.b16 %v2015
      %v2152 = vunpack.c.l.b16 %v2016
      %v2153 = vunpack.c.h.b16 %v2016
      %v2154 = vunpack.c.l.b16 %v2017
      %v2155 = vunpack.c.h.b16 %v2017
      %v2156 = vunpack.c.l.b16 %v2018
      %v2157 = vunpack.c.h.b16 %v2018
      %v2158 = vunpack.c.l.b16 %v2019
      %v2159 = vunpack.c.h.b16 %v2019
      %v2160 = vunpack.c.l.b16 %v2020
      %v2161 = vunpack.c.h.b16 %v2020
      %v2162 = vunpack.c.l.b16 %v2021
      %v2163 = vunpack.c.h.b16 %v2021
      %v2164 = vunpack.c.l.b16 %v2022
      %v2165 = vunpack.c.h.b16 %v2022
      %v2166 = vunpack.c.l.b16 %v2023
      %v2167 = vunpack.c.h.b16 %v2023
      %v2168 = vunpack.c.l.b16 %v2024
      %v2169 = vunpack.c.h.b16 %v2024
      %v2170 = vunpack.c.l.b16 %v2025
      %v2171 = vunpack.c.h.b16 %v2025
      %v2172 = vunpack.c.l.b16 %v2026
      %v2173 = vunpack.c.h.b16 %v2026
      %v2174 = vunpack.c.l.b16 %v2027
      %v2175 = vunpack.c.h.b16 %v2027
      %v2176 = vunpack.c.l.b16 %v2028
      %v2177 = vunpack.c.h.b16 %v2028
      %v2178 = vunpack.c.l.b16 %v2029
      %v2179 = vunpack.c.h.b16 %v2029
      %v2180 = vunpack.c.l.b16 %v2030
      %v2181 = vunpack.c.h.b16 %v2030
      %v2182 = vunpack.c.l.b16 %v2031
      %v2183 = vunpack.c.h.b16 %v2031
      %v2184 = vunpack.c.l.b16 %v2032
      %v2185 = vunpack.c.h.b16 %v2032
      %v2186 = vunpack.c.l.b16 %v2033
      %v2187 = vunpack.c.h.b16 %v2033
      %v2188 = vunpack.c.l.b16 %v2034
      %v2189 = vunpack.c.h.b16 %v2034
      %v2190 = vunpack.c.l.b16 %v2035
      %v2191 = vunpack.c.h.b16 %v2035
      %v2192 = vunpack.c.l.b16 %v2036
      %v2193 = vunpack.c.h.b16 %v2036
      %v2194 = vunpack.c.l.b16 %v2037
      %v2195 = vunpack.c.h.b16 %v2037
      %v2196 = vunpack.c.l.b16 %v2038
      %v2197 = vunpack.c.h.b16 %v2038
      %v2198 = vunpack.c.l.b16 %v2039
      %v2199 = vunpack.c.h.b16 %v2039
      %v2200 = vunpack.c.l.b16 %v2040
      %v2201 = vunpack.c.h.b16 %v2040
      %v2202 = vunpack.c.l.b16 %v2041
      %v2203 = vunpack.c.h.b16 %v2041
      %v2204 = vunpack.c.l.b16 %v2042
      %v2205 = vunpack.c.h.b16 %v2042
      %v2206 = vunpack.c.l.b16 %v2043
      %v2207 = vunpack.c.h.b16 %v2043
      %v2208 = vunpack.c.l.b16 %v2044
      %v2209 = vunpack.c.h.b16 %v2044
      %v2210 = vunpack.c.l.b16 %v2045
      %v2211 = vunpack.c.h.b16 %v2045
      %v2212 = vunpack.c.l.b16 %v2046
      %v2213 = vunpack.c.h.b16 %v2046
      %v2214 = vunpack.c.l.b16 %v2047
      %v2215 = vunpack.c.h.b16 %v2047
      %v2216 = vpack.c.b16 %v2108, %v2104
      %v2217 = vpack.c.b16 %v2109, %v2105
      %v2218 = vpack.c.b16 %v2110, %v2106
      %v2219 = vpack.c.b16 %v2111, %v2107
      %v2220 = vpack.c.b16 %v2116, %v2112
      %v2221 = vpack.c.b16 %v2117, %v2113
      %v2222 = vpack.c.b16 %v2118, %v2114
      %v2223 = vpack.c.b16 %v2119, %v2115
      %v2224 = vpack.c.b16 %v2124, %v2120
      %v2225 = vpack.c.b16 %v2125, %v2121
      %v2226 = vpack.c.b16 %v2126, %v2122
      %v2227 = vpack.c.b16 %v2127, %v2123
      %v2228 = vpack.c.b16 %v2132, %v2128
      %v2229 = vpack.c.b16 %v2133, %v2129
      %v2230 = vpack.c.b16 %v2134, %v2130
      %v2231 = vpack.c.b16 %v2135, %v2131
      %v2232 = vpack.c.b16 %v2140, %v2136
      %v2233 = vpack.c.b16 %v2141, %v2137
      %v2234 = vpack.c.b16 %v2142, %v2138
      %v2235 = vpack.c.b16 %v2143, %v2139
      %v2236 = vpack.c.b16 %v2148, %v2144
      %v2237 = vpack.c.b16 %v2149, %v2145
      %v2238 = vpack.c.b16 %v2150, %v2146
      %v2239 = vpack.c.b16 %v2151, %v2147
      %v2240 = vpack.c.b16 %v2156, %v2152
      %v2241 = vpack.c.b16 %v2157, %v2153
      %v2242 = vpack.c.b16 %v2158, %v2154
      %v2243 = vpack.c.b16 %v2159, %v2155
      %v2244 = vpack.c.b16 %v2164, %v2160
      %v2245 = vpack.c.b16 %v2165, %v2161
      %v2246 = vpack.c.b16 %v2166, %v2162
      %v2247 = vpack.c.b16 %v2167, %v2163
      %v2248 = vpack.c.b16 %v2172, %v2168
      %v2249 = vpack.c.b16 %v2173, %v2169
      %v2250 = vpack.c.b16 %v2174, %v2170
      %v2251 = vpack.c.b16 %v2175, %v2171
      %v2252 = vpack.c.b16 %v2180, %v2176
      %v2253 = vpack.c.b16 %v2181, %v2177
      %v2254 = vpack.c.b16 %v2182, %v2178
      %v2255 = vpack.c.b16 %v2183, %v2179
      %v2256 = vpack.c.b16 %v2188, %v2184
      %v2257 = vpack.c.b16 %v2189, %v2185
      %v2258 = vpack.c.b16 %v2190, %v2186
      %v2259 = vpack.c.b16 %v2191, %v2187
      %v2260 = vpack.c.b16 %v2196, %v2192
      %v2261 = vpack.c.b16 %v2197, %v2193
      %v2262 = vpack.c.b16 %v2198, %v2194
      %v2263 = vpack.c.b16 %v2199, %v2195
      %v2264 = vpack.c.b16 %v2204, %v2200
      %v2265 = vpack.c.b16 %v2205, %v2201
      %v2266 = vpack.c.b16 %v2206, %v2202
      %v2267 = vpack.c.b16 %v2207, %v2203
      %v2268 = vpack.c.b16 %v2212, %v2208
      %v2269 = vpack.c.b16 %v2213, %v2209
      %v2270 = vpack.c.b16 %v2214, %v2210
      %v2271 = vpack.c.b16 %v2215, %v2211
      %v2329 = vsel %vm986, %v1990, 0
      %2331 = vmatprep.subr.bf16.mxu0 %v2217
      %2332 = vmatpush1.bf16.msra.mxu0 %v2216
      %2333 = vmatprep.subr.bf16.mxu0 %v2221
      %2334 = vmatpush1.bf16.msra.mxu0 %v2220
      %2335 = vmatprep.subr.bf16.mxu0 %v2225
      %2336 = vmatpush1.bf16.msra.mxu0 %v2224
      %2337 = vmatprep.subr.bf16.mxu0 %v2229
      %2338 = vmatpush1.bf16.msra.mxu0 %v2228
      %2339 = vmatprep.subr.bf16.mxu0 %v2233
      %2340 = vmatpush1.bf16.msra.mxu0 %v2232
      %2341 = vmatprep.subr.bf16.mxu0 %v2237
      %2342 = vmatpush1.bf16.msra.mxu0 %v2236
      %2343 = vmatprep.subr.bf16.mxu0 %v2241
      %2344 = vmatpush1.bf16.msra.mxu0 %v2240
      %2345 = vmatprep.subr.bf16.mxu0 %v2245
      %2346 = vmatpush1.bf16.msra.mxu0 %v2244
      %2347 = vmatprep.subr.bf16.mxu0 %v2249
      %2348 = vmatpush1.bf16.msra.mxu0 %v2248
      %2349 = vmatprep.subr.bf16.mxu0 %v2253
      %2350 = vmatpush1.bf16.msra.mxu0 %v2252
      %2351 = vmatprep.subr.bf16.mxu0 %v2257
      %2352 = vmatpush1.bf16.msra.mxu0 %v2256
      %2353 = vmatprep.subr.bf16.mxu0 %v2261
      %2354 = vmatpush1.bf16.msra.mxu0 %v2260
      %2355 = vmatprep.subr.bf16.mxu0 %v2265
      %2356 = vmatpush1.bf16.msra.mxu0 %v2264
      %2357 = vmatprep.subr.bf16.mxu0 %v2269
      %2358 = vmatpush1.bf16.msra.mxu0 %v2268
      %2359 = vmatprep.subr.bf16.mxu0 0
      %2360 = vmatpush1.bf16.msra.mxu0 0
      %2361 = vmatprep.subr.bf16.mxu0 0
      %2362 = vmatpush1.bf16.msra.mxu0 0
      %2363 = vmatprep.mubr.bf16.mxu0 %v2329
      %2364 = vmatmul.mubr.bf16.gmra.mrb[0].mxu0 %v1989
      %v2365 = vpop.f32.mrb[0].mxu0
      %v2366 = vadd.f32 0.0, %v2365
      %v2367 = vpop.f32.mrb[0].mxu0
      %v2368 = vadd.f32 0.0, %v2367
      %v2369 = vpop.f32.mrb[0].mxu0
      %v2370 = vadd.f32 0.0, %v2369
      %v2371 = vpop.f32.mrb[0].mxu0
      %v2372 = vadd.f32 0.0, %v2371
      %2373 = vdwg.mxu0
      %2374 = vmatprep.subr.bf16.mxu0 %v2219
      %2375 = vmatpush1.bf16.msra.mxu0 %v2218
      %2376 = vmatprep.subr.bf16.mxu0 %v2223
      %2377 = vmatpush1.bf16.msra.mxu0 %v2222
      %2378 = vmatprep.subr.bf16.mxu0 %v2227
      %2379 = vmatpush1.bf16.msra.mxu0 %v2226
      %2380 = vmatprep.subr.bf16.mxu0 %v2231
      %2381 = vmatpush1.bf16.msra.mxu0 %v2230
      %2382 = vmatprep.subr.bf16.mxu0 %v2235
      %2383 = vmatpush1.bf16.msra.mxu0 %v2234
      %2384 = vmatprep.subr.bf16.mxu0 %v2239
      %2385 = vmatpush1.bf16.msra.mxu0 %v2238
      %2386 = vmatprep.subr.bf16.mxu0 %v2243
      %2387 = vmatpush1.bf16.msra.mxu0 %v2242
      %2388 = vmatprep.subr.bf16.mxu0 %v2247
      %2389 = vmatpush1.bf16.msra.mxu0 %v2246
      %2390 = vmatprep.subr.bf16.mxu0 %v2251
      %2391 = vmatpush1.bf16.msra.mxu0 %v2250
      %2392 = vmatprep.subr.bf16.mxu0 %v2255
      %2393 = vmatpush1.bf16.msra.mxu0 %v2254
      %2394 = vmatprep.subr.bf16.mxu0 %v2259
      %2395 = vmatpush1.bf16.msra.mxu0 %v2258
      %2396 = vmatprep.subr.bf16.mxu0 %v2263
      %2397 = vmatpush1.bf16.msra.mxu0 %v2262
      %2398 = vmatprep.subr.bf16.mxu0 %v2267
      %2399 = vmatpush1.bf16.msra.mxu0 %v2266
      %2400 = vmatprep.subr.bf16.mxu0 %v2271
      %2401 = vmatpush1.bf16.msra.mxu0 %v2270
      %2402 = vmatprep.subr.bf16.mxu0 0
      %2403 = vmatpush1.bf16.msra.mxu0 0
      %2404 = vmatprep.subr.bf16.mxu0 0
      %2405 = vmatpush1.bf16.msra.mxu0 0
      %2406 = vmatprep.mubr.bf16.mxu0 %v2329
      %2407 = vmatmul.mubr.bf16.gmra.mrb[0].mxu0 %v1989
      %v2408 = vpop.f32.mrb[0].mxu0
      %v2409 = vadd.f32 0.0, %v2408
      %v2410 = vpop.f32.mrb[0].mxu0
      %v2411 = vadd.f32 0.0, %v2410
      %v2412 = vpop.f32.mrb[0].mxu0
      %v2413 = vadd.f32 0.0, %v2412
      %v2414 = vpop.f32.mrb[0].mxu0
      %v2415 = vadd.f32 0.0, %v2414
      %2416 = vdwg.mxu0
      %v2417 = vadd.f32 %v1927, %v2366
      %v2418 = vadd.f32 %v1928, %v2368
      %v2419 = vadd.f32 %v1929, %v2409
      %v2420 = vadd.f32 %v1930, %v2411
      %v2421 = vadd.f32 %v1931, %v2370
      %v2422 = vadd.f32 %v1932, %v2372
      %v2423 = vadd.f32 %v1933, %v2413
      %v2424 = vadd.f32 %v1934, %v2415
      %s2425 = scalar_lea.vmem %s1, 32
      %v2426 = vld [vmem:[%s2425] sm:$0xf]
      %v2427 = vld [vmem:[%s2425 + $0x4] sm:$0x7]
      %v2430 = vunpack.c.l.b16 %v2426
      %v2431 = vunpack.c.l.b16 %v2427
      %v2432 = vpack.c.b16 %v2431, %v2430
      %v2434 = vsel %vm481, %v2432, 0
      %2436 = vmatprep.subr.bf16.mxu0 %v467
      %2437 = vmatpush1.bf16.msra.mxu0 %v466
      %2438 = vmatprep.subr.bf16.mxu0 %v469
      %2439 = vmatpush1.bf16.msra.mxu0 %v468
      %2440 = vmatprep.subr.bf16.mxu0 %v471
      %2441 = vmatpush1.bf16.msra.mxu0 %v470
      %2442 = vmatprep.subr.bf16.mxu0 %v490
      %2443 = vmatpush1.bf16.msra.mxu0 %v487
      %2444 = vmatprep.subr.bf16.mxu0 0
      %2445 = vmatpush1.bf16.msra.mxu0 0
      %2446 = vmatprep.subr.bf16.mxu0 0
      %2447 = vmatpush1.bf16.msra.mxu0 0
      %2448 = vmatprep.subr.bf16.mxu0 0
      %2449 = vmatpush1.bf16.msra.mxu0 0
      %2450 = vmatprep.subr.bf16.mxu0 0
      %2451 = vmatpush1.bf16.msra.mxu0 0
      %2452 = vmatprep.subr.bf16.mxu0 0
      %2453 = vmatpush1.bf16.msra.mxu0 0
      %2454 = vmatprep.subr.bf16.mxu0 0
      %2455 = vmatpush1.bf16.msra.mxu0 0
      %2456 = vmatprep.subr.bf16.mxu0 0
      %2457 = vmatpush1.bf16.msra.mxu0 0
      %2458 = vmatprep.subr.bf16.mxu0 0
      %2459 = vmatpush1.bf16.msra.mxu0 0
      %2460 = vmatprep.subr.bf16.mxu0 0
      %2461 = vmatpush1.bf16.msra.mxu0 0
      %2462 = vmatprep.subr.bf16.mxu0 0
      %2463 = vmatpush1.bf16.msra.mxu0 0
      %2464 = vmatprep.subr.bf16.mxu0 0
      %2465 = vmatpush1.bf16.msra.mxu0 0
      %2466 = vmatprep.subr.bf16.mxu0 0
      %2467 = vmatpush1.bf16.msra.mxu0 0
      %2468 = vmatprep.mubr.bf16.mxu0 0
      %2469 = vmatmul.mubr.bf16.gmra.mrb[0].mxu0 %v2434
      %v2470 = vpop.f32.mrb[0].mxu0
      %v2471 = vadd.f32 0.0, %v2470
      %v2472 = vpop.f32.mrb[0].mxu0
      %v2473 = vadd.f32 0.0, %v2472
      %v2474 = vpop.f32.mrb[0].mxu0
      %v2475 = vadd.f32 0.0, %v2474
      %v2476 = vpop.f32.mrb[0].mxu0
      %v2477 = vadd.f32 0.0, %v2476
      %2478 = vdwg.mxu0
      %v2479 = vpack.c.bf16 %v2475, %v2471
      %v2480 = vpack.c.bf16 %v2477, %v2473
      %s2481 = scalar_lea.vmem %s2, 1792
      %v2482 = vld [vmem:[%s2481] sm:$0xff]
      %v2483 = vld [vmem:[%s2481 + $0x8] sm:$0xff]
      %v2484 = vld [vmem:[%s2481 + $0x10] sm:$0xff]
      %v2485 = vld [vmem:[%s2481 + $0x18] sm:$0xff]
      %v2486 = vld [vmem:[%s2481 + $0x20] sm:$0xff]
      %v2487 = vld [vmem:[%s2481 + $0x28] sm:$0xff]
      %v2488 = vld [vmem:[%s2481 + $0x30] sm:$0xff]
      %v2489 = vld [vmem:[%s2481 + $0x38] sm:$0xff]
      %v2490 = vld [vmem:[%s2481 + $0x40] sm:$0xff]
      %v2491 = vld [vmem:[%s2481 + $0x48] sm:$0xff]
      %v2492 = vld [vmem:[%s2481 + $0x50] sm:$0xff]
      %v2493 = vld [vmem:[%s2481 + $0x58] sm:$0xff]
      %v2494 = vld [vmem:[%s2481 + $0x60] sm:$0xff]
      %v2495 = vld [vmem:[%s2481 + $0x68] sm:$0xff]
      %v2496 = vld [vmem:[%s2481 + $0x70] sm:$0xff]
      %v2497 = vld [vmem:[%s2481 + $0x78] sm:$0xff]
      %v2498 = vld [vmem:[%s2481 + $0x80] sm:$0xff]
      %v2499 = vld [vmem:[%s2481 + $0x88] sm:$0xff]
      %v2500 = vld [vmem:[%s2481 + $0x90] sm:$0xff]
      %v2501 = vld [vmem:[%s2481 + $0x98] sm:$0xff]
      %v2502 = vld [vmem:[%s2481 + $0xa0] sm:$0xff]
      %v2503 = vld [vmem:[%s2481 + $0xa8] sm:$0xff]
      %v2504 = vld [vmem:[%s2481 + $0xb0] sm:$0xff]
      %v2505 = vld [vmem:[%s2481 + $0xb8] sm:$0xff]
      %v2506 = vld [vmem:[%s2481 + $0xc0] sm:$0xff]
      %v2507 = vld [vmem:[%s2481 + $0xc8] sm:$0xff]
      %v2508 = vld [vmem:[%s2481 + $0xd0] sm:$0xff]
      %v2509 = vld [vmem:[%s2481 + $0xd8] sm:$0xff]
      %v2510 = vld [vmem:[%s2481 + $0xe0] sm:$0xff]
      %v2511 = vld [vmem:[%s2481 + $0xe8] sm:$0xff]
      %v2512 = vld [vmem:[%s2481 + $0xf0] sm:$0xff]
      %v2513 = vld [vmem:[%s2481 + $0xf8] sm:$0xff]
      %v2514 = vld [vmem:[%s2481 + $0x100] sm:$0xff]
      %v2515 = vld [vmem:[%s2481 + $0x108] sm:$0xff]
      %v2516 = vld [vmem:[%s2481 + $0x110] sm:$0xff]
      %v2517 = vld [vmem:[%s2481 + $0x118] sm:$0xff]
      %v2518 = vld [vmem:[%s2481 + $0x120] sm:$0xff]
      %v2519 = vld [vmem:[%s2481 + $0x128] sm:$0xff]
      %v2520 = vld [vmem:[%s2481 + $0x130] sm:$0xff]
      %v2521 = vld [vmem:[%s2481 + $0x138] sm:$0xff]
      %v2522 = vld [vmem:[%s2481 + $0x140] sm:$0xff]
      %v2523 = vld [vmem:[%s2481 + $0x148] sm:$0xff]
      %v2524 = vld [vmem:[%s2481 + $0x150] sm:$0xff]
      %v2525 = vld [vmem:[%s2481 + $0x158] sm:$0xff]
      %v2526 = vld [vmem:[%s2481 + $0x160] sm:$0xff]
      %v2527 = vld [vmem:[%s2481 + $0x168] sm:$0xff]
      %v2528 = vld [vmem:[%s2481 + $0x170] sm:$0xff]
      %v2529 = vld [vmem:[%s2481 + $0x178] sm:$0xff]
      %v2530 = vld [vmem:[%s2481 + $0x180] sm:$0xff]
      %v2531 = vld [vmem:[%s2481 + $0x188] sm:$0xff]
      %v2532 = vld [vmem:[%s2481 + $0x190] sm:$0xff]
      %v2533 = vld [vmem:[%s2481 + $0x198] sm:$0xff]
      %v2534 = vld [vmem:[%s2481 + $0x1a0] sm:$0xff]
      %v2535 = vld [vmem:[%s2481 + $0x1a8] sm:$0xff]
      %v2536 = vld [vmem:[%s2481 + $0x1b0] sm:$0xff]
      %v2537 = vld [vmem:[%s2481 + $0x1b8] sm:$0xff]
      %v2594 = vunpack.c.l.b16 %v2482
      %v2595 = vunpack.c.h.b16 %v2482
      %v2596 = vunpack.c.l.b16 %v2483
      %v2597 = vunpack.c.h.b16 %v2483
      %v2598 = vunpack.c.l.b16 %v2484
      %v2599 = vunpack.c.h.b16 %v2484
      %v2600 = vunpack.c.l.b16 %v2485
      %v2601 = vunpack.c.h.b16 %v2485
      %v2602 = vunpack.c.l.b16 %v2486
      %v2603 = vunpack.c.h.b16 %v2486
      %v2604 = vunpack.c.l.b16 %v2487
      %v2605 = vunpack.c.h.b16 %v2487
      %v2606 = vunpack.c.l.b16 %v2488
      %v2607 = vunpack.c.h.b16 %v2488
      %v2608 = vunpack.c.l.b16 %v2489
      %v2609 = vunpack.c.h.b16 %v2489
      %v2610 = vunpack.c.l.b16 %v2490
      %v2611 = vunpack.c.h.b16 %v2490
      %v2612 = vunpack.c.l.b16 %v2491
      %v2613 = vunpack.c.h.b16 %v2491
      %v2614 = vunpack.c.l.b16 %v2492
      %v2615 = vunpack.c.h.b16 %v2492
      %v2616 = vunpack.c.l.b16 %v2493
      %v2617 = vunpack.c.h.b16 %v2493
      %v2618 = vunpack.c.l.b16 %v2494
      %v2619 = vunpack.c.h.b16 %v2494
      %v2620 = vunpack.c.l.b16 %v2495
      %v2621 = vunpack.c.h.b16 %v2495
      %v2622 = vunpack.c.l.b16 %v2496
      %v2623 = vunpack.c.h.b16 %v2496
      %v2624 = vunpack.c.l.b16 %v2497
      %v2625 = vunpack.c.h.b16 %v2497
      %v2626 = vunpack.c.l.b16 %v2498
      %v2627 = vunpack.c.h.b16 %v2498
      %v2628 = vunpack.c.l.b16 %v2499
      %v2629 = vunpack.c.h.b16 %v2499
      %v2630 = vunpack.c.l.b16 %v2500
      %v2631 = vunpack.c.h.b16 %v2500
      %v2632 = vunpack.c.l.b16 %v2501
      %v2633 = vunpack.c.h.b16 %v2501
      %v2634 = vunpack.c.l.b16 %v2502
      %v2635 = vunpack.c.h.b16 %v2502
      %v2636 = vunpack.c.l.b16 %v2503
      %v2637 = vunpack.c.h.b16 %v2503
      %v2638 = vunpack.c.l.b16 %v2504
      %v2639 = vunpack.c.h.b16 %v2504
      %v2640 = vunpack.c.l.b16 %v2505
      %v2641 = vunpack.c.h.b16 %v2505
      %v2642 = vunpack.c.l.b16 %v2506
      %v2643 = vunpack.c.h.b16 %v2506
      %v2644 = vunpack.c.l.b16 %v2507
      %v2645 = vunpack.c.h.b16 %v2507
      %v2646 = vunpack.c.l.b16 %v2508
      %v2647 = vunpack.c.h.b16 %v2508
      %v2648 = vunpack.c.l.b16 %v2509
      %v2649 = vunpack.c.h.b16 %v2509
      %v2650 = vunpack.c.l.b16 %v2510
      %v2651 = vunpack.c.h.b16 %v2510
      %v2652 = vunpack.c.l.b16 %v2511
      %v2653 = vunpack.c.h.b16 %v2511
      %v2654 = vunpack.c.l.b16 %v2512
      %v2655 = vunpack.c.h.b16 %v2512
      %v2656 = vunpack.c.l.b16 %v2513
      %v2657 = vunpack.c.h.b16 %v2513
      %v2658 = vunpack.c.l.b16 %v2514
      %v2659 = vunpack.c.h.b16 %v2514
      %v2660 = vunpack.c.l.b16 %v2515
      %v2661 = vunpack.c.h.b16 %v2515
      %v2662 = vunpack.c.l.b16 %v2516
      %v2663 = vunpack.c.h.b16 %v2516
      %v2664 = vunpack.c.l.b16 %v2517
      %v2665 = vunpack.c.h.b16 %v2517
      %v2666 = vunpack.c.l.b16 %v2518
      %v2667 = vunpack.c.h.b16 %v2518
      %v2668 = vunpack.c.l.b16 %v2519
      %v2669 = vunpack.c.h.b16 %v2519
      %v2670 = vunpack.c.l.b16 %v2520
      %v2671 = vunpack.c.h.b16 %v2520
      %v2672 = vunpack.c.l.b16 %v2521
      %v2673 = vunpack.c.h.b16 %v2521
      %v2674 = vunpack.c.l.b16 %v2522
      %v2675 = vunpack.c.h.b16 %v2522
      %v2676 = vunpack.c.l.b16 %v2523
      %v2677 = vunpack.c.h.b16 %v2523
      %v2678 = vunpack.c.l.b16 %v2524
      %v2679 = vunpack.c.h.b16 %v2524
      %v2680 = vunpack.c.l.b16 %v2525
      %v2681 = vunpack.c.h.b16 %v2525
      %v2682 = vunpack.c.l.b16 %v2526
      %v2683 = vunpack.c.h.b16 %v2526
      %v2684 = vunpack.c.l.b16 %v2527
      %v2685 = vunpack.c.h.b16 %v2527
      %v2686 = vunpack.c.l.b16 %v2528
      %v2687 = vunpack.c.h.b16 %v2528
      %v2688 = vunpack.c.l.b16 %v2529
      %v2689 = vunpack.c.h.b16 %v2529
      %v2690 = vunpack.c.l.b16 %v2530
      %v2691 = vunpack.c.h.b16 %v2530
      %v2692 = vunpack.c.l.b16 %v2531
      %v2693 = vunpack.c.h.b16 %v2531
      %v2694 = vunpack.c.l.b16 %v2532
      %v2695 = vunpack.c.h.b16 %v2532
      %v2696 = vunpack.c.l.b16 %v2533
      %v2697 = vunpack.c.h.b16 %v2533
      %v2698 = vunpack.c.l.b16 %v2534
      %v2699 = vunpack.c.h.b16 %v2534
      %v2700 = vunpack.c.l.b16 %v2535
      %v2701 = vunpack.c.h.b16 %v2535
      %v2702 = vunpack.c.l.b16 %v2536
      %v2703 = vunpack.c.h.b16 %v2536
      %v2704 = vunpack.c.l.b16 %v2537
      %v2705 = vunpack.c.h.b16 %v2537
      %v2706 = vpack.c.b16 %v2598, %v2594
      %v2707 = vpack.c.b16 %v2599, %v2595
      %v2708 = vpack.c.b16 %v2600, %v2596
      %v2709 = vpack.c.b16 %v2601, %v2597
      %v2710 = vpack.c.b16 %v2606, %v2602
      %v2711 = vpack.c.b16 %v2607, %v2603
      %v2712 = vpack.c.b16 %v2608, %v2604
      %v2713 = vpack.c.b16 %v2609, %v2605
      %v2714 = vpack.c.b16 %v2614, %v2610
      %v2715 = vpack.c.b16 %v2615, %v2611
      %v2716 = vpack.c.b16 %v2616, %v2612
      %v2717 = vpack.c.b16 %v2617, %v2613
      %v2718 = vpack.c.b16 %v2622, %v2618
      %v2719 = vpack.c.b16 %v2623, %v2619
      %v2720 = vpack.c.b16 %v2624, %v2620
      %v2721 = vpack.c.b16 %v2625, %v2621
      %v2722 = vpack.c.b16 %v2630, %v2626
      %v2723 = vpack.c.b16 %v2631, %v2627
      %v2724 = vpack.c.b16 %v2632, %v2628
      %v2725 = vpack.c.b16 %v2633, %v2629
      %v2726 = vpack.c.b16 %v2638, %v2634
      %v2727 = vpack.c.b16 %v2639, %v2635
      %v2728 = vpack.c.b16 %v2640, %v2636
      %v2729 = vpack.c.b16 %v2641, %v2637
      %v2730 = vpack.c.b16 %v2646, %v2642
      %v2731 = vpack.c.b16 %v2647, %v2643
      %v2732 = vpack.c.b16 %v2648, %v2644
      %v2733 = vpack.c.b16 %v2649, %v2645
      %v2734 = vpack.c.b16 %v2654, %v2650
      %v2735 = vpack.c.b16 %v2655, %v2651
      %v2736 = vpack.c.b16 %v2656, %v2652
      %v2737 = vpack.c.b16 %v2657, %v2653
      %v2738 = vpack.c.b16 %v2662, %v2658
      %v2739 = vpack.c.b16 %v2663, %v2659
      %v2740 = vpack.c.b16 %v2664, %v2660
      %v2741 = vpack.c.b16 %v2665, %v2661
      %v2742 = vpack.c.b16 %v2670, %v2666
      %v2743 = vpack.c.b16 %v2671, %v2667
      %v2744 = vpack.c.b16 %v2672, %v2668
      %v2745 = vpack.c.b16 %v2673, %v2669
      %v2746 = vpack.c.b16 %v2678, %v2674
      %v2747 = vpack.c.b16 %v2679, %v2675
      %v2748 = vpack.c.b16 %v2680, %v2676
      %v2749 = vpack.c.b16 %v2681, %v2677
      %v2750 = vpack.c.b16 %v2686, %v2682
      %v2751 = vpack.c.b16 %v2687, %v2683
      %v2752 = vpack.c.b16 %v2688, %v2684
      %v2753 = vpack.c.b16 %v2689, %v2685
      %v2754 = vpack.c.b16 %v2694, %v2690
      %v2755 = vpack.c.b16 %v2695, %v2691
      %v2756 = vpack.c.b16 %v2696, %v2692
      %v2757 = vpack.c.b16 %v2697, %v2693
      %v2758 = vpack.c.b16 %v2702, %v2698
      %v2759 = vpack.c.b16 %v2703, %v2699
      %v2760 = vpack.c.b16 %v2704, %v2700
      %v2761 = vpack.c.b16 %v2705, %v2701
      %v2819 = vsel %vm986, %v2480, 0
      %2821 = vmatprep.subr.bf16.mxu0 %v2707
      %2822 = vmatpush1.bf16.msra.mxu0 %v2706
      %2823 = vmatprep.subr.bf16.mxu0 %v2711
      %2824 = vmatpush1.bf16.msra.mxu0 %v2710
      %2825 = vmatprep.subr.bf16.mxu0 %v2715
      %2826 = vmatpush1.bf16.msra.mxu0 %v2714
      %2827 = vmatprep.subr.bf16.mxu0 %v2719
      %2828 = vmatpush1.bf16.msra.mxu0 %v2718
      %2829 = vmatprep.subr.bf16.mxu0 %v2723
      %2830 = vmatpush1.bf16.msra.mxu0 %v2722
      %2831 = vmatprep.subr.bf16.mxu0 %v2727
      %2832 = vmatpush1.bf16.msra.mxu0 %v2726
      %2833 = vmatprep.subr.bf16.mxu0 %v2731
      %2834 = vmatpush1.bf16.msra.mxu0 %v2730
      %2835 = vmatprep.subr.bf16.mxu0 %v2735
      %2836 = vmatpush1.bf16.msra.mxu0 %v2734
      %2837 = vmatprep.subr.bf16.mxu0 %v2739
      %2838 = vmatpush1.bf16.msra.mxu0 %v2738
      %2839 = vmatprep.subr.bf16.mxu0 %v2743
      %2840 = vmatpush1.bf16.msra.mxu0 %v2742
      %2841 = vmatprep.subr.bf16.mxu0 %v2747
      %2842 = vmatpush1.bf16.msra.mxu0 %v2746
      %2843 = vmatprep.subr.bf16.mxu0 %v2751
      %2844 = vmatpush1.bf16.msra.mxu0 %v2750
      %2845 = vmatprep.subr.bf16.mxu0 %v2755
      %2846 = vmatpush1.bf16.msra.mxu0 %v2754
      %2847 = vmatprep.subr.bf16.mxu0 %v2759
      %2848 = vmatpush1.bf16.msra.mxu0 %v2758
      %2849 = vmatprep.subr.bf16.mxu0 0
      %2850 = vmatpush1.bf16.msra.mxu0 0
      %2851 = vmatprep.subr.bf16.mxu0 0
      %2852 = vmatpush1.bf16.msra.mxu0 0
      %2853 = vmatprep.mubr.bf16.mxu0 %v2819
      %2854 = vmatmul.mubr.bf16.gmra.mrb[0].mxu0 %v2479
      %v2855 = vpop.f32.mrb[0].mxu0
      %v2856 = vadd.f32 0.0, %v2855
      %v2857 = vpop.f32.mrb[0].mxu0
      %v2858 = vadd.f32 0.0, %v2857
      %v2859 = vpop.f32.mrb[0].mxu0
      %v2860 = vadd.f32 0.0, %v2859
      %v2861 = vpop.f32.mrb[0].mxu0
      %v2862 = vadd.f32 0.0, %v2861
      %2863 = vdwg.mxu0
      %2864 = vmatprep.subr.bf16.mxu0 %v2709
      %2865 = vmatpush1.bf16.msra.mxu0 %v2708
      %2866 = vmatprep.subr.bf16.mxu0 %v2713
      %2867 = vmatpush1.bf16.msra.mxu0 %v2712
      %2868 = vmatprep.subr.bf16.mxu0 %v2717
      %2869 = vmatpush1.bf16.msra.mxu0 %v2716
      %2870 = vmatprep.subr.bf16.mxu0 %v2721
      %2871 = vmatpush1.bf16.msra.mxu0 %v2720
      %2872 = vmatprep.subr.bf16.mxu0 %v2725
      %2873 = vmatpush1.bf16.msra.mxu0 %v2724
      %2874 = vmatprep.subr.bf16.mxu0 %v2729
      %2875 = vmatpush1.bf16.msra.mxu0 %v2728
      %2876 = vmatprep.subr.bf16.mxu0 %v2733
      %2877 = vmatpush1.bf16.msra.mxu0 %v2732
      %2878 = vmatprep.subr.bf16.mxu0 %v2737
      %2879 = vmatpush1.bf16.msra.mxu0 %v2736
      %2880 = vmatprep.subr.bf16.mxu0 %v2741
      %2881 = vmatpush1.bf16.msra.mxu0 %v2740
      %2882 = vmatprep.subr.bf16.mxu0 %v2745
      %2883 = vmatpush1.bf16.msra.mxu0 %v2744
      %2884 = vmatprep.subr.bf16.mxu0 %v2749
      %2885 = vmatpush1.bf16.msra.mxu0 %v2748
      %2886 = vmatprep.subr.bf16.mxu0 %v2753
      %2887 = vmatpush1.bf16.msra.mxu0 %v2752
      %2888 = vmatprep.subr.bf16.mxu0 %v2757
      %2889 = vmatpush1.bf16.msra.mxu0 %v2756
      %2890 = vmatprep.subr.bf16.mxu0 %v2761
      %2891 = vmatpush1.bf16.msra.mxu0 %v2760
      %2892 = vmatprep.subr.bf16.mxu0 0
      %2893 = vmatpush1.bf16.msra.mxu0 0
      %2894 = vmatprep.subr.bf16.mxu0 0
      %2895 = vmatpush1.bf16.msra.mxu0 0
      %2896 = vmatprep.mubr.bf16.mxu0 %v2819
      %2897 = vmatmul.mubr.bf16.gmra.mrb[0].mxu0 %v2479
      %v2898 = vpop.f32.mrb[0].mxu0
      %v2899 = vadd.f32 0.0, %v2898
      %v2900 = vpop.f32.mrb[0].mxu0
      %v2901 = vadd.f32 0.0, %v2900
      %v2902 = vpop.f32.mrb[0].mxu0
      %v2903 = vadd.f32 0.0, %v2902
      %v2904 = vpop.f32.mrb[0].mxu0
      %v2905 = vadd.f32 0.0, %v2904
      %2906 = vdwg.mxu0
      %v2907 = vadd.f32 %v2417, %v2856
      %v2908 = vadd.f32 %v2418, %v2858
      %v2909 = vadd.f32 %v2419, %v2899
      %v2910 = vadd.f32 %v2420, %v2901
      %v2911 = vadd.f32 %v2421, %v2860
      %v2912 = vadd.f32 %v2422, %v2862
      %v2913 = vadd.f32 %v2423, %v2903
      %v2914 = vadd.f32 %v2424, %v2905
      %s2915 = scalar_lea.vmem %s1, 40
      %v2916 = vld [vmem:[%s2915] sm:$0xf]
      %v2917 = vld [vmem:[%s2915 + $0x4] sm:$0x7]
      %v2920 = vunpack.c.l.b16 %v2916
      %v2921 = vunpack.c.l.b16 %v2917
      %v2922 = vpack.c.b16 %v2921, %v2920
      %v2924 = vsel %vm481, %v2922, 0
      %2926 = vmatprep.subr.bf16.mxu0 %v467
      %2927 = vmatpush1.bf16.msra.mxu0 %v466
      %2928 = vmatprep.subr.bf16.mxu0 %v469
      %2929 = vmatpush1.bf16.msra.mxu0 %v468
      %2930 = vmatprep.subr.bf16.mxu0 %v471
      %2931 = vmatpush1.bf16.msra.mxu0 %v470
      %2932 = vmatprep.subr.bf16.mxu0 %v490
      %2933 = vmatpush1.bf16.msra.mxu0 %v487
      %2934 = vmatprep.subr.bf16.mxu0 0
      %2935 = vmatpush1.bf16.msra.mxu0 0
      %2936 = vmatprep.subr.bf16.mxu0 0
      %2937 = vmatpush1.bf16.msra.mxu0 0
      %2938 = vmatprep.subr.bf16.mxu0 0
      %2939 = vmatpush1.bf16.msra.mxu0 0
      %2940 = vmatprep.subr.bf16.mxu0 0
      %2941 = vmatpush1.bf16.msra.mxu0 0
      %2942 = vmatprep.subr.bf16.mxu0 0
      %2943 = vmatpush1.bf16.msra.mxu0 0
      %2944 = vmatprep.subr.bf16.mxu0 0
      %2945 = vmatpush1.bf16.msra.mxu0 0
      %2946 = vmatprep.subr.bf16.mxu0 0
      %2947 = vmatpush1.bf16.msra.mxu0 0
      %2948 = vmatprep.subr.bf16.mxu0 0
      %2949 = vmatpush1.bf16.msra.mxu0 0
      %2950 = vmatprep.subr.bf16.mxu0 0
      %2951 = vmatpush1.bf16.msra.mxu0 0
      %2952 = vmatprep.subr.bf16.mxu0 0
      %2953 = vmatpush1.bf16.msra.mxu0 0
      %2954 = vmatprep.subr.bf16.mxu0 0
      %2955 = vmatpush1.bf16.msra.mxu0 0
      %2956 = vmatprep.subr.bf16.mxu0 0
      %2957 = vmatpush1.bf16.msra.mxu0 0
      %2958 = vmatprep.mubr.bf16.mxu0 0
      %2959 = vmatmul.mubr.bf16.gmra.mrb[0].mxu0 %v2924
      %v2960 = vpop.f32.mrb[0].mxu0
      %v2961 = vadd.f32 0.0, %v2960
      %v2962 = vpop.f32.mrb[0].mxu0
      %v2963 = vadd.f32 0.0, %v2962
      %v2964 = vpop.f32.mrb[0].mxu0
      %v2965 = vadd.f32 0.0, %v2964
      %v2966 = vpop.f32.mrb[0].mxu0
      %v2967 = vadd.f32 0.0, %v2966
      %2968 = vdwg.mxu0
      %v2969 = vpack.c.bf16 %v2965, %v2961
      %v2970 = vpack.c.bf16 %v2967, %v2963
      %s2971 = scalar_lea.vmem %s2, 2240
      %v2972 = vld [vmem:[%s2971] sm:$0xff]
      %v2973 = vld [vmem:[%s2971 + $0x8] sm:$0xff]
      %v2974 = vld [vmem:[%s2971 + $0x10] sm:$0xff]
      %v2975 = vld [vmem:[%s2971 + $0x18] sm:$0xff]
      %v2976 = vld [vmem:[%s2971 + $0x20] sm:$0xff]
      %v2977 = vld [vmem:[%s2971 + $0x28] sm:$0xff]
      %v2978 = vld [vmem:[%s2971 + $0x30] sm:$0xff]
      %v2979 = vld [vmem:[%s2971 + $0x38] sm:$0xff]
      %v2980 = vld [vmem:[%s2971 + $0x40] sm:$0xff]
      %v2981 = vld [vmem:[%s2971 + $0x48] sm:$0xff]
      %v2982 = vld [vmem:[%s2971 + $0x50] sm:$0xff]
      %v2983 = vld [vmem:[%s2971 + $0x58] sm:$0xff]
      %v2984 = vld [vmem:[%s2971 + $0x60] sm:$0xff]
      %v2985 = vld [vmem:[%s2971 + $0x68] sm:$0xff]
      %v2986 = vld [vmem:[%s2971 + $0x70] sm:$0xff]
      %v2987 = vld [vmem:[%s2971 + $0x78] sm:$0xff]
      %v2988 = vld [vmem:[%s2971 + $0x80] sm:$0xff]
      %v2989 = vld [vmem:[%s2971 + $0x88] sm:$0xff]
      %v2990 = vld [vmem:[%s2971 + $0x90] sm:$0xff]
      %v2991 = vld [vmem:[%s2971 + $0x98] sm:$0xff]
      %v2992 = vld [vmem:[%s2971 + $0xa0] sm:$0xff]
      %v2993 = vld [vmem:[%s2971 + $0xa8] sm:$0xff]
      %v2994 = vld [vmem:[%s2971 + $0xb0] sm:$0xff]
      %v2995 = vld [vmem:[%s2971 + $0xb8] sm:$0xff]
      %v2996 = vld [vmem:[%s2971 + $0xc0] sm:$0xff]
      %v2997 = vld [vmem:[%s2971 + $0xc8] sm:$0xff]
      %v2998 = vld [vmem:[%s2971 + $0xd0] sm:$0xff]
      %v2999 = vld [vmem:[%s2971 + $0xd8] sm:$0xff]
      %v3000 = vld [vmem:[%s2971 + $0xe0] sm:$0xff]
      %v3001 = vld [vmem:[%s2971 + $0xe8] sm:$0xff]
      %v3002 = vld [vmem:[%s2971 + $0xf0] sm:$0xff]
      %v3003 = vld [vmem:[%s2971 + $0xf8] sm:$0xff]
      %v3004 = vld [vmem:[%s2971 + $0x100] sm:$0xff]
      %v3005 = vld [vmem:[%s2971 + $0x108] sm:$0xff]
      %v3006 = vld [vmem:[%s2971 + $0x110] sm:$0xff]
      %v3007 = vld [vmem:[%s2971 + $0x118] sm:$0xff]
      %v3008 = vld [vmem:[%s2971 + $0x120] sm:$0xff]
      %v3009 = vld [vmem:[%s2971 + $0x128] sm:$0xff]
      %v3010 = vld [vmem:[%s2971 + $0x130] sm:$0xff]
      %v3011 = vld [vmem:[%s2971 + $0x138] sm:$0xff]
      %v3012 = vld [vmem:[%s2971 + $0x140] sm:$0xff]
      %v3013 = vld [vmem:[%s2971 + $0x148] sm:$0xff]
      %v3014 = vld [vmem:[%s2971 + $0x150] sm:$0xff]
      %v3015 = vld [vmem:[%s2971 + $0x158] sm:$0xff]
      %v3016 = vld [vmem:[%s2971 + $0x160] sm:$0xff]
      %v3017 = vld [vmem:[%s2971 + $0x168] sm:$0xff]
      %v3018 = vld [vmem:[%s2971 + $0x170] sm:$0xff]
      %v3019 = vld [vmem:[%s2971 + $0x178] sm:$0xff]
      %v3020 = vld [vmem:[%s2971 + $0x180] sm:$0xff]
      %v3021 = vld [vmem:[%s2971 + $0x188] sm:$0xff]
      %v3022 = vld [vmem:[%s2971 + $0x190] sm:$0xff]
      %v3023 = vld [vmem:[%s2971 + $0x198] sm:$0xff]
      %v3024 = vld [vmem:[%s2971 + $0x1a0] sm:$0xff]
      %v3025 = vld [vmem:[%s2971 + $0x1a8] sm:$0xff]
      %v3026 = vld [vmem:[%s2971 + $0x1b0] sm:$0xff]
      %v3027 = vld [vmem:[%s2971 + $0x1b8] sm:$0xff]
      %v3084 = vunpack.c.l.b16 %v2972
      %v3085 = vunpack.c.h.b16 %v2972
      %v3086 = vunpack.c.l.b16 %v2973
      %v3087 = vunpack.c.h.b16 %v2973
      %v3088 = vunpack.c.l.b16 %v2974
      %v3089 = vunpack.c.h.b16 %v2974
      %v3090 = vunpack.c.l.b16 %v2975
      %v3091 = vunpack.c.h.b16 %v2975
      %v3092 = vunpack.c.l.b16 %v2976
      %v3093 = vunpack.c.h.b16 %v2976
      %v3094 = vunpack.c.l.b16 %v2977
      %v3095 = vunpack.c.h.b16 %v2977
      %v3096 = vunpack.c.l.b16 %v2978
      %v3097 = vunpack.c.h.b16 %v2978
      %v3098 = vunpack.c.l.b16 %v2979
      %v3099 = vunpack.c.h.b16 %v2979
      %v3100 = vunpack.c.l.b16 %v2980
      %v3101 = vunpack.c.h.b16 %v2980
      %v3102 = vunpack.c.l.b16 %v2981
      %v3103 = vunpack.c.h.b16 %v2981
      %v3104 = vunpack.c.l.b16 %v2982
      %v3105 = vunpack.c.h.b16 %v2982
      %v3106 = vunpack.c.l.b16 %v2983
      %v3107 = vunpack.c.h.b16 %v2983
      %v3108 = vunpack.c.l.b16 %v2984
      %v3109 = vunpack.c.h.b16 %v2984
      %v3110 = vunpack.c.l.b16 %v2985
      %v3111 = vunpack.c.h.b16 %v2985
      %v3112 = vunpack.c.l.b16 %v2986
      %v3113 = vunpack.c.h.b16 %v2986
      %v3114 = vunpack.c.l.b16 %v2987
      %v3115 = vunpack.c.h.b16 %v2987
      %v3116 = vunpack.c.l.b16 %v2988
      %v3117 = vunpack.c.h.b16 %v2988
      %v3118 = vunpack.c.l.b16 %v2989
      %v3119 = vunpack.c.h.b16 %v2989
      %v3120 = vunpack.c.l.b16 %v2990
      %v3121 = vunpack.c.h.b16 %v2990
      %v3122 = vunpack.c.l.b16 %v2991
      %v3123 = vunpack.c.h.b16 %v2991
      %v3124 = vunpack.c.l.b16 %v2992
      %v3125 = vunpack.c.h.b16 %v2992
      %v3126 = vunpack.c.l.b16 %v2993
      %v3127 = vunpack.c.h.b16 %v2993
      %v3128 = vunpack.c.l.b16 %v2994
      %v3129 = vunpack.c.h.b16 %v2994
      %v3130 = vunpack.c.l.b16 %v2995
      %v3131 = vunpack.c.h.b16 %v2995
      %v3132 = vunpack.c.l.b16 %v2996
      %v3133 = vunpack.c.h.b16 %v2996
      %v3134 = vunpack.c.l.b16 %v2997
      %v3135 = vunpack.c.h.b16 %v2997
      %v3136 = vunpack.c.l.b16 %v2998
      %v3137 = vunpack.c.h.b16 %v2998
      %v3138 = vunpack.c.l.b16 %v2999
      %v3139 = vunpack.c.h.b16 %v2999
      %v3140 = vunpack.c.l.b16 %v3000
      %v3141 = vunpack.c.h.b16 %v3000
      %v3142 = vunpack.c.l.b16 %v3001
      %v3143 = vunpack.c.h.b16 %v3001
      %v3144 = vunpack.c.l.b16 %v3002
      %v3145 = vunpack.c.h.b16 %v3002
      %v3146 = vunpack.c.l.b16 %v3003
      %v3147 = vunpack.c.h.b16 %v3003
      %v3148 = vunpack.c.l.b16 %v3004
      %v3149 = vunpack.c.h.b16 %v3004
      %v3150 = vunpack.c.l.b16 %v3005
      %v3151 = vunpack.c.h.b16 %v3005
      %v3152 = vunpack.c.l.b16 %v3006
      %v3153 = vunpack.c.h.b16 %v3006
      %v3154 = vunpack.c.l.b16 %v3007
      %v3155 = vunpack.c.h.b16 %v3007
      %v3156 = vunpack.c.l.b16 %v3008
      %v3157 = vunpack.c.h.b16 %v3008
      %v3158 = vunpack.c.l.b16 %v3009
      %v3159 = vunpack.c.h.b16 %v3009
      %v3160 = vunpack.c.l.b16 %v3010
      %v3161 = vunpack.c.h.b16 %v3010
      %v3162 = vunpack.c.l.b16 %v3011
      %v3163 = vunpack.c.h.b16 %v3011
      %v3164 = vunpack.c.l.b16 %v3012
      %v3165 = vunpack.c.h.b16 %v3012
      %v3166 = vunpack.c.l.b16 %v3013
      %v3167 = vunpack.c.h.b16 %v3013
      %v3168 = vunpack.c.l.b16 %v3014
      %v3169 = vunpack.c.h.b16 %v3014
      %v3170 = vunpack.c.l.b16 %v3015
      %v3171 = vunpack.c.h.b16 %v3015
      %v3172 = vunpack.c.l.b16 %v3016
      %v3173 = vunpack.c.h.b16 %v3016
      %v3174 = vunpack.c.l.b16 %v3017
      %v3175 = vunpack.c.h.b16 %v3017
      %v3176 = vunpack.c.l.b16 %v3018
      %v3177 = vunpack.c.h.b16 %v3018
      %v3178 = vunpack.c.l.b16 %v3019
      %v3179 = vunpack.c.h.b16 %v3019
      %v3180 = vunpack.c.l.b16 %v3020
      %v3181 = vunpack.c.h.b16 %v3020
      %v3182 = vunpack.c.l.b16 %v3021
      %v3183 = vunpack.c.h.b16 %v3021
      %v3184 = vunpack.c.l.b16 %v3022
      %v3185 = vunpack.c.h.b16 %v3022
      %v3186 = vunpack.c.l.b16 %v3023
      %v3187 = vunpack.c.h.b16 %v3023
      %v3188 = vunpack.c.l.b16 %v3024
      %v3189 = vunpack.c.h.b16 %v3024
      %v3190 = vunpack.c.l.b16 %v3025
      %v3191 = vunpack.c.h.b16 %v3025
      %v3192 = vunpack.c.l.b16 %v3026
      %v3193 = vunpack.c.h.b16 %v3026
      %v3194 = vunpack.c.l.b16 %v3027
      %v3195 = vunpack.c.h.b16 %v3027
      %v3196 = vpack.c.b16 %v3088, %v3084
      %v3197 = vpack.c.b16 %v3089, %v3085
      %v3198 = vpack.c.b16 %v3090, %v3086
      %v3199 = vpack.c.b16 %v3091, %v3087
      %v3200 = vpack.c.b16 %v3096, %v3092
      %v3201 = vpack.c.b16 %v3097, %v3093
      %v3202 = vpack.c.b16 %v3098, %v3094
      %v3203 = vpack.c.b16 %v3099, %v3095
      %v3204 = vpack.c.b16 %v3104, %v3100
      %v3205 = vpack.c.b16 %v3105, %v3101
      %v3206 = vpack.c.b16 %v3106, %v3102
      %v3207 = vpack.c.b16 %v3107, %v3103
      %v3208 = vpack.c.b16 %v3112, %v3108
      %v3209 = vpack.c.b16 %v3113, %v3109
      %v3210 = vpack.c.b16 %v3114, %v3110
      %v3211 = vpack.c.b16 %v3115, %v3111
      %v3212 = vpack.c.b16 %v3120, %v3116
      %v3213 = vpack.c.b16 %v3121, %v3117
      %v3214 = vpack.c.b16 %v3122, %v3118
      %v3215 = vpack.c.b16 %v3123, %v3119
      %v3216 = vpack.c.b16 %v3128, %v3124
      %v3217 = vpack.c.b16 %v3129, %v3125
      %v3218 = vpack.c.b16 %v3130, %v3126
      %v3219 = vpack.c.b16 %v3131, %v3127
      %v3220 = vpack.c.b16 %v3136, %v3132
      %v3221 = vpack.c.b16 %v3137, %v3133
      %v3222 = vpack.c.b16 %v3138, %v3134
      %v3223 = vpack.c.b16 %v3139, %v3135
      %v3224 = vpack.c.b16 %v3144, %v3140
      %v3225 = vpack.c.b16 %v3145, %v3141
      %v3226 = vpack.c.b16 %v3146, %v3142
      %v3227 = vpack.c.b16 %v3147, %v3143
      %v3228 = vpack.c.b16 %v3152, %v3148
      %v3229 = vpack.c.b16 %v3153, %v3149
      %v3230 = vpack.c.b16 %v3154, %v3150
      %v3231 = vpack.c.b16 %v3155, %v3151
      %v3232 = vpack.c.b16 %v3160, %v3156
      %v3233 = vpack.c.b16 %v3161, %v3157
      %v3234 = vpack.c.b16 %v3162, %v3158
      %v3235 = vpack.c.b16 %v3163, %v3159
      %v3236 = vpack.c.b16 %v3168, %v3164
      %v3237 = vpack.c.b16 %v3169, %v3165
      %v3238 = vpack.c.b16 %v3170, %v3166
      %v3239 = vpack.c.b16 %v3171, %v3167
      %v3240 = vpack.c.b16 %v3176, %v3172
      %v3241 = vpack.c.b16 %v3177, %v3173
      %v3242 = vpack.c.b16 %v3178, %v3174
      %v3243 = vpack.c.b16 %v3179, %v3175
      %v3244 = vpack.c.b16 %v3184, %v3180
      %v3245 = vpack.c.b16 %v3185, %v3181
      %v3246 = vpack.c.b16 %v3186, %v3182
      %v3247 = vpack.c.b16 %v3187, %v3183
      %v3248 = vpack.c.b16 %v3192, %v3188
      %v3249 = vpack.c.b16 %v3193, %v3189
      %v3250 = vpack.c.b16 %v3194, %v3190
      %v3251 = vpack.c.b16 %v3195, %v3191
      %v3309 = vsel %vm986, %v2970, 0
      %3311 = vmatprep.subr.bf16.mxu0 %v3197
      %3312 = vmatpush1.bf16.msra.mxu0 %v3196
      %3313 = vmatprep.subr.bf16.mxu0 %v3201
      %3314 = vmatpush1.bf16.msra.mxu0 %v3200
      %3315 = vmatprep.subr.bf16.mxu0 %v3205
      %3316 = vmatpush1.bf16.msra.mxu0 %v3204
      %3317 = vmatprep.subr.bf16.mxu0 %v3209
      %3318 = vmatpush1.bf16.msra.mxu0 %v3208
      %3319 = vmatprep.subr.bf16.mxu0 %v3213
      %3320 = vmatpush1.bf16.msra.mxu0 %v3212
      %3321 = vmatprep.subr.bf16.mxu0 %v3217
      %3322 = vmatpush1.bf16.msra.mxu0 %v3216
      %3323 = vmatprep.subr.bf16.mxu0 %v3221
      %3324 = vmatpush1.bf16.msra.mxu0 %v3220
      %3325 = vmatprep.subr.bf16.mxu0 %v3225
      %3326 = vmatpush1.bf16.msra.mxu0 %v3224
      %3327 = vmatprep.subr.bf16.mxu0 %v3229
      %3328 = vmatpush1.bf16.msra.mxu0 %v3228
      %3329 = vmatprep.subr.bf16.mxu0 %v3233
      %3330 = vmatpush1.bf16.msra.mxu0 %v3232
      %3331 = vmatprep.subr.bf16.mxu0 %v3237
      %3332 = vmatpush1.bf16.msra.mxu0 %v3236
      %3333 = vmatprep.subr.bf16.mxu0 %v3241
      %3334 = vmatpush1.bf16.msra.mxu0 %v3240
      %3335 = vmatprep.subr.bf16.mxu0 %v3245
      %3336 = vmatpush1.bf16.msra.mxu0 %v3244
      %3337 = vmatprep.subr.bf16.mxu0 %v3249
      %3338 = vmatpush1.bf16.msra.mxu0 %v3248
      %3339 = vmatprep.subr.bf16.mxu0 0
      %3340 = vmatpush1.bf16.msra.mxu0 0
      %3341 = vmatprep.subr.bf16.mxu0 0
      %3342 = vmatpush1.bf16.msra.mxu0 0
      %3343 = vmatprep.mubr.bf16.mxu0 %v3309
      %3344 = vmatmul.mubr.bf16.gmra.mrb[0].mxu0 %v2969
      %v3345 = vpop.f32.mrb[0].mxu0
      %v3346 = vadd.f32 0.0, %v3345
      %v3347 = vpop.f32.mrb[0].mxu0
      %v3348 = vadd.f32 0.0, %v3347
      %v3349 = vpop.f32.mrb[0].mxu0
      %v3350 = vadd.f32 0.0, %v3349
      %v3351 = vpop.f32.mrb[0].mxu0
      %v3352 = vadd.f32 0.0, %v3351
      %3353 = vdwg.mxu0
      %3354 = vmatprep.subr.bf16.mxu0 %v3199
      %3355 = vmatpush1.bf16.msra.mxu0 %v3198
      %3356 = vmatprep.subr.bf16.mxu0 %v3203
      %3357 = vmatpush1.bf16.msra.mxu0 %v3202
      %3358 = vmatprep.subr.bf16.mxu0 %v3207
      %3359 = vmatpush1.bf16.msra.mxu0 %v3206
      %3360 = vmatprep.subr.bf16.mxu0 %v3211
      %3361 = vmatpush1.bf16.msra.mxu0 %v3210
      %3362 = vmatprep.subr.bf16.mxu0 %v3215
      %3363 = vmatpush1.bf16.msra.mxu0 %v3214
      %3364 = vmatprep.subr.bf16.mxu0 %v3219
      %3365 = vmatpush1.bf16.msra.mxu0 %v3218
      %3366 = vmatprep.subr.bf16.mxu0 %v3223
      %3367 = vmatpush1.bf16.msra.mxu0 %v3222
      %3368 = vmatprep.subr.bf16.mxu0 %v3227
      %3369 = vmatpush1.bf16.msra.mxu0 %v3226
      %3370 = vmatprep.subr.bf16.mxu0 %v3231
      %3371 = vmatpush1.bf16.msra.mxu0 %v3230
      %3372 = vmatprep.subr.bf16.mxu0 %v3235
      %3373 = vmatpush1.bf16.msra.mxu0 %v3234
      %3374 = vmatprep.subr.bf16.mxu0 %v3239
      %3375 = vmatpush1.bf16.msra.mxu0 %v3238
      %3376 = vmatprep.subr.bf16.mxu0 %v3243
      %3377 = vmatpush1.bf16.msra.mxu0 %v3242
      %3378 = vmatprep.subr.bf16.mxu0 %v3247
      %3379 = vmatpush1.bf16.msra.mxu0 %v3246
      %3380 = vmatprep.subr.bf16.mxu0 %v3251
      %3381 = vmatpush1.bf16.msra.mxu0 %v3250
      %3382 = vmatprep.subr.bf16.mxu0 0
      %3383 = vmatpush1.bf16.msra.mxu0 0
      %3384 = vmatprep.subr.bf16.mxu0 0
      %3385 = vmatpush1.bf16.msra.mxu0 0
      %3386 = vmatprep.mubr.bf16.mxu0 %v3309
      %3387 = vmatmul.mubr.bf16.gmra.mrb[0].mxu0 %v2969
      %v3388 = vpop.f32.mrb[0].mxu0
      %v3389 = vadd.f32 0.0, %v3388
      %v3390 = vpop.f32.mrb[0].mxu0
      %v3391 = vadd.f32 0.0, %v3390
      %v3392 = vpop.f32.mrb[0].mxu0
      %v3393 = vadd.f32 0.0, %v3392
      %v3394 = vpop.f32.mrb[0].mxu0
      %v3395 = vadd.f32 0.0, %v3394
      %3396 = vdwg.mxu0
      %v3397 = vadd.f32 %v2907, %v3346
      %v3398 = vadd.f32 %v2908, %v3348
      %v3399 = vadd.f32 %v2909, %v3389
      %v3400 = vadd.f32 %v2910, %v3391
      %v3401 = vadd.f32 %v2911, %v3350
      %v3402 = vadd.f32 %v2912, %v3352
      %v3403 = vadd.f32 %v2913, %v3393
      %v3404 = vadd.f32 %v2914, %v3395
      %s3405 = scalar_lea.vmem %s1, 48
      %v3406 = vld [vmem:[%s3405] sm:$0xf]
      %v3407 = vld [vmem:[%s3405 + $0x4] sm:$0x7]
      %v3410 = vunpack.c.l.b16 %v3406
      %v3411 = vunpack.c.l.b16 %v3407
      %v3412 = vpack.c.b16 %v3411, %v3410
      %v3414 = vsel %vm481, %v3412, 0
      %3416 = vmatprep.subr.bf16.mxu0 %v467
      %3417 = vmatpush1.bf16.msra.mxu0 %v466
      %3418 = vmatprep.subr.bf16.mxu0 %v469
      %3419 = vmatpush1.bf16.msra.mxu0 %v468
      %3420 = vmatprep.subr.bf16.mxu0 %v471
      %3421 = vmatpush1.bf16.msra.mxu0 %v470
      %3422 = vmatprep.subr.bf16.mxu0 %v490
      %3423 = vmatpush1.bf16.msra.mxu0 %v487
      %3424 = vmatprep.subr.bf16.mxu0 0
      %3425 = vmatpush1.bf16.msra.mxu0 0
      %3426 = vmatprep.subr.bf16.mxu0 0
      %3427 = vmatpush1.bf16.msra.mxu0 0
      %3428 = vmatprep.subr.bf16.mxu0 0
      %3429 = vmatpush1.bf16.msra.mxu0 0
      %3430 = vmatprep.subr.bf16.mxu0 0
      %3431 = vmatpush1.bf16.msra.mxu0 0
      %3432 = vmatprep.subr.bf16.mxu0 0
      %3433 = vmatpush1.bf16.msra.mxu0 0
      %3434 = vmatprep.subr.bf16.mxu0 0
      %3435 = vmatpush1.bf16.msra.mxu0 0
      %3436 = vmatprep.subr.bf16.mxu0 0
      %3437 = vmatpush1.bf16.msra.mxu0 0
      %3438 = vmatprep.subr.bf16.mxu0 0
      %3439 = vmatpush1.bf16.msra.mxu0 0
      %3440 = vmatprep.subr.bf16.mxu0 0
      %3441 = vmatpush1.bf16.msra.mxu0 0
      %3442 = vmatprep.subr.bf16.mxu0 0
      %3443 = vmatpush1.bf16.msra.mxu0 0
      %3444 = vmatprep.subr.bf16.mxu0 0
      %3445 = vmatpush1.bf16.msra.mxu0 0
      %3446 = vmatprep.subr.bf16.mxu0 0
      %3447 = vmatpush1.bf16.msra.mxu0 0
      %3448 = vmatprep.mubr.bf16.mxu0 0
      %3449 = vmatmul.mubr.bf16.gmra.mrb[0].mxu0 %v3414
      %v3450 = vpop.f32.mrb[0].mxu0
      %v3451 = vadd.f32 0.0, %v3450
      %v3452 = vpop.f32.mrb[0].mxu0
      %v3453 = vadd.f32 0.0, %v3452
      %v3454 = vpop.f32.mrb[0].mxu0
      %v3455 = vadd.f32 0.0, %v3454
      %v3456 = vpop.f32.mrb[0].mxu0
      %v3457 = vadd.f32 0.0, %v3456
      %3458 = vdwg.mxu0
      %v3459 = vpack.c.bf16 %v3455, %v3451
      %v3460 = vpack.c.bf16 %v3457, %v3453
      %s3461 = scalar_lea.vmem %s2, 2688
      %v3462 = vld [vmem:[%s3461] sm:$0xff]
      %v3463 = vld [vmem:[%s3461 + $0x8] sm:$0xff]
      %v3464 = vld [vmem:[%s3461 + $0x10] sm:$0xff]
      %v3465 = vld [vmem:[%s3461 + $0x18] sm:$0xff]
      %v3466 = vld [vmem:[%s3461 + $0x20] sm:$0xff]
      %v3467 = vld [vmem:[%s3461 + $0x28] sm:$0xff]
      %v3468 = vld [vmem:[%s3461 + $0x30] sm:$0xff]
      %v3469 = vld [vmem:[%s3461 + $0x38] sm:$0xff]
      %v3470 = vld [vmem:[%s3461 + $0x40] sm:$0xff]
      %v3471 = vld [vmem:[%s3461 + $0x48] sm:$0xff]
      %v3472 = vld [vmem:[%s3461 + $0x50] sm:$0xff]
      %v3473 = vld [vmem:[%s3461 + $0x58] sm:$0xff]
      %v3474 = vld [vmem:[%s3461 + $0x60] sm:$0xff]
      %v3475 = vld [vmem:[%s3461 + $0x68] sm:$0xff]
      %v3476 = vld [vmem:[%s3461 + $0x70] sm:$0xff]
      %v3477 = vld [vmem:[%s3461 + $0x78] sm:$0xff]
      %v3478 = vld [vmem:[%s3461 + $0x80] sm:$0xff]
      %v3479 = vld [vmem:[%s3461 + $0x88] sm:$0xff]
      %v3480 = vld [vmem:[%s3461 + $0x90] sm:$0xff]
      %v3481 = vld [vmem:[%s3461 + $0x98] sm:$0xff]
      %v3482 = vld [vmem:[%s3461 + $0xa0] sm:$0xff]
      %v3483 = vld [vmem:[%s3461 + $0xa8] sm:$0xff]
      %v3484 = vld [vmem:[%s3461 + $0xb0] sm:$0xff]
      %v3485 = vld [vmem:[%s3461 + $0xb8] sm:$0xff]
      %v3486 = vld [vmem:[%s3461 + $0xc0] sm:$0xff]
      %v3487 = vld [vmem:[%s3461 + $0xc8] sm:$0xff]
      %v3488 = vld [vmem:[%s3461 + $0xd0] sm:$0xff]
      %v3489 = vld [vmem:[%s3461 + $0xd8] sm:$0xff]
      %v3490 = vld [vmem:[%s3461 + $0xe0] sm:$0xff]
      %v3491 = vld [vmem:[%s3461 + $0xe8] sm:$0xff]
      %v3492 = vld [vmem:[%s3461 + $0xf0] sm:$0xff]
      %v3493 = vld [vmem:[%s3461 + $0xf8] sm:$0xff]
      %v3494 = vld [vmem:[%s3461 + $0x100] sm:$0xff]
      %v3495 = vld [vmem:[%s3461 + $0x108] sm:$0xff]
      %v3496 = vld [vmem:[%s3461 + $0x110] sm:$0xff]
      %v3497 = vld [vmem:[%s3461 + $0x118] sm:$0xff]
      %v3498 = vld [vmem:[%s3461 + $0x120] sm:$0xff]
      %v3499 = vld [vmem:[%s3461 + $0x128] sm:$0xff]
      %v3500 = vld [vmem:[%s3461 + $0x130] sm:$0xff]
      %v3501 = vld [vmem:[%s3461 + $0x138] sm:$0xff]
      %v3502 = vld [vmem:[%s3461 + $0x140] sm:$0xff]
      %v3503 = vld [vmem:[%s3461 + $0x148] sm:$0xff]
      %v3504 = vld [vmem:[%s3461 + $0x150] sm:$0xff]
      %v3505 = vld [vmem:[%s3461 + $0x158] sm:$0xff]
      %v3506 = vld [vmem:[%s3461 + $0x160] sm:$0xff]
      %v3507 = vld [vmem:[%s3461 + $0x168] sm:$0xff]
      %v3508 = vld [vmem:[%s3461 + $0x170] sm:$0xff]
      %v3509 = vld [vmem:[%s3461 + $0x178] sm:$0xff]
      %v3510 = vld [vmem:[%s3461 + $0x180] sm:$0xff]
      %v3511 = vld [vmem:[%s3461 + $0x188] sm:$0xff]
      %v3512 = vld [vmem:[%s3461 + $0x190] sm:$0xff]
      %v3513 = vld [vmem:[%s3461 + $0x198] sm:$0xff]
      %v3514 = vld [vmem:[%s3461 + $0x1a0] sm:$0xff]
      %v3515 = vld [vmem:[%s3461 + $0x1a8] sm:$0xff]
      %v3516 = vld [vmem:[%s3461 + $0x1b0] sm:$0xff]
      %v3517 = vld [vmem:[%s3461 + $0x1b8] sm:$0xff]
      %v3574 = vunpack.c.l.b16 %v3462
      %v3575 = vunpack.c.h.b16 %v3462
      %v3576 = vunpack.c.l.b16 %v3463
      %v3577 = vunpack.c.h.b16 %v3463
      %v3578 = vunpack.c.l.b16 %v3464
      %v3579 = vunpack.c.h.b16 %v3464
      %v3580 = vunpack.c.l.b16 %v3465
      %v3581 = vunpack.c.h.b16 %v3465
      %v3582 = vunpack.c.l.b16 %v3466
      %v3583 = vunpack.c.h.b16 %v3466
      %v3584 = vunpack.c.l.b16 %v3467
      %v3585 = vunpack.c.h.b16 %v3467
      %v3586 = vunpack.c.l.b16 %v3468
      %v3587 = vunpack.c.h.b16 %v3468
      %v3588 = vunpack.c.l.b16 %v3469
      %v3589 = vunpack.c.h.b16 %v3469
      %v3590 = vunpack.c.l.b16 %v3470
      %v3591 = vunpack.c.h.b16 %v3470
      %v3592 = vunpack.c.l.b16 %v3471
      %v3593 = vunpack.c.h.b16 %v3471
      %v3594 = vunpack.c.l.b16 %v3472
      %v3595 = vunpack.c.h.b16 %v3472
      %v3596 = vunpack.c.l.b16 %v3473
      %v3597 = vunpack.c.h.b16 %v3473
      %v3598 = vunpack.c.l.b16 %v3474
      %v3599 = vunpack.c.h.b16 %v3474
      %v3600 = vunpack.c.l.b16 %v3475
      %v3601 = vunpack.c.h.b16 %v3475
      %v3602 = vunpack.c.l.b16 %v3476
      %v3603 = vunpack.c.h.b16 %v3476
      %v3604 = vunpack.c.l.b16 %v3477
      %v3605 = vunpack.c.h.b16 %v3477
      %v3606 = vunpack.c.l.b16 %v3478
      %v3607 = vunpack.c.h.b16 %v3478
      %v3608 = vunpack.c.l.b16 %v3479
      %v3609 = vunpack.c.h.b16 %v3479
      %v3610 = vunpack.c.l.b16 %v3480
      %v3611 = vunpack.c.h.b16 %v3480
      %v3612 = vunpack.c.l.b16 %v3481
      %v3613 = vunpack.c.h.b16 %v3481
      %v3614 = vunpack.c.l.b16 %v3482
      %v3615 = vunpack.c.h.b16 %v3482
      %v3616 = vunpack.c.l.b16 %v3483
      %v3617 = vunpack.c.h.b16 %v3483
      %v3618 = vunpack.c.l.b16 %v3484
      %v3619 = vunpack.c.h.b16 %v3484
      %v3620 = vunpack.c.l.b16 %v3485
      %v3621 = vunpack.c.h.b16 %v3485
      %v3622 = vunpack.c.l.b16 %v3486
      %v3623 = vunpack.c.h.b16 %v3486
      %v3624 = vunpack.c.l.b16 %v3487
      %v3625 = vunpack.c.h.b16 %v3487
      %v3626 = vunpack.c.l.b16 %v3488
      %v3627 = vunpack.c.h.b16 %v3488
      %v3628 = vunpack.c.l.b16 %v3489
      %v3629 = vunpack.c.h.b16 %v3489
      %v3630 = vunpack.c.l.b16 %v3490
      %v3631 = vunpack.c.h.b16 %v3490
      %v3632 = vunpack.c.l.b16 %v3491
      %v3633 = vunpack.c.h.b16 %v3491
      %v3634 = vunpack.c.l.b16 %v3492
      %v3635 = vunpack.c.h.b16 %v3492
      %v3636 = vunpack.c.l.b16 %v3493
      %v3637 = vunpack.c.h.b16 %v3493
      %v3638 = vunpack.c.l.b16 %v3494
      %v3639 = vunpack.c.h.b16 %v3494
      %v3640 = vunpack.c.l.b16 %v3495
      %v3641 = vunpack.c.h.b16 %v3495
      %v3642 = vunpack.c.l.b16 %v3496
      %v3643 = vunpack.c.h.b16 %v3496
      %v3644 = vunpack.c.l.b16 %v3497
      %v3645 = vunpack.c.h.b16 %v3497
      %v3646 = vunpack.c.l.b16 %v3498
      %v3647 = vunpack.c.h.b16 %v3498
      %v3648 = vunpack.c.l.b16 %v3499
      %v3649 = vunpack.c.h.b16 %v3499
      %v3650 = vunpack.c.l.b16 %v3500
      %v3651 = vunpack.c.h.b16 %v3500
      %v3652 = vunpack.c.l.b16 %v3501
      %v3653 = vunpack.c.h.b16 %v3501
      %v3654 = vunpack.c.l.b16 %v3502
      %v3655 = vunpack.c.h.b16 %v3502
      %v3656 = vunpack.c.l.b16 %v3503
      %v3657 = vunpack.c.h.b16 %v3503
      %v3658 = vunpack.c.l.b16 %v3504
      %v3659 = vunpack.c.h.b16 %v3504
      %v3660 = vunpack.c.l.b16 %v3505
      %v3661 = vunpack.c.h.b16 %v3505
      %v3662 = vunpack.c.l.b16 %v3506
      %v3663 = vunpack.c.h.b16 %v3506
      %v3664 = vunpack.c.l.b16 %v3507
      %v3665 = vunpack.c.h.b16 %v3507
      %v3666 = vunpack.c.l.b16 %v3508
      %v3667 = vunpack.c.h.b16 %v3508
      %v3668 = vunpack.c.l.b16 %v3509
      %v3669 = vunpack.c.h.b16 %v3509
      %v3670 = vunpack.c.l.b16 %v3510
      %v3671 = vunpack.c.h.b16 %v3510
      %v3672 = vunpack.c.l.b16 %v3511
      %v3673 = vunpack.c.h.b16 %v3511
      %v3674 = vunpack.c.l.b16 %v3512
      %v3675 = vunpack.c.h.b16 %v3512
      %v3676 = vunpack.c.l.b16 %v3513
      %v3677 = vunpack.c.h.b16 %v3513
      %v3678 = vunpack.c.l.b16 %v3514
      %v3679 = vunpack.c.h.b16 %v3514
      %v3680 = vunpack.c.l.b16 %v3515
      %v3681 = vunpack.c.h.b16 %v3515
      %v3682 = vunpack.c.l.b16 %v3516
      %v3683 = vunpack.c.h.b16 %v3516
      %v3684 = vunpack.c.l.b16 %v3517
      %v3685 = vunpack.c.h.b16 %v3517
      %v3686 = vpack.c.b16 %v3578, %v3574
      %v3687 = vpack.c.b16 %v3579, %v3575
      %v3688 = vpack.c.b16 %v3580, %v3576
      %v3689 = vpack.c.b16 %v3581, %v3577
      %v3690 = vpack.c.b16 %v3586, %v3582
      %v3691 = vpack.c.b16 %v3587, %v3583
      %v3692 = vpack.c.b16 %v3588, %v3584
      %v3693 = vpack.c.b16 %v3589, %v3585
      %v3694 = vpack.c.b16 %v3594, %v3590
      %v3695 = vpack.c.b16 %v3595, %v3591
      %v3696 = vpack.c.b16 %v3596, %v3592
      %v3697 = vpack.c.b16 %v3597, %v3593
      %v3698 = vpack.c.b16 %v3602, %v3598
      %v3699 = vpack.c.b16 %v3603, %v3599
      %v3700 = vpack.c.b16 %v3604, %v3600
      %v3701 = vpack.c.b16 %v3605, %v3601
      %v3702 = vpack.c.b16 %v3610, %v3606
      %v3703 = vpack.c.b16 %v3611, %v3607
      %v3704 = vpack.c.b16 %v3612, %v3608
      %v3705 = vpack.c.b16 %v3613, %v3609
      %v3706 = vpack.c.b16 %v3618, %v3614
      %v3707 = vpack.c.b16 %v3619, %v3615
      %v3708 = vpack.c.b16 %v3620, %v3616
      %v3709 = vpack.c.b16 %v3621, %v3617
      %v3710 = vpack.c.b16 %v3626, %v3622
      %v3711 = vpack.c.b16 %v3627, %v3623
      %v3712 = vpack.c.b16 %v3628, %v3624
      %v3713 = vpack.c.b16 %v3629, %v3625
      %v3714 = vpack.c.b16 %v3634, %v3630
      %v3715 = vpack.c.b16 %v3635, %v3631
      %v3716 = vpack.c.b16 %v3636, %v3632
      %v3717 = vpack.c.b16 %v3637, %v3633
      %v3718 = vpack.c.b16 %v3642, %v3638
      %v3719 = vpack.c.b16 %v3643, %v3639
      %v3720 = vpack.c.b16 %v3644, %v3640
      %v3721 = vpack.c.b16 %v3645, %v3641
      %v3722 = vpack.c.b16 %v3650, %v3646
      %v3723 = vpack.c.b16 %v3651, %v3647
      %v3724 = vpack.c.b16 %v3652, %v3648
      %v3725 = vpack.c.b16 %v3653, %v3649
      %v3726 = vpack.c.b16 %v3658, %v3654
      %v3727 = vpack.c.b16 %v3659, %v3655
      %v3728 = vpack.c.b16 %v3660, %v3656
      %v3729 = vpack.c.b16 %v3661, %v3657
      %v3730 = vpack.c.b16 %v3666, %v3662
      %v3731 = vpack.c.b16 %v3667, %v3663
      %v3732 = vpack.c.b16 %v3668, %v3664
      %v3733 = vpack.c.b16 %v3669, %v3665
      %v3734 = vpack.c.b16 %v3674, %v3670
      %v3735 = vpack.c.b16 %v3675, %v3671
      %v3736 = vpack.c.b16 %v3676, %v3672
      %v3737 = vpack.c.b16 %v3677, %v3673
      %v3738 = vpack.c.b16 %v3682, %v3678
      %v3739 = vpack.c.b16 %v3683, %v3679
      %v3740 = vpack.c.b16 %v3684, %v3680
      %v3741 = vpack.c.b16 %v3685, %v3681
      %v3799 = vsel %vm986, %v3460, 0
      %3801 = vmatprep.subr.bf16.mxu0 %v3687
      %3802 = vmatpush1.bf16.msra.mxu0 %v3686
      %3803 = vmatprep.subr.bf16.mxu0 %v3691
      %3804 = vmatpush1.bf16.msra.mxu0 %v3690
      %3805 = vmatprep.subr.bf16.mxu0 %v3695
      %3806 = vmatpush1.bf16.msra.mxu0 %v3694
      %3807 = vmatprep.subr.bf16.mxu0 %v3699
      %3808 = vmatpush1.bf16.msra.mxu0 %v3698
      %3809 = vmatprep.subr.bf16.mxu0 %v3703
      %3810 = vmatpush1.bf16.msra.mxu0 %v3702
      %3811 = vmatprep.subr.bf16.mxu0 %v3707
      %3812 = vmatpush1.bf16.msra.mxu0 %v3706
      %3813 = vmatprep.subr.bf16.mxu0 %v3711
      %3814 = vmatpush1.bf16.msra.mxu0 %v3710
      %3815 = vmatprep.subr.bf16.mxu0 %v3715
      %3816 = vmatpush1.bf16.msra.mxu0 %v3714
      %3817 = vmatprep.subr.bf16.mxu0 %v3719
      %3818 = vmatpush1.bf16.msra.mxu0 %v3718
      %3819 = vmatprep.subr.bf16.mxu0 %v3723
      %3820 = vmatpush1.bf16.msra.mxu0 %v3722
      %3821 = vmatprep.subr.bf16.mxu0 %v3727
      %3822 = vmatpush1.bf16.msra.mxu0 %v3726
      %3823 = vmatprep.subr.bf16.mxu0 %v3731
      %3824 = vmatpush1.bf16.msra.mxu0 %v3730
      %3825 = vmatprep.subr.bf16.mxu0 %v3735
      %3826 = vmatpush1.bf16.msra.mxu0 %v3734
      %3827 = vmatprep.subr.bf16.mxu0 %v3739
      %3828 = vmatpush1.bf16.msra.mxu0 %v3738
      %3829 = vmatprep.subr.bf16.mxu0 0
      %3830 = vmatpush1.bf16.msra.mxu0 0
      %3831 = vmatprep.subr.bf16.mxu0 0
      %3832 = vmatpush1.bf16.msra.mxu0 0
      %3833 = vmatprep.mubr.bf16.mxu0 %v3799
      %3834 = vmatmul.mubr.bf16.gmra.mrb[0].mxu0 %v3459
      %v3835 = vpop.f32.mrb[0].mxu0
      %v3836 = vadd.f32 0.0, %v3835
      %v3837 = vpop.f32.mrb[0].mxu0
      %v3838 = vadd.f32 0.0, %v3837
      %v3839 = vpop.f32.mrb[0].mxu0
      %v3840 = vadd.f32 0.0, %v3839
      %v3841 = vpop.f32.mrb[0].mxu0
      %v3842 = vadd.f32 0.0, %v3841
      %3843 = vdwg.mxu0
      %3844 = vmatprep.subr.bf16.mxu0 %v3689
      %3845 = vmatpush1.bf16.msra.mxu0 %v3688
      %3846 = vmatprep.subr.bf16.mxu0 %v3693
      %3847 = vmatpush1.bf16.msra.mxu0 %v3692
      %3848 = vmatprep.subr.bf16.mxu0 %v3697
      %3849 = vmatpush1.bf16.msra.mxu0 %v3696
      %3850 = vmatprep.subr.bf16.mxu0 %v3701
      %3851 = vmatpush1.bf16.msra.mxu0 %v3700
      %3852 = vmatprep.subr.bf16.mxu0 %v3705
      %3853 = vmatpush1.bf16.msra.mxu0 %v3704
      %3854 = vmatprep.subr.bf16.mxu0 %v3709
      %3855 = vmatpush1.bf16.msra.mxu0 %v3708
      %3856 = vmatprep.subr.bf16.mxu0 %v3713
      %3857 = vmatpush1.bf16.msra.mxu0 %v3712
      %3858 = vmatprep.subr.bf16.mxu0 %v3717
      %3859 = vmatpush1.bf16.msra.mxu0 %v3716
      %3860 = vmatprep.subr.bf16.mxu0 %v3721
      %3861 = vmatpush1.bf16.msra.mxu0 %v3720
      %3862 = vmatprep.subr.bf16.mxu0 %v3725
      %3863 = vmatpush1.bf16.msra.mxu0 %v3724
      %3864 = vmatprep.subr.bf16.mxu0 %v3729
      %3865 = vmatpush1.bf16.msra.mxu0 %v3728
      %3866 = vmatprep.subr.bf16.mxu0 %v3733
      %3867 = vmatpush1.bf16.msra.mxu0 %v3732
      %3868 = vmatprep.subr.bf16.mxu0 %v3737
      %3869 = vmatpush1.bf16.msra.mxu0 %v3736
      %3870 = vmatprep.subr.bf16.mxu0 %v3741
      %3871 = vmatpush1.bf16.msra.mxu0 %v3740
      %3872 = vmatprep.subr.bf16.mxu0 0
      %3873 = vmatpush1.bf16.msra.mxu0 0
      %3874 = vmatprep.subr.bf16.mxu0 0
      %3875 = vmatpush1.bf16.msra.mxu0 0
      %3876 = vmatprep.mubr.bf16.mxu0 %v3799
      %3877 = vmatmul.mubr.bf16.gmra.mrb[0].mxu0 %v3459
      %v3878 = vpop.f32.mrb[0].mxu0
      %v3879 = vadd.f32 0.0, %v3878
      %v3880 = vpop.f32.mrb[0].mxu0
      %v3881 = vadd.f32 0.0, %v3880
      %v3882 = vpop.f32.mrb[0].mxu0
      %v3883 = vadd.f32 0.0, %v3882
      %v3884 = vpop.f32.mrb[0].mxu0
      %v3885 = vadd.f32 0.0, %v3884
      %3886 = vdwg.mxu0
      %v3887 = vadd.f32 %v3397, %v3836
      %v3888 = vadd.f32 %v3398, %v3838
      %v3889 = vadd.f32 %v3399, %v3879
      %v3890 = vadd.f32 %v3400, %v3881
      %v3891 = vadd.f32 %v3401, %v3840
      %v3892 = vadd.f32 %v3402, %v3842
      %v3893 = vadd.f32 %v3403, %v3883
      %v3894 = vadd.f32 %v3404, %v3885
      %s3895 = scalar_lea.vmem %s1, 56
      %v3896 = vld [vmem:[%s3895] sm:$0xf]
      %v3897 = vld [vmem:[%s3895 + $0x4] sm:$0x7]
      %v3900 = vunpack.c.l.b16 %v3896
      %v3901 = vunpack.c.l.b16 %v3897
      %v3902 = vpack.c.b16 %v3901, %v3900
      %v3904 = vsel %vm481, %v3902, 0
      %3906 = vmatprep.subr.bf16.mxu0 %v467
      %3907 = vmatpush1.bf16.msra.mxu0 %v466
      %3908 = vmatprep.subr.bf16.mxu0 %v469
      %3909 = vmatpush1.bf16.msra.mxu0 %v468
      %3910 = vmatprep.subr.bf16.mxu0 %v471
      %3911 = vmatpush1.bf16.msra.mxu0 %v470
      %3912 = vmatprep.subr.bf16.mxu0 %v490
      %3913 = vmatpush1.bf16.msra.mxu0 %v487
      %3914 = vmatprep.subr.bf16.mxu0 0
      %3915 = vmatpush1.bf16.msra.mxu0 0
      %3916 = vmatprep.subr.bf16.mxu0 0
      %3917 = vmatpush1.bf16.msra.mxu0 0
      %3918 = vmatprep.subr.bf16.mxu0 0
      %3919 = vmatpush1.bf16.msra.mxu0 0
      %3920 = vmatprep.subr.bf16.mxu0 0
      %3921 = vmatpush1.bf16.msra.mxu0 0
      %3922 = vmatprep.subr.bf16.mxu0 0
      %3923 = vmatpush1.bf16.msra.mxu0 0
      %3924 = vmatprep.subr.bf16.mxu0 0
      %3925 = vmatpush1.bf16.msra.mxu0 0
      %3926 = vmatprep.subr.bf16.mxu0 0
      %3927 = vmatpush1.bf16.msra.mxu0 0
      %3928 = vmatprep.subr.bf16.mxu0 0
      %3929 = vmatpush1.bf16.msra.mxu0 0
      %3930 = vmatprep.subr.bf16.mxu0 0
      %3931 = vmatpush1.bf16.msra.mxu0 0
      %3932 = vmatprep.subr.bf16.mxu0 0
      %3933 = vmatpush1.bf16.msra.mxu0 0
      %3934 = vmatprep.subr.bf16.mxu0 0
      %3935 = vmatpush1.bf16.msra.mxu0 0
      %3936 = vmatprep.subr.bf16.mxu0 0
      %3937 = vmatpush1.bf16.msra.mxu0 0
      %3938 = vmatprep.mubr.bf16.mxu0 0
      %3939 = vmatmul.mubr.bf16.gmra.mrb[0].mxu0 %v3904
      %v3940 = vpop.f32.mrb[0].mxu0
      %v3941 = vadd.f32 0.0, %v3940
      %v3942 = vpop.f32.mrb[0].mxu0
      %v3943 = vadd.f32 0.0, %v3942
      %v3944 = vpop.f32.mrb[0].mxu0
      %v3945 = vadd.f32 0.0, %v3944
      %v3946 = vpop.f32.mrb[0].mxu0
      %v3947 = vadd.f32 0.0, %v3946
      %3948 = vdwg.mxu0
      %v3949 = vpack.c.bf16 %v3945, %v3941
      %v3950 = vpack.c.bf16 %v3947, %v3943
      %s3951 = scalar_lea.vmem %s2, 3136
      %v3952 = vld [vmem:[%s3951] sm:$0xff]
      %v3953 = vld [vmem:[%s3951 + $0x8] sm:$0xff]
      %v3954 = vld [vmem:[%s3951 + $0x10] sm:$0xff]
      %v3955 = vld [vmem:[%s3951 + $0x18] sm:$0xff]
      %v3956 = vld [vmem:[%s3951 + $0x20] sm:$0xff]
      %v3957 = vld [vmem:[%s3951 + $0x28] sm:$0xff]
      %v3958 = vld [vmem:[%s3951 + $0x30] sm:$0xff]
      %v3959 = vld [vmem:[%s3951 + $0x38] sm:$0xff]
      %v3960 = vld [vmem:[%s3951 + $0x40] sm:$0xff]
      %v3961 = vld [vmem:[%s3951 + $0x48] sm:$0xff]
      %v3962 = vld [vmem:[%s3951 + $0x50] sm:$0xff]
      %v3963 = vld [vmem:[%s3951 + $0x58] sm:$0xff]
      %v3964 = vld [vmem:[%s3951 + $0x60] sm:$0xff]
      %v3965 = vld [vmem:[%s3951 + $0x68] sm:$0xff]
      %v3966 = vld [vmem:[%s3951 + $0x70] sm:$0xff]
      %v3967 = vld [vmem:[%s3951 + $0x78] sm:$0xff]
      %v3968 = vld [vmem:[%s3951 + $0x80] sm:$0xff]
      %v3969 = vld [vmem:[%s3951 + $0x88] sm:$0xff]
      %v3970 = vld [vmem:[%s3951 + $0x90] sm:$0xff]
      %v3971 = vld [vmem:[%s3951 + $0x98] sm:$0xff]
      %v3972 = vld [vmem:[%s3951 + $0xa0] sm:$0xff]
      %v3973 = vld [vmem:[%s3951 + $0xa8] sm:$0xff]
      %v3974 = vld [vmem:[%s3951 + $0xb0] sm:$0xff]
      %v3975 = vld [vmem:[%s3951 + $0xb8] sm:$0xff]
      %v3976 = vld [vmem:[%s3951 + $0xc0] sm:$0xff]
      %v3977 = vld [vmem:[%s3951 + $0xc8] sm:$0xff]
      %v3978 = vld [vmem:[%s3951 + $0xd0] sm:$0xff]
      %v3979 = vld [vmem:[%s3951 + $0xd8] sm:$0xff]
      %v3980 = vld [vmem:[%s3951 + $0xe0] sm:$0xff]
      %v3981 = vld [vmem:[%s3951 + $0xe8] sm:$0xff]
      %v3982 = vld [vmem:[%s3951 + $0xf0] sm:$0xff]
      %v3983 = vld [vmem:[%s3951 + $0xf8] sm:$0xff]
      %v3984 = vld [vmem:[%s3951 + $0x100] sm:$0xff]
      %v3985 = vld [vmem:[%s3951 + $0x108] sm:$0xff]
      %v3986 = vld [vmem:[%s3951 + $0x110] sm:$0xff]
      %v3987 = vld [vmem:[%s3951 + $0x118] sm:$0xff]
      %v3988 = vld [vmem:[%s3951 + $0x120] sm:$0xff]
      %v3989 = vld [vmem:[%s3951 + $0x128] sm:$0xff]
      %v3990 = vld [vmem:[%s3951 + $0x130] sm:$0xff]
      %v3991 = vld [vmem:[%s3951 + $0x138] sm:$0xff]
      %v3992 = vld [vmem:[%s3951 + $0x140] sm:$0xff]
      %v3993 = vld [vmem:[%s3951 + $0x148] sm:$0xff]
      %v3994 = vld [vmem:[%s3951 + $0x150] sm:$0xff]
      %v3995 = vld [vmem:[%s3951 + $0x158] sm:$0xff]
      %v3996 = vld [vmem:[%s3951 + $0x160] sm:$0xff]
      %v3997 = vld [vmem:[%s3951 + $0x168] sm:$0xff]
      %v3998 = vld [vmem:[%s3951 + $0x170] sm:$0xff]
      %v3999 = vld [vmem:[%s3951 + $0x178] sm:$0xff]
      %v4000 = vld [vmem:[%s3951 + $0x180] sm:$0xff]
      %v4001 = vld [vmem:[%s3951 + $0x188] sm:$0xff]
      %v4002 = vld [vmem:[%s3951 + $0x190] sm:$0xff]
      %v4003 = vld [vmem:[%s3951 + $0x198] sm:$0xff]
      %v4004 = vld [vmem:[%s3951 + $0x1a0] sm:$0xff]
      %v4005 = vld [vmem:[%s3951 + $0x1a8] sm:$0xff]
      %v4006 = vld [vmem:[%s3951 + $0x1b0] sm:$0xff]
      %v4007 = vld [vmem:[%s3951 + $0x1b8] sm:$0xff]
      %v4064 = vunpack.c.l.b16 %v3952
      %v4065 = vunpack.c.h.b16 %v3952
      %v4066 = vunpack.c.l.b16 %v3953
      %v4067 = vunpack.c.h.b16 %v3953
      %v4068 = vunpack.c.l.b16 %v3954
      %v4069 = vunpack.c.h.b16 %v3954
      %v4070 = vunpack.c.l.b16 %v3955
      %v4071 = vunpack.c.h.b16 %v3955
      %v4072 = vunpack.c.l.b16 %v3956
      %v4073 = vunpack.c.h.b16 %v3956
      %v4074 = vunpack.c.l.b16 %v3957
      %v4075 = vunpack.c.h.b16 %v3957
      %v4076 = vunpack.c.l.b16 %v3958
      %v4077 = vunpack.c.h.b16 %v3958
      %v4078 = vunpack.c.l.b16 %v3959
      %v4079 = vunpack.c.h.b16 %v3959
      %v4080 = vunpack.c.l.b16 %v3960
      %v4081 = vunpack.c.h.b16 %v3960
      %v4082 = vunpack.c.l.b16 %v3961
      %v4083 = vunpack.c.h.b16 %v3961
      %v4084 = vunpack.c.l.b16 %v3962
      %v4085 = vunpack.c.h.b16 %v3962
      %v4086 = vunpack.c.l.b16 %v3963
      %v4087 = vunpack.c.h.b16 %v3963
      %v4088 = vunpack.c.l.b16 %v3964
      %v4089 = vunpack.c.h.b16 %v3964
      %v4090 = vunpack.c.l.b16 %v3965
      %v4091 = vunpack.c.h.b16 %v3965
      %v4092 = vunpack.c.l.b16 %v3966
      %v4093 = vunpack.c.h.b16 %v3966
      %v4094 = vunpack.c.l.b16 %v3967
      %v4095 = vunpack.c.h.b16 %v3967
      %v4096 = vunpack.c.l.b16 %v3968
      %v4097 = vunpack.c.h.b16 %v3968
      %v4098 = vunpack.c.l.b16 %v3969
      %v4099 = vunpack.c.h.b16 %v3969
      %v4100 = vunpack.c.l.b16 %v3970
      %v4101 = vunpack.c.h.b16 %v3970
      %v4102 = vunpack.c.l.b16 %v3971
      %v4103 = vunpack.c.h.b16 %v3971
      %v4104 = vunpack.c.l.b16 %v3972
      %v4105 = vunpack.c.h.b16 %v3972
      %v4106 = vunpack.c.l.b16 %v3973
      %v4107 = vunpack.c.h.b16 %v3973
      %v4108 = vunpack.c.l.b16 %v3974
      %v4109 = vunpack.c.h.b16 %v3974
      %v4110 = vunpack.c.l.b16 %v3975
      %v4111 = vunpack.c.h.b16 %v3975
      %v4112 = vunpack.c.l.b16 %v3976
      %v4113 = vunpack.c.h.b16 %v3976
      %v4114 = vunpack.c.l.b16 %v3977
      %v4115 = vunpack.c.h.b16 %v3977
      %v4116 = vunpack.c.l.b16 %v3978
      %v4117 = vunpack.c.h.b16 %v3978
      %v4118 = vunpack.c.l.b16 %v3979
      %v4119 = vunpack.c.h.b16 %v3979
      %v4120 = vunpack.c.l.b16 %v3980
      %v4121 = vunpack.c.h.b16 %v3980
      %v4122 = vunpack.c.l.b16 %v3981
      %v4123 = vunpack.c.h.b16 %v3981
      %v4124 = vunpack.c.l.b16 %v3982
      %v4125 = vunpack.c.h.b16 %v3982
      %v4126 = vunpack.c.l.b16 %v3983
      %v4127 = vunpack.c.h.b16 %v3983
      %v4128 = vunpack.c.l.b16 %v3984
      %v4129 = vunpack.c.h.b16 %v3984
      %v4130 = vunpack.c.l.b16 %v3985
      %v4131 = vunpack.c.h.b16 %v3985
      %v4132 = vunpack.c.l.b16 %v3986
      %v4133 = vunpack.c.h.b16 %v3986
      %v4134 = vunpack.c.l.b16 %v3987
      %v4135 = vunpack.c.h.b16 %v3987
      %v4136 = vunpack.c.l.b16 %v3988
      %v4137 = vunpack.c.h.b16 %v3988
      %v4138 = vunpack.c.l.b16 %v3989
      %v4139 = vunpack.c.h.b16 %v3989
      %v4140 = vunpack.c.l.b16 %v3990
      %v4141 = vunpack.c.h.b16 %v3990
      %v4142 = vunpack.c.l.b16 %v3991
      %v4143 = vunpack.c.h.b16 %v3991
      %v4144 = vunpack.c.l.b16 %v3992
      %v4145 = vunpack.c.h.b16 %v3992
      %v4146 = vunpack.c.l.b16 %v3993
      %v4147 = vunpack.c.h.b16 %v3993
      %v4148 = vunpack.c.l.b16 %v3994
      %v4149 = vunpack.c.h.b16 %v3994
      %v4150 = vunpack.c.l.b16 %v3995
      %v4151 = vunpack.c.h.b16 %v3995
      %v4152 = vunpack.c.l.b16 %v3996
      %v4153 = vunpack.c.h.b16 %v3996
      %v4154 = vunpack.c.l.b16 %v3997
      %v4155 = vunpack.c.h.b16 %v3997
      %v4156 = vunpack.c.l.b16 %v3998
      %v4157 = vunpack.c.h.b16 %v3998
      %v4158 = vunpack.c.l.b16 %v3999
      %v4159 = vunpack.c.h.b16 %v3999
      %v4160 = vunpack.c.l.b16 %v4000
      %v4161 = vunpack.c.h.b16 %v4000
      %v4162 = vunpack.c.l.b16 %v4001
      %v4163 = vunpack.c.h.b16 %v4001
      %v4164 = vunpack.c.l.b16 %v4002
      %v4165 = vunpack.c.h.b16 %v4002
      %v4166 = vunpack.c.l.b16 %v4003
      %v4167 = vunpack.c.h.b16 %v4003
      %v4168 = vunpack.c.l.b16 %v4004
      %v4169 = vunpack.c.h.b16 %v4004
      %v4170 = vunpack.c.l.b16 %v4005
      %v4171 = vunpack.c.h.b16 %v4005
      %v4172 = vunpack.c.l.b16 %v4006
      %v4173 = vunpack.c.h.b16 %v4006
      %v4174 = vunpack.c.l.b16 %v4007
      %v4175 = vunpack.c.h.b16 %v4007
      %v4176 = vpack.c.b16 %v4068, %v4064
      %v4177 = vpack.c.b16 %v4069, %v4065
      %v4178 = vpack.c.b16 %v4070, %v4066
      %v4179 = vpack.c.b16 %v4071, %v4067
      %v4180 = vpack.c.b16 %v4076, %v4072
      %v4181 = vpack.c.b16 %v4077, %v4073
      %v4182 = vpack.c.b16 %v4078, %v4074
      %v4183 = vpack.c.b16 %v4079, %v4075
      %v4184 = vpack.c.b16 %v4084, %v4080
      %v4185 = vpack.c.b16 %v4085, %v4081
      %v4186 = vpack.c.b16 %v4086, %v4082
      %v4187 = vpack.c.b16 %v4087, %v4083
      %v4188 = vpack.c.b16 %v4092, %v4088
      %v4189 = vpack.c.b16 %v4093, %v4089
      %v4190 = vpack.c.b16 %v4094, %v4090
      %v4191 = vpack.c.b16 %v4095, %v4091
      %v4192 = vpack.c.b16 %v4100, %v4096
      %v4193 = vpack.c.b16 %v4101, %v4097
      %v4194 = vpack.c.b16 %v4102, %v4098
      %v4195 = vpack.c.b16 %v4103, %v4099
      %v4196 = vpack.c.b16 %v4108, %v4104
      %v4197 = vpack.c.b16 %v4109, %v4105
      %v4198 = vpack.c.b16 %v4110, %v4106
      %v4199 = vpack.c.b16 %v4111, %v4107
      %v4200 = vpack.c.b16 %v4116, %v4112
      %v4201 = vpack.c.b16 %v4117, %v4113
      %v4202 = vpack.c.b16 %v4118, %v4114
      %v4203 = vpack.c.b16 %v4119, %v4115
      %v4204 = vpack.c.b16 %v4124, %v4120
      %v4205 = vpack.c.b16 %v4125, %v4121
      %v4206 = vpack.c.b16 %v4126, %v4122
      %v4207 = vpack.c.b16 %v4127, %v4123
      %v4208 = vpack.c.b16 %v4132, %v4128
      %v4209 = vpack.c.b16 %v4133, %v4129
      %v4210 = vpack.c.b16 %v4134, %v4130
      %v4211 = vpack.c.b16 %v4135, %v4131
      %v4212 = vpack.c.b16 %v4140, %v4136
      %v4213 = vpack.c.b16 %v4141, %v4137
      %v4214 = vpack.c.b16 %v4142, %v4138
      %v4215 = vpack.c.b16 %v4143, %v4139
      %v4216 = vpack.c.b16 %v4148, %v4144
      %v4217 = vpack.c.b16 %v4149, %v4145
      %v4218 = vpack.c.b16 %v4150, %v4146
      %v4219 = vpack.c.b16 %v4151, %v4147
      %v4220 = vpack.c.b16 %v4156, %v4152
      %v4221 = vpack.c.b16 %v4157, %v4153
      %v4222 = vpack.c.b16 %v4158, %v4154
      %v4223 = vpack.c.b16 %v4159, %v4155
      %v4224 = vpack.c.b16 %v4164, %v4160
      %v4225 = vpack.c.b16 %v4165, %v4161
      %v4226 = vpack.c.b16 %v4166, %v4162
      %v4227 = vpack.c.b16 %v4167, %v4163
      %v4228 = vpack.c.b16 %v4172, %v4168
      %v4229 = vpack.c.b16 %v4173, %v4169
      %v4230 = vpack.c.b16 %v4174, %v4170
      %v4231 = vpack.c.b16 %v4175, %v4171
      %v4289 = vsel %vm986, %v3950, 0
      %4291 = vmatprep.subr.bf16.mxu0 %v4177
      %4292 = vmatpush1.bf16.msra.mxu0 %v4176
      %4293 = vmatprep.subr.bf16.mxu0 %v4181
      %4294 = vmatpush1.bf16.msra.mxu0 %v4180
      %4295 = vmatprep.subr.bf16.mxu0 %v4185
      %4296 = vmatpush1.bf16.msra.mxu0 %v4184
      %4297 = vmatprep.subr.bf16.mxu0 %v4189
      %4298 = vmatpush1.bf16.msra.mxu0 %v4188
      %4299 = vmatprep.subr.bf16.mxu0 %v4193
      %4300 = vmatpush1.bf16.msra.mxu0 %v4192
      %4301 = vmatprep.subr.bf16.mxu0 %v4197
      %4302 = vmatpush1.bf16.msra.mxu0 %v4196
      %4303 = vmatprep.subr.bf16.mxu0 %v4201
      %4304 = vmatpush1.bf16.msra.mxu0 %v4200
      %4305 = vmatprep.subr.bf16.mxu0 %v4205
      %4306 = vmatpush1.bf16.msra.mxu0 %v4204
      %4307 = vmatprep.subr.bf16.mxu0 %v4209
      %4308 = vmatpush1.bf16.msra.mxu0 %v4208
      %4309 = vmatprep.subr.bf16.mxu0 %v4213
      %4310 = vmatpush1.bf16.msra.mxu0 %v4212
      %4311 = vmatprep.subr.bf16.mxu0 %v4217
      %4312 = vmatpush1.bf16.msra.mxu0 %v4216
      %4313 = vmatprep.subr.bf16.mxu0 %v4221
      %4314 = vmatpush1.bf16.msra.mxu0 %v4220
      %4315 = vmatprep.subr.bf16.mxu0 %v4225
      %4316 = vmatpush1.bf16.msra.mxu0 %v4224
      %4317 = vmatprep.subr.bf16.mxu0 %v4229
      %4318 = vmatpush1.bf16.msra.mxu0 %v4228
      %4319 = vmatprep.subr.bf16.mxu0 0
      %4320 = vmatpush1.bf16.msra.mxu0 0
      %4321 = vmatprep.subr.bf16.mxu0 0
      %4322 = vmatpush1.bf16.msra.mxu0 0
      %4323 = vmatprep.mubr.bf16.mxu0 %v4289
      %4324 = vmatmul.mubr.bf16.gmra.mrb[0].mxu0 %v3949
      %v4325 = vpop.f32.mrb[0].mxu0
      %v4326 = vadd.f32 0.0, %v4325
      %v4327 = vpop.f32.mrb[0].mxu0
      %v4328 = vadd.f32 0.0, %v4327
      %v4329 = vpop.f32.mrb[0].mxu0
      %v4330 = vadd.f32 0.0, %v4329
      %v4331 = vpop.f32.mrb[0].mxu0
      %v4332 = vadd.f32 0.0, %v4331
      %4333 = vdwg.mxu0
      %4334 = vmatprep.subr.bf16.mxu0 %v4179
      %4335 = vmatpush1.bf16.msra.mxu0 %v4178
      %4336 = vmatprep.subr.bf16.mxu0 %v4183
      %4337 = vmatpush1.bf16.msra.mxu0 %v4182
      %4338 = vmatprep.subr.bf16.mxu0 %v4187
      %4339 = vmatpush1.bf16.msra.mxu0 %v4186
      %4340 = vmatprep.subr.bf16.mxu0 %v4191
      %4341 = vmatpush1.bf16.msra.mxu0 %v4190
      %4342 = vmatprep.subr.bf16.mxu0 %v4195
      %4343 = vmatpush1.bf16.msra.mxu0 %v4194
      %4344 = vmatprep.subr.bf16.mxu0 %v4199
      %4345 = vmatpush1.bf16.msra.mxu0 %v4198
      %4346 = vmatprep.subr.bf16.mxu0 %v4203
      %4347 = vmatpush1.bf16.msra.mxu0 %v4202
      %4348 = vmatprep.subr.bf16.mxu0 %v4207
      %4349 = vmatpush1.bf16.msra.mxu0 %v4206
      %4350 = vmatprep.subr.bf16.mxu0 %v4211
      %4351 = vmatpush1.bf16.msra.mxu0 %v4210
      %4352 = vmatprep.subr.bf16.mxu0 %v4215
      %4353 = vmatpush1.bf16.msra.mxu0 %v4214
      %4354 = vmatprep.subr.bf16.mxu0 %v4219
      %4355 = vmatpush1.bf16.msra.mxu0 %v4218
      %4356 = vmatprep.subr.bf16.mxu0 %v4223
      %4357 = vmatpush1.bf16.msra.mxu0 %v4222
      %4358 = vmatprep.subr.bf16.mxu0 %v4227
      %4359 = vmatpush1.bf16.msra.mxu0 %v4226
      %4360 = vmatprep.subr.bf16.mxu0 %v4231
      %4361 = vmatpush1.bf16.msra.mxu0 %v4230
      %4362 = vmatprep.subr.bf16.mxu0 0
      %4363 = vmatpush1.bf16.msra.mxu0 0
      %4364 = vmatprep.subr.bf16.mxu0 0
      %4365 = vmatpush1.bf16.msra.mxu0 0
      %4366 = vmatprep.mubr.bf16.mxu0 %v4289
      %4367 = vmatmul.mubr.bf16.gmra.mrb[0].mxu0 %v3949
      %v4368 = vpop.f32.mrb[0].mxu0
      %v4369 = vadd.f32 0.0, %v4368
      %v4370 = vpop.f32.mrb[0].mxu0
      %v4371 = vadd.f32 0.0, %v4370
      %v4372 = vpop.f32.mrb[0].mxu0
      %v4373 = vadd.f32 0.0, %v4372
      %v4374 = vpop.f32.mrb[0].mxu0
      %v4375 = vadd.f32 0.0, %v4374
      %4376 = vdwg.mxu0
      %v4377 = vadd.f32 %v3887, %v4326
      %v4378 = vadd.f32 %v3888, %v4328
      %v4379 = vadd.f32 %v3889, %v4369
      %v4380 = vadd.f32 %v3890, %v4371
      %v4381 = vadd.f32 %v3891, %v4330
      %v4382 = vadd.f32 %v3892, %v4332
      %v4383 = vadd.f32 %v3893, %v4373
      %v4384 = vadd.f32 %v3894, %v4375
      %v4385 = vld [vmem:[%s3] sm:$0xf]
      %v4387 = vlaneseq
      %v4388 = vshrl.u32 %v4387, 7
      %v4389 = vsub.s32 0, %v4388
      %v4390 = vrot.slane %v4385, %v4389
      %v4391 = vlaneseq
      %v4392 = vshrl.u32 %v4391, 7
      %v4393 = vsub.s32 1, %v4392
      %v4394 = vrot.slane %v4385, %v4393
      %v4395 = vlaneseq
      %v4396 = vshrl.u32 %v4395, 7
      %v4397 = vsub.s32 2, %v4396
      %v4398 = vrot.slane %v4385, %v4397
      %v4399 = vlaneseq
      %v4400 = vshrl.u32 %v4399, 7
      %v4401 = vsub.s32 3, %v4400
      %v4402 = vrot.slane %v4385, %v4401
      %v4407 = vadd.f32 %v4377, %v4390
      %v4408 = vadd.f32 %v4378, %v4394
      %v4409 = vadd.f32 %v4379, %v4398
      %v4410 = vadd.f32 %v4380, %v4402
      %v4411 = vadd.f32 %v4381, %v4390
      %v4412 = vadd.f32 %v4382, %v4394
      %v4413 = vadd.f32 %v4383, %v4398
      %v4414 = vadd.f32 %v4384, %v4402
      %v4415 = vmax.f32 %v4407, 0.0
      %v4416 = vmax.f32 %v4408, 0.0
      %v4417 = vmax.f32 %v4409, 0.0
      %v4418 = vmax.f32 %v4410, 0.0
      %v4419 = vmax.f32 %v4411, 0.0
      %v4420 = vmax.f32 %v4412, 0.0
      %v4421 = vmax.f32 %v4413, 0.0
      %v4422 = vmax.f32 %v4414, 0.0
      %v4423 = vpack.c.bf16 %v4419, %v4415
      %v4424 = vpack.c.bf16 %v4420, %v4416
      %v4425 = vpack.c.bf16 %v4421, %v4417
      %v4426 = vpack.c.bf16 %v4422, %v4418
      %v4427 = vld [vmem:[%s4] sm:$0x7]
      %vm4428 = vcmask 105472
      %v4430 = vsel %vm4428, %v4427, 0
      %vm4432 = vcmask 1045504
      %vm4433 = vcmask 1046528
      %v4434 = vsel %vm4432, 4294967295, 65535
      %v4435 = vsel %vm4433, %v4434, 0
      %v4437 = vand.u32 %v4423, %v4435
      %v4440 = vand.u32 %v4424, %v4435
      %v4443 = vand.u32 %v4425, %v4435
      %v4446 = vand.u32 %v4426, %v4435
      %4448 = vmatprep.subr.bf16.mxu0 %v4440
      %4449 = vmatpush1.bf16.msra.mxu0 %v4437
      %4450 = vmatprep.subr.bf16.mxu0 0
      %4451 = vmatpush1.bf16.msra.mxu0 0
      %4452 = vmatprep.subr.bf16.mxu0 0
      %4453 = vmatpush1.bf16.msra.mxu0 0
      %4454 = vmatprep.subr.bf16.mxu0 0
      %4455 = vmatpush1.bf16.msra.mxu0 0
      %4456 = vmatprep.subr.bf16.mxu0 0
      %4457 = vmatpush1.bf16.msra.mxu0 0
      %4458 = vmatprep.subr.bf16.mxu0 0
      %4459 = vmatpush1.bf16.msra.mxu0 0
      %4460 = vmatprep.subr.bf16.mxu0 0
      %4461 = vmatpush1.bf16.msra.mxu0 0
      %4462 = vmatprep.subr.bf16.mxu0 0
      %4463 = vmatpush1.bf16.msra.mxu0 0
      %4464 = vmatprep.subr.bf16.mxu0 0
      %4465 = vmatpush1.bf16.msra.mxu0 0
      %4466 = vmatprep.subr.bf16.mxu0 0
      %4467 = vmatpush1.bf16.msra.mxu0 0
      %4468 = vmatprep.subr.bf16.mxu0 0
      %4469 = vmatpush1.bf16.msra.mxu0 0
      %4470 = vmatprep.subr.bf16.mxu0 0
      %4471 = vmatpush1.bf16.msra.mxu0 0
      %4472 = vmatprep.subr.bf16.mxu0 0
      %4473 = vmatpush1.bf16.msra.mxu0 0
      %4474 = vmatprep.subr.bf16.mxu0 0
      %4475 = vmatpush1.bf16.msra.mxu0 0
      %4476 = vmatprep.subr.bf16.mxu0 0
      %4477 = vmatpush1.bf16.msra.mxu0 0
      %4478 = vmatprep.subr.bf16.mxu0 0
      %4479 = vmatpush1.bf16.msra.mxu0 0
      %4480 = vmatprep.mubr.bf16.mxu0 0
      %4481 = vmatmul.mubr.bf16.gmra.mrb[0].mxu0 %v4430
      %v4482 = vpop.f32.mrb[0].mxu0
      %v4483 = vadd.f32 0.0, %v4482
      %v4484 = vpop.f32.mrb[0].mxu0
      %v4485 = vadd.f32 0.0, %v4484
      %v4486 = vpop.f32.mrb[0].mxu0
      %v4487 = vpop.f32.mrb[0].mxu0
      %4488 = vdwg.mxu0
      %4489 = vmatprep.subr.bf16.mxu0 %v4446
      %4490 = vmatpush1.bf16.msra.mxu0 %v4443
      %4491 = vmatprep.subr.bf16.mxu0 0
      %4492 = vmatpush1.bf16.msra.mxu0 0
      %4493 = vmatprep.subr.bf16.mxu0 0
      %4494 = vmatpush1.bf16.msra.mxu0 0
      %4495 = vmatprep.subr.bf16.mxu0 0
      %4496 = vmatpush1.bf16.msra.mxu0 0
      %4497 = vmatprep.subr.bf16.mxu0 0
      %4498 = vmatpush1.bf16.msra.mxu0 0
      %4499 = vmatprep.subr.bf16.mxu0 0
      %4500 = vmatpush1.bf16.msra.mxu0 0
      %4501 = vmatprep.subr.bf16.mxu0 0
      %4502 = vmatpush1.bf16.msra.mxu0 0
      %4503 = vmatprep.subr.bf16.mxu0 0
      %4504 = vmatpush1.bf16.msra.mxu0 0
      %4505 = vmatprep.subr.bf16.mxu0 0
      %4506 = vmatpush1.bf16.msra.mxu0 0
      %4507 = vmatprep.subr.bf16.mxu0 0
      %4508 = vmatpush1.bf16.msra.mxu0 0
      %4509 = vmatprep.subr.bf16.mxu0 0
      %4510 = vmatpush1.bf16.msra.mxu0 0
      %4511 = vmatprep.subr.bf16.mxu0 0
      %4512 = vmatpush1.bf16.msra.mxu0 0
      %4513 = vmatprep.subr.bf16.mxu0 0
      %4514 = vmatpush1.bf16.msra.mxu0 0
      %4515 = vmatprep.subr.bf16.mxu0 0
      %4516 = vmatpush1.bf16.msra.mxu0 0
      %4517 = vmatprep.subr.bf16.mxu0 0
      %4518 = vmatpush1.bf16.msra.mxu0 0
      %4519 = vmatprep.subr.bf16.mxu0 0
      %4520 = vmatpush1.bf16.msra.mxu0 0
      %4521 = vmatprep.mubr.bf16.mxu0 0
      %4522 = vmatmul.mubr.bf16.gmra.mrb[0].mxu0 %v4430
      %v4523 = vpop.f32.mrb[0].mxu0
      %v4524 = vadd.f32 0.0, %v4523
      %v4525 = vpop.f32.mrb[0].mxu0
      %v4526 = vadd.f32 0.0, %v4525
      %v4527 = vpop.f32.mrb[0].mxu0
      %v4528 = vpop.f32.mrb[0].mxu0
      %4529 = vdwg.mxu0
      %v4530 = vpack.c.bf16 %v4483, %v4483
      %v4531 = vpack.c.bf16 %v4485, %v4485
      %v4532 = vpack.c.bf16 %v4524, %v4524
      %v4533 = vpack.c.bf16 %v4526, %v4526
      %v4534 = vld [vmem:[%s5] sm:$0xff]
      %v4535 = vld [vmem:[%s5 + $0x8] sm:$0xf]
      %v4536 = vld [vmem:[%s5 + $0xc] sm:$0xff]
      %v4537 = vld [vmem:[%s5 + $0x14] sm:$0xf]
      %v4538 = vld [vmem:[%s5 + $0x18] sm:$0xff]
      %v4539 = vld [vmem:[%s5 + $0x20] sm:$0xf]
      %v4540 = vld [vmem:[%s5 + $0x24] sm:$0xff]
      %v4541 = vld [vmem:[%s5 + $0x2c] sm:$0xf]
      %v4542 = vld [vmem:[%s5 + $0x30] sm:$0xff]
      %v4543 = vld [vmem:[%s5 + $0x38] sm:$0xf]
      %v4544 = vld [vmem:[%s5 + $0x3c] sm:$0xff]
      %v4545 = vld [vmem:[%s5 + $0x44] sm:$0xf]
      %v4546 = vld [vmem:[%s5 + $0x48] sm:$0xff]
      %v4547 = vld [vmem:[%s5 + $0x50] sm:$0xf]
      %v4548 = vld [vmem:[%s5 + $0x54] sm:$0xff]
      %v4549 = vld [vmem:[%s5 + $0x5c] sm:$0xf]
      %v4550 = vld [vmem:[%s5 + $0x60] sm:$0xff]
      %v4551 = vld [vmem:[%s5 + $0x68] sm:$0xf]
      %v4552 = vld [vmem:[%s5 + $0x6c] sm:$0xff]
      %v4553 = vld [vmem:[%s5 + $0x74] sm:$0xf]
      %v4554 = vld [vmem:[%s5 + $0x78] sm:$0xff]
      %v4555 = vld [vmem:[%s5 + $0x80] sm:$0xf]
      %v4556 = vld [vmem:[%s5 + $0x84] sm:$0xff]
      %v4557 = vld [vmem:[%s5 + $0x8c] sm:$0xf]
      %v4558 = vld [vmem:[%s5 + $0x90] sm:$0xff]
      %v4559 = vld [vmem:[%s5 + $0x98] sm:$0xf]
      %v4560 = vld [vmem:[%s5 + $0x9c] sm:$0xff]
      %v4561 = vld [vmem:[%s5 + $0xa4] sm:$0xf]
      %v4562 = vld [vmem:[%s5 + $0xa8] sm:$0xff]
      %v4563 = vld [vmem:[%s5 + $0xb0] sm:$0xf]
      %v4564 = vld [vmem:[%s5 + $0xb4] sm:$0xff]
      %v4565 = vld [vmem:[%s5 + $0xbc] sm:$0xf]
      %v4566 = vld [vmem:[%s5 + $0xc0] sm:$0xff]
      %v4567 = vld [vmem:[%s5 + $0xc8] sm:$0xf]
      %v4568 = vld [vmem:[%s5 + $0xcc] sm:$0xff]
      %v4569 = vld [vmem:[%s5 + $0xd4] sm:$0xf]
      %v4570 = vld [vmem:[%s5 + $0xd8] sm:$0xff]
      %v4571 = vld [vmem:[%s5 + $0xe0] sm:$0xf]
      %v4572 = vld [vmem:[%s5 + $0xe4] sm:$0xff]
      %v4573 = vld [vmem:[%s5 + $0xec] sm:$0xf]
      %v4574 = vld [vmem:[%s5 + $0xf0] sm:$0xff]
      %v4575 = vld [vmem:[%s5 + $0xf8] sm:$0xf]
      %v4576 = vld [vmem:[%s5 + $0xfc] sm:$0xff]
      %v4577 = vld [vmem:[%s5 + $0x104] sm:$0xf]
      %v4578 = vld [vmem:[%s5 + $0x108] sm:$0xff]
      %v4579 = vld [vmem:[%s5 + $0x110] sm:$0xf]
      %v4580 = vld [vmem:[%s5 + $0x114] sm:$0xff]
      %v4581 = vld [vmem:[%s5 + $0x11c] sm:$0xf]
      %v4582 = vld [vmem:[%s5 + $0x120] sm:$0xff]
      %v4583 = vld [vmem:[%s5 + $0x128] sm:$0xf]
      %v4584 = vld [vmem:[%s5 + $0x12c] sm:$0xff]
      %v4585 = vld [vmem:[%s5 + $0x134] sm:$0xf]
      %v4586 = vld [vmem:[%s5 + $0x138] sm:$0xff]
      %v4587 = vld [vmem:[%s5 + $0x140] sm:$0xf]
      %v4588 = vld [vmem:[%s5 + $0x144] sm:$0xff]
      %v4589 = vld [vmem:[%s5 + $0x14c] sm:$0xf]
      %v4590 = vld [vmem:[%s5 + $0x150] sm:$0xff]
      %v4591 = vld [vmem:[%s5 + $0x158] sm:$0xf]
      %v4592 = vld [vmem:[%s5 + $0x15c] sm:$0xff]
      %v4593 = vld [vmem:[%s5 + $0x164] sm:$0xf]
      %v4594 = vld [vmem:[%s5 + $0x168] sm:$0xff]
      %v4595 = vld [vmem:[%s5 + $0x170] sm:$0xf]
      %v4596 = vld [vmem:[%s5 + $0x174] sm:$0xff]
      %v4597 = vld [vmem:[%s5 + $0x17c] sm:$0xf]
      %v4598 = vld [vmem:[%s5 + $0x180] sm:$0xff]
      %v4599 = vld [vmem:[%s5 + $0x188] sm:$0xf]
      %v4600 = vld [vmem:[%s5 + $0x18c] sm:$0xff]
      %v4601 = vld [vmem:[%s5 + $0x194] sm:$0xf]
      %v4602 = vld [vmem:[%s5 + $0x198] sm:$0xff]
      %v4603 = vld [vmem:[%s5 + $0x1a0] sm:$0xf]
      %v4604 = vld [vmem:[%s5 + $0x1a4] sm:$0xff]
      %v4605 = vld [vmem:[%s5 + $0x1ac] sm:$0xf]
      %v4606 = vld [vmem:[%s5 + $0x1b0] sm:$0xff]
      %v4607 = vld [vmem:[%s5 + $0x1b8] sm:$0xf]
      %v4608 = vld [vmem:[%s5 + $0x1bc] sm:$0xff]
      %v4609 = vld [vmem:[%s5 + $0x1c4] sm:$0xf]
      %v4610 = vld [vmem:[%s5 + $0x1c8] sm:$0xff]
      %v4611 = vld [vmem:[%s5 + $0x1d0] sm:$0xf]
      %v4612 = vld [vmem:[%s5 + $0x1d4] sm:$0xff]
      %v4613 = vld [vmem:[%s5 + $0x1dc] sm:$0xf]
      %v4614 = vld [vmem:[%s5 + $0x1e0] sm:$0xff]
      %v4615 = vld [vmem:[%s5 + $0x1e8] sm:$0xf]
      %v4616 = vld [vmem:[%s5 + $0x1ec] sm:$0xff]
      %v4617 = vld [vmem:[%s5 + $0x1f4] sm:$0xf]
      %v4618 = vld [vmem:[%s5 + $0x1f8] sm:$0xff]
      %v4619 = vld [vmem:[%s5 + $0x200] sm:$0xf]
      %v4620 = vld [vmem:[%s5 + $0x204] sm:$0xff]
      %v4621 = vld [vmem:[%s5 + $0x20c] sm:$0xf]
      %v4622 = vld [vmem:[%s5 + $0x210] sm:$0xff]
      %v4623 = vld [vmem:[%s5 + $0x218] sm:$0xf]
      %v4624 = vld [vmem:[%s5 + $0x21c] sm:$0xff]
      %v4625 = vld [vmem:[%s5 + $0x224] sm:$0xf]
      %v4626 = vld [vmem:[%s5 + $0x228] sm:$0xff]
      %v4627 = vld [vmem:[%s5 + $0x230] sm:$0xf]
      %v4628 = vld [vmem:[%s5 + $0x234] sm:$0xff]
      %v4629 = vld [vmem:[%s5 + $0x23c] sm:$0xf]
      %v4630 = vld [vmem:[%s5 + $0x240] sm:$0xff]
      %v4631 = vld [vmem:[%s5 + $0x248] sm:$0xf]
      %v4632 = vld [vmem:[%s5 + $0x24c] sm:$0xff]
      %v4633 = vld [vmem:[%s5 + $0x254] sm:$0xf]
      %v4634 = vld [vmem:[%s5 + $0x258] sm:$0xff]
      %v4635 = vld [vmem:[%s5 + $0x260] sm:$0xf]
      %v4636 = vld [vmem:[%s5 + $0x264] sm:$0xff]
      %v4637 = vld [vmem:[%s5 + $0x26c] sm:$0xf]
      %s4638 = scalar_lea.vmem %s4, 4
      %v4639 = vld [vmem:[%s4638] sm:$0x7]
      %v4641 = vsel %vm4428, %v4639, 0
      %4643 = vmatprep.subr.bf16.mxu0 %v4440
      %4644 = vmatpush1.bf16.msra.mxu0 %v4437
      %4645 = vmatprep.subr.bf16.mxu0 0
      %4646 = vmatpush1.bf16.msra.mxu0 0
      %4647 = vmatprep.subr.bf16.mxu0 0
      %4648 = vmatpush1.bf16.msra.mxu0 0
      %4649 = vmatprep.subr.bf16.mxu0 0
      %4650 = vmatpush1.bf16.msra.mxu0 0
      %4651 = vmatprep.subr.bf16.mxu0 0
      %4652 = vmatpush1.bf16.msra.mxu0 0
      %4653 = vmatprep.subr.bf16.mxu0 0
      %4654 = vmatpush1.bf16.msra.mxu0 0
      %4655 = vmatprep.subr.bf16.mxu0 0
      %4656 = vmatpush1.bf16.msra.mxu0 0
      %4657 = vmatprep.subr.bf16.mxu0 0
      %4658 = vmatpush1.bf16.msra.mxu0 0
      %4659 = vmatprep.subr.bf16.mxu0 0
      %4660 = vmatpush1.bf16.msra.mxu0 0
      %4661 = vmatprep.subr.bf16.mxu0 0
      %4662 = vmatpush1.bf16.msra.mxu0 0
      %4663 = vmatprep.subr.bf16.mxu0 0
      %4664 = vmatpush1.bf16.msra.mxu0 0
      %4665 = vmatprep.subr.bf16.mxu0 0
      %4666 = vmatpush1.bf16.msra.mxu0 0
      %4667 = vmatprep.subr.bf16.mxu0 0
      %4668 = vmatpush1.bf16.msra.mxu0 0
      %4669 = vmatprep.subr.bf16.mxu0 0
      %4670 = vmatpush1.bf16.msra.mxu0 0
      %4671 = vmatprep.subr.bf16.mxu0 0
      %4672 = vmatpush1.bf16.msra.mxu0 0
      %4673 = vmatprep.subr.bf16.mxu0 0
      %4674 = vmatpush1.bf16.msra.mxu0 0
      %4675 = vmatprep.mubr.bf16.mxu0 0
      %4676 = vmatmul.mubr.bf16.gmra.mrb[0].mxu0 %v4641
      %v4677 = vpop.f32.mrb[0].mxu0
      %v4678 = vadd.f32 0.0, %v4677
      %v4679 = vpop.f32.mrb[0].mxu0
      %v4680 = vadd.f32 0.0, %v4679
      %v4681 = vpop.f32.mrb[0].mxu0
      %v4682 = vpop.f32.mrb[0].mxu0
      %4683 = vdwg.mxu0
      %4684 = vmatprep.subr.bf16.mxu0 %v4446
      %4685 = vmatpush1.bf16.msra.mxu0 %v4443
      %4686 = vmatprep.subr.bf16.mxu0 0
      %4687 = vmatpush1.bf16.msra.mxu0 0
      %4688 = vmatprep.subr.bf16.mxu0 0
      %4689 = vmatpush1.bf16.msra.mxu0 0
      %4690 = vmatprep.subr.bf16.mxu0 0
      %4691 = vmatpush1.bf16.msra.mxu0 0
      %4692 = vmatprep.subr.bf16.mxu0 0
      %4693 = vmatpush1.bf16.msra.mxu0 0
      %4694 = vmatprep.subr.bf16.mxu0 0
      %4695 = vmatpush1.bf16.msra.mxu0 0
      %4696 = vmatprep.subr.bf16.mxu0 0
      %4697 = vmatpush1.bf16.msra.mxu0 0
      %4698 = vmatprep.subr.bf16.mxu0 0
      %4699 = vmatpush1.bf16.msra.mxu0 0
      %4700 = vmatprep.subr.bf16.mxu0 0
      %4701 = vmatpush1.bf16.msra.mxu0 0
      %4702 = vmatprep.subr.bf16.mxu0 0
      %4703 = vmatpush1.bf16.msra.mxu0 0
      %4704 = vmatprep.subr.bf16.mxu0 0
      %4705 = vmatpush1.bf16.msra.mxu0 0
      %4706 = vmatprep.subr.bf16.mxu0 0
      %4707 = vmatpush1.bf16.msra.mxu0 0
      %4708 = vmatprep.subr.bf16.mxu0 0
      %4709 = vmatpush1.bf16.msra.mxu0 0
      %4710 = vmatprep.subr.bf16.mxu0 0
      %4711 = vmatpush1.bf16.msra.mxu0 0
      %4712 = vmatprep.subr.bf16.mxu0 0
      %4713 = vmatpush1.bf16.msra.mxu0 0
      %4714 = vmatprep.subr.bf16.mxu0 0
      %4715 = vmatpush1.bf16.msra.mxu0 0
      %4716 = vmatprep.mubr.bf16.mxu0 0
      %4717 = vmatmul.mubr.bf16.gmra.mrb[0].mxu0 %v4641
      %v4718 = vpop.f32.mrb[0].mxu0
      %v4719 = vadd.f32 0.0, %v4718
      %v4720 = vpop.f32.mrb[0].mxu0
      %v4721 = vadd.f32 0.0, %v4720
      %v4722 = vpop.f32.mrb[0].mxu0
      %v4723 = vpop.f32.mrb[0].mxu0
      %4724 = vdwg.mxu0
      %v4725 = vpack.c.bf16 %v4678, %v4678
      %v4726 = vpack.c.bf16 %v4680, %v4680
      %v4727 = vpack.c.bf16 %v4719, %v4719
      %v4728 = vpack.c.bf16 %v4721, %v4721
      %s4729 = scalar_lea.vmem %s5, 624
      %v4730 = vld [vmem:[%s4729] sm:$0xff]
      %v4731 = vld [vmem:[%s4729 + $0x8] sm:$0xf]
      %v4732 = vld [vmem:[%s4729 + $0xc] sm:$0xff]
      %v4733 = vld [vmem:[%s4729 + $0x14] sm:$0xf]
      %v4734 = vld [vmem:[%s4729 + $0x18] sm:$0xff]
      %v4735 = vld [vmem:[%s4729 + $0x20] sm:$0xf]
      %v4736 = vld [vmem:[%s4729 + $0x24] sm:$0xff]
      %v4737 = vld [vmem:[%s4729 + $0x2c] sm:$0xf]
      %v4738 = vld [vmem:[%s4729 + $0x30] sm:$0xff]
      %v4739 = vld [vmem:[%s4729 + $0x38] sm:$0xf]
      %v4740 = vld [vmem:[%s4729 + $0x3c] sm:$0xff]
      %v4741 = vld [vmem:[%s4729 + $0x44] sm:$0xf]
      %v4742 = vld [vmem:[%s4729 + $0x48] sm:$0xff]
      %v4743 = vld [vmem:[%s4729 + $0x50] sm:$0xf]
      %v4744 = vld [vmem:[%s4729 + $0x54] sm:$0xff]
      %v4745 = vld [vmem:[%s4729 + $0x5c] sm:$0xf]
      %v4746 = vld [vmem:[%s4729 + $0x60] sm:$0xff]
      %v4747 = vld [vmem:[%s4729 + $0x68] sm:$0xf]
      %v4748 = vld [vmem:[%s4729 + $0x6c] sm:$0xff]
      %v4749 = vld [vmem:[%s4729 + $0x74] sm:$0xf]
      %v4750 = vld [vmem:[%s4729 + $0x78] sm:$0xff]
      %v4751 = vld [vmem:[%s4729 + $0x80] sm:$0xf]
      %v4752 = vld [vmem:[%s4729 + $0x84] sm:$0xff]
      %v4753 = vld [vmem:[%s4729 + $0x8c] sm:$0xf]
      %v4754 = vld [vmem:[%s4729 + $0x90] sm:$0xff]
      %v4755 = vld [vmem:[%s4729 + $0x98] sm:$0xf]
      %v4756 = vld [vmem:[%s4729 + $0x9c] sm:$0xff]
      %v4757 = vld [vmem:[%s4729 + $0xa4] sm:$0xf]
      %v4758 = vld [vmem:[%s4729 + $0xa8] sm:$0xff]
      %v4759 = vld [vmem:[%s4729 + $0xb0] sm:$0xf]
      %v4760 = vld [vmem:[%s4729 + $0xb4] sm:$0xff]
      %v4761 = vld [vmem:[%s4729 + $0xbc] sm:$0xf]
      %v4762 = vld [vmem:[%s4729 + $0xc0] sm:$0xff]
      %v4763 = vld [vmem:[%s4729 + $0xc8] sm:$0xf]
      %v4764 = vld [vmem:[%s4729 + $0xcc] sm:$0xff]
      %v4765 = vld [vmem:[%s4729 + $0xd4] sm:$0xf]
      %v4766 = vld [vmem:[%s4729 + $0xd8] sm:$0xff]
      %v4767 = vld [vmem:[%s4729 + $0xe0] sm:$0xf]
      %v4768 = vld [vmem:[%s4729 + $0xe4] sm:$0xff]
      %v4769 = vld [vmem:[%s4729 + $0xec] sm:$0xf]
      %v4770 = vld [vmem:[%s4729 + $0xf0] sm:$0xff]
      %v4771 = vld [vmem:[%s4729 + $0xf8] sm:$0xf]
      %v4772 = vld [vmem:[%s4729 + $0xfc] sm:$0xff]
      %v4773 = vld [vmem:[%s4729 + $0x104] sm:$0xf]
      %v4774 = vld [vmem:[%s4729 + $0x108] sm:$0xff]
      %v4775 = vld [vmem:[%s4729 + $0x110] sm:$0xf]
      %v4776 = vld [vmem:[%s4729 + $0x114] sm:$0xff]
      %v4777 = vld [vmem:[%s4729 + $0x11c] sm:$0xf]
      %v4778 = vld [vmem:[%s4729 + $0x120] sm:$0xff]
      %v4779 = vld [vmem:[%s4729 + $0x128] sm:$0xf]
      %v4780 = vld [vmem:[%s4729 + $0x12c] sm:$0xff]
      %v4781 = vld [vmem:[%s4729 + $0x134] sm:$0xf]
      %v4782 = vld [vmem:[%s4729 + $0x138] sm:$0xff]
      %v4783 = vld [vmem:[%s4729 + $0x140] sm:$0xf]
      %v4784 = vld [vmem:[%s4729 + $0x144] sm:$0xff]
      %v4785 = vld [vmem:[%s4729 + $0x14c] sm:$0xf]
      %v4786 = vld [vmem:[%s4729 + $0x150] sm:$0xff]
      %v4787 = vld [vmem:[%s4729 + $0x158] sm:$0xf]
      %v4788 = vld [vmem:[%s4729 + $0x15c] sm:$0xff]
      %v4789 = vld [vmem:[%s4729 + $0x164] sm:$0xf]
      %v4790 = vld [vmem:[%s4729 + $0x168] sm:$0xff]
      %v4791 = vld [vmem:[%s4729 + $0x170] sm:$0xf]
      %v4792 = vld [vmem:[%s4729 + $0x174] sm:$0xff]
      %v4793 = vld [vmem:[%s4729 + $0x17c] sm:$0xf]
      %v4794 = vld [vmem:[%s4729 + $0x180] sm:$0xff]
      %v4795 = vld [vmem:[%s4729 + $0x188] sm:$0xf]
      %v4796 = vld [vmem:[%s4729 + $0x18c] sm:$0xff]
      %v4797 = vld [vmem:[%s4729 + $0x194] sm:$0xf]
      %v4798 = vld [vmem:[%s4729 + $0x198] sm:$0xff]
      %v4799 = vld [vmem:[%s4729 + $0x1a0] sm:$0xf]
      %v4800 = vld [vmem:[%s4729 + $0x1a4] sm:$0xff]
      %v4801 = vld [vmem:[%s4729 + $0x1ac] sm:$0xf]
      %v4802 = vld [vmem:[%s4729 + $0x1b0] sm:$0xff]
      %v4803 = vld [vmem:[%s4729 + $0x1b8] sm:$0xf]
      %v4804 = vld [vmem:[%s4729 + $0x1bc] sm:$0xff]
      %v4805 = vld [vmem:[%s4729 + $0x1c4] sm:$0xf]
      %v4806 = vld [vmem:[%s4729 + $0x1c8] sm:$0xff]
      %v4807 = vld [vmem:[%s4729 + $0x1d0] sm:$0xf]
      %v4808 = vld [vmem:[%s4729 + $0x1d4] sm:$0xff]
      %v4809 = vld [vmem:[%s4729 + $0x1dc] sm:$0xf]
      %v4810 = vld [vmem:[%s4729 + $0x1e0] sm:$0xff]
      %v4811 = vld [vmem:[%s4729 + $0x1e8] sm:$0xf]
      %v4812 = vld [vmem:[%s4729 + $0x1ec] sm:$0xff]
      %v4813 = vld [vmem:[%s4729 + $0x1f4] sm:$0xf]
      %v4814 = vld [vmem:[%s4729 + $0x1f8] sm:$0xff]
      %v4815 = vld [vmem:[%s4729 + $0x200] sm:$0xf]
      %v4816 = vld [vmem:[%s4729 + $0x204] sm:$0xff]
      %v4817 = vld [vmem:[%s4729 + $0x20c] sm:$0xf]
      %v4818 = vld [vmem:[%s4729 + $0x210] sm:$0xff]
      %v4819 = vld [vmem:[%s4729 + $0x218] sm:$0xf]
      %v4820 = vld [vmem:[%s4729 + $0x21c] sm:$0xff]
      %v4821 = vld [vmem:[%s4729 + $0x224] sm:$0xf]
      %v4822 = vld [vmem:[%s4729 + $0x228] sm:$0xff]
      %v4823 = vld [vmem:[%s4729 + $0x230] sm:$0xf]
      %v4824 = vld [vmem:[%s4729 + $0x234] sm:$0xff]
      %v4825 = vld [vmem:[%s4729 + $0x23c] sm:$0xf]
      %v4826 = vld [vmem:[%s4729 + $0x240] sm:$0xff]
      %v4827 = vld [vmem:[%s4729 + $0x248] sm:$0xf]
      %v4828 = vld [vmem:[%s4729 + $0x24c] sm:$0xff]
      %v4829 = vld [vmem:[%s4729 + $0x254] sm:$0xf]
      %v4830 = vld [vmem:[%s4729 + $0x258] sm:$0xff]
      %v4831 = vld [vmem:[%s4729 + $0x260] sm:$0xf]
      %v4832 = vld [vmem:[%s4729 + $0x264] sm:$0xff]
      %v4833 = vld [vmem:[%s4729 + $0x26c] sm:$0xf]
      %v4938 = vunpack.c.l.b16 %v4730
      %v4939 = vunpack.c.h.b16 %v4730
      %v4940 = vunpack.c.l.b16 %v4731
      %v4941 = vunpack.c.l.b16 %v4732
      %v4942 = vunpack.c.h.b16 %v4732
      %v4943 = vunpack.c.l.b16 %v4733
      %v4944 = vunpack.c.l.b16 %v4734
      %v4945 = vunpack.c.h.b16 %v4734
      %v4946 = vunpack.c.l.b16 %v4735
      %v4947 = vunpack.c.l.b16 %v4736
      %v4948 = vunpack.c.h.b16 %v4736
      %v4949 = vunpack.c.l.b16 %v4737
      %v4950 = vunpack.c.l.b16 %v4738
      %v4951 = vunpack.c.h.b16 %v4738
      %v4952 = vunpack.c.l.b16 %v4739
      %v4953 = vunpack.c.l.b16 %v4740
      %v4954 = vunpack.c.h.b16 %v4740
      %v4955 = vunpack.c.l.b16 %v4741
      %v4956 = vunpack.c.l.b16 %v4742
      %v4957 = vunpack.c.h.b16 %v4742
      %v4958 = vunpack.c.l.b16 %v4743
      %v4959 = vunpack.c.l.b16 %v4744
      %v4960 = vunpack.c.h.b16 %v4744
      %v4961 = vunpack.c.l.b16 %v4745
      %v4962 = vunpack.c.l.b16 %v4746
      %v4963 = vunpack.c.h.b16 %v4746
      %v4964 = vunpack.c.l.b16 %v4747
      %v4965 = vunpack.c.l.b16 %v4748
      %v4966 = vunpack.c.h.b16 %v4748
      %v4967 = vunpack.c.l.b16 %v4749
      %v4968 = vunpack.c.l.b16 %v4750
      %v4969 = vunpack.c.h.b16 %v4750
      %v4970 = vunpack.c.l.b16 %v4751
      %v4971 = vunpack.c.l.b16 %v4752
      %v4972 = vunpack.c.h.b16 %v4752
      %v4973 = vunpack.c.l.b16 %v4753
      %v4974 = vunpack.c.l.b16 %v4754
      %v4975 = vunpack.c.h.b16 %v4754
      %v4976 = vunpack.c.l.b16 %v4755
      %v4977 = vunpack.c.l.b16 %v4756
      %v4978 = vunpack.c.h.b16 %v4756
      %v4979 = vunpack.c.l.b16 %v4757
      %v4980 = vunpack.c.l.b16 %v4758
      %v4981 = vunpack.c.h.b16 %v4758
      %v4982 = vunpack.c.l.b16 %v4759
      %v4983 = vunpack.c.l.b16 %v4760
      %v4984 = vunpack.c.h.b16 %v4760
      %v4985 = vunpack.c.l.b16 %v4761
      %v4986 = vunpack.c.l.b16 %v4762
      %v4987 = vunpack.c.h.b16 %v4762
      %v4988 = vunpack.c.l.b16 %v4763
      %v4989 = vunpack.c.l.b16 %v4764
      %v4990 = vunpack.c.h.b16 %v4764
      %v4991 = vunpack.c.l.b16 %v4765
      %v4992 = vunpack.c.l.b16 %v4766
      %v4993 = vunpack.c.h.b16 %v4766
      %v4994 = vunpack.c.l.b16 %v4767
      %v4995 = vunpack.c.l.b16 %v4768
      %v4996 = vunpack.c.h.b16 %v4768
      %v4997 = vunpack.c.l.b16 %v4769
      %v4998 = vunpack.c.l.b16 %v4770
      %v4999 = vunpack.c.h.b16 %v4770
      %v5000 = vunpack.c.l.b16 %v4771
      %v5001 = vunpack.c.l.b16 %v4772
      %v5002 = vunpack.c.h.b16 %v4772
      %v5003 = vunpack.c.l.b16 %v4773
      %v5004 = vunpack.c.l.b16 %v4774
      %v5005 = vunpack.c.h.b16 %v4774
      %v5006 = vunpack.c.l.b16 %v4775
      %v5007 = vunpack.c.l.b16 %v4776
      %v5008 = vunpack.c.h.b16 %v4776
      %v5009 = vunpack.c.l.b16 %v4777
      %v5010 = vunpack.c.l.b16 %v4778
      %v5011 = vunpack.c.h.b16 %v4778
      %v5012 = vunpack.c.l.b16 %v4779
      %v5013 = vunpack.c.l.b16 %v4780
      %v5014 = vunpack.c.h.b16 %v4780
      %v5015 = vunpack.c.l.b16 %v4781
      %v5016 = vunpack.c.l.b16 %v4782
      %v5017 = vunpack.c.h.b16 %v4782
      %v5018 = vunpack.c.l.b16 %v4783
      %v5019 = vunpack.c.l.b16 %v4784
      %v5020 = vunpack.c.h.b16 %v4784
      %v5021 = vunpack.c.l.b16 %v4785
      %v5022 = vunpack.c.l.b16 %v4786
      %v5023 = vunpack.c.h.b16 %v4786
      %v5024 = vunpack.c.l.b16 %v4787
      %v5025 = vunpack.c.l.b16 %v4788
      %v5026 = vunpack.c.h.b16 %v4788
      %v5027 = vunpack.c.l.b16 %v4789
      %v5028 = vunpack.c.l.b16 %v4790
      %v5029 = vunpack.c.h.b16 %v4790
      %v5030 = vunpack.c.l.b16 %v4791
      %v5031 = vunpack.c.l.b16 %v4792
      %v5032 = vunpack.c.h.b16 %v4792
      %v5033 = vunpack.c.l.b16 %v4793
      %v5034 = vunpack.c.l.b16 %v4794
      %v5035 = vunpack.c.h.b16 %v4794
      %v5036 = vunpack.c.l.b16 %v4795
      %v5037 = vunpack.c.l.b16 %v4796
      %v5038 = vunpack.c.h.b16 %v4796
      %v5039 = vunpack.c.l.b16 %v4797
      %v5040 = vunpack.c.l.b16 %v4798
      %v5041 = vunpack.c.h.b16 %v4798
      %v5042 = vunpack.c.l.b16 %v4799
      %v5043 = vunpack.c.l.b16 %v4800
      %v5044 = vunpack.c.h.b16 %v4800
      %v5045 = vunpack.c.l.b16 %v4801
      %v5046 = vunpack.c.l.b16 %v4802
      %v5047 = vunpack.c.h.b16 %v4802
      %v5048 = vunpack.c.l.b16 %v4803
      %v5049 = vunpack.c.l.b16 %v4804
      %v5050 = vunpack.c.h.b16 %v4804
      %v5051 = vunpack.c.l.b16 %v4805
      %v5052 = vunpack.c.l.b16 %v4806
      %v5053 = vunpack.c.h.b16 %v4806
      %v5054 = vunpack.c.l.b16 %v4807
      %v5055 = vunpack.c.l.b16 %v4808
      %v5056 = vunpack.c.h.b16 %v4808
      %v5057 = vunpack.c.l.b16 %v4809
      %v5058 = vunpack.c.l.b16 %v4810
      %v5059 = vunpack.c.h.b16 %v4810
      %v5060 = vunpack.c.l.b16 %v4811
      %v5061 = vunpack.c.l.b16 %v4812
      %v5062 = vunpack.c.h.b16 %v4812
      %v5063 = vunpack.c.l.b16 %v4813
      %v5064 = vunpack.c.l.b16 %v4814
      %v5065 = vunpack.c.h.b16 %v4814
      %v5066 = vunpack.c.l.b16 %v4815
      %v5067 = vunpack.c.l.b16 %v4816
      %v5068 = vunpack.c.h.b16 %v4816
      %v5069 = vunpack.c.l.b16 %v4817
      %v5070 = vunpack.c.l.b16 %v4818
      %v5071 = vunpack.c.h.b16 %v4818
      %v5072 = vunpack.c.l.b16 %v4819
      %v5073 = vunpack.c.l.b16 %v4820
      %v5074 = vunpack.c.h.b16 %v4820
      %v5075 = vunpack.c.l.b16 %v4821
      %v5076 = vunpack.c.l.b16 %v4822
      %v5077 = vunpack.c.h.b16 %v4822
      %v5078 = vunpack.c.l.b16 %v4823
      %v5079 = vunpack.c.l.b16 %v4824
      %v5080 = vunpack.c.h.b16 %v4824
      %v5081 = vunpack.c.l.b16 %v4825
      %v5082 = vunpack.c.l.b16 %v4826
      %v5083 = vunpack.c.h.b16 %v4826
      %v5084 = vunpack.c.l.b16 %v4827
      %v5085 = vunpack.c.l.b16 %v4828
      %v5086 = vunpack.c.h.b16 %v4828
      %v5087 = vunpack.c.l.b16 %v4829
      %v5088 = vunpack.c.l.b16 %v4830
      %v5089 = vunpack.c.h.b16 %v4830
      %v5090 = vunpack.c.l.b16 %v4831
      %v5091 = vunpack.c.l.b16 %v4832
      %v5092 = vunpack.c.h.b16 %v4832
      %v5093 = vunpack.c.l.b16 %v4833
      %v5094 = vpack.c.b16 %v4941, %v4938
      %v5095 = vpack.c.b16 %v4942, %v4939
      %v5096 = vpack.c.b16 %v4943, %v4940
      %v5097 = vpack.c.b16 %v4947, %v4944
      %v5098 = vpack.c.b16 %v4948, %v4945
      %v5099 = vpack.c.b16 %v4949, %v4946
      %v5100 = vpack.c.b16 %v4953, %v4950
      %v5101 = vpack.c.b16 %v4954, %v4951
      %v5102 = vpack.c.b16 %v4955, %v4952
      %v5103 = vpack.c.b16 %v4959, %v4956
      %v5104 = vpack.c.b16 %v4960, %v4957
      %v5105 = vpack.c.b16 %v4961, %v4958
      %v5106 = vpack.c.b16 %v4965, %v4962
      %v5107 = vpack.c.b16 %v4966, %v4963
      %v5108 = vpack.c.b16 %v4967, %v4964
      %v5109 = vpack.c.b16 %v4971, %v4968
      %v5110 = vpack.c.b16 %v4972, %v4969
      %v5111 = vpack.c.b16 %v4973, %v4970
      %v5112 = vpack.c.b16 %v4977, %v4974
      %v5113 = vpack.c.b16 %v4978, %v4975
      %v5114 = vpack.c.b16 %v4979, %v4976
      %v5115 = vpack.c.b16 %v4983, %v4980
      %v5116 = vpack.c.b16 %v4984, %v4981
      %v5117 = vpack.c.b16 %v4985, %v4982
      %v5118 = vpack.c.b16 %v4989, %v4986
      %v5119 = vpack.c.b16 %v4990, %v4987
      %v5120 = vpack.c.b16 %v4991, %v4988
      %v5121 = vpack.c.b16 %v4995, %v4992
      %v5122 = vpack.c.b16 %v4996, %v4993
      %v5123 = vpack.c.b16 %v4997, %v4994
      %v5124 = vpack.c.b16 %v5001, %v4998
      %v5125 = vpack.c.b16 %v5002, %v4999
      %v5126 = vpack.c.b16 %v5003, %v5000
      %v5127 = vpack.c.b16 %v5007, %v5004
      %v5128 = vpack.c.b16 %v5008, %v5005
      %v5129 = vpack.c.b16 %v5009, %v5006
      %v5130 = vpack.c.b16 %v5013, %v5010
      %v5131 = vpack.c.b16 %v5014, %v5011
      %v5132 = vpack.c.b16 %v5015, %v5012
      %v5133 = vpack.c.b16 %v5019, %v5016
      %v5134 = vpack.c.b16 %v5020, %v5017
      %v5135 = vpack.c.b16 %v5021, %v5018
      %v5136 = vpack.c.b16 %v5025, %v5022
      %v5137 = vpack.c.b16 %v5026, %v5023
      %v5138 = vpack.c.b16 %v5027, %v5024
      %v5139 = vpack.c.b16 %v5031, %v5028
      %v5140 = vpack.c.b16 %v5032, %v5029
      %v5141 = vpack.c.b16 %v5033, %v5030
      %v5142 = vpack.c.b16 %v5037, %v5034
      %v5143 = vpack.c.b16 %v5038, %v5035
      %v5144 = vpack.c.b16 %v5039, %v5036
      %v5145 = vpack.c.b16 %v5043, %v5040
      %v5146 = vpack.c.b16 %v5044, %v5041
      %v5147 = vpack.c.b16 %v5045, %v5042
      %v5148 = vpack.c.b16 %v5049, %v5046
      %v5149 = vpack.c.b16 %v5050, %v5047
      %v5150 = vpack.c.b16 %v5051, %v5048
      %v5151 = vpack.c.b16 %v5055, %v5052
      %v5152 = vpack.c.b16 %v5056, %v5053
      %v5153 = vpack.c.b16 %v5057, %v5054
      %v5154 = vpack.c.b16 %v5061, %v5058
      %v5155 = vpack.c.b16 %v5062, %v5059
      %v5156 = vpack.c.b16 %v5063, %v5060
      %v5157 = vpack.c.b16 %v5067, %v5064
      %v5158 = vpack.c.b16 %v5068, %v5065
      %v5159 = vpack.c.b16 %v5069, %v5066
      %v5160 = vpack.c.b16 %v5073, %v5070
      %v5161 = vpack.c.b16 %v5074, %v5071
      %v5162 = vpack.c.b16 %v5075, %v5072
      %v5163 = vpack.c.b16 %v5079, %v5076
      %v5164 = vpack.c.b16 %v5080, %v5077
      %v5165 = vpack.c.b16 %v5081, %v5078
      %v5166 = vpack.c.b16 %v5085, %v5082
      %v5167 = vpack.c.b16 %v5086, %v5083
      %v5168 = vpack.c.b16 %v5087, %v5084
      %v5169 = vpack.c.b16 %v5091, %v5088
      %v5170 = vpack.c.b16 %v5092, %v5089
      %v5171 = vpack.c.b16 %v5093, %v5090
      %vm5250 = vcmask 261120
      %v5252 = vsel %vm5250, %v4728, 0
      %5254 = vmatprep.subr.bf16.mxu0 %v5095
      %5255 = vmatpush1.bf16.msra.mxu0 %v5094
      %5256 = vmatprep.subr.bf16.mxu0 %v5098
      %5257 = vmatpush1.bf16.msra.mxu0 %v5097
      %5258 = vmatprep.subr.bf16.mxu0 %v5101
      %5259 = vmatpush1.bf16.msra.mxu0 %v5100
      %5260 = vmatprep.subr.bf16.mxu0 %v5104
      %5261 = vmatpush1.bf16.msra.mxu0 %v5103
      %5262 = vmatprep.subr.bf16.mxu0 %v5107
      %5263 = vmatpush1.bf16.msra.mxu0 %v5106
      %5264 = vmatprep.subr.bf16.mxu0 %v5110
      %5265 = vmatpush1.bf16.msra.mxu0 %v5109
      %5266 = vmatprep.subr.bf16.mxu0 %v5113
      %5267 = vmatpush1.bf16.msra.mxu0 %v5112
      %5268 = vmatprep.subr.bf16.mxu0 %v5116
      %5269 = vmatpush1.bf16.msra.mxu0 %v5115
      %5270 = vmatprep.subr.bf16.mxu0 %v5119
      %5271 = vmatpush1.bf16.msra.mxu0 %v5118
      %5272 = vmatprep.subr.bf16.mxu0 %v5122
      %5273 = vmatpush1.bf16.msra.mxu0 %v5121
      %5274 = vmatprep.subr.bf16.mxu0 %v5125
      %5275 = vmatpush1.bf16.msra.mxu0 %v5124
      %5276 = vmatprep.subr.bf16.mxu0 %v5128
      %5277 = vmatpush1.bf16.msra.mxu0 %v5127
      %5278 = vmatprep.subr.bf16.mxu0 %v5131
      %5279 = vmatpush1.bf16.msra.mxu0 %v5130
      %5280 = vmatprep.subr.bf16.mxu0 %v5134
      %5281 = vmatpush1.bf16.msra.mxu0 %v5133
      %5282 = vmatprep.subr.bf16.mxu0 %v5137
      %5283 = vmatpush1.bf16.msra.mxu0 %v5136
      %5284 = vmatprep.subr.bf16.mxu0 %v5140
      %5285 = vmatpush1.bf16.msra.mxu0 %v5139
      %5286 = vmatprep.mubr.bf16.mxu0 %v4726
      %5287 = vmatmul.mubr.bf16.gmra.mrb[0].mxu0 %v4725
      %v5288 = vpop.f32.mrb[0].mxu0
      %v5289 = vadd.f32 0.0, %v5288
      %v5290 = vpop.f32.mrb[0].mxu0
      %v5291 = vadd.f32 0.0, %v5290
      %v5292 = vpop.f32.mrb[0].mxu0
      %v5293 = vpop.f32.mrb[0].mxu0
      %5294 = vdwg.mxu0
      %5295 = vmatprep.subr.bf16.mxu0 %v5143
      %5296 = vmatpush1.bf16.msra.mxu0 %v5142
      %5297 = vmatprep.subr.bf16.mxu0 %v5146
      %5298 = vmatpush1.bf16.msra.mxu0 %v5145
      %5299 = vmatprep.subr.bf16.mxu0 %v5149
      %5300 = vmatpush1.bf16.msra.mxu0 %v5148
      %5301 = vmatprep.subr.bf16.mxu0 %v5152
      %5302 = vmatpush1.bf16.msra.mxu0 %v5151
      %5303 = vmatprep.subr.bf16.mxu0 %v5155
      %5304 = vmatpush1.bf16.msra.mxu0 %v5154
      %5305 = vmatprep.subr.bf16.mxu0 %v5158
      %5306 = vmatpush1.bf16.msra.mxu0 %v5157
      %5307 = vmatprep.subr.bf16.mxu0 %v5161
      %5308 = vmatpush1.bf16.msra.mxu0 %v5160
      %5309 = vmatprep.subr.bf16.mxu0 %v5164
      %5310 = vmatpush1.bf16.msra.mxu0 %v5163
      %5311 = vmatprep.subr.bf16.mxu0 %v5167
      %5312 = vmatpush1.bf16.msra.mxu0 %v5166
      %5313 = vmatprep.subr.bf16.mxu0 %v5170
      %5314 = vmatpush1.bf16.msra.mxu0 %v5169
      %5315 = vmatprep.subr.bf16.mxu0 0
      %5316 = vmatpush1.bf16.msra.mxu0 0
      %5317 = vmatprep.subr.bf16.mxu0 0
      %5318 = vmatpush1.bf16.msra.mxu0 0
      %5319 = vmatprep.subr.bf16.mxu0 0
      %5320 = vmatpush1.bf16.msra.mxu0 0
      %5321 = vmatprep.subr.bf16.mxu0 0
      %5322 = vmatpush1.bf16.msra.mxu0 0
      %5323 = vmatprep.subr.bf16.mxu0 0
      %5324 = vmatpush1.bf16.msra.mxu0 0
      %5325 = vmatprep.subr.bf16.mxu0 0
      %5326 = vmatpush1.bf16.msra.mxu0 0
      %5327 = vmatprep.mubr.bf16.mxu0 %v5252
      %5328 = vmatmul.mubr.bf16.gmra.mrb[0].mxu0 %v4727
      %v5329 = vpop.f32.mrb[0].mxu0
      %v5330 = vadd.f32 %v5289, %v5329
      %v5331 = vpop.f32.mrb[0].mxu0
      %v5332 = vadd.f32 %v5291, %v5331
      %v5333 = vpop.f32.mrb[0].mxu0
      %v5334 = vpop.f32.mrb[0].mxu0
      %5335 = vdwg.mxu0
      %5336 = vmatprep.subr.bf16.mxu0 0
      %5337 = vmatpush1.bf16.msra.mxu0 %v5096
      %5338 = vmatprep.subr.bf16.mxu0 0
      %5339 = vmatpush1.bf16.msra.mxu0 %v5099
      %5340 = vmatprep.subr.bf16.mxu0 0
      %5341 = vmatpush1.bf16.msra.mxu0 %v5102
      %5342 = vmatprep.subr.bf16.mxu0 0
      %5343 = vmatpush1.bf16.msra.mxu0 %v5105
      %5344 = vmatprep.subr.bf16.mxu0 0
      %5345 = vmatpush1.bf16.msra.mxu0 %v5108
      %5346 = vmatprep.subr.bf16.mxu0 0
      %5347 = vmatpush1.bf16.msra.mxu0 %v5111
      %5348 = vmatprep.subr.bf16.mxu0 0
      %5349 = vmatpush1.bf16.msra.mxu0 %v5114
      %5350 = vmatprep.subr.bf16.mxu0 0
      %5351 = vmatpush1.bf16.msra.mxu0 %v5117
      %5352 = vmatprep.subr.bf16.mxu0 0
      %5353 = vmatpush1.bf16.msra.mxu0 %v5120
      %5354 = vmatprep.subr.bf16.mxu0 0
      %5355 = vmatpush1.bf16.msra.mxu0 %v5123
      %5356 = vmatprep.subr.bf16.mxu0 0
      %5357 = vmatpush1.bf16.msra.mxu0 %v5126
      %5358 = vmatprep.subr.bf16.mxu0 0
      %5359 = vmatpush1.bf16.msra.mxu0 %v5129
      %5360 = vmatprep.subr.bf16.mxu0 0
      %5361 = vmatpush1.bf16.msra.mxu0 %v5132
      %5362 = vmatprep.subr.bf16.mxu0 0
      %5363 = vmatpush1.bf16.msra.mxu0 %v5135
      %5364 = vmatprep.subr.bf16.mxu0 0
      %5365 = vmatpush1.bf16.msra.mxu0 %v5138
      %5366 = vmatprep.subr.bf16.mxu0 0
      %5367 = vmatpush1.bf16.msra.mxu0 %v5141
      %5368 = vmatprep.mubr.bf16.mxu0 %v4726
      %5369 = vmatmul.mubr.bf16.gmra.mrb[0].mxu0 %v4725
      %v5370 = vpop.f32.mrb[0].mxu0
      %v5371 = vadd.f32 0.0, %v5370
      %v5372 = vpop.f32.mrb[0].mxu0
      %v5373 = vpop.f32.mrb[0].mxu0
      %v5374 = vpop.f32.mrb[0].mxu0
      %5375 = vdwg.mxu0
      %5376 = vmatprep.subr.bf16.mxu0 0
      %5377 = vmatpush1.bf16.msra.mxu0 %v5144
      %5378 = vmatprep.subr.bf16.mxu0 0
      %5379 = vmatpush1.bf16.msra.mxu0 %v5147
      %5380 = vmatprep.subr.bf16.mxu0 0
      %5381 = vmatpush1.bf16.msra.mxu0 %v5150
      %5382 = vmatprep.subr.bf16.mxu0 0
      %5383 = vmatpush1.bf16.msra.mxu0 %v5153
      %5384 = vmatprep.subr.bf16.mxu0 0
      %5385 = vmatpush1.bf16.msra.mxu0 %v5156
      %5386 = vmatprep.subr.bf16.mxu0 0
      %5387 = vmatpush1.bf16.msra.mxu0 %v5159
      %5388 = vmatprep.subr.bf16.mxu0 0
      %5389 = vmatpush1.bf16.msra.mxu0 %v5162
      %5390 = vmatprep.subr.bf16.mxu0 0
      %5391 = vmatpush1.bf16.msra.mxu0 %v5165
      %5392 = vmatprep.subr.bf16.mxu0 0
      %5393 = vmatpush1.bf16.msra.mxu0 %v5168
      %5394 = vmatprep.subr.bf16.mxu0 0
      %5395 = vmatpush1.bf16.msra.mxu0 %v5171
      %5396 = vmatprep.subr.bf16.mxu0 0
      %5397 = vmatpush1.bf16.msra.mxu0 0
      %5398 = vmatprep.subr.bf16.mxu0 0
      %5399 = vmatpush1.bf16.msra.mxu0 0
      %5400 = vmatprep.subr.bf16.mxu0 0
      %5401 = vmatpush1.bf16.msra.mxu0 0
      %5402 = vmatprep.subr.bf16.mxu0 0
      %5403 = vmatpush1.bf16.msra.mxu0 0
      %5404 = vmatprep.subr.bf16.mxu0 0
      %5405 = vmatpush1.bf16.msra.mxu0 0
      %5406 = vmatprep.subr.bf16.mxu0 0
      %5407 = vmatpush1.bf16.msra.mxu0 0
      %5408 = vmatprep.mubr.bf16.mxu0 %v5252
      %5409 = vmatmul.mubr.bf16.gmra.mrb[0].mxu0 %v4727
      %v5410 = vpop.f32.mrb[0].mxu0
      %v5411 = vadd.f32 %v5371, %v5410
      %v5412 = vpop.f32.mrb[0].mxu0
      %v5413 = vpop.f32.mrb[0].mxu0
      %v5414 = vpop.f32.mrb[0].mxu0
      %5415 = vdwg.mxu0
      %v5520 = vunpack.c.l.b16 %v4534
      %v5521 = vunpack.c.h.b16 %v4534
      %v5522 = vunpack.c.l.b16 %v4535
      %v5523 = vunpack.c.l.b16 %v4536
      %v5524 = vunpack.c.h.b16 %v4536
      %v5525 = vunpack.c.l.b16 %v4537
      %v5526 = vunpack.c.l.b16 %v4538
      %v5527 = vunpack.c.h.b16 %v4538
      %v5528 = vunpack.c.l.b16 %v4539
      %v5529 = vunpack.c.l.b16 %v4540
      %v5530 = vunpack.c.h.b16 %v4540
      %v5531 = vunpack.c.l.b16 %v4541
      %v5532 = vunpack.c.l.b16 %v4542
      %v5533 = vunpack.c.h.b16 %v4542
      %v5534 = vunpack.c.l.b16 %v4543
      %v5535 = vunpack.c.l.b16 %v4544
      %v5536 = vunpack.c.h.b16 %v4544
      %v5537 = vunpack.c.l.b16 %v4545
      %v5538 = vunpack.c.l.b16 %v4546
      %v5539 = vunpack.c.h.b16 %v4546
      %v5540 = vunpack.c.l.b16 %v4547
      %v5541 = vunpack.c.l.b16 %v4548
      %v5542 = vunpack.c.h.b16 %v4548
      %v5543 = vunpack.c.l.b16 %v4549
      %v5544 = vunpack.c.l.b16 %v4550
      %v5545 = vunpack.c.h.b16 %v4550
      %v5546 = vunpack.c.l.b16 %v4551
      %v5547 = vunpack.c.l.b16 %v4552
      %v5548 = vunpack.c.h.b16 %v4552
      %v5549 = vunpack.c.l.b16 %v4553
      %v5550 = vunpack.c.l.b16 %v4554
      %v5551 = vunpack.c.h.b16 %v4554
      %v5552 = vunpack.c.l.b16 %v4555
      %v5553 = vunpack.c.l.b16 %v4556
      %v5554 = vunpack.c.h.b16 %v4556
      %v5555 = vunpack.c.l.b16 %v4557
      %v5556 = vunpack.c.l.b16 %v4558
      %v5557 = vunpack.c.h.b16 %v4558
      %v5558 = vunpack.c.l.b16 %v4559
      %v5559 = vunpack.c.l.b16 %v4560
      %v5560 = vunpack.c.h.b16 %v4560
      %v5561 = vunpack.c.l.b16 %v4561
      %v5562 = vunpack.c.l.b16 %v4562
      %v5563 = vunpack.c.h.b16 %v4562
      %v5564 = vunpack.c.l.b16 %v4563
      %v5565 = vunpack.c.l.b16 %v4564
      %v5566 = vunpack.c.h.b16 %v4564
      %v5567 = vunpack.c.l.b16 %v4565
      %v5568 = vunpack.c.l.b16 %v4566
      %v5569 = vunpack.c.h.b16 %v4566
      %v5570 = vunpack.c.l.b16 %v4567
      %v5571 = vunpack.c.l.b16 %v4568
      %v5572 = vunpack.c.h.b16 %v4568
      %v5573 = vunpack.c.l.b16 %v4569
      %v5574 = vunpack.c.l.b16 %v4570
      %v5575 = vunpack.c.h.b16 %v4570
      %v5576 = vunpack.c.l.b16 %v4571
      %v5577 = vunpack.c.l.b16 %v4572
      %v5578 = vunpack.c.h.b16 %v4572
      %v5579 = vunpack.c.l.b16 %v4573
      %v5580 = vunpack.c.l.b16 %v4574
      %v5581 = vunpack.c.h.b16 %v4574
      %v5582 = vunpack.c.l.b16 %v4575
      %v5583 = vunpack.c.l.b16 %v4576
      %v5584 = vunpack.c.h.b16 %v4576
      %v5585 = vunpack.c.l.b16 %v4577
      %v5586 = vunpack.c.l.b16 %v4578
      %v5587 = vunpack.c.h.b16 %v4578
      %v5588 = vunpack.c.l.b16 %v4579
      %v5589 = vunpack.c.l.b16 %v4580
      %v5590 = vunpack.c.h.b16 %v4580
      %v5591 = vunpack.c.l.b16 %v4581
      %v5592 = vunpack.c.l.b16 %v4582
      %v5593 = vunpack.c.h.b16 %v4582
      %v5594 = vunpack.c.l.b16 %v4583
      %v5595 = vunpack.c.l.b16 %v4584
      %v5596 = vunpack.c.h.b16 %v4584
      %v5597 = vunpack.c.l.b16 %v4585
      %v5598 = vunpack.c.l.b16 %v4586
      %v5599 = vunpack.c.h.b16 %v4586
      %v5600 = vunpack.c.l.b16 %v4587
      %v5601 = vunpack.c.l.b16 %v4588
      %v5602 = vunpack.c.h.b16 %v4588
      %v5603 = vunpack.c.l.b16 %v4589
      %v5604 = vunpack.c.l.b16 %v4590
      %v5605 = vunpack.c.h.b16 %v4590
      %v5606 = vunpack.c.l.b16 %v4591
      %v5607 = vunpack.c.l.b16 %v4592
      %v5608 = vunpack.c.h.b16 %v4592
      %v5609 = vunpack.c.l.b16 %v4593
      %v5610 = vunpack.c.l.b16 %v4594
      %v5611 = vunpack.c.h.b16 %v4594
      %v5612 = vunpack.c.l.b16 %v4595
      %v5613 = vunpack.c.l.b16 %v4596
      %v5614 = vunpack.c.h.b16 %v4596
      %v5615 = vunpack.c.l.b16 %v4597
      %v5616 = vunpack.c.l.b16 %v4598
      %v5617 = vunpack.c.h.b16 %v4598
      %v5618 = vunpack.c.l.b16 %v4599
      %v5619 = vunpack.c.l.b16 %v4600
      %v5620 = vunpack.c.h.b16 %v4600
      %v5621 = vunpack.c.l.b16 %v4601
      %v5622 = vunpack.c.l.b16 %v4602
      %v5623 = vunpack.c.h.b16 %v4602
      %v5624 = vunpack.c.l.b16 %v4603
      %v5625 = vunpack.c.l.b16 %v4604
      %v5626 = vunpack.c.h.b16 %v4604
      %v5627 = vunpack.c.l.b16 %v4605
      %v5628 = vunpack.c.l.b16 %v4606
      %v5629 = vunpack.c.h.b16 %v4606
      %v5630 = vunpack.c.l.b16 %v4607
      %v5631 = vunpack.c.l.b16 %v4608
      %v5632 = vunpack.c.h.b16 %v4608
      %v5633 = vunpack.c.l.b16 %v4609
      %v5634 = vunpack.c.l.b16 %v4610
      %v5635 = vunpack.c.h.b16 %v4610
      %v5636 = vunpack.c.l.b16 %v4611
      %v5637 = vunpack.c.l.b16 %v4612
      %v5638 = vunpack.c.h.b16 %v4612
      %v5639 = vunpack.c.l.b16 %v4613
      %v5640 = vunpack.c.l.b16 %v4614
      %v5641 = vunpack.c.h.b16 %v4614
      %v5642 = vunpack.c.l.b16 %v4615
      %v5643 = vunpack.c.l.b16 %v4616
      %v5644 = vunpack.c.h.b16 %v4616
      %v5645 = vunpack.c.l.b16 %v4617
      %v5646 = vunpack.c.l.b16 %v4618
      %v5647 = vunpack.c.h.b16 %v4618
      %v5648 = vunpack.c.l.b16 %v4619
      %v5649 = vunpack.c.l.b16 %v4620
      %v5650 = vunpack.c.h.b16 %v4620
      %v5651 = vunpack.c.l.b16 %v4621
      %v5652 = vunpack.c.l.b16 %v4622
      %v5653 = vunpack.c.h.b16 %v4622
      %v5654 = vunpack.c.l.b16 %v4623
      %v5655 = vunpack.c.l.b16 %v4624
      %v5656 = vunpack.c.h.b16 %v4624
      %v5657 = vunpack.c.l.b16 %v4625
      %v5658 = vunpack.c.l.b16 %v4626
      %v5659 = vunpack.c.h.b16 %v4626
      %v5660 = vunpack.c.l.b16 %v4627
      %v5661 = vunpack.c.l.b16 %v4628
      %v5662 = vunpack.c.h.b16 %v4628
      %v5663 = vunpack.c.l.b16 %v4629
      %v5664 = vunpack.c.l.b16 %v4630
      %v5665 = vunpack.c.h.b16 %v4630
      %v5666 = vunpack.c.l.b16 %v4631
      %v5667 = vunpack.c.l.b16 %v4632
      %v5668 = vunpack.c.h.b16 %v4632
      %v5669 = vunpack.c.l.b16 %v4633
      %v5670 = vunpack.c.l.b16 %v4634
      %v5671 = vunpack.c.h.b16 %v4634
      %v5672 = vunpack.c.l.b16 %v4635
      %v5673 = vunpack.c.l.b16 %v4636
      %v5674 = vunpack.c.h.b16 %v4636
      %v5675 = vunpack.c.l.b16 %v4637
      %v5676 = vpack.c.b16 %v5523, %v5520
      %v5677 = vpack.c.b16 %v5524, %v5521
      %v5678 = vpack.c.b16 %v5525, %v5522
      %v5679 = vpack.c.b16 %v5529, %v5526
      %v5680 = vpack.c.b16 %v5530, %v5527
      %v5681 = vpack.c.b16 %v5531, %v5528
      %v5682 = vpack.c.b16 %v5535, %v5532
      %v5683 = vpack.c.b16 %v5536, %v5533
      %v5684 = vpack.c.b16 %v5537, %v5534
      %v5685 = vpack.c.b16 %v5541, %v5538
      %v5686 = vpack.c.b16 %v5542, %v5539
      %v5687 = vpack.c.b16 %v5543, %v5540
      %v5688 = vpack.c.b16 %v5547, %v5544
      %v5689 = vpack.c.b16 %v5548, %v5545
      %v5690 = vpack.c.b16 %v5549, %v5546
      %v5691 = vpack.c.b16 %v5553, %v5550
      %v5692 = vpack.c.b16 %v5554, %v5551
      %v5693 = vpack.c.b16 %v5555, %v5552
      %v5694 = vpack.c.b16 %v5559, %v5556
      %v5695 = vpack.c.b16 %v5560, %v5557
      %v5696 = vpack.c.b16 %v5561, %v5558
      %v5697 = vpack.c.b16 %v5565, %v5562
      %v5698 = vpack.c.b16 %v5566, %v5563
      %v5699 = vpack.c.b16 %v5567, %v5564
      %v5700 = vpack.c.b16 %v5571, %v5568
      %v5701 = vpack.c.b16 %v5572, %v5569
      %v5702 = vpack.c.b16 %v5573, %v5570
      %v5703 = vpack.c.b16 %v5577, %v5574
      %v5704 = vpack.c.b16 %v5578, %v5575
      %v5705 = vpack.c.b16 %v5579, %v5576
      %v5706 = vpack.c.b16 %v5583, %v5580
      %v5707 = vpack.c.b16 %v5584, %v5581
      %v5708 = vpack.c.b16 %v5585, %v5582
      %v5709 = vpack.c.b16 %v5589, %v5586
      %v5710 = vpack.c.b16 %v5590, %v5587
      %v5711 = vpack.c.b16 %v5591, %v5588
      %v5712 = vpack.c.b16 %v5595, %v5592
      %v5713 = vpack.c.b16 %v5596, %v5593
      %v5714 = vpack.c.b16 %v5597, %v5594
      %v5715 = vpack.c.b16 %v5601, %v5598
      %v5716 = vpack.c.b16 %v5602, %v5599
      %v5717 = vpack.c.b16 %v5603, %v5600
      %v5718 = vpack.c.b16 %v5607, %v5604
      %v5719 = vpack.c.b16 %v5608, %v5605
      %v5720 = vpack.c.b16 %v5609, %v5606
      %v5721 = vpack.c.b16 %v5613, %v5610
      %v5722 = vpack.c.b16 %v5614, %v5611
      %v5723 = vpack.c.b16 %v5615, %v5612
      %v5724 = vpack.c.b16 %v5619, %v5616
      %v5725 = vpack.c.b16 %v5620, %v5617
      %v5726 = vpack.c.b16 %v5621, %v5618
      %v5727 = vpack.c.b16 %v5625, %v5622
      %v5728 = vpack.c.b16 %v5626, %v5623
      %v5729 = vpack.c.b16 %v5627, %v5624
      %v5730 = vpack.c.b16 %v5631, %v5628
      %v5731 = vpack.c.b16 %v5632, %v5629
      %v5732 = vpack.c.b16 %v5633, %v5630
      %v5733 = vpack.c.b16 %v5637, %v5634
      %v5734 = vpack.c.b16 %v5638, %v5635
      %v5735 = vpack.c.b16 %v5639, %v5636
      %v5736 = vpack.c.b16 %v5643, %v5640
      %v5737 = vpack.c.b16 %v5644, %v5641
      %v5738 = vpack.c.b16 %v5645, %v5642
      %v5739 = vpack.c.b16 %v5649, %v5646
      %v5740 = vpack.c.b16 %v5650, %v5647
      %v5741 = vpack.c.b16 %v5651, %v5648
      %v5742 = vpack.c.b16 %v5655, %v5652
      %v5743 = vpack.c.b16 %v5656, %v5653
      %v5744 = vpack.c.b16 %v5657, %v5654
      %v5745 = vpack.c.b16 %v5661, %v5658
      %v5746 = vpack.c.b16 %v5662, %v5659
      %v5747 = vpack.c.b16 %v5663, %v5660
      %v5748 = vpack.c.b16 %v5667, %v5664
      %v5749 = vpack.c.b16 %v5668, %v5665
      %v5750 = vpack.c.b16 %v5669, %v5666
      %v5751 = vpack.c.b16 %v5673, %v5670
      %v5752 = vpack.c.b16 %v5674, %v5671
      %v5753 = vpack.c.b16 %v5675, %v5672
      %v5833 = vsel %vm5250, %v4533, 0
      %5835 = vmatprep.subr.bf16.mxu0 %v5677
      %5836 = vmatpush1.bf16.msra.mxu0 %v5676
      %5837 = vmatprep.subr.bf16.mxu0 %v5680
      %5838 = vmatpush1.bf16.msra.mxu0 %v5679
      %5839 = vmatprep.subr.bf16.mxu0 %v5683
      %5840 = vmatpush1.bf16.msra.mxu0 %v5682
      %5841 = vmatprep.subr.bf16.mxu0 %v5686
      %5842 = vmatpush1.bf16.msra.mxu0 %v5685
      %5843 = vmatprep.subr.bf16.mxu0 %v5689
      %5844 = vmatpush1.bf16.msra.mxu0 %v5688
      %5845 = vmatprep.subr.bf16.mxu0 %v5692
      %5846 = vmatpush1.bf16.msra.mxu0 %v5691
      %5847 = vmatprep.subr.bf16.mxu0 %v5695
      %5848 = vmatpush1.bf16.msra.mxu0 %v5694
      %5849 = vmatprep.subr.bf16.mxu0 %v5698
      %5850 = vmatpush1.bf16.msra.mxu0 %v5697
      %5851 = vmatprep.subr.bf16.mxu0 %v5701
      %5852 = vmatpush1.bf16.msra.mxu0 %v5700
      %5853 = vmatprep.subr.bf16.mxu0 %v5704
      %5854 = vmatpush1.bf16.msra.mxu0 %v5703
      %5855 = vmatprep.subr.bf16.mxu0 %v5707
      %5856 = vmatpush1.bf16.msra.mxu0 %v5706
      %5857 = vmatprep.subr.bf16.mxu0 %v5710
      %5858 = vmatpush1.bf16.msra.mxu0 %v5709
      %5859 = vmatprep.subr.bf16.mxu0 %v5713
      %5860 = vmatpush1.bf16.msra.mxu0 %v5712
      %5861 = vmatprep.subr.bf16.mxu0 %v5716
      %5862 = vmatpush1.bf16.msra.mxu0 %v5715
      %5863 = vmatprep.subr.bf16.mxu0 %v5719
      %5864 = vmatpush1.bf16.msra.mxu0 %v5718
      %5865 = vmatprep.subr.bf16.mxu0 %v5722
      %5866 = vmatpush1.bf16.msra.mxu0 %v5721
      %5867 = vmatprep.mubr.bf16.mxu0 %v4531
      %5868 = vmatmul.mubr.bf16.gmra.mrb[0].mxu0 %v4530
      %v5869 = vpop.f32.mrb[0].mxu0
      %v5870 = vadd.f32 %v5330, %v5869
      %v5871 = vpop.f32.mrb[0].mxu0
      %v5872 = vadd.f32 %v5332, %v5871
      %v5873 = vpop.f32.mrb[0].mxu0
      %v5874 = vpop.f32.mrb[0].mxu0
      %5875 = vdwg.mxu0
      %5876 = vmatprep.subr.bf16.mxu0 %v5725
      %5877 = vmatpush1.bf16.msra.mxu0 %v5724
      %5878 = vmatprep.subr.bf16.mxu0 %v5728
      %5879 = vmatpush1.bf16.msra.mxu0 %v5727
      %5880 = vmatprep.subr.bf16.mxu0 %v5731
      %5881 = vmatpush1.bf16.msra.mxu0 %v5730
      %5882 = vmatprep.subr.bf16.mxu0 %v5734
      %5883 = vmatpush1.bf16.msra.mxu0 %v5733
      %5884 = vmatprep.subr.bf16.mxu0 %v5737
      %5885 = vmatpush1.bf16.msra.mxu0 %v5736
      %5886 = vmatprep.subr.bf16.mxu0 %v5740
      %5887 = vmatpush1.bf16.msra.mxu0 %v5739
      %5888 = vmatprep.subr.bf16.mxu0 %v5743
      %5889 = vmatpush1.bf16.msra.mxu0 %v5742
      %5890 = vmatprep.subr.bf16.mxu0 %v5746
      %5891 = vmatpush1.bf16.msra.mxu0 %v5745
      %5892 = vmatprep.subr.bf16.mxu0 %v5749
      %5893 = vmatpush1.bf16.msra.mxu0 %v5748
      %5894 = vmatprep.subr.bf16.mxu0 %v5752
      %5895 = vmatpush1.bf16.msra.mxu0 %v5751
      %5896 = vmatprep.subr.bf16.mxu0 0
      %5897 = vmatpush1.bf16.msra.mxu0 0
      %5898 = vmatprep.subr.bf16.mxu0 0
      %5899 = vmatpush1.bf16.msra.mxu0 0
      %5900 = vmatprep.subr.bf16.mxu0 0
      %5901 = vmatpush1.bf16.msra.mxu0 0
      %5902 = vmatprep.subr.bf16.mxu0 0
      %5903 = vmatpush1.bf16.msra.mxu0 0
      %5904 = vmatprep.subr.bf16.mxu0 0
      %5905 = vmatpush1.bf16.msra.mxu0 0
      %5906 = vmatprep.subr.bf16.mxu0 0
      %5907 = vmatpush1.bf16.msra.mxu0 0
      %5908 = vmatprep.mubr.bf16.mxu0 %v5833
      %5909 = vmatmul.mubr.bf16.gmra.mrb[0].mxu0 %v4532
      %v5910 = vpop.f32.mrb[0].mxu0
      %v5911 = vadd.f32 %v5870, %v5910
      %v5912 = vpop.f32.mrb[0].mxu0
      %v5913 = vadd.f32 %v5872, %v5912
      %v5914 = vpop.f32.mrb[0].mxu0
      %v5915 = vpop.f32.mrb[0].mxu0
      %5916 = vdwg.mxu0
      %5917 = vmatprep.subr.bf16.mxu0 0
      %5918 = vmatpush1.bf16.msra.mxu0 %v5678
      %5919 = vmatprep.subr.bf16.mxu0 0
      %5920 = vmatpush1.bf16.msra.mxu0 %v5681
      %5921 = vmatprep.subr.bf16.mxu0 0
      %5922 = vmatpush1.bf16.msra.mxu0 %v5684
      %5923 = vmatprep.subr.bf16.mxu0 0
      %5924 = vmatpush1.bf16.msra.mxu0 %v5687
      %5925 = vmatprep.subr.bf16.mxu0 0
      %5926 = vmatpush1.bf16.msra.mxu0 %v5690
      %5927 = vmatprep.subr.bf16.mxu0 0
      %5928 = vmatpush1.bf16.msra.mxu0 %v5693
      %5929 = vmatprep.subr.bf16.mxu0 0
      %5930 = vmatpush1.bf16.msra.mxu0 %v5696
      %5931 = vmatprep.subr.bf16.mxu0 0
      %5932 = vmatpush1.bf16.msra.mxu0 %v5699
      %5933 = vmatprep.subr.bf16.mxu0 0
      %5934 = vmatpush1.bf16.msra.mxu0 %v5702
      %5935 = vmatprep.subr.bf16.mxu0 0
      %5936 = vmatpush1.bf16.msra.mxu0 %v5705
      %5937 = vmatprep.subr.bf16.mxu0 0
      %5938 = vmatpush1.bf16.msra.mxu0 %v5708
      %5939 = vmatprep.subr.bf16.mxu0 0
      %5940 = vmatpush1.bf16.msra.mxu0 %v5711
      %5941 = vmatprep.subr.bf16.mxu0 0
      %5942 = vmatpush1.bf16.msra.mxu0 %v5714
      %5943 = vmatprep.subr.bf16.mxu0 0
      %5944 = vmatpush1.bf16.msra.mxu0 %v5717
      %5945 = vmatprep.subr.bf16.mxu0 0
      %5946 = vmatpush1.bf16.msra.mxu0 %v5720
      %5947 = vmatprep.subr.bf16.mxu0 0
      %5948 = vmatpush1.bf16.msra.mxu0 %v5723
      %5949 = vmatprep.mubr.bf16.mxu0 %v4531
      %5950 = vmatmul.mubr.bf16.gmra.mrb[0].mxu0 %v4530
      %v5951 = vpop.f32.mrb[0].mxu0
      %v5952 = vadd.f32 %v5411, %v5951
      %v5953 = vpop.f32.mrb[0].mxu0
      %v5954 = vpop.f32.mrb[0].mxu0
      %v5955 = vpop.f32.mrb[0].mxu0
      %5956 = vdwg.mxu0
      %5957 = vmatprep.subr.bf16.mxu0 0
      %5958 = vmatpush1.bf16.msra.mxu0 %v5726
      %5959 = vmatprep.subr.bf16.mxu0 0
      %5960 = vmatpush1.bf16.msra.mxu0 %v5729
      %5961 = vmatprep.subr.bf16.mxu0 0
      %5962 = vmatpush1.bf16.msra.mxu0 %v5732
      %5963 = vmatprep.subr.bf16.mxu0 0
      %5964 = vmatpush1.bf16.msra.mxu0 %v5735
      %5965 = vmatprep.subr.bf16.mxu0 0
      %5966 = vmatpush1.bf16.msra.mxu0 %v5738
      %5967 = vmatprep.subr.bf16.mxu0 0
      %5968 = vmatpush1.bf16.msra.mxu0 %v5741
      %5969 = vmatprep.subr.bf16.mxu0 0
      %5970 = vmatpush1.bf16.msra.mxu0 %v5744
      %5971 = vmatprep.subr.bf16.mxu0 0
      %5972 = vmatpush1.bf16.msra.mxu0 %v5747
      %5973 = vmatprep.subr.bf16.mxu0 0
      %5974 = vmatpush1.bf16.msra.mxu0 %v5750
      %5975 = vmatprep.subr.bf16.mxu0 0
      %5976 = vmatpush1.bf16.msra.mxu0 %v5753
      %5977 = vmatprep.subr.bf16.mxu0 0
      %5978 = vmatpush1.bf16.msra.mxu0 0
      %5979 = vmatprep.subr.bf16.mxu0 0
      %5980 = vmatpush1.bf16.msra.mxu0 0
      %5981 = vmatprep.subr.bf16.mxu0 0
      %5982 = vmatpush1.bf16.msra.mxu0 0
      %5983 = vmatprep.subr.bf16.mxu0 0
      %5984 = vmatpush1.bf16.msra.mxu0 0
      %5985 = vmatprep.subr.bf16.mxu0 0
      %5986 = vmatpush1.bf16.msra.mxu0 0
      %5987 = vmatprep.subr.bf16.mxu0 0
      %5988 = vmatpush1.bf16.msra.mxu0 0
      %5989 = vmatprep.mubr.bf16.mxu0 %v5833
      %5990 = vmatmul.mubr.bf16.gmra.mrb[0].mxu0 %v4532
      %v5991 = vpop.f32.mrb[0].mxu0
      %v5992 = vadd.f32 %v5952, %v5991
      %v5993 = vpop.f32.mrb[0].mxu0
      %v5994 = vpop.f32.mrb[0].mxu0
      %v5995 = vpop.f32.mrb[0].mxu0
      %5996 = vdwg.mxu0
      %s5997 = scalar_lea.vmem %s4, 8
      %v5998 = vld [vmem:[%s5997] sm:$0x7]
      %v6000 = vsel %vm4428, %v5998, 0
      %6002 = vmatprep.subr.bf16.mxu0 %v4440
      %6003 = vmatpush1.bf16.msra.mxu0 %v4437
      %6004 = vmatprep.subr.bf16.mxu0 0
      %6005 = vmatpush1.bf16.msra.mxu0 0
      %6006 = vmatprep.subr.bf16.mxu0 0
      %6007 = vmatpush1.bf16.msra.mxu0 0
      %6008 = vmatprep.subr.bf16.mxu0 0
      %6009 = vmatpush1.bf16.msra.mxu0 0
      %6010 = vmatprep.subr.bf16.mxu0 0
      %6011 = vmatpush1.bf16.msra.mxu0 0
      %6012 = vmatprep.subr.bf16.mxu0 0
      %6013 = vmatpush1.bf16.msra.mxu0 0
      %6014 = vmatprep.subr.bf16.mxu0 0
      %6015 = vmatpush1.bf16.msra.mxu0 0
      %6016 = vmatprep.subr.bf16.mxu0 0
      %6017 = vmatpush1.bf16.msra.mxu0 0
      %6018 = vmatprep.subr.bf16.mxu0 0
      %6019 = vmatpush1.bf16.msra.mxu0 0
      %6020 = vmatprep.subr.bf16.mxu0 0
      %6021 = vmatpush1.bf16.msra.mxu0 0
      %6022 = vmatprep.subr.bf16.mxu0 0
      %6023 = vmatpush1.bf16.msra.mxu0 0
      %6024 = vmatprep.subr.bf16.mxu0 0
      %6025 = vmatpush1.bf16.msra.mxu0 0
      %6026 = vmatprep.subr.bf16.mxu0 0
      %6027 = vmatpush1.bf16.msra.mxu0 0
      %6028 = vmatprep.subr.bf16.mxu0 0
      %6029 = vmatpush1.bf16.msra.mxu0 0
      %6030 = vmatprep.subr.bf16.mxu0 0
      %6031 = vmatpush1.bf16.msra.mxu0 0
      %6032 = vmatprep.subr.bf16.mxu0 0
      %6033 = vmatpush1.bf16.msra.mxu0 0
      %6034 = vmatprep.mubr.bf16.mxu0 0
      %6035 = vmatmul.mubr.bf16.gmra.mrb[0].mxu0 %v6000
      %v6036 = vpop.f32.mrb[0].mxu0
      %v6037 = vadd.f32 0.0, %v6036
      %v6038 = vpop.f32.mrb[0].mxu0
      %v6039 = vadd.f32 0.0, %v6038
      %v6040 = vpop.f32.mrb[0].mxu0
      %v6041 = vpop.f32.mrb[0].mxu0
      %6042 = vdwg.mxu0
      %6043 = vmatprep.subr.bf16.mxu0 %v4446
      %6044 = vmatpush1.bf16.msra.mxu0 %v4443
      %6045 = vmatprep.subr.bf16.mxu0 0
      %6046 = vmatpush1.bf16.msra.mxu0 0
      %6047 = vmatprep.subr.bf16.mxu0 0
      %6048 = vmatpush1.bf16.msra.mxu0 0
      %6049 = vmatprep.subr.bf16.mxu0 0
      %6050 = vmatpush1.bf16.msra.mxu0 0
      %6051 = vmatprep.subr.bf16.mxu0 0
      %6052 = vmatpush1.bf16.msra.mxu0 0
      %6053 = vmatprep.subr.bf16.mxu0 0
      %6054 = vmatpush1.bf16.msra.mxu0 0
      %6055 = vmatprep.subr.bf16.mxu0 0
      %6056 = vmatpush1.bf16.msra.mxu0 0
      %6057 = vmatprep.subr.bf16.mxu0 0
      %6058 = vmatpush1.bf16.msra.mxu0 0
      %6059 = vmatprep.subr.bf16.mxu0 0
      %6060 = vmatpush1.bf16.msra.mxu0 0
      %6061 = vmatprep.subr.bf16.mxu0 0
      %6062 = vmatpush1.bf16.msra.mxu0 0
      %6063 = vmatprep.subr.bf16.mxu0 0
      %6064 = vmatpush1.bf16.msra.mxu0 0
      %6065 = vmatprep.subr.bf16.mxu0 0
      %6066 = vmatpush1.bf16.msra.mxu0 0
      %6067 = vmatprep.subr.bf16.mxu0 0
      %6068 = vmatpush1.bf16.msra.mxu0 0
      %6069 = vmatprep.subr.bf16.mxu0 0
      %6070 = vmatpush1.bf16.msra.mxu0 0
      %6071 = vmatprep.subr.bf16.mxu0 0
      %6072 = vmatpush1.bf16.msra.mxu0 0
      %6073 = vmatprep.subr.bf16.mxu0 0
      %6074 = vmatpush1.bf16.msra.mxu0 0
      %6075 = vmatprep.mubr.bf16.mxu0 0
      %6076 = vmatmul.mubr.bf16.gmra.mrb[0].mxu0 %v6000
      %v6077 = vpop.f32.mrb[0].mxu0
      %v6078 = vadd.f32 0.0, %v6077
      %v6079 = vpop.f32.mrb[0].mxu0
      %v6080 = vadd.f32 0.0, %v6079
      %v6081 = vpop.f32.mrb[0].mxu0
      %v6082 = vpop.f32.mrb[0].mxu0
      %6083 = vdwg.mxu0
      %v6084 = vpack.c.bf16 %v6037, %v6037
      %v6085 = vpack.c.bf16 %v6039, %v6039
      %v6086 = vpack.c.bf16 %v6078, %v6078
      %v6087 = vpack.c.bf16 %v6080, %v6080
      %s6088 = scalar_lea.vmem %s5, 1248
      %v6089 = vld [vmem:[%s6088] sm:$0xff]
      %v6090 = vld [vmem:[%s6088 + $0x8] sm:$0xf]
      %v6091 = vld [vmem:[%s6088 + $0xc] sm:$0xff]
      %v6092 = vld [vmem:[%s6088 + $0x14] sm:$0xf]
      %v6093 = vld [vmem:[%s6088 + $0x18] sm:$0xff]
      %v6094 = vld [vmem:[%s6088 + $0x20] sm:$0xf]
      %v6095 = vld [vmem:[%s6088 + $0x24] sm:$0xff]
      %v6096 = vld [vmem:[%s6088 + $0x2c] sm:$0xf]
      %v6097 = vld [vmem:[%s6088 + $0x30] sm:$0xff]
      %v6098 = vld [vmem:[%s6088 + $0x38] sm:$0xf]
      %v6099 = vld [vmem:[%s6088 + $0x3c] sm:$0xff]
      %v6100 = vld [vmem:[%s6088 + $0x44] sm:$0xf]
      %v6101 = vld [vmem:[%s6088 + $0x48] sm:$0xff]
      %v6102 = vld [vmem:[%s6088 + $0x50] sm:$0xf]
      %v6103 = vld [vmem:[%s6088 + $0x54] sm:$0xff]
      %v6104 = vld [vmem:[%s6088 + $0x5c] sm:$0xf]
      %v6105 = vld [vmem:[%s6088 + $0x60] sm:$0xff]
      %v6106 = vld [vmem:[%s6088 + $0x68] sm:$0xf]
      %v6107 = vld [vmem:[%s6088 + $0x6c] sm:$0xff]
      %v6108 = vld [vmem:[%s6088 + $0x74] sm:$0xf]
      %v6109 = vld [vmem:[%s6088 + $0x78] sm:$0xff]
      %v6110 = vld [vmem:[%s6088 + $0x80] sm:$0xf]
      %v6111 = vld [vmem:[%s6088 + $0x84] sm:$0xff]
      %v6112 = vld [vmem:[%s6088 + $0x8c] sm:$0xf]
      %v6113 = vld [vmem:[%s6088 + $0x90] sm:$0xff]
      %v6114 = vld [vmem:[%s6088 + $0x98] sm:$0xf]
      %v6115 = vld [vmem:[%s6088 + $0x9c] sm:$0xff]
      %v6116 = vld [vmem:[%s6088 + $0xa4] sm:$0xf]
      %v6117 = vld [vmem:[%s6088 + $0xa8] sm:$0xff]
      %v6118 = vld [vmem:[%s6088 + $0xb0] sm:$0xf]
      %v6119 = vld [vmem:[%s6088 + $0xb4] sm:$0xff]
      %v6120 = vld [vmem:[%s6088 + $0xbc] sm:$0xf]
      %v6121 = vld [vmem:[%s6088 + $0xc0] sm:$0xff]
      %v6122 = vld [vmem:[%s6088 + $0xc8] sm:$0xf]
      %v6123 = vld [vmem:[%s6088 + $0xcc] sm:$0xff]
      %v6124 = vld [vmem:[%s6088 + $0xd4] sm:$0xf]
      %v6125 = vld [vmem:[%s6088 + $0xd8] sm:$0xff]
      %v6126 = vld [vmem:[%s6088 + $0xe0] sm:$0xf]
      %v6127 = vld [vmem:[%s6088 + $0xe4] sm:$0xff]
      %v6128 = vld [vmem:[%s6088 + $0xec] sm:$0xf]
      %v6129 = vld [vmem:[%s6088 + $0xf0] sm:$0xff]
      %v6130 = vld [vmem:[%s6088 + $0xf8] sm:$0xf]
      %v6131 = vld [vmem:[%s6088 + $0xfc] sm:$0xff]
      %v6132 = vld [vmem:[%s6088 + $0x104] sm:$0xf]
      %v6133 = vld [vmem:[%s6088 + $0x108] sm:$0xff]
      %v6134 = vld [vmem:[%s6088 + $0x110] sm:$0xf]
      %v6135 = vld [vmem:[%s6088 + $0x114] sm:$0xff]
      %v6136 = vld [vmem:[%s6088 + $0x11c] sm:$0xf]
      %v6137 = vld [vmem:[%s6088 + $0x120] sm:$0xff]
      %v6138 = vld [vmem:[%s6088 + $0x128] sm:$0xf]
      %v6139 = vld [vmem:[%s6088 + $0x12c] sm:$0xff]
      %v6140 = vld [vmem:[%s6088 + $0x134] sm:$0xf]
      %v6141 = vld [vmem:[%s6088 + $0x138] sm:$0xff]
      %v6142 = vld [vmem:[%s6088 + $0x140] sm:$0xf]
      %v6143 = vld [vmem:[%s6088 + $0x144] sm:$0xff]
      %v6144 = vld [vmem:[%s6088 + $0x14c] sm:$0xf]
      %v6145 = vld [vmem:[%s6088 + $0x150] sm:$0xff]
      %v6146 = vld [vmem:[%s6088 + $0x158] sm:$0xf]
      %v6147 = vld [vmem:[%s6088 + $0x15c] sm:$0xff]
      %v6148 = vld [vmem:[%s6088 + $0x164] sm:$0xf]
      %v6149 = vld [vmem:[%s6088 + $0x168] sm:$0xff]
      %v6150 = vld [vmem:[%s6088 + $0x170] sm:$0xf]
      %v6151 = vld [vmem:[%s6088 + $0x174] sm:$0xff]
      %v6152 = vld [vmem:[%s6088 + $0x17c] sm:$0xf]
      %v6153 = vld [vmem:[%s6088 + $0x180] sm:$0xff]
      %v6154 = vld [vmem:[%s6088 + $0x188] sm:$0xf]
      %v6155 = vld [vmem:[%s6088 + $0x18c] sm:$0xff]
      %v6156 = vld [vmem:[%s6088 + $0x194] sm:$0xf]
      %v6157 = vld [vmem:[%s6088 + $0x198] sm:$0xff]
      %v6158 = vld [vmem:[%s6088 + $0x1a0] sm:$0xf]
      %v6159 = vld [vmem:[%s6088 + $0x1a4] sm:$0xff]
      %v6160 = vld [vmem:[%s6088 + $0x1ac] sm:$0xf]
      %v6161 = vld [vmem:[%s6088 + $0x1b0] sm:$0xff]
      %v6162 = vld [vmem:[%s6088 + $0x1b8] sm:$0xf]
      %v6163 = vld [vmem:[%s6088 + $0x1bc] sm:$0xff]
      %v6164 = vld [vmem:[%s6088 + $0x1c4] sm:$0xf]
      %v6165 = vld [vmem:[%s6088 + $0x1c8] sm:$0xff]
      %v6166 = vld [vmem:[%s6088 + $0x1d0] sm:$0xf]
      %v6167 = vld [vmem:[%s6088 + $0x1d4] sm:$0xff]
      %v6168 = vld [vmem:[%s6088 + $0x1dc] sm:$0xf]
      %v6169 = vld [vmem:[%s6088 + $0x1e0] sm:$0xff]
      %v6170 = vld [vmem:[%s6088 + $0x1e8] sm:$0xf]
      %v6171 = vld [vmem:[%s6088 + $0x1ec] sm:$0xff]
      %v6172 = vld [vmem:[%s6088 + $0x1f4] sm:$0xf]
      %v6173 = vld [vmem:[%s6088 + $0x1f8] sm:$0xff]
      %v6174 = vld [vmem:[%s6088 + $0x200] sm:$0xf]
      %v6175 = vld [vmem:[%s6088 + $0x204] sm:$0xff]
      %v6176 = vld [vmem:[%s6088 + $0x20c] sm:$0xf]
      %v6177 = vld [vmem:[%s6088 + $0x210] sm:$0xff]
      %v6178 = vld [vmem:[%s6088 + $0x218] sm:$0xf]
      %v6179 = vld [vmem:[%s6088 + $0x21c] sm:$0xff]
      %v6180 = vld [vmem:[%s6088 + $0x224] sm:$0xf]
      %v6181 = vld [vmem:[%s6088 + $0x228] sm:$0xff]
      %v6182 = vld [vmem:[%s6088 + $0x230] sm:$0xf]
      %v6183 = vld [vmem:[%s6088 + $0x234] sm:$0xff]
      %v6184 = vld [vmem:[%s6088 + $0x23c] sm:$0xf]
      %v6185 = vld [vmem:[%s6088 + $0x240] sm:$0xff]
      %v6186 = vld [vmem:[%s6088 + $0x248] sm:$0xf]
      %v6187 = vld [vmem:[%s6088 + $0x24c] sm:$0xff]
      %v6188 = vld [vmem:[%s6088 + $0x254] sm:$0xf]
      %v6189 = vld [vmem:[%s6088 + $0x258] sm:$0xff]
      %v6190 = vld [vmem:[%s6088 + $0x260] sm:$0xf]
      %v6191 = vld [vmem:[%s6088 + $0x264] sm:$0xff]
      %v6192 = vld [vmem:[%s6088 + $0x26c] sm:$0xf]
      %v6297 = vunpack.c.l.b16 %v6089
      %v6298 = vunpack.c.h.b16 %v6089
      %v6299 = vunpack.c.l.b16 %v6090
      %v6300 = vunpack.c.l.b16 %v6091
      %v6301 = vunpack.c.h.b16 %v6091
      %v6302 = vunpack.c.l.b16 %v6092
      %v6303 = vunpack.c.l.b16 %v6093
      %v6304 = vunpack.c.h.b16 %v6093
      %v6305 = vunpack.c.l.b16 %v6094
      %v6306 = vunpack.c.l.b16 %v6095
      %v6307 = vunpack.c.h.b16 %v6095
      %v6308 = vunpack.c.l.b16 %v6096
      %v6309 = vunpack.c.l.b16 %v6097
      %v6310 = vunpack.c.h.b16 %v6097
      %v6311 = vunpack.c.l.b16 %v6098
      %v6312 = vunpack.c.l.b16 %v6099
      %v6313 = vunpack.c.h.b16 %v6099
      %v6314 = vunpack.c.l.b16 %v6100
      %v6315 = vunpack.c.l.b16 %v6101
      %v6316 = vunpack.c.h.b16 %v6101
      %v6317 = vunpack.c.l.b16 %v6102
      %v6318 = vunpack.c.l.b16 %v6103
      %v6319 = vunpack.c.h.b16 %v6103
      %v6320 = vunpack.c.l.b16 %v6104
      %v6321 = vunpack.c.l.b16 %v6105
      %v6322 = vunpack.c.h.b16 %v6105
      %v6323 = vunpack.c.l.b16 %v6106
      %v6324 = vunpack.c.l.b16 %v6107
      %v6325 = vunpack.c.h.b16 %v6107
      %v6326 = vunpack.c.l.b16 %v6108
      %v6327 = vunpack.c.l.b16 %v6109
      %v6328 = vunpack.c.h.b16 %v6109
      %v6329 = vunpack.c.l.b16 %v6110
      %v6330 = vunpack.c.l.b16 %v6111
      %v6331 = vunpack.c.h.b16 %v6111
      %v6332 = vunpack.c.l.b16 %v6112
      %v6333 = vunpack.c.l.b16 %v6113
      %v6334 = vunpack.c.h.b16 %v6113
      %v6335 = vunpack.c.l.b16 %v6114
      %v6336 = vunpack.c.l.b16 %v6115
      %v6337 = vunpack.c.h.b16 %v6115
      %v6338 = vunpack.c.l.b16 %v6116
      %v6339 = vunpack.c.l.b16 %v6117
      %v6340 = vunpack.c.h.b16 %v6117
      %v6341 = vunpack.c.l.b16 %v6118
      %v6342 = vunpack.c.l.b16 %v6119
      %v6343 = vunpack.c.h.b16 %v6119
      %v6344 = vunpack.c.l.b16 %v6120
      %v6345 = vunpack.c.l.b16 %v6121
      %v6346 = vunpack.c.h.b16 %v6121
      %v6347 = vunpack.c.l.b16 %v6122
      %v6348 = vunpack.c.l.b16 %v6123
      %v6349 = vunpack.c.h.b16 %v6123
      %v6350 = vunpack.c.l.b16 %v6124
      %v6351 = vunpack.c.l.b16 %v6125
      %v6352 = vunpack.c.h.b16 %v6125
      %v6353 = vunpack.c.l.b16 %v6126
      %v6354 = vunpack.c.l.b16 %v6127
      %v6355 = vunpack.c.h.b16 %v6127
      %v6356 = vunpack.c.l.b16 %v6128
      %v6357 = vunpack.c.l.b16 %v6129
      %v6358 = vunpack.c.h.b16 %v6129
      %v6359 = vunpack.c.l.b16 %v6130
      %v6360 = vunpack.c.l.b16 %v6131
      %v6361 = vunpack.c.h.b16 %v6131
      %v6362 = vunpack.c.l.b16 %v6132
      %v6363 = vunpack.c.l.b16 %v6133
      %v6364 = vunpack.c.h.b16 %v6133
      %v6365 = vunpack.c.l.b16 %v6134
      %v6366 = vunpack.c.l.b16 %v6135
      %v6367 = vunpack.c.h.b16 %v6135
      %v6368 = vunpack.c.l.b16 %v6136
      %v6369 = vunpack.c.l.b16 %v6137
      %v6370 = vunpack.c.h.b16 %v6137
      %v6371 = vunpack.c.l.b16 %v6138
      %v6372 = vunpack.c.l.b16 %v6139
      %v6373 = vunpack.c.h.b16 %v6139
      %v6374 = vunpack.c.l.b16 %v6140
      %v6375 = vunpack.c.l.b16 %v6141
      %v6376 = vunpack.c.h.b16 %v6141
      %v6377 = vunpack.c.l.b16 %v6142
      %v6378 = vunpack.c.l.b16 %v6143
      %v6379 = vunpack.c.h.b16 %v6143
      %v6380 = vunpack.c.l.b16 %v6144
      %v6381 = vunpack.c.l.b16 %v6145
      %v6382 = vunpack.c.h.b16 %v6145
      %v6383 = vunpack.c.l.b16 %v6146
      %v6384 = vunpack.c.l.b16 %v6147
      %v6385 = vunpack.c.h.b16 %v6147
      %v6386 = vunpack.c.l.b16 %v6148
      %v6387 = vunpack.c.l.b16 %v6149
      %v6388 = vunpack.c.h.b16 %v6149
      %v6389 = vunpack.c.l.b16 %v6150
      %v6390 = vunpack.c.l.b16 %v6151
      %v6391 = vunpack.c.h.b16 %v6151
      %v6392 = vunpack.c.l.b16 %v6152
      %v6393 = vunpack.c.l.b16 %v6153
      %v6394 = vunpack.c.h.b16 %v6153
      %v6395 = vunpack.c.l.b16 %v6154
      %v6396 = vunpack.c.l.b16 %v6155
      %v6397 = vunpack.c.h.b16 %v6155
      %v6398 = vunpack.c.l.b16 %v6156
      %v6399 = vunpack.c.l.b16 %v6157
      %v6400 = vunpack.c.h.b16 %v6157
      %v6401 = vunpack.c.l.b16 %v6158
      %v6402 = vunpack.c.l.b16 %v6159
      %v6403 = vunpack.c.h.b16 %v6159
      %v6404 = vunpack.c.l.b16 %v6160
      %v6405 = vunpack.c.l.b16 %v6161
      %v6406 = vunpack.c.h.b16 %v6161
      %v6407 = vunpack.c.l.b16 %v6162
      %v6408 = vunpack.c.l.b16 %v6163
      %v6409 = vunpack.c.h.b16 %v6163
      %v6410 = vunpack.c.l.b16 %v6164
      %v6411 = vunpack.c.l.b16 %v6165
      %v6412 = vunpack.c.h.b16 %v6165
      %v6413 = vunpack.c.l.b16 %v6166
      %v6414 = vunpack.c.l.b16 %v6167
      %v6415 = vunpack.c.h.b16 %v6167
      %v6416 = vunpack.c.l.b16 %v6168
      %v6417 = vunpack.c.l.b16 %v6169
      %v6418 = vunpack.c.h.b16 %v6169
      %v6419 = vunpack.c.l.b16 %v6170
      %v6420 = vunpack.c.l.b16 %v6171
      %v6421 = vunpack.c.h.b16 %v6171
      %v6422 = vunpack.c.l.b16 %v6172
      %v6423 = vunpack.c.l.b16 %v6173
      %v6424 = vunpack.c.h.b16 %v6173
      %v6425 = vunpack.c.l.b16 %v6174
      %v6426 = vunpack.c.l.b16 %v6175
      %v6427 = vunpack.c.h.b16 %v6175
      %v6428 = vunpack.c.l.b16 %v6176
      %v6429 = vunpack.c.l.b16 %v6177
      %v6430 = vunpack.c.h.b16 %v6177
      %v6431 = vunpack.c.l.b16 %v6178
      %v6432 = vunpack.c.l.b16 %v6179
      %v6433 = vunpack.c.h.b16 %v6179
      %v6434 = vunpack.c.l.b16 %v6180
      %v6435 = vunpack.c.l.b16 %v6181
      %v6436 = vunpack.c.h.b16 %v6181
      %v6437 = vunpack.c.l.b16 %v6182
      %v6438 = vunpack.c.l.b16 %v6183
      %v6439 = vunpack.c.h.b16 %v6183
      %v6440 = vunpack.c.l.b16 %v6184
      %v6441 = vunpack.c.l.b16 %v6185
      %v6442 = vunpack.c.h.b16 %v6185
      %v6443 = vunpack.c.l.b16 %v6186
      %v6444 = vunpack.c.l.b16 %v6187
      %v6445 = vunpack.c.h.b16 %v6187
      %v6446 = vunpack.c.l.b16 %v6188
      %v6447 = vunpack.c.l.b16 %v6189
      %v6448 = vunpack.c.h.b16 %v6189
      %v6449 = vunpack.c.l.b16 %v6190
      %v6450 = vunpack.c.l.b16 %v6191
      %v6451 = vunpack.c.h.b16 %v6191
      %v6452 = vunpack.c.l.b16 %v6192
      %v6453 = vpack.c.b16 %v6300, %v6297
      %v6454 = vpack.c.b16 %v6301, %v6298
      %v6455 = vpack.c.b16 %v6302, %v6299
      %v6456 = vpack.c.b16 %v6306, %v6303
      %v6457 = vpack.c.b16 %v6307, %v6304
      %v6458 = vpack.c.b16 %v6308, %v6305
      %v6459 = vpack.c.b16 %v6312, %v6309
      %v6460 = vpack.c.b16 %v6313, %v6310
      %v6461 = vpack.c.b16 %v6314, %v6311
      %v6462 = vpack.c.b16 %v6318, %v6315
      %v6463 = vpack.c.b16 %v6319, %v6316
      %v6464 = vpack.c.b16 %v6320, %v6317
      %v6465 = vpack.c.b16 %v6324, %v6321
      %v6466 = vpack.c.b16 %v6325, %v6322
      %v6467 = vpack.c.b16 %v6326, %v6323
      %v6468 = vpack.c.b16 %v6330, %v6327
      %v6469 = vpack.c.b16 %v6331, %v6328
      %v6470 = vpack.c.b16 %v6332, %v6329
      %v6471 = vpack.c.b16 %v6336, %v6333
      %v6472 = vpack.c.b16 %v6337, %v6334
      %v6473 = vpack.c.b16 %v6338, %v6335
      %v6474 = vpack.c.b16 %v6342, %v6339
      %v6475 = vpack.c.b16 %v6343, %v6340
      %v6476 = vpack.c.b16 %v6344, %v6341
      %v6477 = vpack.c.b16 %v6348, %v6345
      %v6478 = vpack.c.b16 %v6349, %v6346
      %v6479 = vpack.c.b16 %v6350, %v6347
      %v6480 = vpack.c.b16 %v6354, %v6351
      %v6481 = vpack.c.b16 %v6355, %v6352
      %v6482 = vpack.c.b16 %v6356, %v6353
      %v6483 = vpack.c.b16 %v6360, %v6357
      %v6484 = vpack.c.b16 %v6361, %v6358
      %v6485 = vpack.c.b16 %v6362, %v6359
      %v6486 = vpack.c.b16 %v6366, %v6363
      %v6487 = vpack.c.b16 %v6367, %v6364
      %v6488 = vpack.c.b16 %v6368, %v6365
      %v6489 = vpack.c.b16 %v6372, %v6369
      %v6490 = vpack.c.b16 %v6373, %v6370
      %v6491 = vpack.c.b16 %v6374, %v6371
      %v6492 = vpack.c.b16 %v6378, %v6375
      %v6493 = vpack.c.b16 %v6379, %v6376
      %v6494 = vpack.c.b16 %v6380, %v6377
      %v6495 = vpack.c.b16 %v6384, %v6381
      %v6496 = vpack.c.b16 %v6385, %v6382
      %v6497 = vpack.c.b16 %v6386, %v6383
      %v6498 = vpack.c.b16 %v6390, %v6387
      %v6499 = vpack.c.b16 %v6391, %v6388
      %v6500 = vpack.c.b16 %v6392, %v6389
      %v6501 = vpack.c.b16 %v6396, %v6393
      %v6502 = vpack.c.b16 %v6397, %v6394
      %v6503 = vpack.c.b16 %v6398, %v6395
      %v6504 = vpack.c.b16 %v6402, %v6399
      %v6505 = vpack.c.b16 %v6403, %v6400
      %v6506 = vpack.c.b16 %v6404, %v6401
      %v6507 = vpack.c.b16 %v6408, %v6405
      %v6508 = vpack.c.b16 %v6409, %v6406
      %v6509 = vpack.c.b16 %v6410, %v6407
      %v6510 = vpack.c.b16 %v6414, %v6411
      %v6511 = vpack.c.b16 %v6415, %v6412
      %v6512 = vpack.c.b16 %v6416, %v6413
      %v6513 = vpack.c.b16 %v6420, %v6417
      %v6514 = vpack.c.b16 %v6421, %v6418
      %v6515 = vpack.c.b16 %v6422, %v6419
      %v6516 = vpack.c.b16 %v6426, %v6423
      %v6517 = vpack.c.b16 %v6427, %v6424
      %v6518 = vpack.c.b16 %v6428, %v6425
      %v6519 = vpack.c.b16 %v6432, %v6429
      %v6520 = vpack.c.b16 %v6433, %v6430
      %v6521 = vpack.c.b16 %v6434, %v6431
      %v6522 = vpack.c.b16 %v6438, %v6435
      %v6523 = vpack.c.b16 %v6439, %v6436
      %v6524 = vpack.c.b16 %v6440, %v6437
      %v6525 = vpack.c.b16 %v6444, %v6441
      %v6526 = vpack.c.b16 %v6445, %v6442
      %v6527 = vpack.c.b16 %v6446, %v6443
      %v6528 = vpack.c.b16 %v6450, %v6447
      %v6529 = vpack.c.b16 %v6451, %v6448
      %v6530 = vpack.c.b16 %v6452, %v6449
      %v6610 = vsel %vm5250, %v6087, 0
      %6612 = vmatprep.subr.bf16.mxu0 %v6454
      %6613 = vmatpush1.bf16.msra.mxu0 %v6453
      %6614 = vmatprep.subr.bf16.mxu0 %v6457
      %6615 = vmatpush1.bf16.msra.mxu0 %v6456
      %6616 = vmatprep.subr.bf16.mxu0 %v6460
      %6617 = vmatpush1.bf16.msra.mxu0 %v6459
      %6618 = vmatprep.subr.bf16.mxu0 %v6463
      %6619 = vmatpush1.bf16.msra.mxu0 %v6462
      %6620 = vmatprep.subr.bf16.mxu0 %v6466
      %6621 = vmatpush1.bf16.msra.mxu0 %v6465
      %6622 = vmatprep.subr.bf16.mxu0 %v6469
      %6623 = vmatpush1.bf16.msra.mxu0 %v6468
      %6624 = vmatprep.subr.bf16.mxu0 %v6472
      %6625 = vmatpush1.bf16.msra.mxu0 %v6471
      %6626 = vmatprep.subr.bf16.mxu0 %v6475
      %6627 = vmatpush1.bf16.msra.mxu0 %v6474
      %6628 = vmatprep.subr.bf16.mxu0 %v6478
      %6629 = vmatpush1.bf16.msra.mxu0 %v6477
      %6630 = vmatprep.subr.bf16.mxu0 %v6481
      %6631 = vmatpush1.bf16.msra.mxu0 %v6480
      %6632 = vmatprep.subr.bf16.mxu0 %v6484
      %6633 = vmatpush1.bf16.msra.mxu0 %v6483
      %6634 = vmatprep.subr.bf16.mxu0 %v6487
      %6635 = vmatpush1.bf16.msra.mxu0 %v6486
      %6636 = vmatprep.subr.bf16.mxu0 %v6490
      %6637 = vmatpush1.bf16.msra.mxu0 %v6489
      %6638 = vmatprep.subr.bf16.mxu0 %v6493
      %6639 = vmatpush1.bf16.msra.mxu0 %v6492
      %6640 = vmatprep.subr.bf16.mxu0 %v6496
      %6641 = vmatpush1.bf16.msra.mxu0 %v6495
      %6642 = vmatprep.subr.bf16.mxu0 %v6499
      %6643 = vmatpush1.bf16.msra.mxu0 %v6498
      %6644 = vmatprep.mubr.bf16.mxu0 %v6085
      %6645 = vmatmul.mubr.bf16.gmra.mrb[0].mxu0 %v6084
      %v6646 = vpop.f32.mrb[0].mxu0
      %v6647 = vadd.f32 0.0, %v6646
      %v6648 = vpop.f32.mrb[0].mxu0
      %v6649 = vadd.f32 0.0, %v6648
      %v6650 = vpop.f32.mrb[0].mxu0
      %v6651 = vpop.f32.mrb[0].mxu0
      %6652 = vdwg.mxu0
      %6653 = vmatprep.subr.bf16.mxu0 %v6502
      %6654 = vmatpush1.bf16.msra.mxu0 %v6501
      %6655 = vmatprep.subr.bf16.mxu0 %v6505
      %6656 = vmatpush1.bf16.msra.mxu0 %v6504
      %6657 = vmatprep.subr.bf16.mxu0 %v6508
      %6658 = vmatpush1.bf16.msra.mxu0 %v6507
      %6659 = vmatprep.subr.bf16.mxu0 %v6511
      %6660 = vmatpush1.bf16.msra.mxu0 %v6510
      %6661 = vmatprep.subr.bf16.mxu0 %v6514
      %6662 = vmatpush1.bf16.msra.mxu0 %v6513
      %6663 = vmatprep.subr.bf16.mxu0 %v6517
      %6664 = vmatpush1.bf16.msra.mxu0 %v6516
      %6665 = vmatprep.subr.bf16.mxu0 %v6520
      %6666 = vmatpush1.bf16.msra.mxu0 %v6519
      %6667 = vmatprep.subr.bf16.mxu0 %v6523
      %6668 = vmatpush1.bf16.msra.mxu0 %v6522
      %6669 = vmatprep.subr.bf16.mxu0 %v6526
      %6670 = vmatpush1.bf16.msra.mxu0 %v6525
      %6671 = vmatprep.subr.bf16.mxu0 %v6529
      %6672 = vmatpush1.bf16.msra.mxu0 %v6528
      %6673 = vmatprep.subr.bf16.mxu0 0
      %6674 = vmatpush1.bf16.msra.mxu0 0
      %6675 = vmatprep.subr.bf16.mxu0 0
      %6676 = vmatpush1.bf16.msra.mxu0 0
      %6677 = vmatprep.subr.bf16.mxu0 0
      %6678 = vmatpush1.bf16.msra.mxu0 0
      %6679 = vmatprep.subr.bf16.mxu0 0
      %6680 = vmatpush1.bf16.msra.mxu0 0
      %6681 = vmatprep.subr.bf16.mxu0 0
      %6682 = vmatpush1.bf16.msra.mxu0 0
      %6683 = vmatprep.subr.bf16.mxu0 0
      %6684 = vmatpush1.bf16.msra.mxu0 0
      %6685 = vmatprep.mubr.bf16.mxu0 %v6610
      %6686 = vmatmul.mubr.bf16.gmra.mrb[0].mxu0 %v6086
      %v6687 = vpop.f32.mrb[0].mxu0
      %v6688 = vadd.f32 %v6647, %v6687
      %v6689 = vpop.f32.mrb[0].mxu0
      %v6690 = vadd.f32 %v6649, %v6689
      %v6691 = vpop.f32.mrb[0].mxu0
      %v6692 = vpop.f32.mrb[0].mxu0
      %6693 = vdwg.mxu0
      %6694 = vmatprep.subr.bf16.mxu0 0
      %6695 = vmatpush1.bf16.msra.mxu0 %v6455
      %6696 = vmatprep.subr.bf16.mxu0 0
      %6697 = vmatpush1.bf16.msra.mxu0 %v6458
      %6698 = vmatprep.subr.bf16.mxu0 0
      %6699 = vmatpush1.bf16.msra.mxu0 %v6461
      %6700 = vmatprep.subr.bf16.mxu0 0
      %6701 = vmatpush1.bf16.msra.mxu0 %v6464
      %6702 = vmatprep.subr.bf16.mxu0 0
      %6703 = vmatpush1.bf16.msra.mxu0 %v6467
      %6704 = vmatprep.subr.bf16.mxu0 0
      %6705 = vmatpush1.bf16.msra.mxu0 %v6470
      %6706 = vmatprep.subr.bf16.mxu0 0
      %6707 = vmatpush1.bf16.msra.mxu0 %v6473
      %6708 = vmatprep.subr.bf16.mxu0 0
      %6709 = vmatpush1.bf16.msra.mxu0 %v6476
      %6710 = vmatprep.subr.bf16.mxu0 0
      %6711 = vmatpush1.bf16.msra.mxu0 %v6479
      %6712 = vmatprep.subr.bf16.mxu0 0
      %6713 = vmatpush1.bf16.msra.mxu0 %v6482
      %6714 = vmatprep.subr.bf16.mxu0 0
      %6715 = vmatpush1.bf16.msra.mxu0 %v6485
      %6716 = vmatprep.subr.bf16.mxu0 0
      %6717 = vmatpush1.bf16.msra.mxu0 %v6488
      %6718 = vmatprep.subr.bf16.mxu0 0
      %6719 = vmatpush1.bf16.msra.mxu0 %v6491
      %6720 = vmatprep.subr.bf16.mxu0 0
      %6721 = vmatpush1.bf16.msra.mxu0 %v6494
      %6722 = vmatprep.subr.bf16.mxu0 0
      %6723 = vmatpush1.bf16.msra.mxu0 %v6497
      %6724 = vmatprep.subr.bf16.mxu0 0
      %6725 = vmatpush1.bf16.msra.mxu0 %v6500
      %6726 = vmatprep.mubr.bf16.mxu0 %v6085
      %6727 = vmatmul.mubr.bf16.gmra.mrb[0].mxu0 %v6084
      %v6728 = vpop.f32.mrb[0].mxu0
      %v6729 = vadd.f32 0.0, %v6728
      %v6730 = vpop.f32.mrb[0].mxu0
      %v6731 = vpop.f32.mrb[0].mxu0
      %v6732 = vpop.f32.mrb[0].mxu0
      %6733 = vdwg.mxu0
      %6734 = vmatprep.subr.bf16.mxu0 0
      %6735 = vmatpush1.bf16.msra.mxu0 %v6503
      %6736 = vmatprep.subr.bf16.mxu0 0
      %6737 = vmatpush1.bf16.msra.mxu0 %v6506
      %6738 = vmatprep.subr.bf16.mxu0 0
      %6739 = vmatpush1.bf16.msra.mxu0 %v6509
      %6740 = vmatprep.subr.bf16.mxu0 0
      %6741 = vmatpush1.bf16.msra.mxu0 %v6512
      %6742 = vmatprep.subr.bf16.mxu0 0
      %6743 = vmatpush1.bf16.msra.mxu0 %v6515
      %6744 = vmatprep.subr.bf16.mxu0 0
      %6745 = vmatpush1.bf16.msra.mxu0 %v6518
      %6746 = vmatprep.subr.bf16.mxu0 0
      %6747 = vmatpush1.bf16.msra.mxu0 %v6521
      %6748 = vmatprep.subr.bf16.mxu0 0
      %6749 = vmatpush1.bf16.msra.mxu0 %v6524
      %6750 = vmatprep.subr.bf16.mxu0 0
      %6751 = vmatpush1.bf16.msra.mxu0 %v6527
      %6752 = vmatprep.subr.bf16.mxu0 0
      %6753 = vmatpush1.bf16.msra.mxu0 %v6530
      %6754 = vmatprep.subr.bf16.mxu0 0
      %6755 = vmatpush1.bf16.msra.mxu0 0
      %6756 = vmatprep.subr.bf16.mxu0 0
      %6757 = vmatpush1.bf16.msra.mxu0 0
      %6758 = vmatprep.subr.bf16.mxu0 0
      %6759 = vmatpush1.bf16.msra.mxu0 0
      %6760 = vmatprep.subr.bf16.mxu0 0
      %6761 = vmatpush1.bf16.msra.mxu0 0
      %6762 = vmatprep.subr.bf16.mxu0 0
      %6763 = vmatpush1.bf16.msra.mxu0 0
      %6764 = vmatprep.subr.bf16.mxu0 0
      %6765 = vmatpush1.bf16.msra.mxu0 0
      %6766 = vmatprep.mubr.bf16.mxu0 %v6610
      %6767 = vmatmul.mubr.bf16.gmra.mrb[0].mxu0 %v6086
      %v6768 = vpop.f32.mrb[0].mxu0
      %v6769 = vadd.f32 %v6729, %v6768
      %v6770 = vpop.f32.mrb[0].mxu0
      %v6771 = vpop.f32.mrb[0].mxu0
      %v6772 = vpop.f32.mrb[0].mxu0
      %6773 = vdwg.mxu0
      %v6774 = vadd.f32 %v5911, %v6688
      %v6775 = vadd.f32 %v5913, %v6690
      %v6776 = vadd.f32 %v5992, %v6769
      %s6777 = scalar_lea.vmem %s4, 12
      %v6778 = vld [vmem:[%s6777] sm:$0x7]
      %v6780 = vsel %vm4428, %v6778, 0
      %6782 = vmatprep.subr.bf16.mxu0 %v4440
      %6783 = vmatpush1.bf16.msra.mxu0 %v4437
      %6784 = vmatprep.subr.bf16.mxu0 0
      %6785 = vmatpush1.bf16.msra.mxu0 0
      %6786 = vmatprep.subr.bf16.mxu0 0
      %6787 = vmatpush1.bf16.msra.mxu0 0
      %6788 = vmatprep.subr.bf16.mxu0 0
      %6789 = vmatpush1.bf16.msra.mxu0 0
      %6790 = vmatprep.subr.bf16.mxu0 0
      %6791 = vmatpush1.bf16.msra.mxu0 0
      %6792 = vmatprep.subr.bf16.mxu0 0
      %6793 = vmatpush1.bf16.msra.mxu0 0
      %6794 = vmatprep.subr.bf16.mxu0 0
      %6795 = vmatpush1.bf16.msra.mxu0 0
      %6796 = vmatprep.subr.bf16.mxu0 0
      %6797 = vmatpush1.bf16.msra.mxu0 0
      %6798 = vmatprep.subr.bf16.mxu0 0
      %6799 = vmatpush1.bf16.msra.mxu0 0
      %6800 = vmatprep.subr.bf16.mxu0 0
      %6801 = vmatpush1.bf16.msra.mxu0 0
      %6802 = vmatprep.subr.bf16.mxu0 0
      %6803 = vmatpush1.bf16.msra.mxu0 0
      %6804 = vmatprep.subr.bf16.mxu0 0
      %6805 = vmatpush1.bf16.msra.mxu0 0
      %6806 = vmatprep.subr.bf16.mxu0 0
      %6807 = vmatpush1.bf16.msra.mxu0 0
      %6808 = vmatprep.subr.bf16.mxu0 0
      %6809 = vmatpush1.bf16.msra.mxu0 0
      %6810 = vmatprep.subr.bf16.mxu0 0
      %6811 = vmatpush1.bf16.msra.mxu0 0
      %6812 = vmatprep.subr.bf16.mxu0 0
      %6813 = vmatpush1.bf16.msra.mxu0 0
      %6814 = vmatprep.mubr.bf16.mxu0 0
      %6815 = vmatmul.mubr.bf16.gmra.mrb[0].mxu0 %v6780
      %v6816 = vpop.f32.mrb[0].mxu0
      %v6817 = vadd.f32 0.0, %v6816
      %v6818 = vpop.f32.mrb[0].mxu0
      %v6819 = vadd.f32 0.0, %v6818
      %v6820 = vpop.f32.mrb[0].mxu0
      %v6821 = vpop.f32.mrb[0].mxu0
      %6822 = vdwg.mxu0
      %6823 = vmatprep.subr.bf16.mxu0 %v4446
      %6824 = vmatpush1.bf16.msra.mxu0 %v4443
      %6825 = vmatprep.subr.bf16.mxu0 0
      %6826 = vmatpush1.bf16.msra.mxu0 0
      %6827 = vmatprep.subr.bf16.mxu0 0
      %6828 = vmatpush1.bf16.msra.mxu0 0
      %6829 = vmatprep.subr.bf16.mxu0 0
      %6830 = vmatpush1.bf16.msra.mxu0 0
      %6831 = vmatprep.subr.bf16.mxu0 0
      %6832 = vmatpush1.bf16.msra.mxu0 0
      %6833 = vmatprep.subr.bf16.mxu0 0
      %6834 = vmatpush1.bf16.msra.mxu0 0
      %6835 = vmatprep.subr.bf16.mxu0 0
      %6836 = vmatpush1.bf16.msra.mxu0 0
      %6837 = vmatprep.subr.bf16.mxu0 0
      %6838 = vmatpush1.bf16.msra.mxu0 0
      %6839 = vmatprep.subr.bf16.mxu0 0
      %6840 = vmatpush1.bf16.msra.mxu0 0
      %6841 = vmatprep.subr.bf16.mxu0 0
      %6842 = vmatpush1.bf16.msra.mxu0 0
      %6843 = vmatprep.subr.bf16.mxu0 0
      %6844 = vmatpush1.bf16.msra.mxu0 0
      %6845 = vmatprep.subr.bf16.mxu0 0
      %6846 = vmatpush1.bf16.msra.mxu0 0
      %6847 = vmatprep.subr.bf16.mxu0 0
      %6848 = vmatpush1.bf16.msra.mxu0 0
      %6849 = vmatprep.subr.bf16.mxu0 0
      %6850 = vmatpush1.bf16.msra.mxu0 0
      %6851 = vmatprep.subr.bf16.mxu0 0
      %6852 = vmatpush1.bf16.msra.mxu0 0
      %6853 = vmatprep.subr.bf16.mxu0 0
      %6854 = vmatpush1.bf16.msra.mxu0 0
      %6855 = vmatprep.mubr.bf16.mxu0 0
      %6856 = vmatmul.mubr.bf16.gmra.mrb[0].mxu0 %v6780
      %v6857 = vpop.f32.mrb[0].mxu0
      %v6858 = vadd.f32 0.0, %v6857
      %v6859 = vpop.f32.mrb[0].mxu0
      %v6860 = vadd.f32 0.0, %v6859
      %v6861 = vpop.f32.mrb[0].mxu0
      %v6862 = vpop.f32.mrb[0].mxu0
      %6863 = vdwg.mxu0
      %v6864 = vpack.c.bf16 %v6817, %v6817
      %v6865 = vpack.c.bf16 %v6819, %v6819
      %v6866 = vpack.c.bf16 %v6858, %v6858
      %v6867 = vpack.c.bf16 %v6860, %v6860
      %s6868 = scalar_lea.vmem %s5, 1872
      %v6869 = vld [vmem:[%s6868] sm:$0xff]
      %v6870 = vld [vmem:[%s6868 + $0x8] sm:$0xf]
      %v6871 = vld [vmem:[%s6868 + $0xc] sm:$0xff]
      %v6872 = vld [vmem:[%s6868 + $0x14] sm:$0xf]
      %v6873 = vld [vmem:[%s6868 + $0x18] sm:$0xff]
      %v6874 = vld [vmem:[%s6868 + $0x20] sm:$0xf]
      %v6875 = vld [vmem:[%s6868 + $0x24] sm:$0xff]
      %v6876 = vld [vmem:[%s6868 + $0x2c] sm:$0xf]
      %v6877 = vld [vmem:[%s6868 + $0x30] sm:$0xff]
      %v6878 = vld [vmem:[%s6868 + $0x38] sm:$0xf]
      %v6879 = vld [vmem:[%s6868 + $0x3c] sm:$0xff]
      %v6880 = vld [vmem:[%s6868 + $0x44] sm:$0xf]
      %v6881 = vld [vmem:[%s6868 + $0x48] sm:$0xff]
      %v6882 = vld [vmem:[%s6868 + $0x50] sm:$0xf]
      %v6883 = vld [vmem:[%s6868 + $0x54] sm:$0xff]
      %v6884 = vld [vmem:[%s6868 + $0x5c] sm:$0xf]
      %v6885 = vld [vmem:[%s6868 + $0x60] sm:$0xff]
      %v6886 = vld [vmem:[%s6868 + $0x68] sm:$0xf]
      %v6887 = vld [vmem:[%s6868 + $0x6c] sm:$0xff]
      %v6888 = vld [vmem:[%s6868 + $0x74] sm:$0xf]
      %v6889 = vld [vmem:[%s6868 + $0x78] sm:$0xff]
      %v6890 = vld [vmem:[%s6868 + $0x80] sm:$0xf]
      %v6891 = vld [vmem:[%s6868 + $0x84] sm:$0xff]
      %v6892 = vld [vmem:[%s6868 + $0x8c] sm:$0xf]
      %v6893 = vld [vmem:[%s6868 + $0x90] sm:$0xff]
      %v6894 = vld [vmem:[%s6868 + $0x98] sm:$0xf]
      %v6895 = vld [vmem:[%s6868 + $0x9c] sm:$0xff]
      %v6896 = vld [vmem:[%s6868 + $0xa4] sm:$0xf]
      %v6897 = vld [vmem:[%s6868 + $0xa8] sm:$0xff]
      %v6898 = vld [vmem:[%s6868 + $0xb0] sm:$0xf]
      %v6899 = vld [vmem:[%s6868 + $0xb4] sm:$0xff]
      %v6900 = vld [vmem:[%s6868 + $0xbc] sm:$0xf]
      %v6901 = vld [vmem:[%s6868 + $0xc0] sm:$0xff]
      %v6902 = vld [vmem:[%s6868 + $0xc8] sm:$0xf]
      %v6903 = vld [vmem:[%s6868 + $0xcc] sm:$0xff]
      %v6904 = vld [vmem:[%s6868 + $0xd4] sm:$0xf]
      %v6905 = vld [vmem:[%s6868 + $0xd8] sm:$0xff]
      %v6906 = vld [vmem:[%s6868 + $0xe0] sm:$0xf]
      %v6907 = vld [vmem:[%s6868 + $0xe4] sm:$0xff]
      %v6908 = vld [vmem:[%s6868 + $0xec] sm:$0xf]
      %v6909 = vld [vmem:[%s6868 + $0xf0] sm:$0xff]
      %v6910 = vld [vmem:[%s6868 + $0xf8] sm:$0xf]
      %v6911 = vld [vmem:[%s6868 + $0xfc] sm:$0xff]
      %v6912 = vld [vmem:[%s6868 + $0x104] sm:$0xf]
      %v6913 = vld [vmem:[%s6868 + $0x108] sm:$0xff]
      %v6914 = vld [vmem:[%s6868 + $0x110] sm:$0xf]
      %v6915 = vld [vmem:[%s6868 + $0x114] sm:$0xff]
      %v6916 = vld [vmem:[%s6868 + $0x11c] sm:$0xf]
      %v6917 = vld [vmem:[%s6868 + $0x120] sm:$0xff]
      %v6918 = vld [vmem:[%s6868 + $0x128] sm:$0xf]
      %v6919 = vld [vmem:[%s6868 + $0x12c] sm:$0xff]
      %v6920 = vld [vmem:[%s6868 + $0x134] sm:$0xf]
      %v6921 = vld [vmem:[%s6868 + $0x138] sm:$0xff]
      %v6922 = vld [vmem:[%s6868 + $0x140] sm:$0xf]
      %v6923 = vld [vmem:[%s6868 + $0x144] sm:$0xff]
      %v6924 = vld [vmem:[%s6868 + $0x14c] sm:$0xf]
      %v6925 = vld [vmem:[%s6868 + $0x150] sm:$0xff]
      %v6926 = vld [vmem:[%s6868 + $0x158] sm:$0xf]
      %v6927 = vld [vmem:[%s6868 + $0x15c] sm:$0xff]
      %v6928 = vld [vmem:[%s6868 + $0x164] sm:$0xf]
      %v6929 = vld [vmem:[%s6868 + $0x168] sm:$0xff]
      %v6930 = vld [vmem:[%s6868 + $0x170] sm:$0xf]
      %v6931 = vld [vmem:[%s6868 + $0x174] sm:$0xff]
      %v6932 = vld [vmem:[%s6868 + $0x17c] sm:$0xf]
      %v6933 = vld [vmem:[%s6868 + $0x180] sm:$0xff]
      %v6934 = vld [vmem:[%s6868 + $0x188] sm:$0xf]
      %v6935 = vld [vmem:[%s6868 + $0x18c] sm:$0xff]
      %v6936 = vld [vmem:[%s6868 + $0x194] sm:$0xf]
      %v6937 = vld [vmem:[%s6868 + $0x198] sm:$0xff]
      %v6938 = vld [vmem:[%s6868 + $0x1a0] sm:$0xf]
      %v6939 = vld [vmem:[%s6868 + $0x1a4] sm:$0xff]
      %v6940 = vld [vmem:[%s6868 + $0x1ac] sm:$0xf]
      %v6941 = vld [vmem:[%s6868 + $0x1b0] sm:$0xff]
      %v6942 = vld [vmem:[%s6868 + $0x1b8] sm:$0xf]
      %v6943 = vld [vmem:[%s6868 + $0x1bc] sm:$0xff]
      %v6944 = vld [vmem:[%s6868 + $0x1c4] sm:$0xf]
      %v6945 = vld [vmem:[%s6868 + $0x1c8] sm:$0xff]
      %v6946 = vld [vmem:[%s6868 + $0x1d0] sm:$0xf]
      %v6947 = vld [vmem:[%s6868 + $0x1d4] sm:$0xff]
      %v6948 = vld [vmem:[%s6868 + $0x1dc] sm:$0xf]
      %v6949 = vld [vmem:[%s6868 + $0x1e0] sm:$0xff]
      %v6950 = vld [vmem:[%s6868 + $0x1e8] sm:$0xf]
      %v6951 = vld [vmem:[%s6868 + $0x1ec] sm:$0xff]
      %v6952 = vld [vmem:[%s6868 + $0x1f4] sm:$0xf]
      %v6953 = vld [vmem:[%s6868 + $0x1f8] sm:$0xff]
      %v6954 = vld [vmem:[%s6868 + $0x200] sm:$0xf]
      %v6955 = vld [vmem:[%s6868 + $0x204] sm:$0xff]
      %v6956 = vld [vmem:[%s6868 + $0x20c] sm:$0xf]
      %v6957 = vld [vmem:[%s6868 + $0x210] sm:$0xff]
      %v6958 = vld [vmem:[%s6868 + $0x218] sm:$0xf]
      %v6959 = vld [vmem:[%s6868 + $0x21c] sm:$0xff]
      %v6960 = vld [vmem:[%s6868 + $0x224] sm:$0xf]
      %v6961 = vld [vmem:[%s6868 + $0x228] sm:$0xff]
      %v6962 = vld [vmem:[%s6868 + $0x230] sm:$0xf]
      %v6963 = vld [vmem:[%s6868 + $0x234] sm:$0xff]
      %v6964 = vld [vmem:[%s6868 + $0x23c] sm:$0xf]
      %v6965 = vld [vmem:[%s6868 + $0x240] sm:$0xff]
      %v6966 = vld [vmem:[%s6868 + $0x248] sm:$0xf]
      %v6967 = vld [vmem:[%s6868 + $0x24c] sm:$0xff]
      %v6968 = vld [vmem:[%s6868 + $0x254] sm:$0xf]
      %v6969 = vld [vmem:[%s6868 + $0x258] sm:$0xff]
      %v6970 = vld [vmem:[%s6868 + $0x260] sm:$0xf]
      %v6971 = vld [vmem:[%s6868 + $0x264] sm:$0xff]
      %v6972 = vld [vmem:[%s6868 + $0x26c] sm:$0xf]
      %v7077 = vunpack.c.l.b16 %v6869
      %v7078 = vunpack.c.h.b16 %v6869
      %v7079 = vunpack.c.l.b16 %v6870
      %v7080 = vunpack.c.l.b16 %v6871
      %v7081 = vunpack.c.h.b16 %v6871
      %v7082 = vunpack.c.l.b16 %v6872
      %v7083 = vunpack.c.l.b16 %v6873
      %v7084 = vunpack.c.h.b16 %v6873
      %v7085 = vunpack.c.l.b16 %v6874
      %v7086 = vunpack.c.l.b16 %v6875
      %v7087 = vunpack.c.h.b16 %v6875
      %v7088 = vunpack.c.l.b16 %v6876
      %v7089 = vunpack.c.l.b16 %v6877
      %v7090 = vunpack.c.h.b16 %v6877
      %v7091 = vunpack.c.l.b16 %v6878
      %v7092 = vunpack.c.l.b16 %v6879
      %v7093 = vunpack.c.h.b16 %v6879
      %v7094 = vunpack.c.l.b16 %v6880
      %v7095 = vunpack.c.l.b16 %v6881
      %v7096 = vunpack.c.h.b16 %v6881
      %v7097 = vunpack.c.l.b16 %v6882
      %v7098 = vunpack.c.l.b16 %v6883
      %v7099 = vunpack.c.h.b16 %v6883
      %v7100 = vunpack.c.l.b16 %v6884
      %v7101 = vunpack.c.l.b16 %v6885
      %v7102 = vunpack.c.h.b16 %v6885
      %v7103 = vunpack.c.l.b16 %v6886
      %v7104 = vunpack.c.l.b16 %v6887
      %v7105 = vunpack.c.h.b16 %v6887
      %v7106 = vunpack.c.l.b16 %v6888
      %v7107 = vunpack.c.l.b16 %v6889
      %v7108 = vunpack.c.h.b16 %v6889
      %v7109 = vunpack.c.l.b16 %v6890
      %v7110 = vunpack.c.l.b16 %v6891
      %v7111 = vunpack.c.h.b16 %v6891
      %v7112 = vunpack.c.l.b16 %v6892
      %v7113 = vunpack.c.l.b16 %v6893
      %v7114 = vunpack.c.h.b16 %v6893
      %v7115 = vunpack.c.l.b16 %v6894
      %v7116 = vunpack.c.l.b16 %v6895
      %v7117 = vunpack.c.h.b16 %v6895
      %v7118 = vunpack.c.l.b16 %v6896
      %v7119 = vunpack.c.l.b16 %v6897
      %v7120 = vunpack.c.h.b16 %v6897
      %v7121 = vunpack.c.l.b16 %v6898
      %v7122 = vunpack.c.l.b16 %v6899
      %v7123 = vunpack.c.h.b16 %v6899
      %v7124 = vunpack.c.l.b16 %v6900
      %v7125 = vunpack.c.l.b16 %v6901
      %v7126 = vunpack.c.h.b16 %v6901
      %v7127 = vunpack.c.l.b16 %v6902
      %v7128 = vunpack.c.l.b16 %v6903
      %v7129 = vunpack.c.h.b16 %v6903
      %v7130 = vunpack.c.l.b16 %v6904
      %v7131 = vunpack.c.l.b16 %v6905
      %v7132 = vunpack.c.h.b16 %v6905
      %v7133 = vunpack.c.l.b16 %v6906
      %v7134 = vunpack.c.l.b16 %v6907
      %v7135 = vunpack.c.h.b16 %v6907
      %v7136 = vunpack.c.l.b16 %v6908
      %v7137 = vunpack.c.l.b16 %v6909
      %v7138 = vunpack.c.h.b16 %v6909
      %v7139 = vunpack.c.l.b16 %v6910
      %v7140 = vunpack.c.l.b16 %v6911
      %v7141 = vunpack.c.h.b16 %v6911
      %v7142 = vunpack.c.l.b16 %v6912
      %v7143 = vunpack.c.l.b16 %v6913
      %v7144 = vunpack.c.h.b16 %v6913
      %v7145 = vunpack.c.l.b16 %v6914
      %v7146 = vunpack.c.l.b16 %v6915
      %v7147 = vunpack.c.h.b16 %v6915
      %v7148 = vunpack.c.l.b16 %v6916
      %v7149 = vunpack.c.l.b16 %v6917
      %v7150 = vunpack.c.h.b16 %v6917
      %v7151 = vunpack.c.l.b16 %v6918
      %v7152 = vunpack.c.l.b16 %v6919
      %v7153 = vunpack.c.h.b16 %v6919
      %v7154 = vunpack.c.l.b16 %v6920
      %v7155 = vunpack.c.l.b16 %v6921
      %v7156 = vunpack.c.h.b16 %v6921
      %v7157 = vunpack.c.l.b16 %v6922
      %v7158 = vunpack.c.l.b16 %v6923
      %v7159 = vunpack.c.h.b16 %v6923
      %v7160 = vunpack.c.l.b16 %v6924
      %v7161 = vunpack.c.l.b16 %v6925
      %v7162 = vunpack.c.h.b16 %v6925
      %v7163 = vunpack.c.l.b16 %v6926
      %v7164 = vunpack.c.l.b16 %v6927
      %v7165 = vunpack.c.h.b16 %v6927
      %v7166 = vunpack.c.l.b16 %v6928
      %v7167 = vunpack.c.l.b16 %v6929
      %v7168 = vunpack.c.h.b16 %v6929
      %v7169 = vunpack.c.l.b16 %v6930
      %v7170 = vunpack.c.l.b16 %v6931
      %v7171 = vunpack.c.h.b16 %v6931
      %v7172 = vunpack.c.l.b16 %v6932
      %v7173 = vunpack.c.l.b16 %v6933
      %v7174 = vunpack.c.h.b16 %v6933
      %v7175 = vunpack.c.l.b16 %v6934
      %v7176 = vunpack.c.l.b16 %v6935
      %v7177 = vunpack.c.h.b16 %v6935
      %v7178 = vunpack.c.l.b16 %v6936
      %v7179 = vunpack.c.l.b16 %v6937
      %v7180 = vunpack.c.h.b16 %v6937
      %v7181 = vunpack.c.l.b16 %v6938
      %v7182 = vunpack.c.l.b16 %v6939
      %v7183 = vunpack.c.h.b16 %v6939
      %v7184 = vunpack.c.l.b16 %v6940
      %v7185 = vunpack.c.l.b16 %v6941
      %v7186 = vunpack.c.h.b16 %v6941
      %v7187 = vunpack.c.l.b16 %v6942
      %v7188 = vunpack.c.l.b16 %v6943
      %v7189 = vunpack.c.h.b16 %v6943
      %v7190 = vunpack.c.l.b16 %v6944
      %v7191 = vunpack.c.l.b16 %v6945
      %v7192 = vunpack.c.h.b16 %v6945
      %v7193 = vunpack.c.l.b16 %v6946
      %v7194 = vunpack.c.l.b16 %v6947
      %v7195 = vunpack.c.h.b16 %v6947
      %v7196 = vunpack.c.l.b16 %v6948
      %v7197 = vunpack.c.l.b16 %v6949
      %v7198 = vunpack.c.h.b16 %v6949
      %v7199 = vunpack.c.l.b16 %v6950
      %v7200 = vunpack.c.l.b16 %v6951
      %v7201 = vunpack.c.h.b16 %v6951
      %v7202 = vunpack.c.l.b16 %v6952
      %v7203 = vunpack.c.l.b16 %v6953
      %v7204 = vunpack.c.h.b16 %v6953
      %v7205 = vunpack.c.l.b16 %v6954
      %v7206 = vunpack.c.l.b16 %v6955
      %v7207 = vunpack.c.h.b16 %v6955
      %v7208 = vunpack.c.l.b16 %v6956
      %v7209 = vunpack.c.l.b16 %v6957
      %v7210 = vunpack.c.h.b16 %v6957
      %v7211 = vunpack.c.l.b16 %v6958
      %v7212 = vunpack.c.l.b16 %v6959
      %v7213 = vunpack.c.h.b16 %v6959
      %v7214 = vunpack.c.l.b16 %v6960
      %v7215 = vunpack.c.l.b16 %v6961
      %v7216 = vunpack.c.h.b16 %v6961
      %v7217 = vunpack.c.l.b16 %v6962
      %v7218 = vunpack.c.l.b16 %v6963
      %v7219 = vunpack.c.h.b16 %v6963
      %v7220 = vunpack.c.l.b16 %v6964
      %v7221 = vunpack.c.l.b16 %v6965
      %v7222 = vunpack.c.h.b16 %v6965
      %v7223 = vunpack.c.l.b16 %v6966
      %v7224 = vunpack.c.l.b16 %v6967
      %v7225 = vunpack.c.h.b16 %v6967
      %v7226 = vunpack.c.l.b16 %v6968
      %v7227 = vunpack.c.l.b16 %v6969
      %v7228 = vunpack.c.h.b16 %v6969
      %v7229 = vunpack.c.l.b16 %v6970
      %v7230 = vunpack.c.l.b16 %v6971
      %v7231 = vunpack.c.h.b16 %v6971
      %v7232 = vunpack.c.l.b16 %v6972
      %v7233 = vpack.c.b16 %v7080, %v7077
      %v7234 = vpack.c.b16 %v7081, %v7078
      %v7235 = vpack.c.b16 %v7082, %v7079
      %v7236 = vpack.c.b16 %v7086, %v7083
      %v7237 = vpack.c.b16 %v7087, %v7084
      %v7238 = vpack.c.b16 %v7088, %v7085
      %v7239 = vpack.c.b16 %v7092, %v7089
      %v7240 = vpack.c.b16 %v7093, %v7090
      %v7241 = vpack.c.b16 %v7094, %v7091
      %v7242 = vpack.c.b16 %v7098, %v7095
      %v7243 = vpack.c.b16 %v7099, %v7096
      %v7244 = vpack.c.b16 %v7100, %v7097
      %v7245 = vpack.c.b16 %v7104, %v7101
      %v7246 = vpack.c.b16 %v7105, %v7102
      %v7247 = vpack.c.b16 %v7106, %v7103
      %v7248 = vpack.c.b16 %v7110, %v7107
      %v7249 = vpack.c.b16 %v7111, %v7108
      %v7250 = vpack.c.b16 %v7112, %v7109
      %v7251 = vpack.c.b16 %v7116, %v7113
      %v7252 = vpack.c.b16 %v7117, %v7114
      %v7253 = vpack.c.b16 %v7118, %v7115
      %v7254 = vpack.c.b16 %v7122, %v7119
      %v7255 = vpack.c.b16 %v7123, %v7120
      %v7256 = vpack.c.b16 %v7124, %v7121
      %v7257 = vpack.c.b16 %v7128, %v7125
      %v7258 = vpack.c.b16 %v7129, %v7126
      %v7259 = vpack.c.b16 %v7130, %v7127
      %v7260 = vpack.c.b16 %v7134, %v7131
      %v7261 = vpack.c.b16 %v7135, %v7132
      %v7262 = vpack.c.b16 %v7136, %v7133
      %v7263 = vpack.c.b16 %v7140, %v7137
      %v7264 = vpack.c.b16 %v7141, %v7138
      %v7265 = vpack.c.b16 %v7142, %v7139
      %v7266 = vpack.c.b16 %v7146, %v7143
      %v7267 = vpack.c.b16 %v7147, %v7144
      %v7268 = vpack.c.b16 %v7148, %v7145
      %v7269 = vpack.c.b16 %v7152, %v7149
      %v7270 = vpack.c.b16 %v7153, %v7150
      %v7271 = vpack.c.b16 %v7154, %v7151
      %v7272 = vpack.c.b16 %v7158, %v7155
      %v7273 = vpack.c.b16 %v7159, %v7156
      %v7274 = vpack.c.b16 %v7160, %v7157
      %v7275 = vpack.c.b16 %v7164, %v7161
      %v7276 = vpack.c.b16 %v7165, %v7162
      %v7277 = vpack.c.b16 %v7166, %v7163
      %v7278 = vpack.c.b16 %v7170, %v7167
      %v7279 = vpack.c.b16 %v7171, %v7168
      %v7280 = vpack.c.b16 %v7172, %v7169
      %v7281 = vpack.c.b16 %v7176, %v7173
      %v7282 = vpack.c.b16 %v7177, %v7174
      %v7283 = vpack.c.b16 %v7178, %v7175
      %v7284 = vpack.c.b16 %v7182, %v7179
      %v7285 = vpack.c.b16 %v7183, %v7180
      %v7286 = vpack.c.b16 %v7184, %v7181
      %v7287 = vpack.c.b16 %v7188, %v7185
      %v7288 = vpack.c.b16 %v7189, %v7186
      %v7289 = vpack.c.b16 %v7190, %v7187
      %v7290 = vpack.c.b16 %v7194, %v7191
      %v7291 = vpack.c.b16 %v7195, %v7192
      %v7292 = vpack.c.b16 %v7196, %v7193
      %v7293 = vpack.c.b16 %v7200, %v7197
      %v7294 = vpack.c.b16 %v7201, %v7198
      %v7295 = vpack.c.b16 %v7202, %v7199
      %v7296 = vpack.c.b16 %v7206, %v7203
      %v7297 = vpack.c.b16 %v7207, %v7204
      %v7298 = vpack.c.b16 %v7208, %v7205
      %v7299 = vpack.c.b16 %v7212, %v7209
      %v7300 = vpack.c.b16 %v7213, %v7210
      %v7301 = vpack.c.b16 %v7214, %v7211
      %v7302 = vpack.c.b16 %v7218, %v7215
      %v7303 = vpack.c.b16 %v7219, %v7216
      %v7304 = vpack.c.b16 %v7220, %v7217
      %v7305 = vpack.c.b16 %v7224, %v7221
      %v7306 = vpack.c.b16 %v7225, %v7222
      %v7307 = vpack.c.b16 %v7226, %v7223
      %v7308 = vpack.c.b16 %v7230, %v7227
      %v7309 = vpack.c.b16 %v7231, %v7228
      %v7310 = vpack.c.b16 %v7232, %v7229
      %v7390 = vsel %vm5250, %v6867, 0
      %7392 = vmatprep.subr.bf16.mxu0 %v7234
      %7393 = vmatpush1.bf16.msra.mxu0 %v7233
      %7394 = vmatprep.subr.bf16.mxu0 %v7237
      %7395 = vmatpush1.bf16.msra.mxu0 %v7236
      %7396 = vmatprep.subr.bf16.mxu0 %v7240
      %7397 = vmatpush1.bf16.msra.mxu0 %v7239
      %7398 = vmatprep.subr.bf16.mxu0 %v7243
      %7399 = vmatpush1.bf16.msra.mxu0 %v7242
      %7400 = vmatprep.subr.bf16.mxu0 %v7246
      %7401 = vmatpush1.bf16.msra.mxu0 %v7245
      %7402 = vmatprep.subr.bf16.mxu0 %v7249
      %7403 = vmatpush1.bf16.msra.mxu0 %v7248
      %7404 = vmatprep.subr.bf16.mxu0 %v7252
      %7405 = vmatpush1.bf16.msra.mxu0 %v7251
      %7406 = vmatprep.subr.bf16.mxu0 %v7255
      %7407 = vmatpush1.bf16.msra.mxu0 %v7254
      %7408 = vmatprep.subr.bf16.mxu0 %v7258
      %7409 = vmatpush1.bf16.msra.mxu0 %v7257
      %7410 = vmatprep.subr.bf16.mxu0 %v7261
      %7411 = vmatpush1.bf16.msra.mxu0 %v7260
      %7412 = vmatprep.subr.bf16.mxu0 %v7264
      %7413 = vmatpush1.bf16.msra.mxu0 %v7263
      %7414 = vmatprep.subr.bf16.mxu0 %v7267
      %7415 = vmatpush1.bf16.msra.mxu0 %v7266
      %7416 = vmatprep.subr.bf16.mxu0 %v7270
      %7417 = vmatpush1.bf16.msra.mxu0 %v7269
      %7418 = vmatprep.subr.bf16.mxu0 %v7273
      %7419 = vmatpush1.bf16.msra.mxu0 %v7272
      %7420 = vmatprep.subr.bf16.mxu0 %v7276
      %7421 = vmatpush1.bf16.msra.mxu0 %v7275
      %7422 = vmatprep.subr.bf16.mxu0 %v7279
      %7423 = vmatpush1.bf16.msra.mxu0 %v7278
      %7424 = vmatprep.mubr.bf16.mxu0 %v6865
      %7425 = vmatmul.mubr.bf16.gmra.mrb[0].mxu0 %v6864
      %v7426 = vpop.f32.mrb[0].mxu0
      %v7427 = vadd.f32 0.0, %v7426
      %v7428 = vpop.f32.mrb[0].mxu0
      %v7429 = vadd.f32 0.0, %v7428
      %v7430 = vpop.f32.mrb[0].mxu0
      %v7431 = vpop.f32.mrb[0].mxu0
      %7432 = vdwg.mxu0
      %7433 = vmatprep.subr.bf16.mxu0 %v7282
      %7434 = vmatpush1.bf16.msra.mxu0 %v7281
      %7435 = vmatprep.subr.bf16.mxu0 %v7285
      %7436 = vmatpush1.bf16.msra.mxu0 %v7284
      %7437 = vmatprep.subr.bf16.mxu0 %v7288
      %7438 = vmatpush1.bf16.msra.mxu0 %v7287
      %7439 = vmatprep.subr.bf16.mxu0 %v7291
      %7440 = vmatpush1.bf16.msra.mxu0 %v7290
      %7441 = vmatprep.subr.bf16.mxu0 %v7294
      %7442 = vmatpush1.bf16.msra.mxu0 %v7293
      %7443 = vmatprep.subr.bf16.mxu0 %v7297
      %7444 = vmatpush1.bf16.msra.mxu0 %v7296
      %7445 = vmatprep.subr.bf16.mxu0 %v7300
      %7446 = vmatpush1.bf16.msra.mxu0 %v7299
      %7447 = vmatprep.subr.bf16.mxu0 %v7303
      %7448 = vmatpush1.bf16.msra.mxu0 %v7302
      %7449 = vmatprep.subr.bf16.mxu0 %v7306
      %7450 = vmatpush1.bf16.msra.mxu0 %v7305
      %7451 = vmatprep.subr.bf16.mxu0 %v7309
      %7452 = vmatpush1.bf16.msra.mxu0 %v7308
      %7453 = vmatprep.subr.bf16.mxu0 0
      %7454 = vmatpush1.bf16.msra.mxu0 0
      %7455 = vmatprep.subr.bf16.mxu0 0
      %7456 = vmatpush1.bf16.msra.mxu0 0
      %7457 = vmatprep.subr.bf16.mxu0 0
      %7458 = vmatpush1.bf16.msra.mxu0 0
      %7459 = vmatprep.subr.bf16.mxu0 0
      %7460 = vmatpush1.bf16.msra.mxu0 0
      %7461 = vmatprep.subr.bf16.mxu0 0
      %7462 = vmatpush1.bf16.msra.mxu0 0
      %7463 = vmatprep.subr.bf16.mxu0 0
      %7464 = vmatpush1.bf16.msra.mxu0 0
      %7465 = vmatprep.mubr.bf16.mxu0 %v7390
      %7466 = vmatmul.mubr.bf16.gmra.mrb[0].mxu0 %v6866
      %v7467 = vpop.f32.mrb[0].mxu0
      %v7468 = vadd.f32 %v7427, %v7467
      %v7469 = vpop.f32.mrb[0].mxu0
      %v7470 = vadd.f32 %v7429, %v7469
      %v7471 = vpop.f32.mrb[0].mxu0
      %v7472 = vpop.f32.mrb[0].mxu0
      %7473 = vdwg.mxu0
      %7474 = vmatprep.subr.bf16.mxu0 0
      %7475 = vmatpush1.bf16.msra.mxu0 %v7235
      %7476 = vmatprep.subr.bf16.mxu0 0
      %7477 = vmatpush1.bf16.msra.mxu0 %v7238
      %7478 = vmatprep.subr.bf16.mxu0 0
      %7479 = vmatpush1.bf16.msra.mxu0 %v7241
      %7480 = vmatprep.subr.bf16.mxu0 0
      %7481 = vmatpush1.bf16.msra.mxu0 %v7244
      %7482 = vmatprep.subr.bf16.mxu0 0
      %7483 = vmatpush1.bf16.msra.mxu0 %v7247
      %7484 = vmatprep.subr.bf16.mxu0 0
      %7485 = vmatpush1.bf16.msra.mxu0 %v7250
      %7486 = vmatprep.subr.bf16.mxu0 0
      %7487 = vmatpush1.bf16.msra.mxu0 %v7253
      %7488 = vmatprep.subr.bf16.mxu0 0
      %7489 = vmatpush1.bf16.msra.mxu0 %v7256
      %7490 = vmatprep.subr.bf16.mxu0 0
      %7491 = vmatpush1.bf16.msra.mxu0 %v7259
      %7492 = vmatprep.subr.bf16.mxu0 0
      %7493 = vmatpush1.bf16.msra.mxu0 %v7262
      %7494 = vmatprep.subr.bf16.mxu0 0
      %7495 = vmatpush1.bf16.msra.mxu0 %v7265
      %7496 = vmatprep.subr.bf16.mxu0 0
      %7497 = vmatpush1.bf16.msra.mxu0 %v7268
      %7498 = vmatprep.subr.bf16.mxu0 0
      %7499 = vmatpush1.bf16.msra.mxu0 %v7271
      %7500 = vmatprep.subr.bf16.mxu0 0
      %7501 = vmatpush1.bf16.msra.mxu0 %v7274
      %7502 = vmatprep.subr.bf16.mxu0 0
      %7503 = vmatpush1.bf16.msra.mxu0 %v7277
      %7504 = vmatprep.subr.bf16.mxu0 0
      %7505 = vmatpush1.bf16.msra.mxu0 %v7280
      %7506 = vmatprep.mubr.bf16.mxu0 %v6865
      %7507 = vmatmul.mubr.bf16.gmra.mrb[0].mxu0 %v6864
      %v7508 = vpop.f32.mrb[0].mxu0
      %v7509 = vadd.f32 0.0, %v7508
      %v7510 = vpop.f32.mrb[0].mxu0
      %v7511 = vpop.f32.mrb[0].mxu0
      %v7512 = vpop.f32.mrb[0].mxu0
      %7513 = vdwg.mxu0
      %7514 = vmatprep.subr.bf16.mxu0 0
      %7515 = vmatpush1.bf16.msra.mxu0 %v7283
      %7516 = vmatprep.subr.bf16.mxu0 0
      %7517 = vmatpush1.bf16.msra.mxu0 %v7286
      %7518 = vmatprep.subr.bf16.mxu0 0
      %7519 = vmatpush1.bf16.msra.mxu0 %v7289
      %7520 = vmatprep.subr.bf16.mxu0 0
      %7521 = vmatpush1.bf16.msra.mxu0 %v7292
      %7522 = vmatprep.subr.bf16.mxu0 0
      %7523 = vmatpush1.bf16.msra.mxu0 %v7295
      %7524 = vmatprep.subr.bf16.mxu0 0
      %7525 = vmatpush1.bf16.msra.mxu0 %v7298
      %7526 = vmatprep.subr.bf16.mxu0 0
      %7527 = vmatpush1.bf16.msra.mxu0 %v7301
      %7528 = vmatprep.subr.bf16.mxu0 0
      %7529 = vmatpush1.bf16.msra.mxu0 %v7304
      %7530 = vmatprep.subr.bf16.mxu0 0
      %7531 = vmatpush1.bf16.msra.mxu0 %v7307
      %7532 = vmatprep.subr.bf16.mxu0 0
      %7533 = vmatpush1.bf16.msra.mxu0 %v7310
      %7534 = vmatprep.subr.bf16.mxu0 0
      %7535 = vmatpush1.bf16.msra.mxu0 0
      %7536 = vmatprep.subr.bf16.mxu0 0
      %7537 = vmatpush1.bf16.msra.mxu0 0
      %7538 = vmatprep.subr.bf16.mxu0 0
      %7539 = vmatpush1.bf16.msra.mxu0 0
      %7540 = vmatprep.subr.bf16.mxu0 0
      %7541 = vmatpush1.bf16.msra.mxu0 0
      %7542 = vmatprep.subr.bf16.mxu0 0
      %7543 = vmatpush1.bf16.msra.mxu0 0
      %7544 = vmatprep.subr.bf16.mxu0 0
      %7545 = vmatpush1.bf16.msra.mxu0 0
      %7546 = vmatprep.mubr.bf16.mxu0 %v7390
      %7547 = vmatmul.mubr.bf16.gmra.mrb[0].mxu0 %v6866
      %v7548 = vpop.f32.mrb[0].mxu0
      %v7549 = vadd.f32 %v7509, %v7548
      %v7550 = vpop.f32.mrb[0].mxu0
      %v7551 = vpop.f32.mrb[0].mxu0
      %v7552 = vpop.f32.mrb[0].mxu0
      %7553 = vdwg.mxu0
      %v7554 = vadd.f32 %v6774, %v7468
      %v7555 = vadd.f32 %v6775, %v7470
      %v7556 = vadd.f32 %v6776, %v7549
      %v7557 = vld [vmem:[%s6] sm:$0x7]
      %v7559 = vlaneseq
      %v7560 = vshrl.u32 %v7559, 7
      %v7561 = vsub.s32 0, %v7560
      %v7562 = vrot.slane %v7557, %v7561
      %v7563 = vlaneseq
      %v7564 = vshrl.u32 %v7563, 7
      %v7565 = vsub.s32 1, %v7564
      %v7566 = vrot.slane %v7557, %v7565
      %v7567 = vlaneseq
      %v7568 = vshrl.u32 %v7567, 7
      %v7569 = vsub.s32 2, %v7568
      %v7570 = vrot.slane %v7557, %v7569
      %v7574 = vadd.f32 %v7554, %v7562
      %v7575 = vadd.f32 %v7555, %v7566
      %v7576 = vadd.f32 %v7556, %v7570
      %v7577 = vmax.f32 %v7574, 0.0
      %v7578 = vmax.f32 %v7575, 0.0
      %v7579 = vmax.f32 %v7576, 0.0
      %v7580 = vpack.c.bf16 %v7577, %v7577
      %v7581 = vpack.c.bf16 %v7578, %v7578
      %v7582 = vpack.c.bf16 %v7579, %v7579
      %v7583 = vld [vmem:[%s7] sm:$0xff]
      %v7584 = vld [vmem:[%s7 + $0x8] sm:$0xff]
      %v7585 = vld [vmem:[%s7 + $0x10] sm:$0xff]
      %v7586 = vld [vmem:[%s7 + $0x18] sm:$0xff]
      %v7587 = vld [vmem:[%s7 + $0x20] sm:$0xff]
      %v7588 = vld [vmem:[%s7 + $0x28] sm:$0xff]
      %v7589 = vld [vmem:[%s7 + $0x30] sm:$0xff]
      %v7590 = vld [vmem:[%s7 + $0x38] sm:$0xff]
      %v7591 = vld [vmem:[%s7 + $0x40] sm:$0xff]
      %v7592 = vld [vmem:[%s7 + $0x48] sm:$0xff]
      %v7593 = vld [vmem:[%s7 + $0x50] sm:$0xff]
      %v7594 = vld [vmem:[%s7 + $0x58] sm:$0xff]
      %v7595 = vld [vmem:[%s7 + $0x60] sm:$0xff]
      %v7596 = vld [vmem:[%s7 + $0x68] sm:$0xff]
      %v7597 = vld [vmem:[%s7 + $0x70] sm:$0xff]
      %v7598 = vld [vmem:[%s7 + $0x78] sm:$0xff]
      %v7599 = vld [vmem:[%s7 + $0x80] sm:$0xff]
      %v7600 = vld [vmem:[%s7 + $0x88] sm:$0xff]
      %v7601 = vld [vmem:[%s7 + $0x90] sm:$0xff]
      %v7602 = vld [vmem:[%s7 + $0x98] sm:$0xff]
      %v7603 = vld [vmem:[%s7 + $0xa0] sm:$0xff]
      %v7604 = vld [vmem:[%s7 + $0xa8] sm:$0xff]
      %v7605 = vld [vmem:[%s7 + $0xb0] sm:$0xff]
      %v7606 = vld [vmem:[%s7 + $0xb8] sm:$0xff]
      %v7607 = vld [vmem:[%s7 + $0xc0] sm:$0xff]
      %v7608 = vld [vmem:[%s7 + $0xc8] sm:$0xff]
      %v7609 = vld [vmem:[%s7 + $0xd0] sm:$0xff]
      %v7610 = vld [vmem:[%s7 + $0xd8] sm:$0xff]
      %v7611 = vld [vmem:[%s7 + $0xe0] sm:$0xff]
      %v7612 = vld [vmem:[%s7 + $0xe8] sm:$0xff]
      %v7613 = vld [vmem:[%s7 + $0xf0] sm:$0xff]
      %v7614 = vld [vmem:[%s7 + $0xf8] sm:$0xff]
      %v7615 = vld [vmem:[%s7 + $0x100] sm:$0xff]
      %v7616 = vld [vmem:[%s7 + $0x108] sm:$0xff]
      %v7617 = vld [vmem:[%s7 + $0x110] sm:$0xff]
      %v7618 = vld [vmem:[%s7 + $0x118] sm:$0xff]
      %v7619 = vld [vmem:[%s7 + $0x120] sm:$0xff]
      %v7620 = vld [vmem:[%s7 + $0x128] sm:$0xff]
      %v7621 = vld [vmem:[%s7 + $0x130] sm:$0xff]
      %v7622 = vld [vmem:[%s7 + $0x138] sm:$0xff]
      %s7623 = scalar_lea.vmem %s7, 320
      %v7624 = vld [vmem:[%s7623] sm:$0xff]
      %v7625 = vld [vmem:[%s7623 + $0x8] sm:$0xff]
      %v7626 = vld [vmem:[%s7623 + $0x10] sm:$0xff]
      %v7627 = vld [vmem:[%s7623 + $0x18] sm:$0xff]
      %v7628 = vld [vmem:[%s7623 + $0x20] sm:$0xff]
      %v7629 = vld [vmem:[%s7623 + $0x28] sm:$0xff]
      %v7630 = vld [vmem:[%s7623 + $0x30] sm:$0xff]
      %v7631 = vld [vmem:[%s7623 + $0x38] sm:$0xff]
      %v7632 = vld [vmem:[%s7623 + $0x40] sm:$0xff]
      %v7633 = vld [vmem:[%s7623 + $0x48] sm:$0xff]
      %v7634 = vld [vmem:[%s7623 + $0x50] sm:$0xff]
      %v7635 = vld [vmem:[%s7623 + $0x58] sm:$0xff]
      %v7636 = vld [vmem:[%s7623 + $0x60] sm:$0xff]
      %v7637 = vld [vmem:[%s7623 + $0x68] sm:$0xff]
      %v7638 = vld [vmem:[%s7623 + $0x70] sm:$0xff]
      %v7639 = vld [vmem:[%s7623 + $0x78] sm:$0xff]
      %v7640 = vld [vmem:[%s7623 + $0x80] sm:$0xff]
      %v7641 = vld [vmem:[%s7623 + $0x88] sm:$0xff]
      %v7642 = vld [vmem:[%s7623 + $0x90] sm:$0xff]
      %v7643 = vld [vmem:[%s7623 + $0x98] sm:$0xff]
      %v7644 = vld [vmem:[%s7623 + $0xa0] sm:$0xff]
      %v7645 = vld [vmem:[%s7623 + $0xa8] sm:$0xff]
      %v7646 = vld [vmem:[%s7623 + $0xb0] sm:$0xff]
      %v7647 = vld [vmem:[%s7623 + $0xb8] sm:$0xff]
      %v7648 = vld [vmem:[%s7623 + $0xc0] sm:$0xff]
      %v7649 = vld [vmem:[%s7623 + $0xc8] sm:$0xff]
      %v7650 = vld [vmem:[%s7623 + $0xd0] sm:$0xff]
      %v7651 = vld [vmem:[%s7623 + $0xd8] sm:$0xff]
      %v7652 = vld [vmem:[%s7623 + $0xe0] sm:$0xff]
      %v7653 = vld [vmem:[%s7623 + $0xe8] sm:$0xff]
      %v7654 = vld [vmem:[%s7623 + $0xf0] sm:$0xff]
      %v7655 = vld [vmem:[%s7623 + $0xf8] sm:$0xff]
      %v7656 = vld [vmem:[%s7623 + $0x100] sm:$0xff]
      %v7657 = vld [vmem:[%s7623 + $0x108] sm:$0xff]
      %v7658 = vld [vmem:[%s7623 + $0x110] sm:$0xff]
      %v7659 = vld [vmem:[%s7623 + $0x118] sm:$0xff]
      %v7660 = vld [vmem:[%s7623 + $0x120] sm:$0xff]
      %v7661 = vld [vmem:[%s7623 + $0x128] sm:$0xff]
      %v7662 = vld [vmem:[%s7623 + $0x130] sm:$0xff]
      %v7663 = vld [vmem:[%s7623 + $0x138] sm:$0xff]
      %v7665 = vshrl.u32 %v7580, 16
      %v7667 = vshll.u32 %v7580, 16
      %v7669 = vrot.slane %v7667, 1
      %v7670 = vor.u32 %v7665, %v7669
      %v7672 = vshrl.u32 %v7581, 16
      %v7674 = vshll.u32 %v7581, 16
      %v7676 = vrot.slane %v7674, 1
      %v7677 = vor.u32 %v7672, %v7676
      %v7679 = vshrl.u32 %v7582, 16
      %v7681 = vshll.u32 %v7582, 16
      %v7683 = vrot.slane %v7681, 1
      %v7684 = vor.u32 %v7679, %v7683
      %v7727 = vunpack.c.l.b16 %v7624
      %v7728 = vunpack.c.h.b16 %v7624
      %v7729 = vunpack.c.l.b16 %v7625
      %v7730 = vunpack.c.h.b16 %v7625
      %v7731 = vunpack.c.l.b16 %v7626
      %v7732 = vunpack.c.h.b16 %v7626
      %v7733 = vunpack.c.l.b16 %v7627
      %v7734 = vunpack.c.h.b16 %v7627
      %v7735 = vunpack.c.l.b16 %v7628
      %v7736 = vunpack.c.h.b16 %v7628
      %v7737 = vunpack.c.l.b16 %v7629
      %v7738 = vunpack.c.h.b16 %v7629
      %v7739 = vunpack.c.l.b16 %v7630
      %v7740 = vunpack.c.h.b16 %v7630
      %v7741 = vunpack.c.l.b16 %v7631
      %v7742 = vunpack.c.h.b16 %v7631
      %v7743 = vunpack.c.l.b16 %v7632
      %v7744 = vunpack.c.h.b16 %v7632
      %v7745 = vunpack.c.l.b16 %v7633
      %v7746 = vunpack.c.h.b16 %v7633
      %v7747 = vunpack.c.l.b16 %v7634
      %v7748 = vunpack.c.h.b16 %v7634
      %v7749 = vunpack.c.l.b16 %v7635
      %v7750 = vunpack.c.h.b16 %v7635
      %v7751 = vunpack.c.l.b16 %v7636
      %v7752 = vunpack.c.h.b16 %v7636
      %v7753 = vunpack.c.l.b16 %v7637
      %v7754 = vunpack.c.h.b16 %v7637
      %v7755 = vunpack.c.l.b16 %v7638
      %v7756 = vunpack.c.h.b16 %v7638
      %v7757 = vunpack.c.l.b16 %v7639
      %v7758 = vunpack.c.h.b16 %v7639
      %v7759 = vunpack.c.l.b16 %v7640
      %v7760 = vunpack.c.h.b16 %v7640
      %v7761 = vunpack.c.l.b16 %v7641
      %v7762 = vunpack.c.h.b16 %v7641
      %v7763 = vunpack.c.l.b16 %v7642
      %v7764 = vunpack.c.h.b16 %v7642
      %v7765 = vunpack.c.l.b16 %v7643
      %v7766 = vunpack.c.h.b16 %v7643
      %v7767 = vunpack.c.l.b16 %v7644
      %v7768 = vunpack.c.h.b16 %v7644
      %v7769 = vunpack.c.l.b16 %v7645
      %v7770 = vunpack.c.h.b16 %v7645
      %v7771 = vunpack.c.l.b16 %v7646
      %v7772 = vunpack.c.h.b16 %v7646
      %v7773 = vunpack.c.l.b16 %v7647
      %v7774 = vunpack.c.h.b16 %v7647
      %v7775 = vunpack.c.l.b16 %v7648
      %v7776 = vunpack.c.h.b16 %v7648
      %v7777 = vunpack.c.l.b16 %v7649
      %v7778 = vunpack.c.h.b16 %v7649
      %v7779 = vunpack.c.l.b16 %v7650
      %v7780 = vunpack.c.h.b16 %v7650
      %v7781 = vunpack.c.l.b16 %v7651
      %v7782 = vunpack.c.h.b16 %v7651
      %v7783 = vunpack.c.l.b16 %v7652
      %v7784 = vunpack.c.h.b16 %v7652
      %v7785 = vunpack.c.l.b16 %v7653
      %v7786 = vunpack.c.h.b16 %v7653
      %v7787 = vunpack.c.l.b16 %v7654
      %v7788 = vunpack.c.h.b16 %v7654
      %v7789 = vunpack.c.l.b16 %v7655
      %v7790 = vunpack.c.h.b16 %v7655
      %v7791 = vunpack.c.l.b16 %v7656
      %v7792 = vunpack.c.h.b16 %v7656
      %v7793 = vunpack.c.l.b16 %v7657
      %v7794 = vunpack.c.h.b16 %v7657
      %v7795 = vunpack.c.l.b16 %v7658
      %v7796 = vunpack.c.h.b16 %v7658
      %v7797 = vunpack.c.l.b16 %v7659
      %v7798 = vunpack.c.h.b16 %v7659
      %v7799 = vunpack.c.l.b16 %v7660
      %v7800 = vunpack.c.h.b16 %v7660
      %v7801 = vunpack.c.l.b16 %v7661
      %v7802 = vunpack.c.h.b16 %v7661
      %v7803 = vunpack.c.l.b16 %v7662
      %v7804 = vunpack.c.h.b16 %v7662
      %v7805 = vunpack.c.l.b16 %v7663
      %v7806 = vunpack.c.h.b16 %v7663
      %v7807 = vpack.c.b16 %v7729, %v7727
      %v7808 = vpack.c.b16 %v7730, %v7728
      %v7809 = vpack.c.b16 %v7733, %v7731
      %v7810 = vpack.c.b16 %v7734, %v7732
      %v7811 = vpack.c.b16 %v7737, %v7735
      %v7812 = vpack.c.b16 %v7738, %v7736
      %v7813 = vpack.c.b16 %v7741, %v7739
      %v7814 = vpack.c.b16 %v7742, %v7740
      %v7815 = vpack.c.b16 %v7745, %v7743
      %v7816 = vpack.c.b16 %v7746, %v7744
      %v7817 = vpack.c.b16 %v7749, %v7747
      %v7818 = vpack.c.b16 %v7750, %v7748
      %v7819 = vpack.c.b16 %v7753, %v7751
      %v7820 = vpack.c.b16 %v7754, %v7752
      %v7821 = vpack.c.b16 %v7757, %v7755
      %v7822 = vpack.c.b16 %v7758, %v7756
      %v7823 = vpack.c.b16 %v7761, %v7759
      %v7824 = vpack.c.b16 %v7762, %v7760
      %v7825 = vpack.c.b16 %v7765, %v7763
      %v7826 = vpack.c.b16 %v7766, %v7764
      %v7827 = vpack.c.b16 %v7769, %v7767
      %v7828 = vpack.c.b16 %v7770, %v7768
      %v7829 = vpack.c.b16 %v7773, %v7771
      %v7830 = vpack.c.b16 %v7774, %v7772
      %v7831 = vpack.c.b16 %v7777, %v7775
      %v7832 = vpack.c.b16 %v7778, %v7776
      %v7833 = vpack.c.b16 %v7781, %v7779
      %v7834 = vpack.c.b16 %v7782, %v7780
      %v7835 = vpack.c.b16 %v7785, %v7783
      %v7836 = vpack.c.b16 %v7786, %v7784
      %v7837 = vpack.c.b16 %v7789, %v7787
      %v7838 = vpack.c.b16 %v7790, %v7788
      %v7839 = vpack.c.b16 %v7793, %v7791
      %v7840 = vpack.c.b16 %v7794, %v7792
      %v7841 = vpack.c.b16 %v7797, %v7795
      %v7842 = vpack.c.b16 %v7798, %v7796
      %v7843 = vpack.c.b16 %v7801, %v7799
      %v7844 = vpack.c.b16 %v7802, %v7800
      %v7845 = vpack.c.b16 %v7805, %v7803
      %v7846 = vpack.c.b16 %v7806, %v7804
      %vm7887 = vcmask 523264
      %v7889 = vsel %vm7887, %v7684, 0
      %7891 = vmatprep.subr.bf16.mxu0 %v7808
      %7892 = vmatpush1.bf16.msra.mxu0 %v7807
      %7893 = vmatprep.subr.bf16.mxu0 %v7810
      %7894 = vmatpush1.bf16.msra.mxu0 %v7809
      %7895 = vmatprep.subr.bf16.mxu0 %v7812
      %7896 = vmatpush1.bf16.msra.mxu0 %v7811
      %7897 = vmatprep.subr.bf16.mxu0 %v7814
      %7898 = vmatpush1.bf16.msra.mxu0 %v7813
      %7899 = vmatprep.subr.bf16.mxu0 %v7816
      %7900 = vmatpush1.bf16.msra.mxu0 %v7815
      %7901 = vmatprep.subr.bf16.mxu0 %v7818
      %7902 = vmatpush1.bf16.msra.mxu0 %v7817
      %7903 = vmatprep.subr.bf16.mxu0 %v7820
      %7904 = vmatpush1.bf16.msra.mxu0 %v7819
      %7905 = vmatprep.subr.bf16.mxu0 %v7822
      %7906 = vmatpush1.bf16.msra.mxu0 %v7821
      %7907 = vmatprep.subr.bf16.mxu0 %v7824
      %7908 = vmatpush1.bf16.msra.mxu0 %v7823
      %7909 = vmatprep.subr.bf16.mxu0 %v7826
      %7910 = vmatpush1.bf16.msra.mxu0 %v7825
      %7911 = vmatprep.subr.bf16.mxu0 %v7828
      %7912 = vmatpush1.bf16.msra.mxu0 %v7827
      %7913 = vmatprep.subr.bf16.mxu0 %v7830
      %7914 = vmatpush1.bf16.msra.mxu0 %v7829
      %7915 = vmatprep.subr.bf16.mxu0 %v7832
      %7916 = vmatpush1.bf16.msra.mxu0 %v7831
      %7917 = vmatprep.subr.bf16.mxu0 %v7834
      %7918 = vmatpush1.bf16.msra.mxu0 %v7833
      %7919 = vmatprep.subr.bf16.mxu0 %v7836
      %7920 = vmatpush1.bf16.msra.mxu0 %v7835
      %7921 = vmatprep.subr.bf16.mxu0 %v7838
      %7922 = vmatpush1.bf16.msra.mxu0 %v7837
      %7923 = vmatprep.mubr.bf16.mxu0 %v7677
      %7924 = vmatmul.mubr.bf16.gmra.mrb[0].mxu0 %v7670
      %v7925 = vpop.f32.mrb[0].mxu0
      %v7926 = vadd.f32 0.0, %v7925
      %v7927 = vpop.f32.mrb[0].mxu0
      %v7928 = vadd.f32 0.0, %v7927
      %v7929 = vpop.f32.mrb[0].mxu0
      %v7930 = vpop.f32.mrb[0].mxu0
      %7931 = vdwg.mxu0
      %7932 = vmatprep.subr.bf16.mxu0 %v7840
      %7933 = vmatpush1.bf16.msra.mxu0 %v7839
      %7934 = vmatprep.subr.bf16.mxu0 %v7842
      %7935 = vmatpush1.bf16.msra.mxu0 %v7841
      %7936 = vmatprep.subr.bf16.mxu0 %v7844
      %7937 = vmatpush1.bf16.msra.mxu0 %v7843
      %7938 = vmatprep.subr.bf16.mxu0 %v7846
      %7939 = vmatpush1.bf16.msra.mxu0 %v7845
      %7940 = vmatprep.subr.bf16.mxu0 0
      %7941 = vmatpush1.bf16.msra.mxu0 0
      %7942 = vmatprep.subr.bf16.mxu0 0
      %7943 = vmatpush1.bf16.msra.mxu0 0
      %7944 = vmatprep.subr.bf16.mxu0 0
      %7945 = vmatpush1.bf16.msra.mxu0 0
      %7946 = vmatprep.subr.bf16.mxu0 0
      %7947 = vmatpush1.bf16.msra.mxu0 0
      %7948 = vmatprep.subr.bf16.mxu0 0
      %7949 = vmatpush1.bf16.msra.mxu0 0
      %7950 = vmatprep.subr.bf16.mxu0 0
      %7951 = vmatpush1.bf16.msra.mxu0 0
      %7952 = vmatprep.subr.bf16.mxu0 0
      %7953 = vmatpush1.bf16.msra.mxu0 0
      %7954 = vmatprep.subr.bf16.mxu0 0
      %7955 = vmatpush1.bf16.msra.mxu0 0
      %7956 = vmatprep.subr.bf16.mxu0 0
      %7957 = vmatpush1.bf16.msra.mxu0 0
      %7958 = vmatprep.subr.bf16.mxu0 0
      %7959 = vmatpush1.bf16.msra.mxu0 0
      %7960 = vmatprep.subr.bf16.mxu0 0
      %7961 = vmatpush1.bf16.msra.mxu0 0
      %7962 = vmatprep.subr.bf16.mxu0 0
      %7963 = vmatpush1.bf16.msra.mxu0 0
      %7964 = vmatprep.mubr.bf16.mxu0 0
      %7965 = vmatmul.mubr.bf16.gmra.mrb[0].mxu0 %v7889
      %v7966 = vpop.f32.mrb[0].mxu0
      %v7967 = vadd.f32 %v7926, %v7966
      %v7968 = vpop.f32.mrb[0].mxu0
      %v7969 = vadd.f32 %v7928, %v7968
      %v7970 = vpop.f32.mrb[0].mxu0
      %v7971 = vpop.f32.mrb[0].mxu0
      %7972 = vdwg.mxu0
      %v8013 = vunpack.c.l.b16 %v7583
      %v8014 = vunpack.c.h.b16 %v7583
      %v8015 = vunpack.c.l.b16 %v7584
      %v8016 = vunpack.c.h.b16 %v7584
      %v8017 = vunpack.c.l.b16 %v7585
      %v8018 = vunpack.c.h.b16 %v7585
      %v8019 = vunpack.c.l.b16 %v7586
      %v8020 = vunpack.c.h.b16 %v7586
      %v8021 = vunpack.c.l.b16 %v7587
      %v8022 = vunpack.c.h.b16 %v7587
      %v8023 = vunpack.c.l.b16 %v7588
      %v8024 = vunpack.c.h.b16 %v7588
      %v8025 = vunpack.c.l.b16 %v7589
      %v8026 = vunpack.c.h.b16 %v7589
      %v8027 = vunpack.c.l.b16 %v7590
      %v8028 = vunpack.c.h.b16 %v7590
      %v8029 = vunpack.c.l.b16 %v7591
      %v8030 = vunpack.c.h.b16 %v7591
      %v8031 = vunpack.c.l.b16 %v7592
      %v8032 = vunpack.c.h.b16 %v7592
      %v8033 = vunpack.c.l.b16 %v7593
      %v8034 = vunpack.c.h.b16 %v7593
      %v8035 = vunpack.c.l.b16 %v7594
      %v8036 = vunpack.c.h.b16 %v7594
      %v8037 = vunpack.c.l.b16 %v7595
      %v8038 = vunpack.c.h.b16 %v7595
      %v8039 = vunpack.c.l.b16 %v7596
      %v8040 = vunpack.c.h.b16 %v7596
      %v8041 = vunpack.c.l.b16 %v7597
      %v8042 = vunpack.c.h.b16 %v7597
      %v8043 = vunpack.c.l.b16 %v7598
      %v8044 = vunpack.c.h.b16 %v7598
      %v8045 = vunpack.c.l.b16 %v7599
      %v8046 = vunpack.c.h.b16 %v7599
      %v8047 = vunpack.c.l.b16 %v7600
      %v8048 = vunpack.c.h.b16 %v7600
      %v8049 = vunpack.c.l.b16 %v7601
      %v8050 = vunpack.c.h.b16 %v7601
      %v8051 = vunpack.c.l.b16 %v7602
      %v8052 = vunpack.c.h.b16 %v7602
      %v8053 = vunpack.c.l.b16 %v7603
      %v8054 = vunpack.c.h.b16 %v7603
      %v8055 = vunpack.c.l.b16 %v7604
      %v8056 = vunpack.c.h.b16 %v7604
      %v8057 = vunpack.c.l.b16 %v7605
      %v8058 = vunpack.c.h.b16 %v7605
      %v8059 = vunpack.c.l.b16 %v7606
      %v8060 = vunpack.c.h.b16 %v7606
      %v8061 = vunpack.c.l.b16 %v7607
      %v8062 = vunpack.c.h.b16 %v7607
      %v8063 = vunpack.c.l.b16 %v7608
      %v8064 = vunpack.c.h.b16 %v7608
      %v8065 = vunpack.c.l.b16 %v7609
      %v8066 = vunpack.c.h.b16 %v7609
      %v8067 = vunpack.c.l.b16 %v7610
      %v8068 = vunpack.c.h.b16 %v7610
      %v8069 = vunpack.c.l.b16 %v7611
      %v8070 = vunpack.c.h.b16 %v7611
      %v8071 = vunpack.c.l.b16 %v7612
      %v8072 = vunpack.c.h.b16 %v7612
      %v8073 = vunpack.c.l.b16 %v7613
      %v8074 = vunpack.c.h.b16 %v7613
      %v8075 = vunpack.c.l.b16 %v7614
      %v8076 = vunpack.c.h.b16 %v7614
      %v8077 = vunpack.c.l.b16 %v7615
      %v8078 = vunpack.c.h.b16 %v7615
      %v8079 = vunpack.c.l.b16 %v7616
      %v8080 = vunpack.c.h.b16 %v7616
      %v8081 = vunpack.c.l.b16 %v7617
      %v8082 = vunpack.c.h.b16 %v7617
      %v8083 = vunpack.c.l.b16 %v7618
      %v8084 = vunpack.c.h.b16 %v7618
      %v8085 = vunpack.c.l.b16 %v7619
      %v8086 = vunpack.c.h.b16 %v7619
      %v8087 = vunpack.c.l.b16 %v7620
      %v8088 = vunpack.c.h.b16 %v7620
      %v8089 = vunpack.c.l.b16 %v7621
      %v8090 = vunpack.c.h.b16 %v7621
      %v8091 = vunpack.c.l.b16 %v7622
      %v8092 = vunpack.c.h.b16 %v7622
      %v8093 = vpack.c.b16 %v8015, %v8013
      %v8094 = vpack.c.b16 %v8016, %v8014
      %v8095 = vpack.c.b16 %v8019, %v8017
      %v8096 = vpack.c.b16 %v8020, %v8018
      %v8097 = vpack.c.b16 %v8023, %v8021
      %v8098 = vpack.c.b16 %v8024, %v8022
      %v8099 = vpack.c.b16 %v8027, %v8025
      %v8100 = vpack.c.b16 %v8028, %v8026
      %v8101 = vpack.c.b16 %v8031, %v8029
      %v8102 = vpack.c.b16 %v8032, %v8030
      %v8103 = vpack.c.b16 %v8035, %v8033
      %v8104 = vpack.c.b16 %v8036, %v8034
      %v8105 = vpack.c.b16 %v8039, %v8037
      %v8106 = vpack.c.b16 %v8040, %v8038
      %v8107 = vpack.c.b16 %v8043, %v8041
      %v8108 = vpack.c.b16 %v8044, %v8042
      %v8109 = vpack.c.b16 %v8047, %v8045
      %v8110 = vpack.c.b16 %v8048, %v8046
      %v8111 = vpack.c.b16 %v8051, %v8049
      %v8112 = vpack.c.b16 %v8052, %v8050
      %v8113 = vpack.c.b16 %v8055, %v8053
      %v8114 = vpack.c.b16 %v8056, %v8054
      %v8115 = vpack.c.b16 %v8059, %v8057
      %v8116 = vpack.c.b16 %v8060, %v8058
      %v8117 = vpack.c.b16 %v8063, %v8061
      %v8118 = vpack.c.b16 %v8064, %v8062
      %v8119 = vpack.c.b16 %v8067, %v8065
      %v8120 = vpack.c.b16 %v8068, %v8066
      %v8121 = vpack.c.b16 %v8071, %v8069
      %v8122 = vpack.c.b16 %v8072, %v8070
      %v8123 = vpack.c.b16 %v8075, %v8073
      %v8124 = vpack.c.b16 %v8076, %v8074
      %v8125 = vpack.c.b16 %v8079, %v8077
      %v8126 = vpack.c.b16 %v8080, %v8078
      %v8127 = vpack.c.b16 %v8083, %v8081
      %v8128 = vpack.c.b16 %v8084, %v8082
      %v8129 = vpack.c.b16 %v8087, %v8085
      %v8130 = vpack.c.b16 %v8088, %v8086
      %v8131 = vpack.c.b16 %v8091, %v8089
      %v8132 = vpack.c.b16 %v8092, %v8090
      %v8173 = vsel %vm7887, %v7582, 0
      %8175 = vmatprep.subr.bf16.mxu0 %v8094
      %8176 = vmatpush1.bf16.msra.mxu0 %v8093
      %8177 = vmatprep.subr.bf16.mxu0 %v8096
      %8178 = vmatpush1.bf16.msra.mxu0 %v8095
      %8179 = vmatprep.subr.bf16.mxu0 %v8098
      %8180 = vmatpush1.bf16.msra.mxu0 %v8097
      %8181 = vmatprep.subr.bf16.mxu0 %v8100
      %8182 = vmatpush1.bf16.msra.mxu0 %v8099
      %8183 = vmatprep.subr.bf16.mxu0 %v8102
      %8184 = vmatpush1.bf16.msra.mxu0 %v8101
      %8185 = vmatprep.subr.bf16.mxu0 %v8104
      %8186 = vmatpush1.bf16.msra.mxu0 %v8103
      %8187 = vmatprep.subr.bf16.mxu0 %v8106
      %8188 = vmatpush1.bf16.msra.mxu0 %v8105
      %8189 = vmatprep.subr.bf16.mxu0 %v8108
      %8190 = vmatpush1.bf16.msra.mxu0 %v8107
      %8191 = vmatprep.subr.bf16.mxu0 %v8110
      %8192 = vmatpush1.bf16.msra.mxu0 %v8109
      %8193 = vmatprep.subr.bf16.mxu0 %v8112
      %8194 = vmatpush1.bf16.msra.mxu0 %v8111
      %8195 = vmatprep.subr.bf16.mxu0 %v8114
      %8196 = vmatpush1.bf16.msra.mxu0 %v8113
      %8197 = vmatprep.subr.bf16.mxu0 %v8116
      %8198 = vmatpush1.bf16.msra.mxu0 %v8115
      %8199 = vmatprep.subr.bf16.mxu0 %v8118
      %8200 = vmatpush1.bf16.msra.mxu0 %v8117
      %8201 = vmatprep.subr.bf16.mxu0 %v8120
      %8202 = vmatpush1.bf16.msra.mxu0 %v8119
      %8203 = vmatprep.subr.bf16.mxu0 %v8122
      %8204 = vmatpush1.bf16.msra.mxu0 %v8121
      %8205 = vmatprep.subr.bf16.mxu0 %v8124
      %8206 = vmatpush1.bf16.msra.mxu0 %v8123
      %8207 = vmatprep.mubr.bf16.mxu0 %v7581
      %8208 = vmatmul.mubr.bf16.gmra.mrb[0].mxu0 %v7580
      %v8209 = vpop.f32.mrb[0].mxu0
      %v8210 = vadd.f32 %v7967, %v8209
      %v8211 = vpop.f32.mrb[0].mxu0
      %v8212 = vadd.f32 %v7969, %v8211
      %v8213 = vpop.f32.mrb[0].mxu0
      %v8214 = vpop.f32.mrb[0].mxu0
      %8215 = vdwg.mxu0
      %8216 = vmatprep.subr.bf16.mxu0 %v8126
      %8217 = vmatpush1.bf16.msra.mxu0 %v8125
      %8218 = vmatprep.subr.bf16.mxu0 %v8128
      %8219 = vmatpush1.bf16.msra.mxu0 %v8127
      %8220 = vmatprep.subr.bf16.mxu0 %v8130
      %8221 = vmatpush1.bf16.msra.mxu0 %v8129
      %8222 = vmatprep.subr.bf16.mxu0 %v8132
      %8223 = vmatpush1.bf16.msra.mxu0 %v8131
      %8224 = vmatprep.subr.bf16.mxu0 0
      %8225 = vmatpush1.bf16.msra.mxu0 0
      %8226 = vmatprep.subr.bf16.mxu0 0
      %8227 = vmatpush1.bf16.msra.mxu0 0
      %8228 = vmatprep.subr.bf16.mxu0 0
      %8229 = vmatpush1.bf16.msra.mxu0 0
      %8230 = vmatprep.subr.bf16.mxu0 0
      %8231 = vmatpush1.bf16.msra.mxu0 0
      %8232 = vmatprep.subr.bf16.mxu0 0
      %8233 = vmatpush1.bf16.msra.mxu0 0
      %8234 = vmatprep.subr.bf16.mxu0 0
      %8235 = vmatpush1.bf16.msra.mxu0 0
      %8236 = vmatprep.subr.bf16.mxu0 0
      %8237 = vmatpush1.bf16.msra.mxu0 0
      %8238 = vmatprep.subr.bf16.mxu0 0
      %8239 = vmatpush1.bf16.msra.mxu0 0
      %8240 = vmatprep.subr.bf16.mxu0 0
      %8241 = vmatpush1.bf16.msra.mxu0 0
      %8242 = vmatprep.subr.bf16.mxu0 0
      %8243 = vmatpush1.bf16.msra.mxu0 0
      %8244 = vmatprep.subr.bf16.mxu0 0
      %8245 = vmatpush1.bf16.msra.mxu0 0
      %8246 = vmatprep.subr.bf16.mxu0 0
      %8247 = vmatpush1.bf16.msra.mxu0 0
      %8248 = vmatprep.mubr.bf16.mxu0 0
      %8249 = vmatmul.mubr.bf16.gmra.mrb[0].mxu0 %v8173
      %v8250 = vpop.f32.mrb[0].mxu0
      %v8251 = vadd.f32 %v8210, %v8250
      %v8252 = vpop.f32.mrb[0].mxu0
      %v8253 = vadd.f32 %v8212, %v8252
      %v8254 = vpop.f32.mrb[0].mxu0
      %v8255 = vpop.f32.mrb[0].mxu0
      %8256 = vdwg.mxu0
      %s8257 = scalar_lea.vmem %s7, 640
      %v8258 = vld [vmem:[%s8257] sm:$0xff]
      %v8259 = vld [vmem:[%s8257 + $0x8] sm:$0xff]
      %v8260 = vld [vmem:[%s8257 + $0x10] sm:$0xff]
      %v8261 = vld [vmem:[%s8257 + $0x18] sm:$0xff]
      %v8262 = vld [vmem:[%s8257 + $0x20] sm:$0xff]
      %v8263 = vld [vmem:[%s8257 + $0x28] sm:$0xff]
      %v8264 = vld [vmem:[%s8257 + $0x30] sm:$0xff]
      %v8265 = vld [vmem:[%s8257 + $0x38] sm:$0xff]
      %v8266 = vld [vmem:[%s8257 + $0x40] sm:$0xff]
      %v8267 = vld [vmem:[%s8257 + $0x48] sm:$0xff]
      %v8268 = vld [vmem:[%s8257 + $0x50] sm:$0xff]
      %v8269 = vld [vmem:[%s8257 + $0x58] sm:$0xff]
      %v8270 = vld [vmem:[%s8257 + $0x60] sm:$0xff]
      %v8271 = vld [vmem:[%s8257 + $0x68] sm:$0xff]
      %v8272 = vld [vmem:[%s8257 + $0x70] sm:$0xff]
      %v8273 = vld [vmem:[%s8257 + $0x78] sm:$0xff]
      %v8274 = vld [vmem:[%s8257 + $0x80] sm:$0xff]
      %v8275 = vld [vmem:[%s8257 + $0x88] sm:$0xff]
      %v8276 = vld [vmem:[%s8257 + $0x90] sm:$0xff]
      %v8277 = vld [vmem:[%s8257 + $0x98] sm:$0xff]
      %v8278 = vld [vmem:[%s8257 + $0xa0] sm:$0xff]
      %v8279 = vld [vmem:[%s8257 + $0xa8] sm:$0xff]
      %v8280 = vld [vmem:[%s8257 + $0xb0] sm:$0xff]
      %v8281 = vld [vmem:[%s8257 + $0xb8] sm:$0xff]
      %v8282 = vld [vmem:[%s8257 + $0xc0] sm:$0xff]
      %v8283 = vld [vmem:[%s8257 + $0xc8] sm:$0xff]
      %v8284 = vld [vmem:[%s8257 + $0xd0] sm:$0xff]
      %v8285 = vld [vmem:[%s8257 + $0xd8] sm:$0xff]
      %v8286 = vld [vmem:[%s8257 + $0xe0] sm:$0xff]
      %v8287 = vld [vmem:[%s8257 + $0xe8] sm:$0xff]
      %v8288 = vld [vmem:[%s8257 + $0xf0] sm:$0xff]
      %v8289 = vld [vmem:[%s8257 + $0xf8] sm:$0xff]
      %v8290 = vld [vmem:[%s8257 + $0x100] sm:$0xff]
      %v8291 = vld [vmem:[%s8257 + $0x108] sm:$0xff]
      %v8292 = vld [vmem:[%s8257 + $0x110] sm:$0xff]
      %v8293 = vld [vmem:[%s8257 + $0x118] sm:$0xff]
      %v8294 = vld [vmem:[%s8257 + $0x120] sm:$0xff]
      %v8295 = vld [vmem:[%s8257 + $0x128] sm:$0xff]
      %v8296 = vld [vmem:[%s8257 + $0x130] sm:$0xff]
      %v8297 = vld [vmem:[%s8257 + $0x138] sm:$0xff]
      %v8301 = vrot.slane %v7580, 1
      %v8302 = vrot.slane %v7581, 1
      %v8303 = vrot.slane %v7582, 1
      %v8346 = vunpack.c.l.b16 %v8258
      %v8347 = vunpack.c.h.b16 %v8258
      %v8348 = vunpack.c.l.b16 %v8259
      %v8349 = vunpack.c.h.b16 %v8259
      %v8350 = vunpack.c.l.b16 %v8260
      %v8351 = vunpack.c.h.b16 %v8260
      %v8352 = vunpack.c.l.b16 %v8261
      %v8353 = vunpack.c.h.b16 %v8261
      %v8354 = vunpack.c.l.b16 %v8262
      %v8355 = vunpack.c.h.b16 %v8262
      %v8356 = vunpack.c.l.b16 %v8263
      %v8357 = vunpack.c.h.b16 %v8263
      %v8358 = vunpack.c.l.b16 %v8264
      %v8359 = vunpack.c.h.b16 %v8264
      %v8360 = vunpack.c.l.b16 %v8265
      %v8361 = vunpack.c.h.b16 %v8265
      %v8362 = vunpack.c.l.b16 %v8266
      %v8363 = vunpack.c.h.b16 %v8266
      %v8364 = vunpack.c.l.b16 %v8267
      %v8365 = vunpack.c.h.b16 %v8267
      %v8366 = vunpack.c.l.b16 %v8268
      %v8367 = vunpack.c.h.b16 %v8268
      %v8368 = vunpack.c.l.b16 %v8269
      %v8369 = vunpack.c.h.b16 %v8269
      %v8370 = vunpack.c.l.b16 %v8270
      %v8371 = vunpack.c.h.b16 %v8270
      %v8372 = vunpack.c.l.b16 %v8271
      %v8373 = vunpack.c.h.b16 %v8271
      %v8374 = vunpack.c.l.b16 %v8272
      %v8375 = vunpack.c.h.b16 %v8272
      %v8376 = vunpack.c.l.b16 %v8273
      %v8377 = vunpack.c.h.b16 %v8273
      %v8378 = vunpack.c.l.b16 %v8274
      %v8379 = vunpack.c.h.b16 %v8274
      %v8380 = vunpack.c.l.b16 %v8275
      %v8381 = vunpack.c.h.b16 %v8275
      %v8382 = vunpack.c.l.b16 %v8276
      %v8383 = vunpack.c.h.b16 %v8276
      %v8384 = vunpack.c.l.b16 %v8277
      %v8385 = vunpack.c.h.b16 %v8277
      %v8386 = vunpack.c.l.b16 %v8278
      %v8387 = vunpack.c.h.b16 %v8278
      %v8388 = vunpack.c.l.b16 %v8279
      %v8389 = vunpack.c.h.b16 %v8279
      %v8390 = vunpack.c.l.b16 %v8280
      %v8391 = vunpack.c.h.b16 %v8280
      %v8392 = vunpack.c.l.b16 %v8281
      %v8393 = vunpack.c.h.b16 %v8281
      %v8394 = vunpack.c.l.b16 %v8282
      %v8395 = vunpack.c.h.b16 %v8282
      %v8396 = vunpack.c.l.b16 %v8283
      %v8397 = vunpack.c.h.b16 %v8283
      %v8398 = vunpack.c.l.b16 %v8284
      %v8399 = vunpack.c.h.b16 %v8284
      %v8400 = vunpack.c.l.b16 %v8285
      %v8401 = vunpack.c.h.b16 %v8285
      %v8402 = vunpack.c.l.b16 %v8286
      %v8403 = vunpack.c.h.b16 %v8286
      %v8404 = vunpack.c.l.b16 %v8287
      %v8405 = vunpack.c.h.b16 %v8287
      %v8406 = vunpack.c.l.b16 %v8288
      %v8407 = vunpack.c.h.b16 %v8288
      %v8408 = vunpack.c.l.b16 %v8289
      %v8409 = vunpack.c.h.b16 %v8289
      %v8410 = vunpack.c.l.b16 %v8290
      %v8411 = vunpack.c.h.b16 %v8290
      %v8412 = vunpack.c.l.b16 %v8291
      %v8413 = vunpack.c.h.b16 %v8291
      %v8414 = vunpack.c.l.b16 %v8292
      %v8415 = vunpack.c.h.b16 %v8292
      %v8416 = vunpack.c.l.b16 %v8293
      %v8417 = vunpack.c.h.b16 %v8293
      %v8418 = vunpack.c.l.b16 %v8294
      %v8419 = vunpack.c.h.b16 %v8294
      %v8420 = vunpack.c.l.b16 %v8295
      %v8421 = vunpack.c.h.b16 %v8295
      %v8422 = vunpack.c.l.b16 %v8296
      %v8423 = vunpack.c.h.b16 %v8296
      %v8424 = vunpack.c.l.b16 %v8297
      %v8425 = vunpack.c.h.b16 %v8297
      %v8426 = vpack.c.b16 %v8348, %v8346
      %v8427 = vpack.c.b16 %v8349, %v8347
      %v8428 = vpack.c.b16 %v8352, %v8350
      %v8429 = vpack.c.b16 %v8353, %v8351
      %v8430 = vpack.c.b16 %v8356, %v8354
      %v8431 = vpack.c.b16 %v8357, %v8355
      %v8432 = vpack.c.b16 %v8360, %v8358
      %v8433 = vpack.c.b16 %v8361, %v8359
      %v8434 = vpack.c.b16 %v8364, %v8362
      %v8435 = vpack.c.b16 %v8365, %v8363
      %v8436 = vpack.c.b16 %v8368, %v8366
      %v8437 = vpack.c.b16 %v8369, %v8367
      %v8438 = vpack.c.b16 %v8372, %v8370
      %v8439 = vpack.c.b16 %v8373, %v8371
      %v8440 = vpack.c.b16 %v8376, %v8374
      %v8441 = vpack.c.b16 %v8377, %v8375
      %v8442 = vpack.c.b16 %v8380, %v8378
      %v8443 = vpack.c.b16 %v8381, %v8379
      %v8444 = vpack.c.b16 %v8384, %v8382
      %v8445 = vpack.c.b16 %v8385, %v8383
      %v8446 = vpack.c.b16 %v8388, %v8386
      %v8447 = vpack.c.b16 %v8389, %v8387
      %v8448 = vpack.c.b16 %v8392, %v8390
      %v8449 = vpack.c.b16 %v8393, %v8391
      %v8450 = vpack.c.b16 %v8396, %v8394
      %v8451 = vpack.c.b16 %v8397, %v8395
      %v8452 = vpack.c.b16 %v8400, %v8398
      %v8453 = vpack.c.b16 %v8401, %v8399
      %v8454 = vpack.c.b16 %v8404, %v8402
      %v8455 = vpack.c.b16 %v8405, %v8403
      %v8456 = vpack.c.b16 %v8408, %v8406
      %v8457 = vpack.c.b16 %v8409, %v8407
      %v8458 = vpack.c.b16 %v8412, %v8410
      %v8459 = vpack.c.b16 %v8413, %v8411
      %v8460 = vpack.c.b16 %v8416, %v8414
      %v8461 = vpack.c.b16 %v8417, %v8415
      %v8462 = vpack.c.b16 %v8420, %v8418
      %v8463 = vpack.c.b16 %v8421, %v8419
      %v8464 = vpack.c.b16 %v8424, %v8422
      %v8465 = vpack.c.b16 %v8425, %v8423
      %v8507 = vsel %vm7887, %v8303, 0
      %8509 = vmatprep.subr.bf16.mxu0 %v8427
      %8510 = vmatpush1.bf16.msra.mxu0 %v8426
      %8511 = vmatprep.subr.bf16.mxu0 %v8429
      %8512 = vmatpush1.bf16.msra.mxu0 %v8428
      %8513 = vmatprep.subr.bf16.mxu0 %v8431
      %8514 = vmatpush1.bf16.msra.mxu0 %v8430
      %8515 = vmatprep.subr.bf16.mxu0 %v8433
      %8516 = vmatpush1.bf16.msra.mxu0 %v8432
      %8517 = vmatprep.subr.bf16.mxu0 %v8435
      %8518 = vmatpush1.bf16.msra.mxu0 %v8434
      %8519 = vmatprep.subr.bf16.mxu0 %v8437
      %8520 = vmatpush1.bf16.msra.mxu0 %v8436
      %8521 = vmatprep.subr.bf16.mxu0 %v8439
      %8522 = vmatpush1.bf16.msra.mxu0 %v8438
      %8523 = vmatprep.subr.bf16.mxu0 %v8441
      %8524 = vmatpush1.bf16.msra.mxu0 %v8440
      %8525 = vmatprep.subr.bf16.mxu0 %v8443
      %8526 = vmatpush1.bf16.msra.mxu0 %v8442
      %8527 = vmatprep.subr.bf16.mxu0 %v8445
      %8528 = vmatpush1.bf16.msra.mxu0 %v8444
      %8529 = vmatprep.subr.bf16.mxu0 %v8447
      %8530 = vmatpush1.bf16.msra.mxu0 %v8446
      %8531 = vmatprep.subr.bf16.mxu0 %v8449
      %8532 = vmatpush1.bf16.msra.mxu0 %v8448
      %8533 = vmatprep.subr.bf16.mxu0 %v8451
      %8534 = vmatpush1.bf16.msra.mxu0 %v8450
      %8535 = vmatprep.subr.bf16.mxu0 %v8453
      %8536 = vmatpush1.bf16.msra.mxu0 %v8452
      %8537 = vmatprep.subr.bf16.mxu0 %v8455
      %8538 = vmatpush1.bf16.msra.mxu0 %v8454
      %8539 = vmatprep.subr.bf16.mxu0 %v8457
      %8540 = vmatpush1.bf16.msra.mxu0 %v8456
      %8541 = vmatprep.mubr.bf16.mxu0 %v8302
      %8542 = vmatmul.mubr.bf16.gmra.mrb[0].mxu0 %v8301
      %v8543 = vpop.f32.mrb[0].mxu0
      %v8544 = vadd.f32 0.0, %v8543
      %v8545 = vpop.f32.mrb[0].mxu0
      %v8546 = vadd.f32 0.0, %v8545
      %v8547 = vpop.f32.mrb[0].mxu0
      %v8548 = vpop.f32.mrb[0].mxu0
      %8549 = vdwg.mxu0
      %8550 = vmatprep.subr.bf16.mxu0 %v8459
      %8551 = vmatpush1.bf16.msra.mxu0 %v8458
      %8552 = vmatprep.subr.bf16.mxu0 %v8461
      %8553 = vmatpush1.bf16.msra.mxu0 %v8460
      %8554 = vmatprep.subr.bf16.mxu0 %v8463
      %8555 = vmatpush1.bf16.msra.mxu0 %v8462
      %8556 = vmatprep.subr.bf16.mxu0 %v8465
      %8557 = vmatpush1.bf16.msra.mxu0 %v8464
      %8558 = vmatprep.subr.bf16.mxu0 0
      %8559 = vmatpush1.bf16.msra.mxu0 0
      %8560 = vmatprep.subr.bf16.mxu0 0
      %8561 = vmatpush1.bf16.msra.mxu0 0
      %8562 = vmatprep.subr.bf16.mxu0 0
      %8563 = vmatpush1.bf16.msra.mxu0 0
      %8564 = vmatprep.subr.bf16.mxu0 0
      %8565 = vmatpush1.bf16.msra.mxu0 0
      %8566 = vmatprep.subr.bf16.mxu0 0
      %8567 = vmatpush1.bf16.msra.mxu0 0
      %8568 = vmatprep.subr.bf16.mxu0 0
      %8569 = vmatpush1.bf16.msra.mxu0 0
      %8570 = vmatprep.subr.bf16.mxu0 0
      %8571 = vmatpush1.bf16.msra.mxu0 0
      %8572 = vmatprep.subr.bf16.mxu0 0
      %8573 = vmatpush1.bf16.msra.mxu0 0
      %8574 = vmatprep.subr.bf16.mxu0 0
      %8575 = vmatpush1.bf16.msra.mxu0 0
      %8576 = vmatprep.subr.bf16.mxu0 0
      %8577 = vmatpush1.bf16.msra.mxu0 0
      %8578 = vmatprep.subr.bf16.mxu0 0
      %8579 = vmatpush1.bf16.msra.mxu0 0
      %8580 = vmatprep.subr.bf16.mxu0 0
      %8581 = vmatpush1.bf16.msra.mxu0 0
      %8582 = vmatprep.mubr.bf16.mxu0 0
      %8583 = vmatmul.mubr.bf16.gmra.mrb[0].mxu0 %v8507
      %v8584 = vpop.f32.mrb[0].mxu0
      %v8585 = vadd.f32 %v8544, %v8584
      %v8586 = vpop.f32.mrb[0].mxu0
      %v8587 = vadd.f32 %v8546, %v8586
      %v8588 = vpop.f32.mrb[0].mxu0
      %v8589 = vpop.f32.mrb[0].mxu0
      %8590 = vdwg.mxu0
      %v8591 = vadd.f32 %v8251, %v8585
      %v8592 = vadd.f32 %v8253, %v8587
      %v8593 = vld [vmem:[%s8] sm:$0x3]
      %v8595 = vlaneseq
      %v8596 = vshrl.u32 %v8595, 7
      %v8597 = vsub.s32 0, %v8596
      %v8598 = vrot.slane %v8593, %v8597
      %v8599 = vlaneseq
      %v8600 = vshrl.u32 %v8599, 7
      %v8601 = vsub.s32 1, %v8600
      %v8602 = vrot.slane %v8593, %v8601
      %v8605 = vadd.f32 %v8591, %v8598
      %v8606 = vadd.f32 %v8592, %v8602
      %v8607 = vmax.f32 %v8605, 0.0
      %v8608 = vmax.f32 %v8606, 0.0
      %v8609 = vpack.c.bf16 %v8607, %v8607
      %v8610 = vpack.c.bf16 %v8608, %v8608
      %v8611 = vld [vmem:[%s9] sm:$0xff]
      %v8612 = vld [vmem:[%s9 + $0x8] sm:$0xff]
      %v8613 = vld [vmem:[%s9 + $0x10] sm:$0xff]
      %v8614 = vld [vmem:[%s9 + $0x18] sm:$0xff]
      %v8615 = vld [vmem:[%s9 + $0x20] sm:$0xff]
      %v8616 = vld [vmem:[%s9 + $0x28] sm:$0xff]
      %v8617 = vld [vmem:[%s9 + $0x30] sm:$0xff]
      %v8618 = vld [vmem:[%s9 + $0x38] sm:$0xff]
      %v8619 = vld [vmem:[%s9 + $0x40] sm:$0xff]
      %v8620 = vld [vmem:[%s9 + $0x48] sm:$0xff]
      %v8621 = vld [vmem:[%s9 + $0x50] sm:$0xff]
      %v8622 = vld [vmem:[%s9 + $0x58] sm:$0xff]
      %v8623 = vld [vmem:[%s9 + $0x60] sm:$0xff]
      %v8624 = vld [vmem:[%s9 + $0x68] sm:$0xff]
      %v8625 = vld [vmem:[%s9 + $0x70] sm:$0xff]
      %v8626 = vld [vmem:[%s9 + $0x78] sm:$0xff]
      %v8627 = vld [vmem:[%s9 + $0x80] sm:$0xff]
      %v8628 = vld [vmem:[%s9 + $0x88] sm:$0xff]
      %v8629 = vld [vmem:[%s9 + $0x90] sm:$0xff]
      %v8630 = vld [vmem:[%s9 + $0x98] sm:$0xff]
      %v8631 = vld [vmem:[%s9 + $0xa0] sm:$0xff]
      %v8632 = vld [vmem:[%s9 + $0xa8] sm:$0xff]
      %v8633 = vld [vmem:[%s9 + $0xb0] sm:$0xff]
      %v8634 = vld [vmem:[%s9 + $0xb8] sm:$0xff]
      %v8635 = vld [vmem:[%s9 + $0xc0] sm:$0xff]
      %v8636 = vld [vmem:[%s9 + $0xc8] sm:$0xff]
      %v8637 = vld [vmem:[%s9 + $0xd0] sm:$0xff]
      %v8638 = vld [vmem:[%s9 + $0xd8] sm:$0xff]
      %v8639 = vld [vmem:[%s9 + $0xe0] sm:$0xff]
      %v8640 = vld [vmem:[%s9 + $0xe8] sm:$0xff]
      %v8641 = vld [vmem:[%s9 + $0xf0] sm:$0xff]
      %v8642 = vld [vmem:[%s9 + $0xf8] sm:$0xff]
      %v8643 = vld [vmem:[%s9 + $0x100] sm:$0xff]
      %v8644 = vld [vmem:[%s9 + $0x108] sm:$0xff]
      %v8645 = vld [vmem:[%s9 + $0x110] sm:$0xff]
      %v8646 = vld [vmem:[%s9 + $0x118] sm:$0xff]
      %v8647 = vld [vmem:[%s9 + $0x120] sm:$0xff]
      %v8648 = vld [vmem:[%s9 + $0x128] sm:$0xff]
      %v8649 = vld [vmem:[%s9 + $0x130] sm:$0xff]
      %v8650 = vld [vmem:[%s9 + $0x138] sm:$0xff]
      %v8651 = vld [vmem:[%s9 + $0x140] sm:$0xff]
      %v8652 = vld [vmem:[%s9 + $0x148] sm:$0xff]
      %v8653 = vld [vmem:[%s9 + $0x150] sm:$0xff]
      %v8654 = vld [vmem:[%s9 + $0x158] sm:$0xff]
      %v8655 = vld [vmem:[%s9 + $0x160] sm:$0xff]
      %v8656 = vld [vmem:[%s9 + $0x168] sm:$0xff]
      %v8657 = vld [vmem:[%s9 + $0x170] sm:$0xff]
      %v8658 = vld [vmem:[%s9 + $0x178] sm:$0xff]
      %s8659 = scalar_lea.vmem %s9, 384
      %v8660 = vld [vmem:[%s8659] sm:$0xff]
      %v8661 = vld [vmem:[%s8659 + $0x8] sm:$0xff]
      %v8662 = vld [vmem:[%s8659 + $0x10] sm:$0xff]
      %v8663 = vld [vmem:[%s8659 + $0x18] sm:$0xff]
      %v8664 = vld [vmem:[%s8659 + $0x20] sm:$0xff]
      %v8665 = vld [vmem:[%s8659 + $0x28] sm:$0xff]
      %v8666 = vld [vmem:[%s8659 + $0x30] sm:$0xff]
      %v8667 = vld [vmem:[%s8659 + $0x38] sm:$0xff]
      %v8668 = vld [vmem:[%s8659 + $0x40] sm:$0xff]
      %v8669 = vld [vmem:[%s8659 + $0x48] sm:$0xff]
      %v8670 = vld [vmem:[%s8659 + $0x50] sm:$0xff]
      %v8671 = vld [vmem:[%s8659 + $0x58] sm:$0xff]
      %v8672 = vld [vmem:[%s8659 + $0x60] sm:$0xff]
      %v8673 = vld [vmem:[%s8659 + $0x68] sm:$0xff]
      %v8674 = vld [vmem:[%s8659 + $0x70] sm:$0xff]
      %v8675 = vld [vmem:[%s8659 + $0x78] sm:$0xff]
      %v8676 = vld [vmem:[%s8659 + $0x80] sm:$0xff]
      %v8677 = vld [vmem:[%s8659 + $0x88] sm:$0xff]
      %v8678 = vld [vmem:[%s8659 + $0x90] sm:$0xff]
      %v8679 = vld [vmem:[%s8659 + $0x98] sm:$0xff]
      %v8680 = vld [vmem:[%s8659 + $0xa0] sm:$0xff]
      %v8681 = vld [vmem:[%s8659 + $0xa8] sm:$0xff]
      %v8682 = vld [vmem:[%s8659 + $0xb0] sm:$0xff]
      %v8683 = vld [vmem:[%s8659 + $0xb8] sm:$0xff]
      %v8684 = vld [vmem:[%s8659 + $0xc0] sm:$0xff]
      %v8685 = vld [vmem:[%s8659 + $0xc8] sm:$0xff]
      %v8686 = vld [vmem:[%s8659 + $0xd0] sm:$0xff]
      %v8687 = vld [vmem:[%s8659 + $0xd8] sm:$0xff]
      %v8688 = vld [vmem:[%s8659 + $0xe0] sm:$0xff]
      %v8689 = vld [vmem:[%s8659 + $0xe8] sm:$0xff]
      %v8690 = vld [vmem:[%s8659 + $0xf0] sm:$0xff]
      %v8691 = vld [vmem:[%s8659 + $0xf8] sm:$0xff]
      %v8692 = vld [vmem:[%s8659 + $0x100] sm:$0xff]
      %v8693 = vld [vmem:[%s8659 + $0x108] sm:$0xff]
      %v8694 = vld [vmem:[%s8659 + $0x110] sm:$0xff]
      %v8695 = vld [vmem:[%s8659 + $0x118] sm:$0xff]
      %v8696 = vld [vmem:[%s8659 + $0x120] sm:$0xff]
      %v8697 = vld [vmem:[%s8659 + $0x128] sm:$0xff]
      %v8698 = vld [vmem:[%s8659 + $0x130] sm:$0xff]
      %v8699 = vld [vmem:[%s8659 + $0x138] sm:$0xff]
      %v8700 = vld [vmem:[%s8659 + $0x140] sm:$0xff]
      %v8701 = vld [vmem:[%s8659 + $0x148] sm:$0xff]
      %v8702 = vld [vmem:[%s8659 + $0x150] sm:$0xff]
      %v8703 = vld [vmem:[%s8659 + $0x158] sm:$0xff]
      %v8704 = vld [vmem:[%s8659 + $0x160] sm:$0xff]
      %v8705 = vld [vmem:[%s8659 + $0x168] sm:$0xff]
      %v8706 = vld [vmem:[%s8659 + $0x170] sm:$0xff]
      %v8707 = vld [vmem:[%s8659 + $0x178] sm:$0xff]
      %v8709 = vshrl.u32 %v8609, 16
      %v8712 = vshrl.u32 %v8610, 16
      %v8763 = vunpack.c.l.b16 %v8660
      %v8764 = vunpack.c.h.b16 %v8660
      %v8765 = vunpack.c.l.b16 %v8661
      %v8766 = vunpack.c.h.b16 %v8661
      %v8767 = vunpack.c.l.b16 %v8662
      %v8768 = vunpack.c.h.b16 %v8662
      %v8769 = vunpack.c.l.b16 %v8663
      %v8770 = vunpack.c.h.b16 %v8663
      %v8771 = vunpack.c.l.b16 %v8664
      %v8772 = vunpack.c.h.b16 %v8664
      %v8773 = vunpack.c.l.b16 %v8665
      %v8774 = vunpack.c.h.b16 %v8665
      %v8775 = vunpack.c.l.b16 %v8666
      %v8776 = vunpack.c.h.b16 %v8666
      %v8777 = vunpack.c.l.b16 %v8667
      %v8778 = vunpack.c.h.b16 %v8667
      %v8779 = vunpack.c.l.b16 %v8668
      %v8780 = vunpack.c.h.b16 %v8668
      %v8781 = vunpack.c.l.b16 %v8669
      %v8782 = vunpack.c.h.b16 %v8669
      %v8783 = vunpack.c.l.b16 %v8670
      %v8784 = vunpack.c.h.b16 %v8670
      %v8785 = vunpack.c.l.b16 %v8671
      %v8786 = vunpack.c.h.b16 %v8671
      %v8787 = vunpack.c.l.b16 %v8672
      %v8788 = vunpack.c.h.b16 %v8672
      %v8789 = vunpack.c.l.b16 %v8673
      %v8790 = vunpack.c.h.b16 %v8673
      %v8791 = vunpack.c.l.b16 %v8674
      %v8792 = vunpack.c.h.b16 %v8674
      %v8793 = vunpack.c.l.b16 %v8675
      %v8794 = vunpack.c.h.b16 %v8675
      %v8795 = vunpack.c.l.b16 %v8676
      %v8796 = vunpack.c.h.b16 %v8676
      %v8797 = vunpack.c.l.b16 %v8677
      %v8798 = vunpack.c.h.b16 %v8677
      %v8799 = vunpack.c.l.b16 %v8678
      %v8800 = vunpack.c.h.b16 %v8678
      %v8801 = vunpack.c.l.b16 %v8679
      %v8802 = vunpack.c.h.b16 %v8679
      %v8803 = vunpack.c.l.b16 %v8680
      %v8804 = vunpack.c.h.b16 %v8680
      %v8805 = vunpack.c.l.b16 %v8681
      %v8806 = vunpack.c.h.b16 %v8681
      %v8807 = vunpack.c.l.b16 %v8682
      %v8808 = vunpack.c.h.b16 %v8682
      %v8809 = vunpack.c.l.b16 %v8683
      %v8810 = vunpack.c.h.b16 %v8683
      %v8811 = vunpack.c.l.b16 %v8684
      %v8812 = vunpack.c.h.b16 %v8684
      %v8813 = vunpack.c.l.b16 %v8685
      %v8814 = vunpack.c.h.b16 %v8685
      %v8815 = vunpack.c.l.b16 %v8686
      %v8816 = vunpack.c.h.b16 %v8686
      %v8817 = vunpack.c.l.b16 %v8687
      %v8818 = vunpack.c.h.b16 %v8687
      %v8819 = vunpack.c.l.b16 %v8688
      %v8820 = vunpack.c.h.b16 %v8688
      %v8821 = vunpack.c.l.b16 %v8689
      %v8822 = vunpack.c.h.b16 %v8689
      %v8823 = vunpack.c.l.b16 %v8690
      %v8824 = vunpack.c.h.b16 %v8690
      %v8825 = vunpack.c.l.b16 %v8691
      %v8826 = vunpack.c.h.b16 %v8691
      %v8827 = vunpack.c.l.b16 %v8692
      %v8828 = vunpack.c.h.b16 %v8692
      %v8829 = vunpack.c.l.b16 %v8693
      %v8830 = vunpack.c.h.b16 %v8693
      %v8831 = vunpack.c.l.b16 %v8694
      %v8832 = vunpack.c.h.b16 %v8694
      %v8833 = vunpack.c.l.b16 %v8695
      %v8834 = vunpack.c.h.b16 %v8695
      %v8835 = vunpack.c.l.b16 %v8696
      %v8836 = vunpack.c.h.b16 %v8696
      %v8837 = vunpack.c.l.b16 %v8697
      %v8838 = vunpack.c.h.b16 %v8697
      %v8839 = vunpack.c.l.b16 %v8698
      %v8840 = vunpack.c.h.b16 %v8698
      %v8841 = vunpack.c.l.b16 %v8699
      %v8842 = vunpack.c.h.b16 %v8699
      %v8843 = vunpack.c.l.b16 %v8700
      %v8844 = vunpack.c.h.b16 %v8700
      %v8845 = vunpack.c.l.b16 %v8701
      %v8846 = vunpack.c.h.b16 %v8701
      %v8847 = vunpack.c.l.b16 %v8702
      %v8848 = vunpack.c.h.b16 %v8702
      %v8849 = vunpack.c.l.b16 %v8703
      %v8850 = vunpack.c.h.b16 %v8703
      %v8851 = vunpack.c.l.b16 %v8704
      %v8852 = vunpack.c.h.b16 %v8704
      %v8853 = vunpack.c.l.b16 %v8705
      %v8854 = vunpack.c.h.b16 %v8705
      %v8855 = vunpack.c.l.b16 %v8706
      %v8856 = vunpack.c.h.b16 %v8706
      %v8857 = vunpack.c.l.b16 %v8707
      %v8858 = vunpack.c.h.b16 %v8707
      %v8859 = vpack.c.b16 %v8767, %v8763
      %v8860 = vpack.c.b16 %v8768, %v8764
      %v8861 = vpack.c.b16 %v8769, %v8765
      %v8862 = vpack.c.b16 %v8770, %v8766
      %v8863 = vpack.c.b16 %v8775, %v8771
      %v8864 = vpack.c.b16 %v8776, %v8772
      %v8865 = vpack.c.b16 %v8777, %v8773
      %v8866 = vpack.c.b16 %v8778, %v8774
      %v8867 = vpack.c.b16 %v8783, %v8779
      %v8868 = vpack.c.b16 %v8784, %v8780
      %v8869 = vpack.c.b16 %v8785, %v8781
      %v8870 = vpack.c.b16 %v8786, %v8782
      %v8871 = vpack.c.b16 %v8791, %v8787
      %v8872 = vpack.c.b16 %v8792, %v8788
      %v8873 = vpack.c.b16 %v8793, %v8789
      %v8874 = vpack.c.b16 %v8794, %v8790
      %v8875 = vpack.c.b16 %v8799, %v8795
      %v8876 = vpack.c.b16 %v8800, %v8796
      %v8877 = vpack.c.b16 %v8801, %v8797
      %v8878 = vpack.c.b16 %v8802, %v8798
      %v8879 = vpack.c.b16 %v8807, %v8803
      %v8880 = vpack.c.b16 %v8808, %v8804
      %v8881 = vpack.c.b16 %v8809, %v8805
      %v8882 = vpack.c.b16 %v8810, %v8806
      %v8883 = vpack.c.b16 %v8815, %v8811
      %v8884 = vpack.c.b16 %v8816, %v8812
      %v8885 = vpack.c.b16 %v8817, %v8813
      %v8886 = vpack.c.b16 %v8818, %v8814
      %v8887 = vpack.c.b16 %v8823, %v8819
      %v8888 = vpack.c.b16 %v8824, %v8820
      %v8889 = vpack.c.b16 %v8825, %v8821
      %v8890 = vpack.c.b16 %v8826, %v8822
      %v8891 = vpack.c.b16 %v8831, %v8827
      %v8892 = vpack.c.b16 %v8832, %v8828
      %v8893 = vpack.c.b16 %v8833, %v8829
      %v8894 = vpack.c.b16 %v8834, %v8830
      %v8895 = vpack.c.b16 %v8839, %v8835
      %v8896 = vpack.c.b16 %v8840, %v8836
      %v8897 = vpack.c.b16 %v8841, %v8837
      %v8898 = vpack.c.b16 %v8842, %v8838
      %v8899 = vpack.c.b16 %v8847, %v8843
      %v8900 = vpack.c.b16 %v8848, %v8844
      %v8901 = vpack.c.b16 %v8849, %v8845
      %v8902 = vpack.c.b16 %v8850, %v8846
      %v8903 = vpack.c.b16 %v8855, %v8851
      %v8904 = vpack.c.b16 %v8856, %v8852
      %v8905 = vpack.c.b16 %v8857, %v8853
      %v8906 = vpack.c.b16 %v8858, %v8854
      %v8956 = vsel %vm7887, %v8712, 0
      %8958 = vmatprep.subr.bf16.mxu0 %v8860
      %8959 = vmatpush1.bf16.msra.mxu0 %v8859
      %8960 = vmatprep.subr.bf16.mxu0 %v8864
      %8961 = vmatpush1.bf16.msra.mxu0 %v8863
      %8962 = vmatprep.subr.bf16.mxu0 %v8868
      %8963 = vmatpush1.bf16.msra.mxu0 %v8867
      %8964 = vmatprep.subr.bf16.mxu0 %v8872
      %8965 = vmatpush1.bf16.msra.mxu0 %v8871
      %8966 = vmatprep.subr.bf16.mxu0 %v8876
      %8967 = vmatpush1.bf16.msra.mxu0 %v8875
      %8968 = vmatprep.subr.bf16.mxu0 %v8880
      %8969 = vmatpush1.bf16.msra.mxu0 %v8879
      %8970 = vmatprep.subr.bf16.mxu0 %v8884
      %8971 = vmatpush1.bf16.msra.mxu0 %v8883
      %8972 = vmatprep.subr.bf16.mxu0 %v8888
      %8973 = vmatpush1.bf16.msra.mxu0 %v8887
      %8974 = vmatprep.subr.bf16.mxu0 %v8892
      %8975 = vmatpush1.bf16.msra.mxu0 %v8891
      %8976 = vmatprep.subr.bf16.mxu0 %v8896
      %8977 = vmatpush1.bf16.msra.mxu0 %v8895
      %8978 = vmatprep.subr.bf16.mxu0 %v8900
      %8979 = vmatpush1.bf16.msra.mxu0 %v8899
      %8980 = vmatprep.subr.bf16.mxu0 %v8904
      %8981 = vmatpush1.bf16.msra.mxu0 %v8903
      %8982 = vmatprep.subr.bf16.mxu0 0
      %8983 = vmatpush1.bf16.msra.mxu0 0
      %8984 = vmatprep.subr.bf16.mxu0 0
      %8985 = vmatpush1.bf16.msra.mxu0 0
      %8986 = vmatprep.subr.bf16.mxu0 0
      %8987 = vmatpush1.bf16.msra.mxu0 0
      %8988 = vmatprep.subr.bf16.mxu0 0
      %8989 = vmatpush1.bf16.msra.mxu0 0
      %8990 = vmatprep.mubr.bf16.mxu0 %v8956
      %8991 = vmatmul.mubr.bf16.gmra.mrb[0].mxu0 %v8709
      %v8992 = vpop.f32.mrb[0].mxu0
      %v8993 = vadd.f32 0.0, %v8992
      %v8994 = vpop.f32.mrb[0].mxu0
      %v8995 = vadd.f32 0.0, %v8994
      %v8996 = vpop.f32.mrb[0].mxu0
      %v8997 = vpop.f32.mrb[0].mxu0
      %8998 = vdwg.mxu0
      %8999 = vmatprep.subr.bf16.mxu0 %v8862
      %9000 = vmatpush1.bf16.msra.mxu0 %v8861
      %9001 = vmatprep.subr.bf16.mxu0 %v8866
      %9002 = vmatpush1.bf16.msra.mxu0 %v8865
      %9003 = vmatprep.subr.bf16.mxu0 %v8870
      %9004 = vmatpush1.bf16.msra.mxu0 %v8869
      %9005 = vmatprep.subr.bf16.mxu0 %v8874
      %9006 = vmatpush1.bf16.msra.mxu0 %v8873
      %9007 = vmatprep.subr.bf16.mxu0 %v8878
      %9008 = vmatpush1.bf16.msra.mxu0 %v8877
      %9009 = vmatprep.subr.bf16.mxu0 %v8882
      %9010 = vmatpush1.bf16.msra.mxu0 %v8881
      %9011 = vmatprep.subr.bf16.mxu0 %v8886
      %9012 = vmatpush1.bf16.msra.mxu0 %v8885
      %9013 = vmatprep.subr.bf16.mxu0 %v8890
      %9014 = vmatpush1.bf16.msra.mxu0 %v8889
      %9015 = vmatprep.subr.bf16.mxu0 %v8894
      %9016 = vmatpush1.bf16.msra.mxu0 %v8893
      %9017 = vmatprep.subr.bf16.mxu0 %v8898
      %9018 = vmatpush1.bf16.msra.mxu0 %v8897
      %9019 = vmatprep.subr.bf16.mxu0 %v8902
      %9020 = vmatpush1.bf16.msra.mxu0 %v8901
      %9021 = vmatprep.subr.bf16.mxu0 %v8906
      %9022 = vmatpush1.bf16.msra.mxu0 %v8905
      %9023 = vmatprep.subr.bf16.mxu0 0
      %9024 = vmatpush1.bf16.msra.mxu0 0
      %9025 = vmatprep.subr.bf16.mxu0 0
      %9026 = vmatpush1.bf16.msra.mxu0 0
      %9027 = vmatprep.subr.bf16.mxu0 0
      %9028 = vmatpush1.bf16.msra.mxu0 0
      %9029 = vmatprep.subr.bf16.mxu0 0
      %9030 = vmatpush1.bf16.msra.mxu0 0
      %9031 = vmatprep.mubr.bf16.mxu0 %v8956
      %9032 = vmatmul.mubr.bf16.gmra.mrb[0].mxu0 %v8709
      %v9033 = vpop.f32.mrb[0].mxu0
      %v9034 = vadd.f32 0.0, %v9033
      %v9035 = vpop.f32.mrb[0].mxu0
      %v9036 = vadd.f32 0.0, %v9035
      %v9037 = vpop.f32.mrb[0].mxu0
      %v9038 = vpop.f32.mrb[0].mxu0
      %9039 = vdwg.mxu0
      %v9088 = vunpack.c.l.b16 %v8611
      %v9089 = vunpack.c.h.b16 %v8611
      %v9090 = vunpack.c.l.b16 %v8612
      %v9091 = vunpack.c.h.b16 %v8612
      %v9092 = vunpack.c.l.b16 %v8613
      %v9093 = vunpack.c.h.b16 %v8613
      %v9094 = vunpack.c.l.b16 %v8614
      %v9095 = vunpack.c.h.b16 %v8614
      %v9096 = vunpack.c.l.b16 %v8615
      %v9097 = vunpack.c.h.b16 %v8615
      %v9098 = vunpack.c.l.b16 %v8616
      %v9099 = vunpack.c.h.b16 %v8616
      %v9100 = vunpack.c.l.b16 %v8617
      %v9101 = vunpack.c.h.b16 %v8617
      %v9102 = vunpack.c.l.b16 %v8618
      %v9103 = vunpack.c.h.b16 %v8618
      %v9104 = vunpack.c.l.b16 %v8619
      %v9105 = vunpack.c.h.b16 %v8619
      %v9106 = vunpack.c.l.b16 %v8620
      %v9107 = vunpack.c.h.b16 %v8620
      %v9108 = vunpack.c.l.b16 %v8621
      %v9109 = vunpack.c.h.b16 %v8621
      %v9110 = vunpack.c.l.b16 %v8622
      %v9111 = vunpack.c.h.b16 %v8622
      %v9112 = vunpack.c.l.b16 %v8623
      %v9113 = vunpack.c.h.b16 %v8623
      %v9114 = vunpack.c.l.b16 %v8624
      %v9115 = vunpack.c.h.b16 %v8624
      %v9116 = vunpack.c.l.b16 %v8625
      %v9117 = vunpack.c.h.b16 %v8625
      %v9118 = vunpack.c.l.b16 %v8626
      %v9119 = vunpack.c.h.b16 %v8626
      %v9120 = vunpack.c.l.b16 %v8627
      %v9121 = vunpack.c.h.b16 %v8627
      %v9122 = vunpack.c.l.b16 %v8628
      %v9123 = vunpack.c.h.b16 %v8628
      %v9124 = vunpack.c.l.b16 %v8629
      %v9125 = vunpack.c.h.b16 %v8629
      %v9126 = vunpack.c.l.b16 %v8630
      %v9127 = vunpack.c.h.b16 %v8630
      %v9128 = vunpack.c.l.b16 %v8631
      %v9129 = vunpack.c.h.b16 %v8631
      %v9130 = vunpack.c.l.b16 %v8632
      %v9131 = vunpack.c.h.b16 %v8632
      %v9132 = vunpack.c.l.b16 %v8633
      %v9133 = vunpack.c.h.b16 %v8633
      %v9134 = vunpack.c.l.b16 %v8634
      %v9135 = vunpack.c.h.b16 %v8634
      %v9136 = vunpack.c.l.b16 %v8635
      %v9137 = vunpack.c.h.b16 %v8635
      %v9138 = vunpack.c.l.b16 %v8636
      %v9139 = vunpack.c.h.b16 %v8636
      %v9140 = vunpack.c.l.b16 %v8637
      %v9141 = vunpack.c.h.b16 %v8637
      %v9142 = vunpack.c.l.b16 %v8638
      %v9143 = vunpack.c.h.b16 %v8638
      %v9144 = vunpack.c.l.b16 %v8639
      %v9145 = vunpack.c.h.b16 %v8639
      %v9146 = vunpack.c.l.b16 %v8640
      %v9147 = vunpack.c.h.b16 %v8640
      %v9148 = vunpack.c.l.b16 %v8641
      %v9149 = vunpack.c.h.b16 %v8641
      %v9150 = vunpack.c.l.b16 %v8642
      %v9151 = vunpack.c.h.b16 %v8642
      %v9152 = vunpack.c.l.b16 %v8643
      %v9153 = vunpack.c.h.b16 %v8643
      %v9154 = vunpack.c.l.b16 %v8644
      %v9155 = vunpack.c.h.b16 %v8644
      %v9156 = vunpack.c.l.b16 %v8645
      %v9157 = vunpack.c.h.b16 %v8645
      %v9158 = vunpack.c.l.b16 %v8646
      %v9159 = vunpack.c.h.b16 %v8646
      %v9160 = vunpack.c.l.b16 %v8647
      %v9161 = vunpack.c.h.b16 %v8647
      %v9162 = vunpack.c.l.b16 %v8648
      %v9163 = vunpack.c.h.b16 %v8648
      %v9164 = vunpack.c.l.b16 %v8649
      %v9165 = vunpack.c.h.b16 %v8649
      %v9166 = vunpack.c.l.b16 %v8650
      %v9167 = vunpack.c.h.b16 %v8650
      %v9168 = vunpack.c.l.b16 %v8651
      %v9169 = vunpack.c.h.b16 %v8651
      %v9170 = vunpack.c.l.b16 %v8652
      %v9171 = vunpack.c.h.b16 %v8652
      %v9172 = vunpack.c.l.b16 %v8653
      %v9173 = vunpack.c.h.b16 %v8653
      %v9174 = vunpack.c.l.b16 %v8654
      %v9175 = vunpack.c.h.b16 %v8654
      %v9176 = vunpack.c.l.b16 %v8655
      %v9177 = vunpack.c.h.b16 %v8655
      %v9178 = vunpack.c.l.b16 %v8656
      %v9179 = vunpack.c.h.b16 %v8656
      %v9180 = vunpack.c.l.b16 %v8657
      %v9181 = vunpack.c.h.b16 %v8657
      %v9182 = vunpack.c.l.b16 %v8658
      %v9183 = vunpack.c.h.b16 %v8658
      %v9184 = vpack.c.b16 %v9092, %v9088
      %v9185 = vpack.c.b16 %v9093, %v9089
      %v9186 = vpack.c.b16 %v9094, %v9090
      %v9187 = vpack.c.b16 %v9095, %v9091
      %v9188 = vpack.c.b16 %v9100, %v9096
      %v9189 = vpack.c.b16 %v9101, %v9097
      %v9190 = vpack.c.b16 %v9102, %v9098
      %v9191 = vpack.c.b16 %v9103, %v9099
      %v9192 = vpack.c.b16 %v9108, %v9104
      %v9193 = vpack.c.b16 %v9109, %v9105
      %v9194 = vpack.c.b16 %v9110, %v9106
      %v9195 = vpack.c.b16 %v9111, %v9107
      %v9196 = vpack.c.b16 %v9116, %v9112
      %v9197 = vpack.c.b16 %v9117, %v9113
      %v9198 = vpack.c.b16 %v9118, %v9114
      %v9199 = vpack.c.b16 %v9119, %v9115
      %v9200 = vpack.c.b16 %v9124, %v9120
      %v9201 = vpack.c.b16 %v9125, %v9121
      %v9202 = vpack.c.b16 %v9126, %v9122
      %v9203 = vpack.c.b16 %v9127, %v9123
      %v9204 = vpack.c.b16 %v9132, %v9128
      %v9205 = vpack.c.b16 %v9133, %v9129
      %v9206 = vpack.c.b16 %v9134, %v9130
      %v9207 = vpack.c.b16 %v9135, %v9131
      %v9208 = vpack.c.b16 %v9140, %v9136
      %v9209 = vpack.c.b16 %v9141, %v9137
      %v9210 = vpack.c.b16 %v9142, %v9138
      %v9211 = vpack.c.b16 %v9143, %v9139
      %v9212 = vpack.c.b16 %v9148, %v9144
      %v9213 = vpack.c.b16 %v9149, %v9145
      %v9214 = vpack.c.b16 %v9150, %v9146
      %v9215 = vpack.c.b16 %v9151, %v9147
      %v9216 = vpack.c.b16 %v9156, %v9152
      %v9217 = vpack.c.b16 %v9157, %v9153
      %v9218 = vpack.c.b16 %v9158, %v9154
      %v9219 = vpack.c.b16 %v9159, %v9155
      %v9220 = vpack.c.b16 %v9164, %v9160
      %v9221 = vpack.c.b16 %v9165, %v9161
      %v9222 = vpack.c.b16 %v9166, %v9162
      %v9223 = vpack.c.b16 %v9167, %v9163
      %v9224 = vpack.c.b16 %v9172, %v9168
      %v9225 = vpack.c.b16 %v9173, %v9169
      %v9226 = vpack.c.b16 %v9174, %v9170
      %v9227 = vpack.c.b16 %v9175, %v9171
      %v9228 = vpack.c.b16 %v9180, %v9176
      %v9229 = vpack.c.b16 %v9181, %v9177
      %v9230 = vpack.c.b16 %v9182, %v9178
      %v9231 = vpack.c.b16 %v9183, %v9179
      %v9280 = vsel %vm7887, %v8610, 0
      %9282 = vmatprep.subr.bf16.mxu0 %v9185
      %9283 = vmatpush1.bf16.msra.mxu0 %v9184
      %9284 = vmatprep.subr.bf16.mxu0 %v9189
      %9285 = vmatpush1.bf16.msra.mxu0 %v9188
      %9286 = vmatprep.subr.bf16.mxu0 %v9193
      %9287 = vmatpush1.bf16.msra.mxu0 %v9192
      %9288 = vmatprep.subr.bf16.mxu0 %v9197
      %9289 = vmatpush1.bf16.msra.mxu0 %v9196
      %9290 = vmatprep.subr.bf16.mxu0 %v9201
      %9291 = vmatpush1.bf16.msra.mxu0 %v9200
      %9292 = vmatprep.subr.bf16.mxu0 %v9205
      %9293 = vmatpush1.bf16.msra.mxu0 %v9204
      %9294 = vmatprep.subr.bf16.mxu0 %v9209
      %9295 = vmatpush1.bf16.msra.mxu0 %v9208
      %9296 = vmatprep.subr.bf16.mxu0 %v9213
      %9297 = vmatpush1.bf16.msra.mxu0 %v9212
      %9298 = vmatprep.subr.bf16.mxu0 %v9217
      %9299 = vmatpush1.bf16.msra.mxu0 %v9216
      %9300 = vmatprep.subr.bf16.mxu0 %v9221
      %9301 = vmatpush1.bf16.msra.mxu0 %v9220
      %9302 = vmatprep.subr.bf16.mxu0 %v9225
      %9303 = vmatpush1.bf16.msra.mxu0 %v9224
      %9304 = vmatprep.subr.bf16.mxu0 %v9229
      %9305 = vmatpush1.bf16.msra.mxu0 %v9228
      %9306 = vmatprep.subr.bf16.mxu0 0
      %9307 = vmatpush1.bf16.msra.mxu0 0
      %9308 = vmatprep.subr.bf16.mxu0 0
      %9309 = vmatpush1.bf16.msra.mxu0 0
      %9310 = vmatprep.subr.bf16.mxu0 0
      %9311 = vmatpush1.bf16.msra.mxu0 0
      %9312 = vmatprep.subr.bf16.mxu0 0
      %9313 = vmatpush1.bf16.msra.mxu0 0
      %9314 = vmatprep.mubr.bf16.mxu0 %v9280
      %9315 = vmatmul.mubr.bf16.gmra.mrb[0].mxu0 %v8609
      %v9316 = vpop.f32.mrb[0].mxu0
      %v9317 = vadd.f32 %v8993, %v9316
      %v9318 = vpop.f32.mrb[0].mxu0
      %v9319 = vadd.f32 %v8995, %v9318
      %v9320 = vpop.f32.mrb[0].mxu0
      %v9321 = vpop.f32.mrb[0].mxu0
      %9322 = vdwg.mxu0
      %9323 = vmatprep.subr.bf16.mxu0 %v9187
      %9324 = vmatpush1.bf16.msra.mxu0 %v9186
      %9325 = vmatprep.subr.bf16.mxu0 %v9191
      %9326 = vmatpush1.bf16.msra.mxu0 %v9190
      %9327 = vmatprep.subr.bf16.mxu0 %v9195
      %9328 = vmatpush1.bf16.msra.mxu0 %v9194
      %9329 = vmatprep.subr.bf16.mxu0 %v9199
      %9330 = vmatpush1.bf16.msra.mxu0 %v9198
      %9331 = vmatprep.subr.bf16.mxu0 %v9203
      %9332 = vmatpush1.bf16.msra.mxu0 %v9202
      %9333 = vmatprep.subr.bf16.mxu0 %v9207
      %9334 = vmatpush1.bf16.msra.mxu0 %v9206
      %9335 = vmatprep.subr.bf16.mxu0 %v9211
      %9336 = vmatpush1.bf16.msra.mxu0 %v9210
      %9337 = vmatprep.subr.bf16.mxu0 %v9215
      %9338 = vmatpush1.bf16.msra.mxu0 %v9214
      %9339 = vmatprep.subr.bf16.mxu0 %v9219
      %9340 = vmatpush1.bf16.msra.mxu0 %v9218
      %9341 = vmatprep.subr.bf16.mxu0 %v9223
      %9342 = vmatpush1.bf16.msra.mxu0 %v9222
      %9343 = vmatprep.subr.bf16.mxu0 %v9227
      %9344 = vmatpush1.bf16.msra.mxu0 %v9226
      %9345 = vmatprep.subr.bf16.mxu0 %v9231
      %9346 = vmatpush1.bf16.msra.mxu0 %v9230
      %9347 = vmatprep.subr.bf16.mxu0 0
      %9348 = vmatpush1.bf16.msra.mxu0 0
      %9349 = vmatprep.subr.bf16.mxu0 0
      %9350 = vmatpush1.bf16.msra.mxu0 0
      %9351 = vmatprep.subr.bf16.mxu0 0
      %9352 = vmatpush1.bf16.msra.mxu0 0
      %9353 = vmatprep.subr.bf16.mxu0 0
      %9354 = vmatpush1.bf16.msra.mxu0 0
      %9355 = vmatprep.mubr.bf16.mxu0 %v9280
      %9356 = vmatmul.mubr.bf16.gmra.mrb[0].mxu0 %v8609
      %v9357 = vpop.f32.mrb[0].mxu0
      %v9358 = vadd.f32 %v9034, %v9357
      %v9359 = vpop.f32.mrb[0].mxu0
      %v9360 = vadd.f32 %v9036, %v9359
      %v9361 = vpop.f32.mrb[0].mxu0
      %v9362 = vpop.f32.mrb[0].mxu0
      %9363 = vdwg.mxu0
      %s9364 = scalar_lea.vmem %s9, 768
      %v9365 = vld [vmem:[%s9364] sm:$0xff]
      %v9366 = vld [vmem:[%s9364 + $0x8] sm:$0xff]
      %v9367 = vld [vmem:[%s9364 + $0x10] sm:$0xff]
      %v9368 = vld [vmem:[%s9364 + $0x18] sm:$0xff]
      %v9369 = vld [vmem:[%s9364 + $0x20] sm:$0xff]
      %v9370 = vld [vmem:[%s9364 + $0x28] sm:$0xff]
      %v9371 = vld [vmem:[%s9364 + $0x30] sm:$0xff]
      %v9372 = vld [vmem:[%s9364 + $0x38] sm:$0xff]
      %v9373 = vld [vmem:[%s9364 + $0x40] sm:$0xff]
      %v9374 = vld [vmem:[%s9364 + $0x48] sm:$0xff]
      %v9375 = vld [vmem:[%s9364 + $0x50] sm:$0xff]
      %v9376 = vld [vmem:[%s9364 + $0x58] sm:$0xff]
      %v9377 = vld [vmem:[%s9364 + $0x60] sm:$0xff]
      %v9378 = vld [vmem:[%s9364 + $0x68] sm:$0xff]
      %v9379 = vld [vmem:[%s9364 + $0x70] sm:$0xff]
      %v9380 = vld [vmem:[%s9364 + $0x78] sm:$0xff]
      %v9381 = vld [vmem:[%s9364 + $0x80] sm:$0xff]
      %v9382 = vld [vmem:[%s9364 + $0x88] sm:$0xff]
      %v9383 = vld [vmem:[%s9364 + $0x90] sm:$0xff]
      %v9384 = vld [vmem:[%s9364 + $0x98] sm:$0xff]
      %v9385 = vld [vmem:[%s9364 + $0xa0] sm:$0xff]
      %v9386 = vld [vmem:[%s9364 + $0xa8] sm:$0xff]
      %v9387 = vld [vmem:[%s9364 + $0xb0] sm:$0xff]
      %v9388 = vld [vmem:[%s9364 + $0xb8] sm:$0xff]
      %v9389 = vld [vmem:[%s9364 + $0xc0] sm:$0xff]
      %v9390 = vld [vmem:[%s9364 + $0xc8] sm:$0xff]
      %v9391 = vld [vmem:[%s9364 + $0xd0] sm:$0xff]
      %v9392 = vld [vmem:[%s9364 + $0xd8] sm:$0xff]
      %v9393 = vld [vmem:[%s9364 + $0xe0] sm:$0xff]
      %v9394 = vld [vmem:[%s9364 + $0xe8] sm:$0xff]
      %v9395 = vld [vmem:[%s9364 + $0xf0] sm:$0xff]
      %v9396 = vld [vmem:[%s9364 + $0xf8] sm:$0xff]
      %v9397 = vld [vmem:[%s9364 + $0x100] sm:$0xff]
      %v9398 = vld [vmem:[%s9364 + $0x108] sm:$0xff]
      %v9399 = vld [vmem:[%s9364 + $0x110] sm:$0xff]
      %v9400 = vld [vmem:[%s9364 + $0x118] sm:$0xff]
      %v9401 = vld [vmem:[%s9364 + $0x120] sm:$0xff]
      %v9402 = vld [vmem:[%s9364 + $0x128] sm:$0xff]
      %v9403 = vld [vmem:[%s9364 + $0x130] sm:$0xff]
      %v9404 = vld [vmem:[%s9364 + $0x138] sm:$0xff]
      %v9405 = vld [vmem:[%s9364 + $0x140] sm:$0xff]
      %v9406 = vld [vmem:[%s9364 + $0x148] sm:$0xff]
      %v9407 = vld [vmem:[%s9364 + $0x150] sm:$0xff]
      %v9408 = vld [vmem:[%s9364 + $0x158] sm:$0xff]
      %v9409 = vld [vmem:[%s9364 + $0x160] sm:$0xff]
      %v9410 = vld [vmem:[%s9364 + $0x168] sm:$0xff]
      %v9411 = vld [vmem:[%s9364 + $0x170] sm:$0xff]
      %v9412 = vld [vmem:[%s9364 + $0x178] sm:$0xff]
      %v9415 = vrot.slane %v8609, 1
      %v9416 = vrot.slane %v8610, 1
      %v9466 = vunpack.c.l.b16 %v9365
      %v9467 = vunpack.c.h.b16 %v9365
      %v9468 = vunpack.c.l.b16 %v9366
      %v9469 = vunpack.c.h.b16 %v9366
      %v9470 = vunpack.c.l.b16 %v9367
      %v9471 = vunpack.c.h.b16 %v9367
      %v9472 = vunpack.c.l.b16 %v9368
      %v9473 = vunpack.c.h.b16 %v9368
      %v9474 = vunpack.c.l.b16 %v9369
      %v9475 = vunpack.c.h.b16 %v9369
      %v9476 = vunpack.c.l.b16 %v9370
      %v9477 = vunpack.c.h.b16 %v9370
      %v9478 = vunpack.c.l.b16 %v9371
      %v9479 = vunpack.c.h.b16 %v9371
      %v9480 = vunpack.c.l.b16 %v9372
      %v9481 = vunpack.c.h.b16 %v9372
      %v9482 = vunpack.c.l.b16 %v9373
      %v9483 = vunpack.c.h.b16 %v9373
      %v9484 = vunpack.c.l.b16 %v9374
      %v9485 = vunpack.c.h.b16 %v9374
      %v9486 = vunpack.c.l.b16 %v9375
      %v9487 = vunpack.c.h.b16 %v9375
      %v9488 = vunpack.c.l.b16 %v9376
      %v9489 = vunpack.c.h.b16 %v9376
      %v9490 = vunpack.c.l.b16 %v9377
      %v9491 = vunpack.c.h.b16 %v9377
      %v9492 = vunpack.c.l.b16 %v9378
      %v9493 = vunpack.c.h.b16 %v9378
      %v9494 = vunpack.c.l.b16 %v9379
      %v9495 = vunpack.c.h.b16 %v9379
      %v9496 = vunpack.c.l.b16 %v9380
      %v9497 = vunpack.c.h.b16 %v9380
      %v9498 = vunpack.c.l.b16 %v9381
      %v9499 = vunpack.c.h.b16 %v9381
      %v9500 = vunpack.c.l.b16 %v9382
      %v9501 = vunpack.c.h.b16 %v9382
      %v9502 = vunpack.c.l.b16 %v9383
      %v9503 = vunpack.c.h.b16 %v9383
      %v9504 = vunpack.c.l.b16 %v9384
      %v9505 = vunpack.c.h.b16 %v9384
      %v9506 = vunpack.c.l.b16 %v9385
      %v9507 = vunpack.c.h.b16 %v9385
      %v9508 = vunpack.c.l.b16 %v9386
      %v9509 = vunpack.c.h.b16 %v9386
      %v9510 = vunpack.c.l.b16 %v9387
      %v9511 = vunpack.c.h.b16 %v9387
      %v9512 = vunpack.c.l.b16 %v9388
      %v9513 = vunpack.c.h.b16 %v9388
      %v9514 = vunpack.c.l.b16 %v9389
      %v9515 = vunpack.c.h.b16 %v9389
      %v9516 = vunpack.c.l.b16 %v9390
      %v9517 = vunpack.c.h.b16 %v9390
      %v9518 = vunpack.c.l.b16 %v9391
      %v9519 = vunpack.c.h.b16 %v9391
      %v9520 = vunpack.c.l.b16 %v9392
      %v9521 = vunpack.c.h.b16 %v9392
      %v9522 = vunpack.c.l.b16 %v9393
      %v9523 = vunpack.c.h.b16 %v9393
      %v9524 = vunpack.c.l.b16 %v9394
      %v9525 = vunpack.c.h.b16 %v9394
      %v9526 = vunpack.c.l.b16 %v9395
      %v9527 = vunpack.c.h.b16 %v9395
      %v9528 = vunpack.c.l.b16 %v9396
      %v9529 = vunpack.c.h.b16 %v9396
      %v9530 = vunpack.c.l.b16 %v9397
      %v9531 = vunpack.c.h.b16 %v9397
      %v9532 = vunpack.c.l.b16 %v9398
      %v9533 = vunpack.c.h.b16 %v9398
      %v9534 = vunpack.c.l.b16 %v9399
      %v9535 = vunpack.c.h.b16 %v9399
      %v9536 = vunpack.c.l.b16 %v9400
      %v9537 = vunpack.c.h.b16 %v9400
      %v9538 = vunpack.c.l.b16 %v9401
      %v9539 = vunpack.c.h.b16 %v9401
      %v9540 = vunpack.c.l.b16 %v9402
      %v9541 = vunpack.c.h.b16 %v9402
      %v9542 = vunpack.c.l.b16 %v9403
      %v9543 = vunpack.c.h.b16 %v9403
      %v9544 = vunpack.c.l.b16 %v9404
      %v9545 = vunpack.c.h.b16 %v9404
      %v9546 = vunpack.c.l.b16 %v9405
      %v9547 = vunpack.c.h.b16 %v9405
      %v9548 = vunpack.c.l.b16 %v9406
      %v9549 = vunpack.c.h.b16 %v9406
      %v9550 = vunpack.c.l.b16 %v9407
      %v9551 = vunpack.c.h.b16 %v9407
      %v9552 = vunpack.c.l.b16 %v9408
      %v9553 = vunpack.c.h.b16 %v9408
      %v9554 = vunpack.c.l.b16 %v9409
      %v9555 = vunpack.c.h.b16 %v9409
      %v9556 = vunpack.c.l.b16 %v9410
      %v9557 = vunpack.c.h.b16 %v9410
      %v9558 = vunpack.c.l.b16 %v9411
      %v9559 = vunpack.c.h.b16 %v9411
      %v9560 = vunpack.c.l.b16 %v9412
      %v9561 = vunpack.c.h.b16 %v9412
      %v9562 = vpack.c.b16 %v9470, %v9466
      %v9563 = vpack.c.b16 %v9471, %v9467
      %v9564 = vpack.c.b16 %v9472, %v9468
      %v9565 = vpack.c.b16 %v9473, %v9469
      %v9566 = vpack.c.b16 %v9478, %v9474
      %v9567 = vpack.c.b16 %v9479, %v9475
      %v9568 = vpack.c.b16 %v9480, %v9476
      %v9569 = vpack.c.b16 %v9481, %v9477
      %v9570 = vpack.c.b16 %v9486, %v9482
      %v9571 = vpack.c.b16 %v9487, %v9483
      %v9572 = vpack.c.b16 %v9488, %v9484
      %v9573 = vpack.c.b16 %v9489, %v9485
      %v9574 = vpack.c.b16 %v9494, %v9490
      %v9575 = vpack.c.b16 %v9495, %v9491
      %v9576 = vpack.c.b16 %v9496, %v9492
      %v9577 = vpack.c.b16 %v9497, %v9493
      %v9578 = vpack.c.b16 %v9502, %v9498
      %v9579 = vpack.c.b16 %v9503, %v9499
      %v9580 = vpack.c.b16 %v9504, %v9500
      %v9581 = vpack.c.b16 %v9505, %v9501
      %v9582 = vpack.c.b16 %v9510, %v9506
      %v9583 = vpack.c.b16 %v9511, %v9507
      %v9584 = vpack.c.b16 %v9512, %v9508
      %v9585 = vpack.c.b16 %v9513, %v9509
      %v9586 = vpack.c.b16 %v9518, %v9514
      %v9587 = vpack.c.b16 %v9519, %v9515
      %v9588 = vpack.c.b16 %v9520, %v9516
      %v9589 = vpack.c.b16 %v9521, %v9517
      %v9590 = vpack.c.b16 %v9526, %v9522
      %v9591 = vpack.c.b16 %v9527, %v9523
      %v9592 = vpack.c.b16 %v9528, %v9524
      %v9593 = vpack.c.b16 %v9529, %v9525
      %v9594 = vpack.c.b16 %v9534, %v9530
      %v9595 = vpack.c.b16 %v9535, %v9531
      %v9596 = vpack.c.b16 %v9536, %v9532
      %v9597 = vpack.c.b16 %v9537, %v9533
      %v9598 = vpack.c.b16 %v9542, %v9538
      %v9599 = vpack.c.b16 %v9543, %v9539
      %v9600 = vpack.c.b16 %v9544, %v9540
      %v9601 = vpack.c.b16 %v9545, %v9541
      %v9602 = vpack.c.b16 %v9550, %v9546
      %v9603 = vpack.c.b16 %v9551, %v9547
      %v9604 = vpack.c.b16 %v9552, %v9548
      %v9605 = vpack.c.b16 %v9553, %v9549
      %v9606 = vpack.c.b16 %v9558, %v9554
      %v9607 = vpack.c.b16 %v9559, %v9555
      %v9608 = vpack.c.b16 %v9560, %v9556
      %v9609 = vpack.c.b16 %v9561, %v9557
      %v9659 = vsel %vm7887, %v9416, 0
      %9661 = vmatprep.subr.bf16.mxu0 %v9563
      %9662 = vmatpush1.bf16.msra.mxu0 %v9562
      %9663 = vmatprep.subr.bf16.mxu0 %v9567
      %9664 = vmatpush1.bf16.msra.mxu0 %v9566
      %9665 = vmatprep.subr.bf16.mxu0 %v9571
      %9666 = vmatpush1.bf16.msra.mxu0 %v9570
      %9667 = vmatprep.subr.bf16.mxu0 %v9575
      %9668 = vmatpush1.bf16.msra.mxu0 %v9574
      %9669 = vmatprep.subr.bf16.mxu0 %v9579
      %9670 = vmatpush1.bf16.msra.mxu0 %v9578
      %9671 = vmatprep.subr.bf16.mxu0 %v9583
      %9672 = vmatpush1.bf16.msra.mxu0 %v9582
      %9673 = vmatprep.subr.bf16.mxu0 %v9587
      %9674 = vmatpush1.bf16.msra.mxu0 %v9586
      %9675 = vmatprep.subr.bf16.mxu0 %v9591
      %9676 = vmatpush1.bf16.msra.mxu0 %v9590
      %9677 = vmatprep.subr.bf16.mxu0 %v9595
      %9678 = vmatpush1.bf16.msra.mxu0 %v9594
      %9679 = vmatprep.subr.bf16.mxu0 %v9599
      %9680 = vmatpush1.bf16.msra.mxu0 %v9598
      %9681 = vmatprep.subr.bf16.mxu0 %v9603
      %9682 = vmatpush1.bf16.msra.mxu0 %v9602
      %9683 = vmatprep.subr.bf16.mxu0 %v9607
      %9684 = vmatpush1.bf16.msra.mxu0 %v9606
      %9685 = vmatprep.subr.bf16.mxu0 0
      %9686 = vmatpush1.bf16.msra.mxu0 0
      %9687 = vmatprep.subr.bf16.mxu0 0
      %9688 = vmatpush1.bf16.msra.mxu0 0
      %9689 = vmatprep.subr.bf16.mxu0 0
      %9690 = vmatpush1.bf16.msra.mxu0 0
      %9691 = vmatprep.subr.bf16.mxu0 0
      %9692 = vmatpush1.bf16.msra.mxu0 0
      %9693 = vmatprep.mubr.bf16.mxu0 %v9659
      %9694 = vmatmul.mubr.bf16.gmra.mrb[0].mxu0 %v9415
      %v9695 = vpop.f32.mrb[0].mxu0
      %v9696 = vadd.f32 0.0, %v9695
      %v9697 = vpop.f32.mrb[0].mxu0
      %v9698 = vadd.f32 0.0, %v9697
      %v9699 = vpop.f32.mrb[0].mxu0
      %v9700 = vpop.f32.mrb[0].mxu0
      %9701 = vdwg.mxu0
      %9702 = vmatprep.subr.bf16.mxu0 %v9565
      %9703 = vmatpush1.bf16.msra.mxu0 %v9564
      %9704 = vmatprep.subr.bf16.mxu0 %v9569
      %9705 = vmatpush1.bf16.msra.mxu0 %v9568
      %9706 = vmatprep.subr.bf16.mxu0 %v9573
      %9707 = vmatpush1.bf16.msra.mxu0 %v9572
      %9708 = vmatprep.subr.bf16.mxu0 %v9577
      %9709 = vmatpush1.bf16.msra.mxu0 %v9576
      %9710 = vmatprep.subr.bf16.mxu0 %v9581
      %9711 = vmatpush1.bf16.msra.mxu0 %v9580
      %9712 = vmatprep.subr.bf16.mxu0 %v9585
      %9713 = vmatpush1.bf16.msra.mxu0 %v9584
      %9714 = vmatprep.subr.bf16.mxu0 %v9589
      %9715 = vmatpush1.bf16.msra.mxu0 %v9588
      %9716 = vmatprep.subr.bf16.mxu0 %v9593
      %9717 = vmatpush1.bf16.msra.mxu0 %v9592
      %9718 = vmatprep.subr.bf16.mxu0 %v9597
      %9719 = vmatpush1.bf16.msra.mxu0 %v9596
      %9720 = vmatprep.subr.bf16.mxu0 %v9601
      %9721 = vmatpush1.bf16.msra.mxu0 %v9600
      %9722 = vmatprep.subr.bf16.mxu0 %v9605
      %9723 = vmatpush1.bf16.msra.mxu0 %v9604
      %9724 = vmatprep.subr.bf16.mxu0 %v9609
      %9725 = vmatpush1.bf16.msra.mxu0 %v9608
      %9726 = vmatprep.subr.bf16.mxu0 0
      %9727 = vmatpush1.bf16.msra.mxu0 0
      %9728 = vmatprep.subr.bf16.mxu0 0
      %9729 = vmatpush1.bf16.msra.mxu0 0
      %9730 = vmatprep.subr.bf16.mxu0 0
      %9731 = vmatpush1.bf16.msra.mxu0 0
      %9732 = vmatprep.subr.bf16.mxu0 0
      %9733 = vmatpush1.bf16.msra.mxu0 0
      %9734 = vmatprep.mubr.bf16.mxu0 %v9659
      %9735 = vmatmul.mubr.bf16.gmra.mrb[0].mxu0 %v9415
      %v9736 = vpop.f32.mrb[0].mxu0
      %v9737 = vadd.f32 0.0, %v9736
      %v9738 = vpop.f32.mrb[0].mxu0
      %v9739 = vadd.f32 0.0, %v9738
      %v9740 = vpop.f32.mrb[0].mxu0
      %v9741 = vpop.f32.mrb[0].mxu0
      %9742 = vdwg.mxu0
      %v9743 = vadd.f32 %v9317, %v9696
      %v9744 = vadd.f32 %v9319, %v9698
      %v9745 = vadd.f32 %v9358, %v9737
      %v9746 = vadd.f32 %v9360, %v9739
      %v9747 = vld [vmem:[%s10] sm:$0xf]
      %v9749 = vlaneseq
      %v9750 = vshrl.u32 %v9749, 7
      %v9751 = vsub.s32 0, %v9750
      %v9752 = vrot.slane %v9747, %v9751
      %v9753 = vlaneseq
      %v9754 = vshrl.u32 %v9753, 7
      %v9755 = vsub.s32 1, %v9754
      %v9756 = vrot.slane %v9747, %v9755
      %v9757 = vlaneseq
      %v9758 = vshrl.u32 %v9757, 7
      %v9759 = vsub.s32 2, %v9758
      %v9760 = vrot.slane %v9747, %v9759
      %v9761 = vlaneseq
      %v9762 = vshrl.u32 %v9761, 7
      %v9763 = vsub.s32 3, %v9762
      %v9764 = vrot.slane %v9747, %v9763
      %v9769 = vadd.f32 %v9743, %v9752
      %v9770 = vadd.f32 %v9744, %v9756
      %v9771 = vadd.f32 %v9745, %v9760
      %v9772 = vadd.f32 %v9746, %v9764
      %v9773 = vmax.f32 %v9769, 0.0
      %v9774 = vmax.f32 %v9770, 0.0
      %v9775 = vmax.f32 %v9771, 0.0
      %v9776 = vmax.f32 %v9772, 0.0
      %v9777 = vpack.c.bf16 %v9773, %v9773
      %v9778 = vpack.c.bf16 %v9774, %v9774
      %v9779 = vpack.c.bf16 %v9775, %v9775
      %v9780 = vpack.c.bf16 %v9776, %v9776
      %v9781 = vld [vmem:[%s11] sm:$0xf]
      %v9782 = vld [vmem:[%s11 + $0x4] sm:$0xf]
      %v9783 = vld [vmem:[%s11 + $0x8] sm:$0xf]
      %v9784 = vld [vmem:[%s11 + $0xc] sm:$0xf]
      %v9785 = vld [vmem:[%s11 + $0x10] sm:$0xf]
      %v9786 = vld [vmem:[%s11 + $0x14] sm:$0xf]
      %v9787 = vld [vmem:[%s11 + $0x18] sm:$0xf]
      %v9788 = vld [vmem:[%s11 + $0x1c] sm:$0xf]
      %v9789 = vld [vmem:[%s11 + $0x20] sm:$0xf]
      %v9790 = vld [vmem:[%s11 + $0x24] sm:$0xf]
      %v9791 = vld [vmem:[%s11 + $0x28] sm:$0xf]
      %v9792 = vld [vmem:[%s11 + $0x2c] sm:$0xf]
      %v9793 = vld [vmem:[%s11 + $0x30] sm:$0xf]
      %v9794 = vld [vmem:[%s11 + $0x34] sm:$0xf]
      %v9795 = vld [vmem:[%s11 + $0x38] sm:$0xf]
      %v9796 = vld [vmem:[%s11 + $0x3c] sm:$0xf]
      %v9797 = vld [vmem:[%s11 + $0x40] sm:$0xf]
      %v9798 = vld [vmem:[%s11 + $0x44] sm:$0xf]
      %v9799 = vld [vmem:[%s11 + $0x48] sm:$0xf]
      %v9800 = vld [vmem:[%s11 + $0x4c] sm:$0xf]
      %v9801 = vld [vmem:[%s11 + $0x50] sm:$0xf]
      %v9802 = vld [vmem:[%s11 + $0x54] sm:$0xf]
      %v9803 = vld [vmem:[%s11 + $0x58] sm:$0xf]
      %v9804 = vld [vmem:[%s11 + $0x5c] sm:$0xf]
      %v9805 = vld [vmem:[%s11 + $0x60] sm:$0xf]
      %v9806 = vld [vmem:[%s11 + $0x64] sm:$0xf]
      %v9807 = vld [vmem:[%s11 + $0x68] sm:$0xf]
      %v9808 = vld [vmem:[%s11 + $0x6c] sm:$0xf]
      %v9809 = vld [vmem:[%s11 + $0x70] sm:$0xf]
      %v9810 = vld [vmem:[%s11 + $0x74] sm:$0xf]
      %v9811 = vld [vmem:[%s11 + $0x78] sm:$0xf]
      %v9812 = vld [vmem:[%s11 + $0x7c] sm:$0xf]
      %v9813 = vld [vmem:[%s11 + $0x80] sm:$0xf]
      %v9814 = vld [vmem:[%s11 + $0x84] sm:$0xf]
      %v9815 = vld [vmem:[%s11 + $0x88] sm:$0xf]
      %v9816 = vld [vmem:[%s11 + $0x8c] sm:$0xf]
      %v9817 = vld [vmem:[%s11 + $0x90] sm:$0xf]
      %v9818 = vld [vmem:[%s11 + $0x94] sm:$0xf]
      %v9819 = vld [vmem:[%s11 + $0x98] sm:$0xf]
      %v9820 = vld [vmem:[%s11 + $0x9c] sm:$0xf]
      %v9821 = vld [vmem:[%s11 + $0xa0] sm:$0xf]
      %v9822 = vld [vmem:[%s11 + $0xa4] sm:$0xf]
      %v9823 = vld [vmem:[%s11 + $0xa8] sm:$0xf]
      %v9824 = vld [vmem:[%s11 + $0xac] sm:$0xf]
      %v9825 = vld [vmem:[%s11 + $0xb0] sm:$0xf]
      %v9826 = vld [vmem:[%s11 + $0xb4] sm:$0xf]
      %v9827 = vld [vmem:[%s11 + $0xb8] sm:$0xf]
      %v9828 = vld [vmem:[%s11 + $0xbc] sm:$0xf]
      %v9829 = vld [vmem:[%s11 + $0xc0] sm:$0xf]
      %v9830 = vld [vmem:[%s11 + $0xc4] sm:$0xf]
      %v9831 = vld [vmem:[%s11 + $0xc8] sm:$0xf]
      %v9832 = vld [vmem:[%s11 + $0xcc] sm:$0xf]
      %v9833 = vld [vmem:[%s11 + $0xd0] sm:$0xf]
      %v9834 = vld [vmem:[%s11 + $0xd4] sm:$0xf]
      %v9835 = vld [vmem:[%s11 + $0xd8] sm:$0xf]
      %v9836 = vld [vmem:[%s11 + $0xdc] sm:$0xf]
      %v9837 = vld [vmem:[%s11 + $0xe0] sm:$0xf]
      %v9838 = vld [vmem:[%s11 + $0xe4] sm:$0xf]
      %v9839 = vld [vmem:[%s11 + $0xe8] sm:$0xf]
      %v9840 = vld [vmem:[%s11 + $0xec] sm:$0xf]
      %v9841 = vld [vmem:[%s11 + $0xf0] sm:$0xf]
      %v9842 = vld [vmem:[%s11 + $0xf4] sm:$0xf]
      %v9843 = vld [vmem:[%s11 + $0xf8] sm:$0xf]
      %v9844 = vld [vmem:[%s11 + $0xfc] sm:$0xf]
      %v9845 = vld [vmem:[%s12] sm:$0x1]
      %v9910 = vunpack.c.l.b16 %v9781
      %v9911 = vunpack.c.l.b16 %v9782
      %v9912 = vunpack.c.l.b16 %v9783
      %v9913 = vunpack.c.l.b16 %v9784
      %v9914 = vunpack.c.l.b16 %v9785
      %v9915 = vunpack.c.l.b16 %v9786
      %v9916 = vunpack.c.l.b16 %v9787
      %v9917 = vunpack.c.l.b16 %v9788
      %v9918 = vunpack.c.l.b16 %v9789
      %v9919 = vunpack.c.l.b16 %v9790
      %v9920 = vunpack.c.l.b16 %v9791
      %v9921 = vunpack.c.l.b16 %v9792
      %v9922 = vunpack.c.l.b16 %v9793
      %v9923 = vunpack.c.l.b16 %v9794
      %v9924 = vunpack.c.l.b16 %v9795
      %v9925 = vunpack.c.l.b16 %v9796
      %v9926 = vunpack.c.l.b16 %v9797
      %v9927 = vunpack.c.l.b16 %v9798
      %v9928 = vunpack.c.l.b16 %v9799
      %v9929 = vunpack.c.l.b16 %v9800
      %v9930 = vunpack.c.l.b16 %v9801
      %v9931 = vunpack.c.l.b16 %v9802
      %v9932 = vunpack.c.l.b16 %v9803
      %v9933 = vunpack.c.l.b16 %v9804
      %v9934 = vunpack.c.l.b16 %v9805
      %v9935 = vunpack.c.l.b16 %v9806
      %v9936 = vunpack.c.l.b16 %v9807
      %v9937 = vunpack.c.l.b16 %v9808
      %v9938 = vunpack.c.l.b16 %v9809
      %v9939 = vunpack.c.l.b16 %v9810
      %v9940 = vunpack.c.l.b16 %v9811
      %v9941 = vunpack.c.l.b16 %v9812
      %v9942 = vunpack.c.l.b16 %v9813
      %v9943 = vunpack.c.l.b16 %v9814
      %v9944 = vunpack.c.l.b16 %v9815
      %v9945 = vunpack.c.l.b16 %v9816
      %v9946 = vunpack.c.l.b16 %v9817
      %v9947 = vunpack.c.l.b16 %v9818
      %v9948 = vunpack.c.l.b16 %v9819
      %v9949 = vunpack.c.l.b16 %v9820
      %v9950 = vunpack.c.l.b16 %v9821
      %v9951 = vunpack.c.l.b16 %v9822
      %v9952 = vunpack.c.l.b16 %v9823
      %v9953 = vunpack.c.l.b16 %v9824
      %v9954 = vunpack.c.l.b16 %v9825
      %v9955 = vunpack.c.l.b16 %v9826
      %v9956 = vunpack.c.l.b16 %v9827
      %v9957 = vunpack.c.l.b16 %v9828
      %v9958 = vunpack.c.l.b16 %v9829
      %v9959 = vunpack.c.l.b16 %v9830
      %v9960 = vunpack.c.l.b16 %v9831
      %v9961 = vunpack.c.l.b16 %v9832
      %v9962 = vunpack.c.l.b16 %v9833
      %v9963 = vunpack.c.l.b16 %v9834
      %v9964 = vunpack.c.l.b16 %v9835
      %v9965 = vunpack.c.l.b16 %v9836
      %v9966 = vunpack.c.l.b16 %v9837
      %v9967 = vunpack.c.l.b16 %v9838
      %v9968 = vunpack.c.l.b16 %v9839
      %v9969 = vunpack.c.l.b16 %v9840
      %v9970 = vunpack.c.l.b16 %v9841
      %v9971 = vunpack.c.l.b16 %v9842
      %v9972 = vunpack.c.l.b16 %v9843
      %v9973 = vunpack.c.l.b16 %v9844
      %v9974 = vpack.c.b16 %v9911, %v9910
      %v9975 = vpack.c.b16 %v9913, %v9912
      %v9976 = vpack.c.b16 %v9915, %v9914
      %v9977 = vpack.c.b16 %v9917, %v9916
      %v9978 = vpack.c.b16 %v9919, %v9918
      %v9979 = vpack.c.b16 %v9921, %v9920
      %v9980 = vpack.c.b16 %v9923, %v9922
      %v9981 = vpack.c.b16 %v9925, %v9924
      %v9982 = vpack.c.b16 %v9927, %v9926
      %v9983 = vpack.c.b16 %v9929, %v9928
      %v9984 = vpack.c.b16 %v9931, %v9930
      %v9985 = vpack.c.b16 %v9933, %v9932
      %v9986 = vpack.c.b16 %v9935, %v9934
      %v9987 = vpack.c.b16 %v9937, %v9936
      %v9988 = vpack.c.b16 %v9939, %v9938
      %v9989 = vpack.c.b16 %v9941, %v9940
      %v9990 = vpack.c.b16 %v9943, %v9942
      %v9991 = vpack.c.b16 %v9945, %v9944
      %v9992 = vpack.c.b16 %v9947, %v9946
      %v9993 = vpack.c.b16 %v9949, %v9948
      %v9994 = vpack.c.b16 %v9951, %v9950
      %v9995 = vpack.c.b16 %v9953, %v9952
      %v9996 = vpack.c.b16 %v9955, %v9954
      %v9997 = vpack.c.b16 %v9957, %v9956
      %v9998 = vpack.c.b16 %v9959, %v9958
      %v9999 = vpack.c.b16 %v9961, %v9960
      %v10000 = vpack.c.b16 %v9963, %v9962
      %v10001 = vpack.c.b16 %v9965, %v9964
      %v10002 = vpack.c.b16 %v9967, %v9966
      %v10003 = vpack.c.b16 %v9969, %v9968
      %v10004 = vpack.c.b16 %v9971, %v9970
      %v10005 = vpack.c.b16 %v9973, %v9972
      %10038 = vmatprep.subr.bf16.mxu0 0
      %10039 = vmatpush1.bf16.msra.mxu0 %v9974
      %10040 = vmatprep.subr.bf16.mxu0 0
      %10041 = vmatpush1.bf16.msra.mxu0 %v9975
      %10042 = vmatprep.subr.bf16.mxu0 0
      %10043 = vmatpush1.bf16.msra.mxu0 %v9976
      %10044 = vmatprep.subr.bf16.mxu0 0
      %10045 = vmatpush1.bf16.msra.mxu0 %v9977
      %10046 = vmatprep.subr.bf16.mxu0 0
      %10047 = vmatpush1.bf16.msra.mxu0 %v9978
      %10048 = vmatprep.subr.bf16.mxu0 0
      %10049 = vmatpush1.bf16.msra.mxu0 %v9979
      %10050 = vmatprep.subr.bf16.mxu0 0
      %10051 = vmatpush1.bf16.msra.mxu0 %v9980
      %10052 = vmatprep.subr.bf16.mxu0 0
      %10053 = vmatpush1.bf16.msra.mxu0 %v9981
      %10054 = vmatprep.subr.bf16.mxu0 0
      %10055 = vmatpush1.bf16.msra.mxu0 %v9982
      %10056 = vmatprep.subr.bf16.mxu0 0
      %10057 = vmatpush1.bf16.msra.mxu0 %v9983
      %10058 = vmatprep.subr.bf16.mxu0 0
      %10059 = vmatpush1.bf16.msra.mxu0 %v9984
      %10060 = vmatprep.subr.bf16.mxu0 0
      %10061 = vmatpush1.bf16.msra.mxu0 %v9985
      %10062 = vmatprep.subr.bf16.mxu0 0
      %10063 = vmatpush1.bf16.msra.mxu0 %v9986
      %10064 = vmatprep.subr.bf16.mxu0 0
      %10065 = vmatpush1.bf16.msra.mxu0 %v9987
      %10066 = vmatprep.subr.bf16.mxu0 0
      %10067 = vmatpush1.bf16.msra.mxu0 %v9988
      %10068 = vmatprep.subr.bf16.mxu0 0
      %10069 = vmatpush1.bf16.msra.mxu0 %v9989
      %10070 = vmatprep.mubr.bf16.mxu0 %v9778
      %10071 = vmatmul.mubr.bf16.gmra.mrb[0].mxu0 %v9777
      %v10072 = vpop.f32.mrb[0].mxu0
      %v10073 = vadd.f32 %v9845, %v10072
      %v10074 = vpop.f32.mrb[0].mxu0
      %v10075 = vpop.f32.mrb[0].mxu0
      %v10076 = vpop.f32.mrb[0].mxu0
      %10077 = vdwg.mxu0
      %10078 = vmatprep.subr.bf16.mxu0 0
      %10079 = vmatpush1.bf16.msra.mxu0 %v9990
      %10080 = vmatprep.subr.bf16.mxu0 0
      %10081 = vmatpush1.bf16.msra.mxu0 %v9991
      %10082 = vmatprep.subr.bf16.mxu0 0
      %10083 = vmatpush1.bf16.msra.mxu0 %v9992
      %10084 = vmatprep.subr.bf16.mxu0 0
      %10085 = vmatpush1.bf16.msra.mxu0 %v9993
      %10086 = vmatprep.subr.bf16.mxu0 0
      %10087 = vmatpush1.bf16.msra.mxu0 %v9994
      %10088 = vmatprep.subr.bf16.mxu0 0
      %10089 = vmatpush1.bf16.msra.mxu0 %v9995
      %10090 = vmatprep.subr.bf16.mxu0 0
      %10091 = vmatpush1.bf16.msra.mxu0 %v9996
      %10092 = vmatprep.subr.bf16.mxu0 0
      %10093 = vmatpush1.bf16.msra.mxu0 %v9997
      %10094 = vmatprep.subr.bf16.mxu0 0
      %10095 = vmatpush1.bf16.msra.mxu0 %v9998
      %10096 = vmatprep.subr.bf16.mxu0 0
      %10097 = vmatpush1.bf16.msra.mxu0 %v9999
      %10098 = vmatprep.subr.bf16.mxu0 0
      %10099 = vmatpush1.bf16.msra.mxu0 %v10000
      %10100 = vmatprep.subr.bf16.mxu0 0
      %10101 = vmatpush1.bf16.msra.mxu0 %v10001
      %10102 = vmatprep.subr.bf16.mxu0 0
      %10103 = vmatpush1.bf16.msra.mxu0 %v10002
      %10104 = vmatprep.subr.bf16.mxu0 0
      %10105 = vmatpush1.bf16.msra.mxu0 %v10003
      %10106 = vmatprep.subr.bf16.mxu0 0
      %10107 = vmatpush1.bf16.msra.mxu0 %v10004
      %10108 = vmatprep.subr.bf16.mxu0 0
      %10109 = vmatpush1.bf16.msra.mxu0 %v10005
      %10110 = vmatprep.mubr.bf16.mxu0 %v9780
      %10111 = vmatmul.mubr.bf16.gmra.mrb[0].mxu0 %v9779
      %v10112 = vpop.f32.mrb[0].mxu0
      %v10113 = vadd.f32 %v10073, %v10112
      %v10114 = vpop.f32.mrb[0].mxu0
      %v10115 = vpop.f32.mrb[0].mxu0
      %v10116 = vpop.f32.mrb[0].mxu0
      %10117 = vdwg.mxu0
      %v10118 = vlaneseq
      %v10119 = vand.u32 %v10118, 127
      %vm10120 = vcmp.lt.s32.totalorder %v10119, 6
      %v10121 = vsel %vm10120, %v10113, -1e+30
      %vm10122 = vcmask 1040384
      %v10123 = vsel %vm10122, %v10121, -inf
      %10124 = vmax.xlane.f32.xlu0 %v10123
      %v10125 = vpop.xlane.xlu0 %10124
      %v10126 = vsub.f32 %v10121, %v10125
      %v10127 = vmul.f32 %v10126, 1.442695
      %v10128 = vpow.pop %v10127
      %v10129 = vsel %vm10122, %v10128, 0.0
      %10130 = vadd.xlane.f32.xlu0 %v10129
      %v10131 = vpop.xlane.xlu0 %10130
      %v10132 = vrcp.pop %v10131
      %v10133 = vmul.f32 %v10128, %v10132
      %vm10134 = vcmp.eq.s32.totalorder %v10119, 6
      %v10135 = vsel %vm10134, %v10113, %v10133
      %10136 = vst [vmem:[%s436] sm:$0x1] %v10135
      %p10137 = scmp.lt.s32.totalorder %s24, 7
      %s10138 = scalar_select %p10137, %s24, 7
      %s10139 = scalar_lea.vmem %s13, %s10138
      // Predicated region
      $region73: #{image_agent_forward.1} parent=71 // pred_check
        %p10140 = pneg %p320
      $region74: #{image_agent_forward.1} parent=71 // pred_check_branch
        %10142 = sbr.rel (%p10140) target = $region76
      $region75: #{image_agent_forward.1} parent=71 // pred_region
        _
      $region76: #{image_agent_forward.1} parent=71 // pred_fallthru
        _
    $region72: #{image_agent_forward.1} parent=5 // pred_fallthru
      _
    %p10143 = scmp.le.s32.totalorder 2, %s19
    // Predicated region
    $region77: #{image_agent_forward.1} parent=5 // pred_check
      %p10144 = pneg %p10143
    $region78: #{image_agent_forward.1} parent=5 // pred_check_branch
      %10146 = sbr.rel (%p10144) target = $region80
    $region79: #{image_agent_forward.1} parent=5 // pred_region
      %s10147 = ssub.s32 %s19, 2
      // Predicated region
      $region81: #{image_agent_forward.1} parent=79 // pred_check
        %p10148 = pneg %p326
      $region82: #{image_agent_forward.1} parent=79 // pred_check_branch
        %10150 = sbr.rel (%p10148) target = $region84
      $region83: #{image_agent_forward.1} parent=79 // pred_region
        %p10151 = scmp.lt.s32.totalorder %s25, 7
        %s10152 = scalar_select %p10151, %s25, 7
        %s10153 = scalar_lea.vmem %s13, %s10152
      $region84: #{image_agent_forward.1} parent=79 // pred_fallthru
        _
    $region80: #{image_agent_forward.1} parent=5 // pred_fallthru
      _
  $region6: #{image_agent_forward.1} parent=0 // loop_footer
    %s23 = sadd.s32 1, %s19
  $region7: #{image_agent_forward.1} parent=0 // loop_footer_branch
    %18 = sbr.rel target = $region3
  $region8: #{image_agent_forward.1} parent=0 // loop_exit
    _

</llo_original>
